<compile_context>
chip_gen: v7x
topology: tpu7x:2x2x1
jax: 0.10.0
libtpu: 0.0.40
codegen_flags: <defaults>
</compile_context>

<pallas_src>
import functools

import jax
import jax.numpy as jnp
from jax.experimental import pallas as pl
from jax.experimental.pallas import tpu as pltpu

IN_FEATURES = 50                 # Numerai classic training data: X_train.shape[1] == 50
IN_PAD = 128                     # zero-padded feature width (lane aligned)
H1, H2, H3, OUT = 1000, 500, 200, 1
H1P, H2P, H3P = 1024, 512, 256   # lane-aligned (128-multiple) hidden widths


def mlp_kernel(x_ref, w1_ref, b1_ref, w2_ref, b2_ref, w3_ref, b3_ref,
               w4_ref, b4_ref, o_ref):
    # fc1 + relu: bf16 MXU inputs, f32 accumulation; bias+ReLU in bf16 (lane-dense, 1024 wide)
    h = jnp.dot(x_ref[...], w1_ref[...], preferred_element_type=jnp.float32)
    h = jnp.maximum(h.astype(jnp.bfloat16) + b1_ref[...], 0)
    # fc2 + relu (bf16 elementwise, 512 wide)
    h = jnp.dot(h, w2_ref[...], preferred_element_type=jnp.float32)
    h = jnp.maximum(h.astype(jnp.bfloat16) + b2_ref[...], 0)
    # fc3 + sigmoid: keep bias+sigmoid in f32 (EUP op), cast once to bf16 for the last MXU op.
    h = jnp.dot(h, w3_ref[...], preferred_element_type=jnp.float32)
    h = jax.nn.sigmoid(h + b3_ref[...]).astype(jnp.bfloat16)          # (tile, 256)
    # fc4 (K=256 incl. zero padding, N=1): contract on the last dim of both operands
    # (q@k.T pattern) -> lane-dense (1, tile) result; padded w4 entries are zero.
    z = jax.lax.dot_general(w4_ref[...], h, (((1,), (1,)), ((), ())),
                            preferred_element_type=jnp.float32)        # (1, tile)
    o_ref[...] = jax.nn.sigmoid(z + b4_ref[...])


def pad_and_cast_input(x, batch_tile=512):
    """One-time pad/cast: zero-pad batch to a tile multiple and features 50->128, cast bf16.
    For repeated inference, call this once on the dataset and use mlp_forward_padded."""
    B = x.shape[0]
    Bp = pl.cdiv(B, batch_tile) * batch_tile
    xp = jnp.zeros((Bp, IN_PAD), jnp.bfloat16)
    return xp.at[:B, :x.shape[1]].set(x.astype(jnp.bfloat16))


@functools.partial(jax.jit, static_argnames=("batch_tile",))
def mlp_forward_padded(xp, params, batch_tile=512):
    """xp: [Bp, IN_PAD] bf16 (pre-padded).  Returns [Bp, 1] float32."""
    w1, b1, w2, b2, w3, b3, w4, b4 = params
    Bp = xp.shape[0]
    num_tiles = Bp // batch_tile

    xmap = lambda i: (i, 0)       # batch-tiled input
    pmap_ = lambda i: (0, 0)      # constant index_map -> weights DMA'd once, VMEM-resident
    omap = lambda i: (0, i)       # lane-dense output row, tiles stitched along lanes

    flops = 2 * Bp * (IN_PAD * H1P + H1P * H2P + H2P * H3P + H3P * OUT)
    transcendentals = Bp * (H3 + OUT)                        # sigmoids (exp on the EUP)
    bytes_accessed = (Bp * IN_PAD * 2                        # bf16 input
                      + (IN_PAD * H1P + H1P * H2P + H2P * H3P + H3P) * 2   # bf16 weights
                      + (H1P + H2P) * 2 + (H3P + 1) * 4      # biases
                      + Bp * 4)                              # f32 output

    out = pl.pallas_call(
        mlp_kernel,
        out_shape=jax.ShapeDtypeStruct((1, Bp), jnp.float32),
        grid_spec=pltpu.PrefetchScalarGridSpec(
            num_scalar_prefetch=0,
            grid=(num_tiles,),
            in_specs=[
                pl.BlockSpec((batch_tile, IN_PAD), xmap),
                pl.BlockSpec((IN_PAD, H1P), pmap_),
                pl.BlockSpec((1, H1P), pmap_),
                pl.BlockSpec((H1P, H2P), pmap_),
                pl.BlockSpec((1, H2P), pmap_),
                pl.BlockSpec((H2P, H3P), pmap_),
                pl.BlockSpec((1, H3P), pmap_),
                pl.BlockSpec((1, H3P), pmap_),   # w4 stored as a (1, H3P) bf16 row
                pl.BlockSpec((1, 1), pmap_),
            ],
            out_specs=pl.BlockSpec((1, batch_tile), omap),
        ),
        compiler_params=pltpu.CompilerParams(
            # parallel batch axis -> megacore sharding on v7x's 2 TensorCores
            dimension_semantics=("parallel",),
            # 32 MiB scoped VMEM is safe on v5e/v6e/v7x; raise and sweep batch_tile up to
            # 1024-2048 on single-TC v5e/v6e for extra per-step-overhead amortization.
            vmem_limit_bytes=32 * 1024 * 1024,
        ),
        cost_estimate=pl.CostEstimate(flops=flops,
                                      transcendentals=transcendentals,
                                      bytes_accessed=bytes_accessed),
    )(xp, w1, b1, w2, b2, w3, b3, w4, b4)
    return out.reshape(Bp, OUT)


def mlp_forward(x, params, batch_tile=512):
    """Convenience one-shot path: x [B, IN_FEATURES] f32 -> [B, 1] f32."""
    B = x.shape[0]
    xp = pad_and_cast_input(x, batch_tile)
    return mlp_forward_padded(xp, params, batch_tile=batch_tile)[:B]


def init_params(key):
    """f32 params mimicking PyTorch Linear default init U[-1/sqrt(fan_in), 1/sqrt(fan_in)].
    Weights stored [in, out] (transposed vs torch's [out, in]) so forward is x @ W + b."""
    dims = [(IN_FEATURES, H1), (H1, H2), (H2, H3), (H3, OUT)]
    params = []
    for fan_in, fan_out in dims:
        key, kw, kb = jax.random.split(key, 3)
        bound = 1.0 / jnp.sqrt(jnp.float32(fan_in))
        w = jax.random.uniform(kw, (fan_in, fan_out), jnp.float32, -bound, bound)
        b = jax.random.uniform(kb, (1, fan_out), jnp.float32, -bound, bound)
        params += [w, b]
    return tuple(params)


def _pad2(a, rows, cols, dtype):
    out = jnp.zeros((rows, cols), dtype)
    return out.at[:a.shape[0], :a.shape[1]].set(a.astype(dtype))


def prepare_params(params):
    """One-time host-side conversion to the kernel layout:
       * all weights zero-padded to lane-aligned shapes and cast to bf16 (MXU inputs,
         f32 accumulation); padded w4 columns MUST stay zero (they meet sigmoid(0)=0.5
         lanes from the padded fc3 output).
       * b1/b2 in bf16 (bf16 bias+ReLU path); b3/b4 stay f32."""
    w1, b1, w2, b2, w3, b3, w4, b4 = params
    return (
        _pad2(w1, IN_PAD, H1P, jnp.bfloat16),
        _pad2(b1, 1, H1P, jnp.bfloat16),
        _pad2(w2, H1P, H2P, jnp.bfloat16),
        _pad2(b2, 1, H2P, jnp.bfloat16),
        _pad2(w3, H2P, H3P, jnp.bfloat16),
        _pad2(b3, 1, H3P, jnp.float32),
        _pad2(w4.reshape(1, H3), 1, H3P, jnp.bfloat16),
        b4.astype(jnp.float32),
    )


def reference_forward(x, params):
    """Pure f32 JAX reference matching the PyTorch module semantics."""
    w1, b1, w2, b2, w3, b3, w4, b4 = params
    h = jax.nn.relu(x @ w1 + b1)
    h = jax.nn.relu(h @ w2 + b2)
    h = jax.nn.sigmoid(h @ w3 + b3)
    return jax.nn.sigmoid(h @ w4 + b4)


if __name__ == "__main__":
    key = jax.random.PRNGKey(0)
    key, kx = jax.random.split(key)
    B = 1000                      # deliberately not a multiple of batch_tile
    x = jax.random.normal(kx, (B, IN_FEATURES), jnp.float32)
    params = init_params(key)
    kernel_params = prepare_params(params)

    out = mlp_forward(x, kernel_params, batch_tile=512)
    out = jax.block_until_ready(out)

    ref = reference_forward(x, params)
    assert out.shape == (B, OUT), out.shape
    # bf16 matmul inputs / bf16 bias path vs. a pure-f32 reference -> relaxed tolerance.
    max_err = float(jnp.max(jnp.abs(out - ref)))
    assert max_err < 2e-2, f"mismatch vs reference: {max_err}"
    print("KERNEL_OK")
</pallas_src>

<mosaic_0001>
module attributes {stable_mosaic.version = 11 : i64} {
  func.func @mlp_kernel(%arg0: i32, %arg1: memref<512x128xbf16, #tpu.memory_space<vmem>>, %arg2: memref<128x1024xbf16, #tpu.memory_space<vmem>>, %arg3: memref<1x1024xbf16, #tpu.memory_space<vmem>>, %arg4: memref<1024x512xbf16, #tpu.memory_space<vmem>>, %arg5: memref<1x512xbf16, #tpu.memory_space<vmem>>, %arg6: memref<512x256xbf16, #tpu.memory_space<vmem>>, %arg7: memref<1x256xf32, #tpu.memory_space<vmem>>, %arg8: memref<1x256xbf16, #tpu.memory_space<vmem>>, %arg9: memref<1x1xf32, #tpu.memory_space<vmem>>, %arg10: memref<1x512xf32, #tpu.memory_space<vmem>>) attributes {dimension_semantics = [#tpu.dimension_semantics<parallel>], iteration_bounds = array<i64: 2>, scalar_prefetch = 0 : i64, scratch_operands = 0 : i64, tpu.core_type = #tpu.core_type<tc>, window_params = [{transform_indices = @transform_0, window_bounds = array<i64: 512, 128>}, {pipeline_mode = #tpu.pipeline_mode<synchronous>, transform_indices = @transform_1, window_bounds = array<i64: 128, 1024>}, {pipeline_mode = #tpu.pipeline_mode<synchronous>, transform_indices = @transform_2, window_bounds = array<i64: 1, 1024>}, {pipeline_mode = #tpu.pipeline_mode<synchronous>, transform_indices = @transform_3, window_bounds = array<i64: 1024, 512>}, {pipeline_mode = #tpu.pipeline_mode<synchronous>, transform_indices = @transform_4, window_bounds = array<i64: 1, 512>}, {pipeline_mode = #tpu.pipeline_mode<synchronous>, transform_indices = @transform_5, window_bounds = array<i64: 512, 256>}, {pipeline_mode = #tpu.pipeline_mode<synchronous>, transform_indices = @transform_6, window_bounds = array<i64: 1, 256>}, {pipeline_mode = #tpu.pipeline_mode<synchronous>, transform_indices = @transform_7, window_bounds = array<i64: 1, 256>}, {pipeline_mode = #tpu.pipeline_mode<synchronous>, transform_indices = @transform_8, window_bounds = array<i64: 1, 1>}, {transform_indices = @transform_9, window_bounds = array<i64: 1, 512>}]} {
    %c0 = arith.constant 0 : index
    %c0_0 = arith.constant 0 : index
    %0 = vector.load %arg1[%c0, %c0_0] : memref<512x128xbf16, #tpu.memory_space<vmem>>, vector<512x128xbf16>
    %c0_1 = arith.constant 0 : index
    %c0_2 = arith.constant 0 : index
    %1 = vector.load %arg2[%c0_1, %c0_2] : memref<128x1024xbf16, #tpu.memory_space<vmem>>, vector<128x1024xbf16>
    %cst = arith.constant dense<0.000000e+00> : vector<512x1024xf32>
    %2 = tpu.matmul %0, %1, %cst {dimension_numbers = #tpu.dot_dimension_numbers<[1], [0], [0], [1], [0, 0, 1, 1], [], []>} : vector<512x128xbf16>, vector<128x1024xbf16>, vector<512x1024xf32> -> vector<512x1024xf32>
    %3 = arith.truncf %2 : vector<512x1024xf32> to vector<512x1024xbf16>
    %c0_3 = arith.constant 0 : index
    %c0_4 = arith.constant 0 : index
    %4 = vector.load %arg3[%c0_3, %c0_4] : memref<1x1024xbf16, #tpu.memory_space<vmem>>, vector<1x1024xbf16>
    %5 = vector.broadcast %4 : vector<1x1024xbf16> to vector<512x1024xbf16>
    %6 = arith.addf %3, %5 : vector<512x1024xbf16>
    %cst_5 = arith.constant 0.000000e+00 : bf16
    %7 = vector.broadcast %cst_5 : bf16 to vector<512x1024xbf16>
    %8 = arith.maximumf %6, %7 : vector<512x1024xbf16>
    %c0_6 = arith.constant 0 : index
    %c0_7 = arith.constant 0 : index
    %9 = vector.load %arg4[%c0_6, %c0_7] : memref<1024x512xbf16, #tpu.memory_space<vmem>>, vector<1024x512xbf16>
    %cst_8 = arith.constant dense<0.000000e+00> : vector<512x512xf32>
    %10 = tpu.matmul %8, %9, %cst_8 {dimension_numbers = #tpu.dot_dimension_numbers<[1], [0], [0], [1], [0, 0, 1, 1], [], []>} : vector<512x1024xbf16>, vector<1024x512xbf16>, vector<512x512xf32> -> vector<512x512xf32>
    %11 = arith.truncf %10 : vector<512x512xf32> to vector<512x512xbf16>
    %c0_9 = arith.constant 0 : index
    %c0_10 = arith.constant 0 : index
    %12 = vector.load %arg5[%c0_9, %c0_10] : memref<1x512xbf16, #tpu.memory_space<vmem>>, vector<1x512xbf16>
    %13 = vector.broadcast %12 : vector<1x512xbf16> to vector<512x512xbf16>
    %14 = arith.addf %11, %13 : vector<512x512xbf16>
    %cst_11 = arith.constant 0.000000e+00 : bf16
    %15 = vector.broadcast %cst_11 : bf16 to vector<512x512xbf16>
    %16 = arith.maximumf %14, %15 : vector<512x512xbf16>
    %c0_12 = arith.constant 0 : index
    %c0_13 = arith.constant 0 : index
    %17 = vector.load %arg6[%c0_12, %c0_13] : memref<512x256xbf16, #tpu.memory_space<vmem>>, vector<512x256xbf16>
    %cst_14 = arith.constant dense<0.000000e+00> : vector<512x256xf32>
    %18 = tpu.matmul %16, %17, %cst_14 {dimension_numbers = #tpu.dot_dimension_numbers<[1], [0], [0], [1], [0, 0, 1, 1], [], []>} : vector<512x512xbf16>, vector<512x256xbf16>, vector<512x256xf32> -> vector<512x256xf32>
    %c0_15 = arith.constant 0 : index
    %c0_16 = arith.constant 0 : index
    %19 = vector.load %arg7[%c0_15, %c0_16] : memref<1x256xf32, #tpu.memory_space<vmem>>, vector<1x256xf32>
    %20 = vector.broadcast %19 : vector<1x256xf32> to vector<512x256xf32>
    %21 = arith.addf %18, %20 : vector<512x256xf32>
    %22 = arith.negf %21 : vector<512x256xf32>
    %23 = math.exp %22 : vector<512x256xf32>
    %cst_17 = arith.constant 1.000000e+00 : f32
    %24 = vector.broadcast %cst_17 : f32 to vector<512x256xf32>
    %25 = arith.addf %24, %23 : vector<512x256xf32>
    %26 = arith.divf %24, %25 : vector<512x256xf32>
    %27 = arith.truncf %26 : vector<512x256xf32> to vector<512x256xbf16>
    %c0_18 = arith.constant 0 : index
    %c0_19 = arith.constant 0 : index
    %28 = vector.load %arg8[%c0_18, %c0_19] : memref<1x256xbf16, #tpu.memory_space<vmem>>, vector<1x256xbf16>
    %cst_20 = arith.constant dense<0.000000e+00> : vector<1x512xf32>
    %29 = tpu.matmul %28, %27, %cst_20 {dimension_numbers = #tpu.dot_dimension_numbers<[1], [1], [0], [0], [0, 0, 1, 0], [], []>} : vector<1x256xbf16>, vector<512x256xbf16>, vector<1x512xf32> -> vector<1x512xf32>
    %c0_21 = arith.constant 0 : index
    %c0_22 = arith.constant 0 : index
    %30 = vector.load %arg9[%c0_21, %c0_22] : memref<1x1xf32, #tpu.memory_space<vmem>>, vector<1x1xf32>
    %31 = vector.broadcast %30 : vector<1x1xf32> to vector<1x512xf32>
    %32 = arith.addf %29, %31 : vector<1x512xf32>
    %33 = arith.negf %32 : vector<1x512xf32>
    %34 = math.exp %33 : vector<1x512xf32>
    %cst_23 = arith.constant 1.000000e+00 : f32
    %35 = vector.broadcast %cst_23 : f32 to vector<1x512xf32>
    %36 = arith.addf %35, %34 : vector<1x512xf32>
    %37 = arith.divf %35, %36 : vector<1x512xf32>
    %c0_24 = arith.constant 0 : index
    %c0_25 = arith.constant 0 : index
    %38 = vector.load %arg10[%c0_24, %c0_25] : memref<1x512xf32, #tpu.memory_space<vmem>>, vector<1x512xf32>
    tpu.vector_store %arg10[%c0_24, %c0_25], %37 {strides = array<i32>} : memref<1x512xf32, #tpu.memory_space<vmem>>, vector<1x512xf32>,
    return
  }
  func.func @transform_0(%arg0: i32) -> (i32, i32) {
    %c0_i32 = arith.constant 0 : i32
    %c0_i32_0 = arith.constant 0 : i32
    return %arg0, %c0_i32 : i32, i32
  }
  func.func @transform_1(%arg0: i32) -> (i32, i32) {
    %c0_i32 = arith.constant 0 : i32
    %c0_i32_0 = arith.constant 0 : i32
    %c0_i32_1 = arith.constant 0 : i32
    return %c0_i32, %c0_i32_0 : i32, i32
  }
  func.func @transform_2(%arg0: i32) -> (i32, i32) {
    %c0_i32 = arith.constant 0 : i32
    %c0_i32_0 = arith.constant 0 : i32
    %c0_i32_1 = arith.constant 0 : i32
    return %c0_i32, %c0_i32_0 : i32, i32
  }
  func.func @transform_3(%arg0: i32) -> (i32, i32) {
    %c0_i32 = arith.constant 0 : i32
    %c0_i32_0 = arith.constant 0 : i32
    %c0_i32_1 = arith.constant 0 : i32
    return %c0_i32, %c0_i32_0 : i32, i32
  }
  func.func @transform_4(%arg0: i32) -> (i32, i32) {
    %c0_i32 = arith.constant 0 : i32
    %c0_i32_0 = arith.constant 0 : i32
    %c0_i32_1 = arith.constant 0 : i32
    return %c0_i32, %c0_i32_0 : i32, i32
  }
  func.func @transform_5(%arg0: i32) -> (i32, i32) {
    %c0_i32 = arith.constant 0 : i32
    %c0_i32_0 = arith.constant 0 : i32
    %c0_i32_1 = arith.constant 0 : i32
    return %c0_i32, %c0_i32_0 : i32, i32
  }
  func.func @transform_6(%arg0: i32) -> (i32, i32) {
    %c0_i32 = arith.constant 0 : i32
    %c0_i32_0 = arith.constant 0 : i32
    %c0_i32_1 = arith.constant 0 : i32
    return %c0_i32, %c0_i32_0 : i32, i32
  }
  func.func @transform_7(%arg0: i32) -> (i32, i32) {
    %c0_i32 = arith.constant 0 : i32
    %c0_i32_0 = arith.constant 0 : i32
    %c0_i32_1 = arith.constant 0 : i32
    return %c0_i32, %c0_i32_0 : i32, i32
  }
  func.func @transform_8(%arg0: i32) -> (i32, i32) {
    %c0_i32 = arith.constant 0 : i32
    %c0_i32_0 = arith.constant 0 : i32
    %c0_i32_1 = arith.constant 0 : i32
    return %c0_i32, %c0_i32_0 : i32, i32
  }
  func.func @transform_9(%arg0: i32) -> (i32, i32) {
    %c0_i32 = arith.constant 0 : i32
    %c0_i32_0 = arith.constant 0 : i32
    return %c0_i32, %arg0 : i32, i32
  }
}

</mosaic_0001>

<llo_original>
// kernel: mlp_forward_padded.1
$region0: #{mlp_forward_padded.1}
  #allocation0 [shape = 'u32[]', space=smem, size = 0x4, offset = 0x4, fixed_abs, tag = 'smem constant byte address 0x4 - core index']
  #allocation1 [shape = 'u32[144,128]{1,0:T(1,128)}', space=vmem, size = 0x12000, scoped, tag = 'internal scratch']
  #allocation2 [shape = 'f32[1,1]{1,0:T(1,128)S(1)}', space=vmem, size = 0x200, scoped, tag = 'scoped memory for mlp_forward_padded.1']
  %s0 = inlined_call_operand.hbm [shape: bf16[1024,128], index: 0, kind: input, shape index: {}]
  %s1 = inlined_call_operand.hbm [shape: bf16[128,1024], index: 1, kind: input, shape index: {}]
  %s2 = inlined_call_operand.vmem [shape: bf16[1,1024], index: 2, kind: input, shape index: {}]
  %s3 = inlined_call_operand.hbm [shape: bf16[1024,512], index: 3, kind: input, shape index: {}]
  %s4 = inlined_call_operand.vmem [shape: bf16[1,512], index: 4, kind: input, shape index: {}]
  %s5 = inlined_call_operand.hbm [shape: bf16[512,256], index: 5, kind: input, shape index: {}]
  %s6 = inlined_call_operand.vmem [shape: f32[1,256], index: 6, kind: input, shape index: {}]
  %s7 = inlined_call_operand.vmem [shape: bf16[1,256], index: 7, kind: input, shape index: {}]
  %s8 = inlined_call_operand.<no memory space> [shape: f32[1,1], index: 8, kind: input, shape index: {}]
  %s9 = inlined_call_operand.hbm [shape: f32[1,1024], index: 9, kind: output, shape index: {}]
  %s10 = sld [smem:[#allocation0]]
  $region85: #{mlp_forward_padded.1} parent=0
    _
  %s12 = ssub.s32 1, %s10
  %s13 = scalar_select 0, %s12, %s10
  %v14 = vstv %s8
  %15 = vst [vmem:[#allocation2] sm:$0x1] %v14
  $region1: #{mlp_forward_padded.1} parent=0
    #allocation3 [shape = 'u8[262144]{0}', space=vmem, size = 0x40000, scoped, tag = 'input window, operand 0']
    #allocation4 [shape = 's32[2]{0}', space=sflag, size = 0x8, scoped, tag = 'scoped memory for mlp_forward_padded.1']
    #allocation5 [shape = 's32[2]{0}', space=sflag, size = 0x8, scoped, tag = 'scoped memory for mlp_forward_padded.1']
    #allocation6 [shape = 'u8[262144]{0}', space=vmem, size = 0x40000, scoped, tag = 'input window, operand 1, single buffered']
    #allocation7 [shape = 's32[1]{0}', space=sflag, size = 0x4, scoped, tag = 'scoped memory for mlp_forward_padded.1']
    #allocation8 [shape = 'u8[1048576]{0}', space=vmem, size = 0x100000, scoped, tag = 'input window, operand 3, single buffered']
    #allocation9 [shape = 'u8[262144]{0}', space=vmem, size = 0x40000, scoped, tag = 'input window, operand 5, single buffered']
    #allocation10 [shape = 's32[1]{0}', space=sflag, size = 0x4, scoped, tag = 'scoped memory for mlp_forward_padded.1']
    #allocation11 [shape = 'u8[4096]{0}', space=vmem, size = 0x1000, scoped, tag = 'output window, operand 0']
    %16 = vsyncpa [#allocation4], 0
    %s17 = scalar_lea.sflag [#allocation4], 1
    %18 = vsyncpa %s17, 0
    %19 = vsyncpa [#allocation7], 0
    %20 = vsyncpa [#allocation10], 0
    %21 = vsyncpa [#allocation5], 0
    %s22 = scalar_lea.sflag [#allocation5], 1
    %23 = vsyncpa %s22, 0
    loop: start=0, step=1, limit=4
    $region2: #{mlp_forward_padded.1} parent=1 // loop_pre_header
      _
    $region3: #{mlp_forward_padded.1} parent=1 // loop_header
      %s25 = sphi 0, %s29
      %p26 = scmp.ge.s32.totalorder %s25, 4
      %s35 = sphi 0, %s37
      %s38 = sphi 0, %s35
      %s39 = sphi 0, %s38
      %s55 = sphi 0, %s39
      %s59 = sphi 0, %s59
      %s61 = sphi 0, %s59
      %s62 = sphi 0, %s61
      %s76 = sphi 0, %s62
      %s80 = sphi 0, %s80
      %s82 = sphi 0, %s80
      %s83 = sphi 0, %s82
      %s97 = sphi 0, %s83
      %s101 = sphi 0, %s101
      %s103 = sphi 0, %s101
      %s104 = sphi 0, %s103
      %s118 = sphi 0, %s104
      %s122 = sphi 0, %s122
      %s124 = sphi 0, %s122
      %s125 = sphi 0, %s124
      %s139 = sphi 0, %s125
      %s143 = sphi 0, %s143
      %s145 = sphi 0, %s143
      %s146 = sphi 0, %s145
      %s160 = sphi 0, %s146
      %s164 = sphi 0, %s164
      %s166 = sphi 0, %s164
      %s167 = sphi 0, %s166
      %s181 = sphi 0, %s167
      %s185 = sphi 0, %s185
      %s187 = sphi 0, %s185
      %s188 = sphi 0, %s187
      %s202 = sphi 0, %s188
      %s206 = sphi 0, %s206
      %s208 = sphi 0, %s206
      %s209 = sphi 0, %s208
      %s223 = sphi 0, %s209
      %s229 = sphi 0, %s231
      %s232 = sphi 0, %s229
      %s233 = sphi 0, %s232
      %s249 = sphi 0, %s233
    $region4: #{mlp_forward_padded.1} parent=1 // loop_header_branch
      %28 = sbr.rel (%p26) target = $region8
    $region5: #{mlp_forward_padded.1} parent=1 // loop_body
      %s30 = ssub.s32 %s25, 1
      %s31 = ssub.s32 %s25, 2
      %s32 = sadd.s32 %s25, 1
      %s33 = ssub.s32 %s25, %s32
      %p34 = scmp.eq.s32.totalorder %s33, 0
      %s36 = sadd.s32 %s35, 1
      %s37 = scalar_select %p34, %s35, %s36
      %p40 = pneg %p34
      %p41 = scmp.eq.s32.totalorder %s25, 1
      %p42 = por %p40, %p41
      %p43 = scmp.ne.s32.totalorder %s35, %s38
      %p44 = scmp.eq.s32.totalorder %s25, 0
      %p45 = por %p43, %p44
      %p46 = scmp.ne.s32.totalorder %s35, %s38
      %p47 = scmp.eq.s32.totalorder %s30, 1
      %p48 = por %p46, %p47
      %p49 = scmp.ne.s32.totalorder %s38, %s39
      %p50 = scmp.eq.s32.totalorder %s30, 0
      %p51 = por %p49, %p50
      %p52 = scmp.ne.s32.totalorder %s38, %s39
      %p53 = scmp.eq.s32.totalorder %s31, 1
      %p54 = por %p52, %p53
      %p56 = scmp.ne.s32.totalorder %s39, %s55
      %p57 = scmp.eq.s32.totalorder %s31, 0
      %p58 = por %p56, %p57
      %s60 = sadd.s32 %s59, 1
      %p63 = scmp.eq.s32.totalorder %s25, 1
      %p64 = scmp.ne.s32.totalorder %s59, %s61
      %p65 = scmp.eq.s32.totalorder %s25, 0
      %p66 = por %p64, %p65
      %p67 = scmp.ne.s32.totalorder %s59, %s61
      %p68 = scmp.eq.s32.totalorder %s30, 1
      %p69 = por %p67, %p68
      %p70 = scmp.ne.s32.totalorder %s61, %s62
      %p71 = scmp.eq.s32.totalorder %s30, 0
      %p72 = por %p70, %p71
      %p73 = scmp.ne.s32.totalorder %s61, %s62
      %p74 = scmp.eq.s32.totalorder %s31, 1
      %p75 = por %p73, %p74
      %p77 = scmp.ne.s32.totalorder %s62, %s76
      %p78 = scmp.eq.s32.totalorder %s31, 0
      %p79 = por %p77, %p78
      %s81 = sadd.s32 %s80, 1
      %p84 = scmp.eq.s32.totalorder %s25, 1
      %p85 = scmp.ne.s32.totalorder %s80, %s82
      %p86 = scmp.eq.s32.totalorder %s25, 0
      %p87 = por %p85, %p86
      %p88 = scmp.ne.s32.totalorder %s80, %s82
      %p89 = scmp.eq.s32.totalorder %s30, 1
      %p90 = por %p88, %p89
      %p91 = scmp.ne.s32.totalorder %s82, %s83
      %p92 = scmp.eq.s32.totalorder %s30, 0
      %p93 = por %p91, %p92
      %p94 = scmp.ne.s32.totalorder %s82, %s83
      %p95 = scmp.eq.s32.totalorder %s31, 1
      %p96 = por %p94, %p95
      %p98 = scmp.ne.s32.totalorder %s83, %s97
      %p99 = scmp.eq.s32.totalorder %s31, 0
      %p100 = por %p98, %p99
      %s102 = sadd.s32 %s101, 1
      %p105 = scmp.eq.s32.totalorder %s25, 1
      %p106 = scmp.ne.s32.totalorder %s101, %s103
      %p107 = scmp.eq.s32.totalorder %s25, 0
      %p108 = por %p106, %p107
      %p109 = scmp.ne.s32.totalorder %s101, %s103
      %p110 = scmp.eq.s32.totalorder %s30, 1
      %p111 = por %p109, %p110
      %p112 = scmp.ne.s32.totalorder %s103, %s104
      %p113 = scmp.eq.s32.totalorder %s30, 0
      %p114 = por %p112, %p113
      %p115 = scmp.ne.s32.totalorder %s103, %s104
      %p116 = scmp.eq.s32.totalorder %s31, 1
      %p117 = por %p115, %p116
      %p119 = scmp.ne.s32.totalorder %s104, %s118
      %p120 = scmp.eq.s32.totalorder %s31, 0
      %p121 = por %p119, %p120
      %s123 = sadd.s32 %s122, 1
      %p126 = scmp.eq.s32.totalorder %s25, 1
      %p127 = scmp.ne.s32.totalorder %s122, %s124
      %p128 = scmp.eq.s32.totalorder %s25, 0
      %p129 = por %p127, %p128
      %p130 = scmp.ne.s32.totalorder %s122, %s124
      %p131 = scmp.eq.s32.totalorder %s30, 1
      %p132 = por %p130, %p131
      %p133 = scmp.ne.s32.totalorder %s124, %s125
      %p134 = scmp.eq.s32.totalorder %s30, 0
      %p135 = por %p133, %p134
      %p136 = scmp.ne.s32.totalorder %s124, %s125
      %p137 = scmp.eq.s32.totalorder %s31, 1
      %p138 = por %p136, %p137
      %p140 = scmp.ne.s32.totalorder %s125, %s139
      %p141 = scmp.eq.s32.totalorder %s31, 0
      %p142 = por %p140, %p141
      %s144 = sadd.s32 %s143, 1
      %p147 = scmp.eq.s32.totalorder %s25, 1
      %p148 = scmp.ne.s32.totalorder %s143, %s145
      %p149 = scmp.eq.s32.totalorder %s25, 0
      %p150 = por %p148, %p149
      %p151 = scmp.ne.s32.totalorder %s143, %s145
      %p152 = scmp.eq.s32.totalorder %s30, 1
      %p153 = por %p151, %p152
      %p154 = scmp.ne.s32.totalorder %s145, %s146
      %p155 = scmp.eq.s32.totalorder %s30, 0
      %p156 = por %p154, %p155
      %p157 = scmp.ne.s32.totalorder %s145, %s146
      %p158 = scmp.eq.s32.totalorder %s31, 1
      %p159 = por %p157, %p158
      %p161 = scmp.ne.s32.totalorder %s146, %s160
      %p162 = scmp.eq.s32.totalorder %s31, 0
      %p163 = por %p161, %p162
      %s165 = sadd.s32 %s164, 1
      %p168 = scmp.eq.s32.totalorder %s25, 1
      %p169 = scmp.ne.s32.totalorder %s164, %s166
      %p170 = scmp.eq.s32.totalorder %s25, 0
      %p171 = por %p169, %p170
      %p172 = scmp.ne.s32.totalorder %s164, %s166
      %p173 = scmp.eq.s32.totalorder %s30, 1
      %p174 = por %p172, %p173
      %p175 = scmp.ne.s32.totalorder %s166, %s167
      %p176 = scmp.eq.s32.totalorder %s30, 0
      %p177 = por %p175, %p176
      %p178 = scmp.ne.s32.totalorder %s166, %s167
      %p179 = scmp.eq.s32.totalorder %s31, 1
      %p180 = por %p178, %p179
      %p182 = scmp.ne.s32.totalorder %s167, %s181
      %p183 = scmp.eq.s32.totalorder %s31, 0
      %p184 = por %p182, %p183
      %s186 = sadd.s32 %s185, 1
      %p189 = scmp.eq.s32.totalorder %s25, 1
      %p190 = scmp.ne.s32.totalorder %s185, %s187
      %p191 = scmp.eq.s32.totalorder %s25, 0
      %p192 = por %p190, %p191
      %p193 = scmp.ne.s32.totalorder %s185, %s187
      %p194 = scmp.eq.s32.totalorder %s30, 1
      %p195 = por %p193, %p194
      %p196 = scmp.ne.s32.totalorder %s187, %s188
      %p197 = scmp.eq.s32.totalorder %s30, 0
      %p198 = por %p196, %p197
      %p199 = scmp.ne.s32.totalorder %s187, %s188
      %p200 = scmp.eq.s32.totalorder %s31, 1
      %p201 = por %p199, %p200
      %p203 = scmp.ne.s32.totalorder %s188, %s202
      %p204 = scmp.eq.s32.totalorder %s31, 0
      %p205 = por %p203, %p204
      %s207 = sadd.s32 %s206, 1
      %p210 = scmp.eq.s32.totalorder %s25, 1
      %p211 = scmp.ne.s32.totalorder %s206, %s208
      %p212 = scmp.eq.s32.totalorder %s25, 0
      %p213 = por %p211, %p212
      %p214 = scmp.ne.s32.totalorder %s206, %s208
      %p215 = scmp.eq.s32.totalorder %s30, 1
      %p216 = por %p214, %p215
      %p217 = scmp.ne.s32.totalorder %s208, %s209
      %p218 = scmp.eq.s32.totalorder %s30, 0
      %p219 = por %p217, %p218
      %p220 = scmp.ne.s32.totalorder %s208, %s209
      %p221 = scmp.eq.s32.totalorder %s31, 1
      %p222 = por %p220, %p221
      %p224 = scmp.ne.s32.totalorder %s209, %s223
      %p225 = scmp.eq.s32.totalorder %s31, 0
      %p226 = por %p224, %p225
      %s227 = ssub.s32 %s25, %s32
      %p228 = scmp.eq.s32.totalorder %s227, 0
      %s230 = sadd.s32 %s229, 1
      %s231 = scalar_select %p228, %s229, %s230
      %p234 = pneg %p228
      %p235 = scmp.eq.s32.totalorder %s25, 1
      %p236 = por %p234, %p235
      %p237 = scmp.ne.s32.totalorder %s229, %s232
      %p238 = scmp.eq.s32.totalorder %s25, 0
      %p239 = por %p237, %p238
      %p240 = scmp.ne.s32.totalorder %s229, %s232
      %p241 = scmp.eq.s32.totalorder %s30, 1
      %p242 = por %p240, %p241
      %p243 = scmp.ne.s32.totalorder %s232, %s233
      %p244 = scmp.eq.s32.totalorder %s30, 0
      %p245 = por %p243, %p244
      %p246 = scmp.ne.s32.totalorder %s232, %s233
      %p247 = scmp.eq.s32.totalorder %s31, 1
      %p248 = por %p246, %p247
      %p250 = scmp.ne.s32.totalorder %s233, %s249
      %p251 = scmp.eq.s32.totalorder %s31, 0
      %p252 = por %p250, %p251
      %p253 = scmp.le.s32.totalorder 1, %s25
      %p254 = scmp.lt.s32.totalorder %s25, 3
      %p255 = pnand %p253, %p254
      %p256 = pneg %p255
      // Predicated region
      $region9: #{mlp_forward_padded.1} parent=5 // pred_check
        _
      $region10: #{mlp_forward_padded.1} parent=5 // pred_check_branch
        %258 = sbr.rel (%p255) target = $region12
      $region11: #{mlp_forward_padded.1} parent=5 // pred_region
        %s259 = ssub.s32 %s25, 1
        // Predicated region
        $region13: #{mlp_forward_padded.1} parent=11 // pred_check
          %p260 = pneg %p72
        $region14: #{mlp_forward_padded.1} parent=11 // pred_check_branch
          %262 = sbr.rel (%p260) target = $region16
        $region15: #{mlp_forward_padded.1} parent=11 // pred_region
          %s264 = ssub.s32 8192, 8192
          %265 = vsyncadd [#allocation7], %s264
          %s266 = sshll.u32 [#allocation6], 4
          %s267 = int_to_ptr.vmem [resolvable:$true] %s266
          %272 = dma.hbm_to_vmem [thread:$0]  %s1, 8192, %s267, [#allocation7], 512, 512, 32
        $region16: #{mlp_forward_padded.1} parent=11 // pred_fallthru
          _
        // Predicated region
        $region17: #{mlp_forward_padded.1} parent=11 // pred_check
          %p273 = pneg %p93
        $region18: #{mlp_forward_padded.1} parent=11 // pred_check_branch
          %275 = sbr.rel (%p273) target = $region20
        $region19: #{mlp_forward_padded.1} parent=11 // pred_region
          _
        $region20: #{mlp_forward_padded.1} parent=11 // pred_fallthru
          _
        // Predicated region
        $region21: #{mlp_forward_padded.1} parent=11 // pred_check
          %p276 = pneg %p114
        $region22: #{mlp_forward_padded.1} parent=11 // pred_check_branch
          %278 = sbr.rel (%p276) target = $region24
        $region23: #{mlp_forward_padded.1} parent=11 // pred_region
          %s280 = ssub.s32 32768, 32768
          %281 = vsyncadd [#allocation7], %s280
          %s282 = sshll.u32 [#allocation8], 4
          %s283 = int_to_ptr.vmem [resolvable:$true] %s282
          %288 = dma.hbm_to_vmem [thread:$0]  %s3, 32768, %s283, [#allocation7], 256, 256, 16
        $region24: #{mlp_forward_padded.1} parent=11 // pred_fallthru
          _
        // Predicated region
        $region25: #{mlp_forward_padded.1} parent=11 // pred_check
          %p289 = pneg %p135
        $region26: #{mlp_forward_padded.1} parent=11 // pred_check_branch
          %291 = sbr.rel (%p289) target = $region28
        $region27: #{mlp_forward_padded.1} parent=11 // pred_region
          _
        $region28: #{mlp_forward_padded.1} parent=11 // pred_fallthru
          _
        // Predicated region
        $region29: #{mlp_forward_padded.1} parent=11 // pred_check
          %p292 = pneg %p156
        $region30: #{mlp_forward_padded.1} parent=11 // pred_check_branch
          %294 = sbr.rel (%p292) target = $region32
        $region31: #{mlp_forward_padded.1} parent=11 // pred_region
          %s296 = ssub.s32 8192, 8192
          %297 = vsyncadd [#allocation10], %s296
          %s298 = sshll.u32 [#allocation9], 4
          %s299 = int_to_ptr.vmem [resolvable:$true] %s298
          %304 = dma.hbm_to_vmem [thread:$0]  %s5, 8192, %s299, [#allocation10], 128, 128, 8
        $region32: #{mlp_forward_padded.1} parent=11 // pred_fallthru
          _
        // Predicated region
        $region33: #{mlp_forward_padded.1} parent=11 // pred_check
          %p305 = pneg %p177
        $region34: #{mlp_forward_padded.1} parent=11 // pred_check_branch
          %307 = sbr.rel (%p305) target = $region36
        $region35: #{mlp_forward_padded.1} parent=11 // pred_region
          _
        $region36: #{mlp_forward_padded.1} parent=11 // pred_fallthru
          _
        // Predicated region
        $region37: #{mlp_forward_padded.1} parent=11 // pred_check
          %p308 = pneg %p198
        $region38: #{mlp_forward_padded.1} parent=11 // pred_check_branch
          %310 = sbr.rel (%p308) target = $region40
        $region39: #{mlp_forward_padded.1} parent=11 // pred_region
          _
        $region40: #{mlp_forward_padded.1} parent=11 // pred_fallthru
          _
        // Predicated region
        $region41: #{mlp_forward_padded.1} parent=11 // pred_check
          %p311 = pneg %p219
        $region42: #{mlp_forward_padded.1} parent=11 // pred_check_branch
          %313 = sbr.rel (%p311) target = $region44
        $region43: #{mlp_forward_padded.1} parent=11 // pred_region
          _
        $region44: #{mlp_forward_padded.1} parent=11 // pred_fallthru
          _
      $region12: #{mlp_forward_padded.1} parent=5 // pred_fallthru
        _
      %p314 = scmp.lt.s32.totalorder %s25, 2
      // Predicated region
      $region45: #{mlp_forward_padded.1} parent=5 // pred_check
        %p315 = pneg %p314
      $region46: #{mlp_forward_padded.1} parent=5 // pred_check_branch
        %317 = sbr.rel (%p315) target = $region48
      $region47: #{mlp_forward_padded.1} parent=5 // pred_region
        // Predicated region
        $region49: #{mlp_forward_padded.1} parent=47 // pred_check
          %p318 = pneg %p45
        $region50: #{mlp_forward_padded.1} parent=47 // pred_check_branch
          %320 = sbr.rel (%p318) target = $region52
        $region51: #{mlp_forward_padded.1} parent=47 // pred_region
          %s321 = sand.u32 %s35, 1
          %s322 = scalar_lea.sflag [#allocation4], %s321
          %s323 = sand.u32 %s35, 1
          %s324 = smul.addr %s323, 256
          %s325 = scalar_lea.vmem [#allocation3], %s324
          %s326 = smul.u32 64, %s25
          %s328 = ssub.s32 4096, 4096
          %329 = vsyncadd %s322, %s328
          %s330 = smul.addr %s326, 64
          %s331 = scalar_lea.hbm %s0, %s330
          %s332 = sshll.u32 %s325, 4
          %s333 = int_to_ptr.vmem [resolvable:$true] %s332
          %338 = dma.hbm_to_vmem [thread:$0]  %s331, 4096, %s333, %s322, 64, 64, 4
        $region52: #{mlp_forward_padded.1} parent=47 // pred_fallthru
          _
      $region48: #{mlp_forward_padded.1} parent=5 // pred_fallthru
        _
      %p339 = scmp.le.s32.totalorder 1, %s25
      %p340 = scmp.lt.s32.totalorder %s25, 3
      %p341 = pnand %p339, %p340
      %p342 = pneg %p341
      // Predicated region
      $region53: #{mlp_forward_padded.1} parent=5 // pred_check
        _
      $region54: #{mlp_forward_padded.1} parent=5 // pred_check_branch
        %344 = sbr.rel (%p341) target = $region56
      $region55: #{mlp_forward_padded.1} parent=5 // pred_region
        %s345 = ssub.s32 %s25, 1
        %s346 = sand.u32 %s38, 1
        %s347 = scalar_lea.sflag [#allocation4], %s346
        %s348 = sand.u32 %s38, 1
        %s349 = smul.addr %s348, 256
        %s350 = scalar_lea.vmem [#allocation3], %s349
        // Predicated region
        $region57: #{mlp_forward_padded.1} parent=55 // pred_check
          %p351 = pneg %p51
        $region58: #{mlp_forward_padded.1} parent=55 // pred_check_branch
          %353 = sbr.rel (%p351) target = $region60
        $region59: #{mlp_forward_padded.1} parent=55 // pred_region
          %354 = dma.done %s347, 4096
        $region60: #{mlp_forward_padded.1} parent=55 // pred_fallthru
          _
        // Predicated region
        $region61: #{mlp_forward_padded.1} parent=55 // pred_check
          %p355 = pneg %p72
        $region62: #{mlp_forward_padded.1} parent=55 // pred_check_branch
          %357 = sbr.rel (%p355) target = $region64
        $region63: #{mlp_forward_padded.1} parent=55 // pred_region
          %358 = dma.done [#allocation7], 8192
        $region64: #{mlp_forward_padded.1} parent=55 // pred_fallthru
          _
        // Predicated region
        $region65: #{mlp_forward_padded.1} parent=55 // pred_check
          %p359 = pneg %p114
        $region66: #{mlp_forward_padded.1} parent=55 // pred_check_branch
          %361 = sbr.rel (%p359) target = $region68
        $region67: #{mlp_forward_padded.1} parent=55 // pred_region
          %362 = dma.done [#allocation7], 32768
        $region68: #{mlp_forward_padded.1} parent=55 // pred_fallthru
          _
        // Predicated region
        $region69: #{mlp_forward_padded.1} parent=55 // pred_check
          %p363 = pneg %p156
        $region70: #{mlp_forward_padded.1} parent=55 // pred_check_branch
          %365 = sbr.rel (%p363) target = $region72
        $region71: #{mlp_forward_padded.1} parent=55 // pred_region
          %366 = dma.done [#allocation10], 8192
        $region72: #{mlp_forward_padded.1} parent=55 // pred_fallthru
          _
        %s367 = sand.u32 %s38, 1
        %s368 = scalar_lea.sflag [#allocation4], %s367
        %s369 = sand.u32 %s38, 1
        %s370 = smul.addr %s369, 256
        %s371 = scalar_lea.vmem [#allocation3], %s370
        %p372 = pneg %p51
        %p373 = pneg %p48
        %p374 = pneg %p72
        %p375 = pneg %p69
        %p376 = pneg %p93
        %p377 = pneg %p90
        %p378 = pneg %p114
        %p379 = pneg %p111
        %p380 = pneg %p135
        %p381 = pneg %p132
        %p382 = pneg %p156
        %p383 = pneg %p153
        %p384 = pneg %p177
        %p385 = pneg %p174
        %p386 = pneg %p198
        %p387 = pneg %p195
        %p388 = pneg %p219
        %p389 = pneg %p216
        %p390 = pneg %p245
        %p391 = pneg %p242
        %s392 = sand.u32 %s232, 1
        %s393 = scalar_lea.sflag [#allocation5], %s392
        %s394 = sand.u32 %s232, 1
        %s395 = smul.addr %s394, 4
        %s396 = scalar_lea.vmem [#allocation11], %s395
        %s397 = smul.u32 64, %s30
        %s398 = smul.u32 4, %s30
        %v400 = vld [vmem:[%s350] sm:$0xf]
        %v401 = vld [vmem:[%s350 + $0x4] sm:$0xf]
        %v402 = vld [vmem:[%s350 + $0x8] sm:$0xf]
        %v403 = vld [vmem:[%s350 + $0xc] sm:$0xf]
        %v404 = vld [vmem:[%s350 + $0x10] sm:$0xf]
        %v405 = vld [vmem:[%s350 + $0x14] sm:$0xf]
        %v406 = vld [vmem:[%s350 + $0x18] sm:$0xf]
        %v407 = vld [vmem:[%s350 + $0x1c] sm:$0xf]
        %v408 = vld [vmem:[%s350 + $0x20] sm:$0xf]
        %v409 = vld [vmem:[%s350 + $0x24] sm:$0xf]
        %v410 = vld [vmem:[%s350 + $0x28] sm:$0xf]
        %v411 = vld [vmem:[%s350 + $0x2c] sm:$0xf]
        %v412 = vld [vmem:[%s350 + $0x30] sm:$0xf]
        %v413 = vld [vmem:[%s350 + $0x34] sm:$0xf]
        %v414 = vld [vmem:[%s350 + $0x38] sm:$0xf]
        %v415 = vld [vmem:[%s350 + $0x3c] sm:$0xf]
        %v416 = vld [vmem:[%s350 + $0x40] sm:$0xf]
        %v417 = vld [vmem:[%s350 + $0x44] sm:$0xf]
        %v418 = vld [vmem:[%s350 + $0x48] sm:$0xf]
        %v419 = vld [vmem:[%s350 + $0x4c] sm:$0xf]
        %v420 = vld [vmem:[%s350 + $0x50] sm:$0xf]
        %v421 = vld [vmem:[%s350 + $0x54] sm:$0xf]
        %v422 = vld [vmem:[%s350 + $0x58] sm:$0xf]
        %v423 = vld [vmem:[%s350 + $0x5c] sm:$0xf]
        %v424 = vld [vmem:[%s350 + $0x60] sm:$0xf]
        %v425 = vld [vmem:[%s350 + $0x64] sm:$0xf]
        %v426 = vld [vmem:[%s350 + $0x68] sm:$0xf]
        %v427 = vld [vmem:[%s350 + $0x6c] sm:$0xf]
        %v428 = vld [vmem:[%s350 + $0x70] sm:$0xf]
        %v429 = vld [vmem:[%s350 + $0x74] sm:$0xf]
        %v430 = vld [vmem:[%s350 + $0x78] sm:$0xf]
        %v431 = vld [vmem:[%s350 + $0x7c] sm:$0xf]
        %v432 = vld [vmem:[%s350 + $0x80] sm:$0xf]
        %v433 = vld [vmem:[%s350 + $0x84] sm:$0xf]
        %v434 = vld [vmem:[%s350 + $0x88] sm:$0xf]
        %v435 = vld [vmem:[%s350 + $0x8c] sm:$0xf]
        %v436 = vld [vmem:[%s350 + $0x90] sm:$0xf]
        %v437 = vld [vmem:[%s350 + $0x94] sm:$0xf]
        %v438 = vld [vmem:[%s350 + $0x98] sm:$0xf]
        %v439 = vld [vmem:[%s350 + $0x9c] sm:$0xf]
        %v440 = vld [vmem:[%s350 + $0xa0] sm:$0xf]
        %v441 = vld [vmem:[%s350 + $0xa4] sm:$0xf]
        %v442 = vld [vmem:[%s350 + $0xa8] sm:$0xf]
        %v443 = vld [vmem:[%s350 + $0xac] sm:$0xf]
        %v444 = vld [vmem:[%s350 + $0xb0] sm:$0xf]
        %v445 = vld [vmem:[%s350 + $0xb4] sm:$0xf]
        %v446 = vld [vmem:[%s350 + $0xb8] sm:$0xf]
        %v447 = vld [vmem:[%s350 + $0xbc] sm:$0xf]
        %v448 = vld [vmem:[%s350 + $0xc0] sm:$0xf]
        %v449 = vld [vmem:[%s350 + $0xc4] sm:$0xf]
        %v450 = vld [vmem:[%s350 + $0xc8] sm:$0xf]
        %v451 = vld [vmem:[%s350 + $0xcc] sm:$0xf]
        %v452 = vld [vmem:[%s350 + $0xd0] sm:$0xf]
        %v453 = vld [vmem:[%s350 + $0xd4] sm:$0xf]
        %v454 = vld [vmem:[%s350 + $0xd8] sm:$0xf]
        %v455 = vld [vmem:[%s350 + $0xdc] sm:$0xf]
        %v456 = vld [vmem:[%s350 + $0xe0] sm:$0xf]
        %v457 = vld [vmem:[%s350 + $0xe4] sm:$0xf]
        %v458 = vld [vmem:[%s350 + $0xe8] sm:$0xf]
        %v459 = vld [vmem:[%s350 + $0xec] sm:$0xf]
        %v460 = vld [vmem:[%s350 + $0xf0] sm:$0xf]
        %v461 = vld [vmem:[%s350 + $0xf4] sm:$0xf]
        %v462 = vld [vmem:[%s350 + $0xf8] sm:$0xf]
        %v463 = vld [vmem:[%s350 + $0xfc] sm:$0xf]
        %v464 = vld [vmem:[#allocation6] sm:$0xff]
        %v465 = vld [vmem:[#allocation6 + $0x8] sm:$0xff]
        %v466 = vld [vmem:[#allocation6 + $0x10] sm:$0xff]
        %v467 = vld [vmem:[#allocation6 + $0x18] sm:$0xff]
        %v468 = vld [vmem:[#allocation6 + $0x20] sm:$0xff]
        %v469 = vld [vmem:[#allocation6 + $0x28] sm:$0xff]
        %v470 = vld [vmem:[#allocation6 + $0x30] sm:$0xff]
        %v471 = vld [vmem:[#allocation6 + $0x38] sm:$0xff]
        %v472 = vld [vmem:[#allocation6 + $0x40] sm:$0xff]
        %v473 = vld [vmem:[#allocation6 + $0x48] sm:$0xff]
        %v474 = vld [vmem:[#allocation6 + $0x50] sm:$0xff]
        %v475 = vld [vmem:[#allocation6 + $0x58] sm:$0xff]
        %v476 = vld [vmem:[#allocation6 + $0x60] sm:$0xff]
        %v477 = vld [vmem:[#allocation6 + $0x68] sm:$0xff]
        %v478 = vld [vmem:[#allocation6 + $0x70] sm:$0xff]
        %v479 = vld [vmem:[#allocation6 + $0x78] sm:$0xff]
        %v480 = vld [vmem:[#allocation6 + $0x80] sm:$0xff]
        %v481 = vld [vmem:[#allocation6 + $0x88] sm:$0xff]
        %v482 = vld [vmem:[#allocation6 + $0x90] sm:$0xff]
        %v483 = vld [vmem:[#allocation6 + $0x98] sm:$0xff]
        %v484 = vld [vmem:[#allocation6 + $0xa0] sm:$0xff]
        %v485 = vld [vmem:[#allocation6 + $0xa8] sm:$0xff]
        %v486 = vld [vmem:[#allocation6 + $0xb0] sm:$0xff]
        %v487 = vld [vmem:[#allocation6 + $0xb8] sm:$0xff]
        %v488 = vld [vmem:[#allocation6 + $0xc0] sm:$0xff]
        %v489 = vld [vmem:[#allocation6 + $0xc8] sm:$0xff]
        %v490 = vld [vmem:[#allocation6 + $0xd0] sm:$0xff]
        %v491 = vld [vmem:[#allocation6 + $0xd8] sm:$0xff]
        %v492 = vld [vmem:[#allocation6 + $0xe0] sm:$0xff]
        %v493 = vld [vmem:[#allocation6 + $0xe8] sm:$0xff]
        %v494 = vld [vmem:[#allocation6 + $0xf0] sm:$0xff]
        %v495 = vld [vmem:[#allocation6 + $0xf8] sm:$0xff]
        %v496 = vld [vmem:[#allocation6 + $0x100] sm:$0xff]
        %v497 = vld [vmem:[#allocation6 + $0x108] sm:$0xff]
        %v498 = vld [vmem:[#allocation6 + $0x110] sm:$0xff]
        %v499 = vld [vmem:[#allocation6 + $0x118] sm:$0xff]
        %v500 = vld [vmem:[#allocation6 + $0x120] sm:$0xff]
        %v501 = vld [vmem:[#allocation6 + $0x128] sm:$0xff]
        %v502 = vld [vmem:[#allocation6 + $0x130] sm:$0xff]
        %v503 = vld [vmem:[#allocation6 + $0x138] sm:$0xff]
        %v504 = vld [vmem:[#allocation6 + $0x140] sm:$0xff]
        %v505 = vld [vmem:[#allocation6 + $0x148] sm:$0xff]
        %v506 = vld [vmem:[#allocation6 + $0x150] sm:$0xff]
        %v507 = vld [vmem:[#allocation6 + $0x158] sm:$0xff]
        %v508 = vld [vmem:[#allocation6 + $0x160] sm:$0xff]
        %v509 = vld [vmem:[#allocation6 + $0x168] sm:$0xff]
        %v510 = vld [vmem:[#allocation6 + $0x170] sm:$0xff]
        %v511 = vld [vmem:[#allocation6 + $0x178] sm:$0xff]
        %v512 = vld [vmem:[#allocation6 + $0x180] sm:$0xff]
        %v513 = vld [vmem:[#allocation6 + $0x188] sm:$0xff]
        %v514 = vld [vmem:[#allocation6 + $0x190] sm:$0xff]
        %v515 = vld [vmem:[#allocation6 + $0x198] sm:$0xff]
        %v516 = vld [vmem:[#allocation6 + $0x1a0] sm:$0xff]
        %v517 = vld [vmem:[#allocation6 + $0x1a8] sm:$0xff]
        %v518 = vld [vmem:[#allocation6 + $0x1b0] sm:$0xff]
        %v519 = vld [vmem:[#allocation6 + $0x1b8] sm:$0xff]
        %v520 = vld [vmem:[#allocation6 + $0x1c0] sm:$0xff]
        %v521 = vld [vmem:[#allocation6 + $0x1c8] sm:$0xff]
        %v522 = vld [vmem:[#allocation6 + $0x1d0] sm:$0xff]
        %v523 = vld [vmem:[#allocation6 + $0x1d8] sm:$0xff]
        %v524 = vld [vmem:[#allocation6 + $0x1e0] sm:$0xff]
        %v525 = vld [vmem:[#allocation6 + $0x1e8] sm:$0xff]
        %v526 = vld [vmem:[#allocation6 + $0x1f0] sm:$0xff]
        %v527 = vld [vmem:[#allocation6 + $0x1f8] sm:$0xff]
        %v592 = vunpack.c.l.b16 %v400
        %v593 = vunpack.c.l.b16 %v401
        %v594 = vunpack.c.l.b16 %v402
        %v595 = vunpack.c.l.b16 %v403
        %v596 = vunpack.c.l.b16 %v404
        %v597 = vunpack.c.l.b16 %v405
        %v598 = vunpack.c.l.b16 %v406
        %v599 = vunpack.c.l.b16 %v407
        %v600 = vunpack.c.l.b16 %v408
        %v601 = vunpack.c.l.b16 %v409
        %v602 = vunpack.c.l.b16 %v410
        %v603 = vunpack.c.l.b16 %v411
        %v604 = vunpack.c.l.b16 %v412
        %v605 = vunpack.c.l.b16 %v413
        %v606 = vunpack.c.l.b16 %v414
        %v607 = vunpack.c.l.b16 %v415
        %v608 = vunpack.c.l.b16 %v416
        %v609 = vunpack.c.l.b16 %v417
        %v610 = vunpack.c.l.b16 %v418
        %v611 = vunpack.c.l.b16 %v419
        %v612 = vunpack.c.l.b16 %v420
        %v613 = vunpack.c.l.b16 %v421
        %v614 = vunpack.c.l.b16 %v422
        %v615 = vunpack.c.l.b16 %v423
        %v616 = vunpack.c.l.b16 %v424
        %v617 = vunpack.c.l.b16 %v425
        %v618 = vunpack.c.l.b16 %v426
        %v619 = vunpack.c.l.b16 %v427
        %v620 = vunpack.c.l.b16 %v428
        %v621 = vunpack.c.l.b16 %v429
        %v622 = vunpack.c.l.b16 %v430
        %v623 = vunpack.c.l.b16 %v431
        %v624 = vunpack.c.l.b16 %v432
        %v625 = vunpack.c.l.b16 %v433
        %v626 = vunpack.c.l.b16 %v434
        %v627 = vunpack.c.l.b16 %v435
        %v628 = vunpack.c.l.b16 %v436
        %v629 = vunpack.c.l.b16 %v437
        %v630 = vunpack.c.l.b16 %v438
        %v631 = vunpack.c.l.b16 %v439
        %v632 = vunpack.c.l.b16 %v440
        %v633 = vunpack.c.l.b16 %v441
        %v634 = vunpack.c.l.b16 %v442
        %v635 = vunpack.c.l.b16 %v443
        %v636 = vunpack.c.l.b16 %v444
        %v637 = vunpack.c.l.b16 %v445
        %v638 = vunpack.c.l.b16 %v446
        %v639 = vunpack.c.l.b16 %v447
        %v640 = vunpack.c.l.b16 %v448
        %v641 = vunpack.c.l.b16 %v449
        %v642 = vunpack.c.l.b16 %v450
        %v643 = vunpack.c.l.b16 %v451
        %v644 = vunpack.c.l.b16 %v452
        %v645 = vunpack.c.l.b16 %v453
        %v646 = vunpack.c.l.b16 %v454
        %v647 = vunpack.c.l.b16 %v455
        %v648 = vunpack.c.l.b16 %v456
        %v649 = vunpack.c.l.b16 %v457
        %v650 = vunpack.c.l.b16 %v458
        %v651 = vunpack.c.l.b16 %v459
        %v652 = vunpack.c.l.b16 %v460
        %v653 = vunpack.c.l.b16 %v461
        %v654 = vunpack.c.l.b16 %v462
        %v655 = vunpack.c.l.b16 %v463
        %v656 = vpack.c.b16 %v593, %v592
        %v657 = vpack.c.b16 %v595, %v594
        %v658 = vpack.c.b16 %v597, %v596
        %v659 = vpack.c.b16 %v599, %v598
        %v660 = vpack.c.b16 %v601, %v600
        %v661 = vpack.c.b16 %v603, %v602
        %v662 = vpack.c.b16 %v605, %v604
        %v663 = vpack.c.b16 %v607, %v606
        %v664 = vpack.c.b16 %v609, %v608
        %v665 = vpack.c.b16 %v611, %v610
        %v666 = vpack.c.b16 %v613, %v612
        %v667 = vpack.c.b16 %v615, %v614
        %v668 = vpack.c.b16 %v617, %v616
        %v669 = vpack.c.b16 %v619, %v618
        %v670 = vpack.c.b16 %v621, %v620
        %v671 = vpack.c.b16 %v623, %v622
        %v672 = vpack.c.b16 %v625, %v624
        %v673 = vpack.c.b16 %v627, %v626
        %v674 = vpack.c.b16 %v629, %v628
        %v675 = vpack.c.b16 %v631, %v630
        %v676 = vpack.c.b16 %v633, %v632
        %v677 = vpack.c.b16 %v635, %v634
        %v678 = vpack.c.b16 %v637, %v636
        %v679 = vpack.c.b16 %v639, %v638
        %v680 = vpack.c.b16 %v641, %v640
        %v681 = vpack.c.b16 %v643, %v642
        %v682 = vpack.c.b16 %v645, %v644
        %v683 = vpack.c.b16 %v647, %v646
        %v684 = vpack.c.b16 %v649, %v648
        %v685 = vpack.c.b16 %v651, %v650
        %v686 = vpack.c.b16 %v653, %v652
        %v687 = vpack.c.b16 %v655, %v654
        %v784 = vunpack.c.l.b16 %v464
        %v785 = vunpack.c.h.b16 %v464
        %v786 = vunpack.c.l.b16 %v465
        %v787 = vunpack.c.h.b16 %v465
        %v788 = vunpack.c.l.b16 %v466
        %v789 = vunpack.c.h.b16 %v466
        %v790 = vunpack.c.l.b16 %v467
        %v791 = vunpack.c.h.b16 %v467
        %v792 = vunpack.c.l.b16 %v468
        %v793 = vunpack.c.h.b16 %v468
        %v794 = vunpack.c.l.b16 %v469
        %v795 = vunpack.c.h.b16 %v469
        %v796 = vunpack.c.l.b16 %v470
        %v797 = vunpack.c.h.b16 %v470
        %v798 = vunpack.c.l.b16 %v471
        %v799 = vunpack.c.h.b16 %v471
        %v800 = vunpack.c.l.b16 %v472
        %v801 = vunpack.c.h.b16 %v472
        %v802 = vunpack.c.l.b16 %v473
        %v803 = vunpack.c.h.b16 %v473
        %v804 = vunpack.c.l.b16 %v474
        %v805 = vunpack.c.h.b16 %v474
        %v806 = vunpack.c.l.b16 %v475
        %v807 = vunpack.c.h.b16 %v475
        %v808 = vunpack.c.l.b16 %v476
        %v809 = vunpack.c.h.b16 %v476
        %v810 = vunpack.c.l.b16 %v477
        %v811 = vunpack.c.h.b16 %v477
        %v812 = vunpack.c.l.b16 %v478
        %v813 = vunpack.c.h.b16 %v478
        %v814 = vunpack.c.l.b16 %v479
        %v815 = vunpack.c.h.b16 %v479
        %v816 = vunpack.c.l.b16 %v480
        %v817 = vunpack.c.h.b16 %v480
        %v818 = vunpack.c.l.b16 %v481
        %v819 = vunpack.c.h.b16 %v481
        %v820 = vunpack.c.l.b16 %v482
        %v821 = vunpack.c.h.b16 %v482
        %v822 = vunpack.c.l.b16 %v483
        %v823 = vunpack.c.h.b16 %v483
        %v824 = vunpack.c.l.b16 %v484
        %v825 = vunpack.c.h.b16 %v484
        %v826 = vunpack.c.l.b16 %v485
        %v827 = vunpack.c.h.b16 %v485
        %v828 = vunpack.c.l.b16 %v486
        %v829 = vunpack.c.h.b16 %v486
        %v830 = vunpack.c.l.b16 %v487
        %v831 = vunpack.c.h.b16 %v487
        %v832 = vunpack.c.l.b16 %v488
        %v833 = vunpack.c.h.b16 %v488
        %v834 = vunpack.c.l.b16 %v489
        %v835 = vunpack.c.h.b16 %v489
        %v836 = vunpack.c.l.b16 %v490
        %v837 = vunpack.c.h.b16 %v490
        %v838 = vunpack.c.l.b16 %v491
        %v839 = vunpack.c.h.b16 %v491
        %v840 = vunpack.c.l.b16 %v492
        %v841 = vunpack.c.h.b16 %v492
        %v842 = vunpack.c.l.b16 %v493
        %v843 = vunpack.c.h.b16 %v493
        %v844 = vunpack.c.l.b16 %v494
        %v845 = vunpack.c.h.b16 %v494
        %v846 = vunpack.c.l.b16 %v495
        %v847 = vunpack.c.h.b16 %v495
        %v848 = vunpack.c.l.b16 %v496
        %v849 = vunpack.c.h.b16 %v496
        %v850 = vunpack.c.l.b16 %v497
        %v851 = vunpack.c.h.b16 %v497
        %v852 = vunpack.c.l.b16 %v498
        %v853 = vunpack.c.h.b16 %v498
        %v854 = vunpack.c.l.b16 %v499
        %v855 = vunpack.c.h.b16 %v499
        %v856 = vunpack.c.l.b16 %v500
        %v857 = vunpack.c.h.b16 %v500
        %v858 = vunpack.c.l.b16 %v501
        %v859 = vunpack.c.h.b16 %v501
        %v860 = vunpack.c.l.b16 %v502
        %v861 = vunpack.c.h.b16 %v502
        %v862 = vunpack.c.l.b16 %v503
        %v863 = vunpack.c.h.b16 %v503
        %v864 = vunpack.c.l.b16 %v504
        %v865 = vunpack.c.h.b16 %v504
        %v866 = vunpack.c.l.b16 %v505
        %v867 = vunpack.c.h.b16 %v505
        %v868 = vunpack.c.l.b16 %v506
        %v869 = vunpack.c.h.b16 %v506
        %v870 = vunpack.c.l.b16 %v507
        %v871 = vunpack.c.h.b16 %v507
        %v872 = vunpack.c.l.b16 %v508
        %v873 = vunpack.c.h.b16 %v508
        %v874 = vunpack.c.l.b16 %v509
        %v875 = vunpack.c.h.b16 %v509
        %v876 = vunpack.c.l.b16 %v510
        %v877 = vunpack.c.h.b16 %v510
        %v878 = vunpack.c.l.b16 %v511
        %v879 = vunpack.c.h.b16 %v511
        %v880 = vunpack.c.l.b16 %v512
        %v881 = vunpack.c.h.b16 %v512
        %v882 = vunpack.c.l.b16 %v513
        %v883 = vunpack.c.h.b16 %v513
        %v884 = vunpack.c.l.b16 %v514
        %v885 = vunpack.c.h.b16 %v514
        %v886 = vunpack.c.l.b16 %v515
        %v887 = vunpack.c.h.b16 %v515
        %v888 = vunpack.c.l.b16 %v516
        %v889 = vunpack.c.h.b16 %v516
        %v890 = vunpack.c.l.b16 %v517
        %v891 = vunpack.c.h.b16 %v517
        %v892 = vunpack.c.l.b16 %v518
        %v893 = vunpack.c.h.b16 %v518
        %v894 = vunpack.c.l.b16 %v519
        %v895 = vunpack.c.h.b16 %v519
        %v896 = vunpack.c.l.b16 %v520
        %v897 = vunpack.c.h.b16 %v520
        %v898 = vunpack.c.l.b16 %v521
        %v899 = vunpack.c.h.b16 %v521
        %v900 = vunpack.c.l.b16 %v522
        %v901 = vunpack.c.h.b16 %v522
        %v902 = vunpack.c.l.b16 %v523
        %v903 = vunpack.c.h.b16 %v523
        %v904 = vunpack.c.l.b16 %v524
        %v905 = vunpack.c.h.b16 %v524
        %v906 = vunpack.c.l.b16 %v525
        %v907 = vunpack.c.h.b16 %v525
        %v908 = vunpack.c.l.b16 %v526
        %v909 = vunpack.c.h.b16 %v526
        %v910 = vunpack.c.l.b16 %v527
        %v911 = vunpack.c.h.b16 %v527
        %v912 = vpack.c.b16 %v792, %v784
        %v913 = vpack.c.b16 %v793, %v785
        %v914 = vpack.c.b16 %v794, %v786
        %v915 = vpack.c.b16 %v795, %v787
        %v916 = vpack.c.b16 %v796, %v788
        %v917 = vpack.c.b16 %v797, %v789
        %v918 = vpack.c.b16 %v798, %v790
        %v919 = vpack.c.b16 %v799, %v791
        %v920 = vpack.c.b16 %v808, %v800
        %v921 = vpack.c.b16 %v809, %v801
        %v922 = vpack.c.b16 %v810, %v802
        %v923 = vpack.c.b16 %v811, %v803
        %v924 = vpack.c.b16 %v812, %v804
        %v925 = vpack.c.b16 %v813, %v805
        %v926 = vpack.c.b16 %v814, %v806
        %v927 = vpack.c.b16 %v815, %v807
        %v928 = vpack.c.b16 %v824, %v816
        %v929 = vpack.c.b16 %v825, %v817
        %v930 = vpack.c.b16 %v826, %v818
        %v931 = vpack.c.b16 %v827, %v819
        %v932 = vpack.c.b16 %v828, %v820
        %v933 = vpack.c.b16 %v829, %v821
        %v934 = vpack.c.b16 %v830, %v822
        %v935 = vpack.c.b16 %v831, %v823
        %v936 = vpack.c.b16 %v840, %v832
        %v937 = vpack.c.b16 %v841, %v833
        %v938 = vpack.c.b16 %v842, %v834
        %v939 = vpack.c.b16 %v843, %v835
        %v940 = vpack.c.b16 %v844, %v836
        %v941 = vpack.c.b16 %v845, %v837
        %v942 = vpack.c.b16 %v846, %v838
        %v943 = vpack.c.b16 %v847, %v839
        %v944 = vpack.c.b16 %v856, %v848
        %v945 = vpack.c.b16 %v857, %v849
        %v946 = vpack.c.b16 %v858, %v850
        %v947 = vpack.c.b16 %v859, %v851
        %v948 = vpack.c.b16 %v860, %v852
        %v949 = vpack.c.b16 %v861, %v853
        %v950 = vpack.c.b16 %v862, %v854
        %v951 = vpack.c.b16 %v863, %v855
        %v952 = vpack.c.b16 %v872, %v864
        %v953 = vpack.c.b16 %v873, %v865
        %v954 = vpack.c.b16 %v874, %v866
        %v955 = vpack.c.b16 %v875, %v867
        %v956 = vpack.c.b16 %v876, %v868
        %v957 = vpack.c.b16 %v877, %v869
        %v958 = vpack.c.b16 %v878, %v870
        %v959 = vpack.c.b16 %v879, %v871
        %v960 = vpack.c.b16 %v888, %v880
        %v961 = vpack.c.b16 %v889, %v881
        %v962 = vpack.c.b16 %v890, %v882
        %v963 = vpack.c.b16 %v891, %v883
        %v964 = vpack.c.b16 %v892, %v884
        %v965 = vpack.c.b16 %v893, %v885
        %v966 = vpack.c.b16 %v894, %v886
        %v967 = vpack.c.b16 %v895, %v887
        %v968 = vpack.c.b16 %v904, %v896
        %v969 = vpack.c.b16 %v905, %v897
        %v970 = vpack.c.b16 %v906, %v898
        %v971 = vpack.c.b16 %v907, %v899
        %v972 = vpack.c.b16 %v908, %v900
        %v973 = vpack.c.b16 %v909, %v901
        %v974 = vpack.c.b16 %v910, %v902
        %v975 = vpack.c.b16 %v911, %v903
        %1040 = vmatprep.subr.bf16.mxu0 %v913
        %1041 = vmatpush1.bf16.msra.mxu0 %v912
        %1042 = vmatprep.subr.bf16.mxu0 %v921
        %1043 = vmatpush1.bf16.msra.mxu0 %v920
        %1044 = vmatprep.subr.bf16.mxu0 %v929
        %1045 = vmatpush1.bf16.msra.mxu0 %v928
        %1046 = vmatprep.subr.bf16.mxu0 %v937
        %1047 = vmatpush1.bf16.msra.mxu0 %v936
        %1048 = vmatprep.subr.bf16.mxu0 %v945
        %1049 = vmatpush1.bf16.msra.mxu0 %v944
        %1050 = vmatprep.subr.bf16.mxu0 %v953
        %1051 = vmatpush1.bf16.msra.mxu0 %v952
        %1052 = vmatprep.subr.bf16.mxu0 %v961
        %1053 = vmatpush1.bf16.msra.mxu0 %v960
        %1054 = vmatprep.subr.bf16.mxu0 %v969
        %1055 = vmatpush1.bf16.msra.mxu0 %v968
        %1056 = vmatprep.subr.bf16.mxu0 0
        %1057 = vmatpush1.bf16.msra.mxu0 0
        %1058 = vmatprep.subr.bf16.mxu0 0
        %1059 = vmatpush1.bf16.msra.mxu0 0
        %1060 = vmatprep.subr.bf16.mxu0 0
        %1061 = vmatpush1.bf16.msra.mxu0 0
        %1062 = vmatprep.subr.bf16.mxu0 0
        %1063 = vmatpush1.bf16.msra.mxu0 0
        %1064 = vmatprep.subr.bf16.mxu0 0
        %1065 = vmatpush1.bf16.msra.mxu0 0
        %1066 = vmatprep.subr.bf16.mxu0 0
        %1067 = vmatpush1.bf16.msra.mxu0 0
        %1068 = vmatprep.subr.bf16.mxu0 0
        %1069 = vmatpush1.bf16.msra.mxu0 0
        %1070 = vmatprep.subr.bf16.mxu0 0
        %1071 = vmatpush1.bf16.msra.mxu0 0
        %1072 = vmatprep.mubr.bf16.mxu0 0
        %1073 = vmatmul.mubr.bf16.gmra.mrb[0].mxu0 %v656
        %v1074 = vpop.f32.mrb[0].mxu0
        %v1075 = vadd.f32 0.0, %v1074
        %v1076 = vpop.f32.mrb[0].mxu0
        %v1077 = vadd.f32 0.0, %v1076
        %v1078 = vpop.f32.mrb[0].mxu0
        %v1079 = vadd.f32 0.0, %v1078
        %v1080 = vpop.f32.mrb[0].mxu0
        %v1081 = vadd.f32 0.0, %v1080
        %1082 = vmatprep.mubr.bf16.mxu0 0
        %1083 = vmatmul.mubr.bf16.gmra.mrb[0].mxu0 %v657
        %v1084 = vpop.f32.mrb[0].mxu0
        %v1085 = vadd.f32 0.0, %v1084
        %v1086 = vpop.f32.mrb[0].mxu0
        %v1087 = vadd.f32 0.0, %v1086
        %v1088 = vpop.f32.mrb[0].mxu0
        %v1089 = vadd.f32 0.0, %v1088
        %v1090 = vpop.f32.mrb[0].mxu0
        %v1091 = vadd.f32 0.0, %v1090
        %1092 = vmatprep.mubr.bf16.mxu0 0
        %1093 = vmatmul.mubr.bf16.gmra.mrb[0].mxu0 %v658
        %v1094 = vpop.f32.mrb[0].mxu0
        %v1095 = vadd.f32 0.0, %v1094
        %v1096 = vpop.f32.mrb[0].mxu0
        %v1097 = vadd.f32 0.0, %v1096
        %v1098 = vpop.f32.mrb[0].mxu0
        %v1099 = vadd.f32 0.0, %v1098
        %v1100 = vpop.f32.mrb[0].mxu0
        %v1101 = vadd.f32 0.0, %v1100
        %1102 = vmatprep.mubr.bf16.mxu0 0
        %1103 = vmatmul.mubr.bf16.gmra.mrb[0].mxu0 %v659
        %v1104 = vpop.f32.mrb[0].mxu0
        %v1105 = vadd.f32 0.0, %v1104
        %v1106 = vpop.f32.mrb[0].mxu0
        %v1107 = vadd.f32 0.0, %v1106
        %v1108 = vpop.f32.mrb[0].mxu0
        %v1109 = vadd.f32 0.0, %v1108
        %v1110 = vpop.f32.mrb[0].mxu0
        %v1111 = vadd.f32 0.0, %v1110
        %1112 = vmatprep.mubr.bf16.mxu0 0
        %1113 = vmatmul.mubr.bf16.gmra.mrb[0].mxu0 %v660
        %v1114 = vpop.f32.mrb[0].mxu0
        %v1115 = vadd.f32 0.0, %v1114
        %v1116 = vpop.f32.mrb[0].mxu0
        %v1117 = vadd.f32 0.0, %v1116
        %v1118 = vpop.f32.mrb[0].mxu0
        %v1119 = vadd.f32 0.0, %v1118
        %v1120 = vpop.f32.mrb[0].mxu0
        %v1121 = vadd.f32 0.0, %v1120
        %1122 = vmatprep.mubr.bf16.mxu0 0
        %1123 = vmatmul.mubr.bf16.gmra.mrb[0].mxu0 %v661
        %v1124 = vpop.f32.mrb[0].mxu0
        %v1125 = vadd.f32 0.0, %v1124
        %v1126 = vpop.f32.mrb[0].mxu0
        %v1127 = vadd.f32 0.0, %v1126
        %v1128 = vpop.f32.mrb[0].mxu0
        %v1129 = vadd.f32 0.0, %v1128
        %v1130 = vpop.f32.mrb[0].mxu0
        %v1131 = vadd.f32 0.0, %v1130
        %1132 = vmatprep.mubr.bf16.mxu0 0
        %1133 = vmatmul.mubr.bf16.gmra.mrb[0].mxu0 %v662
        %v1134 = vpop.f32.mrb[0].mxu0
        %v1135 = vadd.f32 0.0, %v1134
        %v1136 = vpop.f32.mrb[0].mxu0
        %v1137 = vadd.f32 0.0, %v1136
        %v1138 = vpop.f32.mrb[0].mxu0
        %v1139 = vadd.f32 0.0, %v1138
        %v1140 = vpop.f32.mrb[0].mxu0
        %v1141 = vadd.f32 0.0, %v1140
        %1142 = vmatprep.mubr.bf16.mxu0 0
        %1143 = vmatmul.mubr.bf16.gmra.mrb[0].mxu0 %v663
        %v1144 = vpop.f32.mrb[0].mxu0
        %v1145 = vadd.f32 0.0, %v1144
        %v1146 = vpop.f32.mrb[0].mxu0
        %v1147 = vadd.f32 0.0, %v1146
        %v1148 = vpop.f32.mrb[0].mxu0
        %v1149 = vadd.f32 0.0, %v1148
        %v1150 = vpop.f32.mrb[0].mxu0
        %v1151 = vadd.f32 0.0, %v1150
        %1152 = vmatprep.mubr.bf16.mxu0 0
        %1153 = vmatmul.mubr.bf16.gmra.mrb[0].mxu0 %v664
        %v1154 = vpop.f32.mrb[0].mxu0
        %v1155 = vadd.f32 0.0, %v1154
        %v1156 = vpop.f32.mrb[0].mxu0
        %v1157 = vadd.f32 0.0, %v1156
        %v1158 = vpop.f32.mrb[0].mxu0
        %v1159 = vadd.f32 0.0, %v1158
        %v1160 = vpop.f32.mrb[0].mxu0
        %v1161 = vadd.f32 0.0, %v1160
        %1162 = vmatprep.mubr.bf16.mxu0 0
        %1163 = vmatmul.mubr.bf16.gmra.mrb[0].mxu0 %v665
        %v1164 = vpop.f32.mrb[0].mxu0
        %v1165 = vadd.f32 0.0, %v1164
        %v1166 = vpop.f32.mrb[0].mxu0
        %v1167 = vadd.f32 0.0, %v1166
        %v1168 = vpop.f32.mrb[0].mxu0
        %v1169 = vadd.f32 0.0, %v1168
        %v1170 = vpop.f32.mrb[0].mxu0
        %v1171 = vadd.f32 0.0, %v1170
        %1172 = vmatprep.mubr.bf16.mxu0 0
        %1173 = vmatmul.mubr.bf16.gmra.mrb[0].mxu0 %v666
        %v1174 = vpop.f32.mrb[0].mxu0
        %v1175 = vadd.f32 0.0, %v1174
        %v1176 = vpop.f32.mrb[0].mxu0
        %v1177 = vadd.f32 0.0, %v1176
        %v1178 = vpop.f32.mrb[0].mxu0
        %v1179 = vadd.f32 0.0, %v1178
        %v1180 = vpop.f32.mrb[0].mxu0
        %v1181 = vadd.f32 0.0, %v1180
        %1182 = vmatprep.mubr.bf16.mxu0 0
        %1183 = vmatmul.mubr.bf16.gmra.mrb[0].mxu0 %v667
        %v1184 = vpop.f32.mrb[0].mxu0
        %v1185 = vadd.f32 0.0, %v1184
        %v1186 = vpop.f32.mrb[0].mxu0
        %v1187 = vadd.f32 0.0, %v1186
        %v1188 = vpop.f32.mrb[0].mxu0
        %v1189 = vadd.f32 0.0, %v1188
        %v1190 = vpop.f32.mrb[0].mxu0
        %v1191 = vadd.f32 0.0, %v1190
        %1192 = vmatprep.mubr.bf16.mxu0 0
        %1193 = vmatmul.mubr.bf16.gmra.mrb[0].mxu0 %v668
        %v1194 = vpop.f32.mrb[0].mxu0
        %v1195 = vadd.f32 0.0, %v1194
        %v1196 = vpop.f32.mrb[0].mxu0
        %v1197 = vadd.f32 0.0, %v1196
        %v1198 = vpop.f32.mrb[0].mxu0
        %v1199 = vadd.f32 0.0, %v1198
        %v1200 = vpop.f32.mrb[0].mxu0
        %v1201 = vadd.f32 0.0, %v1200
        %1202 = vmatprep.mubr.bf16.mxu0 0
        %1203 = vmatmul.mubr.bf16.gmra.mrb[0].mxu0 %v669
        %v1204 = vpop.f32.mrb[0].mxu0
        %v1205 = vadd.f32 0.0, %v1204
        %v1206 = vpop.f32.mrb[0].mxu0
        %v1207 = vadd.f32 0.0, %v1206
        %v1208 = vpop.f32.mrb[0].mxu0
        %v1209 = vadd.f32 0.0, %v1208
        %v1210 = vpop.f32.mrb[0].mxu0
        %v1211 = vadd.f32 0.0, %v1210
        %1212 = vmatprep.mubr.bf16.mxu0 0
        %1213 = vmatmul.mubr.bf16.gmra.mrb[0].mxu0 %v670
        %v1214 = vpop.f32.mrb[0].mxu0
        %v1215 = vadd.f32 0.0, %v1214
        %v1216 = vpop.f32.mrb[0].mxu0
        %v1217 = vadd.f32 0.0, %v1216
        %v1218 = vpop.f32.mrb[0].mxu0
        %v1219 = vadd.f32 0.0, %v1218
        %v1220 = vpop.f32.mrb[0].mxu0
        %v1221 = vadd.f32 0.0, %v1220
        %1222 = vmatprep.mubr.bf16.mxu0 0
        %1223 = vmatmul.mubr.bf16.gmra.mrb[0].mxu0 %v671
        %v1224 = vpop.f32.mrb[0].mxu0
        %v1225 = vadd.f32 0.0, %v1224
        %v1226 = vpop.f32.mrb[0].mxu0
        %v1227 = vadd.f32 0.0, %v1226
        %v1228 = vpop.f32.mrb[0].mxu0
        %v1229 = vadd.f32 0.0, %v1228
        %v1230 = vpop.f32.mrb[0].mxu0
        %v1231 = vadd.f32 0.0, %v1230
        %1232 = vmatprep.mubr.bf16.mxu0 0
        %1233 = vmatmul.mubr.bf16.gmra.mrb[0].mxu0 %v672
        %v1234 = vpop.f32.mrb[0].mxu0
        %v1235 = vadd.f32 0.0, %v1234
        %v1236 = vpop.f32.mrb[0].mxu0
        %v1237 = vadd.f32 0.0, %v1236
        %v1238 = vpop.f32.mrb[0].mxu0
        %v1239 = vadd.f32 0.0, %v1238
        %v1240 = vpop.f32.mrb[0].mxu0
        %v1241 = vadd.f32 0.0, %v1240
        %1242 = vmatprep.mubr.bf16.mxu0 0
        %1243 = vmatmul.mubr.bf16.gmra.mrb[0].mxu0 %v673
        %v1244 = vpop.f32.mrb[0].mxu0
        %v1245 = vadd.f32 0.0, %v1244
        %v1246 = vpop.f32.mrb[0].mxu0
        %v1247 = vadd.f32 0.0, %v1246
        %v1248 = vpop.f32.mrb[0].mxu0
        %v1249 = vadd.f32 0.0, %v1248
        %v1250 = vpop.f32.mrb[0].mxu0
        %v1251 = vadd.f32 0.0, %v1250
        %1252 = vmatprep.mubr.bf16.mxu0 0
        %1253 = vmatmul.mubr.bf16.gmra.mrb[0].mxu0 %v674
        %v1254 = vpop.f32.mrb[0].mxu0
        %v1255 = vadd.f32 0.0, %v1254
        %v1256 = vpop.f32.mrb[0].mxu0
        %v1257 = vadd.f32 0.0, %v1256
        %v1258 = vpop.f32.mrb[0].mxu0
        %v1259 = vadd.f32 0.0, %v1258
        %v1260 = vpop.f32.mrb[0].mxu0
        %v1261 = vadd.f32 0.0, %v1260
        %1262 = vmatprep.mubr.bf16.mxu0 0
        %1263 = vmatmul.mubr.bf16.gmra.mrb[0].mxu0 %v675
        %v1264 = vpop.f32.mrb[0].mxu0
        %v1265 = vadd.f32 0.0, %v1264
        %v1266 = vpop.f32.mrb[0].mxu0
        %v1267 = vadd.f32 0.0, %v1266
        %v1268 = vpop.f32.mrb[0].mxu0
        %v1269 = vadd.f32 0.0, %v1268
        %v1270 = vpop.f32.mrb[0].mxu0
        %v1271 = vadd.f32 0.0, %v1270
        %1272 = vmatprep.mubr.bf16.mxu0 0
        %1273 = vmatmul.mubr.bf16.gmra.mrb[0].mxu0 %v676
        %v1274 = vpop.f32.mrb[0].mxu0
        %v1275 = vadd.f32 0.0, %v1274
        %v1276 = vpop.f32.mrb[0].mxu0
        %v1277 = vadd.f32 0.0, %v1276
        %v1278 = vpop.f32.mrb[0].mxu0
        %v1279 = vadd.f32 0.0, %v1278
        %v1280 = vpop.f32.mrb[0].mxu0
        %v1281 = vadd.f32 0.0, %v1280
        %1282 = vmatprep.mubr.bf16.mxu0 0
        %1283 = vmatmul.mubr.bf16.gmra.mrb[0].mxu0 %v677
        %v1284 = vpop.f32.mrb[0].mxu0
        %v1285 = vadd.f32 0.0, %v1284
        %v1286 = vpop.f32.mrb[0].mxu0
        %v1287 = vadd.f32 0.0, %v1286
        %v1288 = vpop.f32.mrb[0].mxu0
        %v1289 = vadd.f32 0.0, %v1288
        %v1290 = vpop.f32.mrb[0].mxu0
        %v1291 = vadd.f32 0.0, %v1290
        %1292 = vmatprep.mubr.bf16.mxu0 0
        %1293 = vmatmul.mubr.bf16.gmra.mrb[0].mxu0 %v678
        %v1294 = vpop.f32.mrb[0].mxu0
        %v1295 = vadd.f32 0.0, %v1294
        %v1296 = vpop.f32.mrb[0].mxu0
        %v1297 = vadd.f32 0.0, %v1296
        %v1298 = vpop.f32.mrb[0].mxu0
        %v1299 = vadd.f32 0.0, %v1298
        %v1300 = vpop.f32.mrb[0].mxu0
        %v1301 = vadd.f32 0.0, %v1300
        %1302 = vmatprep.mubr.bf16.mxu0 0
        %1303 = vmatmul.mubr.bf16.gmra.mrb[0].mxu0 %v679
        %v1304 = vpop.f32.mrb[0].mxu0
        %v1305 = vadd.f32 0.0, %v1304
        %v1306 = vpop.f32.mrb[0].mxu0
        %v1307 = vadd.f32 0.0, %v1306
        %v1308 = vpop.f32.mrb[0].mxu0
        %v1309 = vadd.f32 0.0, %v1308
        %v1310 = vpop.f32.mrb[0].mxu0
        %v1311 = vadd.f32 0.0, %v1310
        %1312 = vmatprep.mubr.bf16.mxu0 0
        %1313 = vmatmul.mubr.bf16.gmra.mrb[0].mxu0 %v680
        %v1314 = vpop.f32.mrb[0].mxu0
        %v1315 = vadd.f32 0.0, %v1314
        %v1316 = vpop.f32.mrb[0].mxu0
        %v1317 = vadd.f32 0.0, %v1316
        %v1318 = vpop.f32.mrb[0].mxu0
        %v1319 = vadd.f32 0.0, %v1318
        %v1320 = vpop.f32.mrb[0].mxu0
        %v1321 = vadd.f32 0.0, %v1320
        %1322 = vmatprep.mubr.bf16.mxu0 0
        %1323 = vmatmul.mubr.bf16.gmra.mrb[0].mxu0 %v681
        %v1324 = vpop.f32.mrb[0].mxu0
        %v1325 = vadd.f32 0.0, %v1324
        %v1326 = vpop.f32.mrb[0].mxu0
        %v1327 = vadd.f32 0.0, %v1326
        %v1328 = vpop.f32.mrb[0].mxu0
        %v1329 = vadd.f32 0.0, %v1328
        %v1330 = vpop.f32.mrb[0].mxu0
        %v1331 = vadd.f32 0.0, %v1330
        %1332 = vmatprep.mubr.bf16.mxu0 0
        %1333 = vmatmul.mubr.bf16.gmra.mrb[0].mxu0 %v682
        %v1334 = vpop.f32.mrb[0].mxu0
        %v1335 = vadd.f32 0.0, %v1334
        %v1336 = vpop.f32.mrb[0].mxu0
        %v1337 = vadd.f32 0.0, %v1336
        %v1338 = vpop.f32.mrb[0].mxu0
        %v1339 = vadd.f32 0.0, %v1338
        %v1340 = vpop.f32.mrb[0].mxu0
        %v1341 = vadd.f32 0.0, %v1340
        %1342 = vmatprep.mubr.bf16.mxu0 0
        %1343 = vmatmul.mubr.bf16.gmra.mrb[0].mxu0 %v683
        %v1344 = vpop.f32.mrb[0].mxu0
        %v1345 = vadd.f32 0.0, %v1344
        %v1346 = vpop.f32.mrb[0].mxu0
        %v1347 = vadd.f32 0.0, %v1346
        %v1348 = vpop.f32.mrb[0].mxu0
        %v1349 = vadd.f32 0.0, %v1348
        %v1350 = vpop.f32.mrb[0].mxu0
        %v1351 = vadd.f32 0.0, %v1350
        %1352 = vmatprep.mubr.bf16.mxu0 0
        %1353 = vmatmul.mubr.bf16.gmra.mrb[0].mxu0 %v684
        %v1354 = vpop.f32.mrb[0].mxu0
        %v1355 = vadd.f32 0.0, %v1354
        %v1356 = vpop.f32.mrb[0].mxu0
        %v1357 = vadd.f32 0.0, %v1356
        %v1358 = vpop.f32.mrb[0].mxu0
        %v1359 = vadd.f32 0.0, %v1358
        %v1360 = vpop.f32.mrb[0].mxu0
        %v1361 = vadd.f32 0.0, %v1360
        %1362 = vmatprep.mubr.bf16.mxu0 0
        %1363 = vmatmul.mubr.bf16.gmra.mrb[0].mxu0 %v685
        %v1364 = vpop.f32.mrb[0].mxu0
        %v1365 = vadd.f32 0.0, %v1364
        %v1366 = vpop.f32.mrb[0].mxu0
        %v1367 = vadd.f32 0.0, %v1366
        %v1368 = vpop.f32.mrb[0].mxu0
        %v1369 = vadd.f32 0.0, %v1368
        %v1370 = vpop.f32.mrb[0].mxu0
        %v1371 = vadd.f32 0.0, %v1370
        %1372 = vmatprep.mubr.bf16.mxu0 0
        %1373 = vmatmul.mubr.bf16.gmra.mrb[0].mxu0 %v686
        %v1374 = vpop.f32.mrb[0].mxu0
        %v1375 = vadd.f32 0.0, %v1374
        %v1376 = vpop.f32.mrb[0].mxu0
        %v1377 = vadd.f32 0.0, %v1376
        %v1378 = vpop.f32.mrb[0].mxu0
        %v1379 = vadd.f32 0.0, %v1378
        %v1380 = vpop.f32.mrb[0].mxu0
        %v1381 = vadd.f32 0.0, %v1380
        %1382 = vmatprep.mubr.bf16.mxu0 0
        %1383 = vmatmul.mubr.bf16.gmra.mrb[0].mxu0 %v687
        %v1384 = vpop.f32.mrb[0].mxu0
        %v1385 = vadd.f32 0.0, %v1384
        %v1386 = vpop.f32.mrb[0].mxu0
        %v1387 = vadd.f32 0.0, %v1386
        %v1388 = vpop.f32.mrb[0].mxu0
        %v1389 = vadd.f32 0.0, %v1388
        %v1390 = vpop.f32.mrb[0].mxu0
        %v1391 = vadd.f32 0.0, %v1390
        %1392 = vdwg.mxu0
        %1393 = vmatprep.subr.bf16.mxu0 %v915
        %1394 = vmatpush1.bf16.msra.mxu0 %v914
        %1395 = vmatprep.subr.bf16.mxu0 %v923
        %1396 = vmatpush1.bf16.msra.mxu0 %v922
        %1397 = vmatprep.subr.bf16.mxu0 %v931
        %1398 = vmatpush1.bf16.msra.mxu0 %v930
        %1399 = vmatprep.subr.bf16.mxu0 %v939
        %1400 = vmatpush1.bf16.msra.mxu0 %v938
        %1401 = vmatprep.subr.bf16.mxu0 %v947
        %1402 = vmatpush1.bf16.msra.mxu0 %v946
        %1403 = vmatprep.subr.bf16.mxu0 %v955
        %1404 = vmatpush1.bf16.msra.mxu0 %v954
        %1405 = vmatprep.subr.bf16.mxu0 %v963
        %1406 = vmatpush1.bf16.msra.mxu0 %v962
        %1407 = vmatprep.subr.bf16.mxu0 %v971
        %1408 = vmatpush1.bf16.msra.mxu0 %v970
        %1409 = vmatprep.subr.bf16.mxu0 0
        %1410 = vmatpush1.bf16.msra.mxu0 0
        %1411 = vmatprep.subr.bf16.mxu0 0
        %1412 = vmatpush1.bf16.msra.mxu0 0
        %1413 = vmatprep.subr.bf16.mxu0 0
        %1414 = vmatpush1.bf16.msra.mxu0 0
        %1415 = vmatprep.subr.bf16.mxu0 0
        %1416 = vmatpush1.bf16.msra.mxu0 0
        %1417 = vmatprep.subr.bf16.mxu0 0
        %1418 = vmatpush1.bf16.msra.mxu0 0
        %1419 = vmatprep.subr.bf16.mxu0 0
        %1420 = vmatpush1.bf16.msra.mxu0 0
        %1421 = vmatprep.subr.bf16.mxu0 0
        %1422 = vmatpush1.bf16.msra.mxu0 0
        %1423 = vmatprep.subr.bf16.mxu0 0
        %1424 = vmatpush1.bf16.msra.mxu0 0
        %1425 = vmatprep.mubr.bf16.mxu0 0
        %1426 = vmatmul.mubr.bf16.gmra.mrb[0].mxu0 %v656
        %v1427 = vpop.f32.mrb[0].mxu0
        %v1428 = vadd.f32 0.0, %v1427
        %v1429 = vpop.f32.mrb[0].mxu0
        %v1430 = vadd.f32 0.0, %v1429
        %v1431 = vpop.f32.mrb[0].mxu0
        %v1432 = vadd.f32 0.0, %v1431
        %v1433 = vpop.f32.mrb[0].mxu0
        %v1434 = vadd.f32 0.0, %v1433
        %1435 = vmatprep.mubr.bf16.mxu0 0
        %1436 = vmatmul.mubr.bf16.gmra.mrb[0].mxu0 %v657
        %v1437 = vpop.f32.mrb[0].mxu0
        %v1438 = vadd.f32 0.0, %v1437
        %v1439 = vpop.f32.mrb[0].mxu0
        %v1440 = vadd.f32 0.0, %v1439
        %v1441 = vpop.f32.mrb[0].mxu0
        %v1442 = vadd.f32 0.0, %v1441
        %v1443 = vpop.f32.mrb[0].mxu0
        %v1444 = vadd.f32 0.0, %v1443
        %1445 = vmatprep.mubr.bf16.mxu0 0
        %1446 = vmatmul.mubr.bf16.gmra.mrb[0].mxu0 %v658
        %v1447 = vpop.f32.mrb[0].mxu0
        %v1448 = vadd.f32 0.0, %v1447
        %v1449 = vpop.f32.mrb[0].mxu0
        %v1450 = vadd.f32 0.0, %v1449
        %v1451 = vpop.f32.mrb[0].mxu0
        %v1452 = vadd.f32 0.0, %v1451
        %v1453 = vpop.f32.mrb[0].mxu0
        %v1454 = vadd.f32 0.0, %v1453
        %1455 = vmatprep.mubr.bf16.mxu0 0
        %1456 = vmatmul.mubr.bf16.gmra.mrb[0].mxu0 %v659
        %v1457 = vpop.f32.mrb[0].mxu0
        %v1458 = vadd.f32 0.0, %v1457
        %v1459 = vpop.f32.mrb[0].mxu0
        %v1460 = vadd.f32 0.0, %v1459
        %v1461 = vpop.f32.mrb[0].mxu0
        %v1462 = vadd.f32 0.0, %v1461
        %v1463 = vpop.f32.mrb[0].mxu0
        %v1464 = vadd.f32 0.0, %v1463
        %1465 = vmatprep.mubr.bf16.mxu0 0
        %1466 = vmatmul.mubr.bf16.gmra.mrb[0].mxu0 %v660
        %v1467 = vpop.f32.mrb[0].mxu0
        %v1468 = vadd.f32 0.0, %v1467
        %v1469 = vpop.f32.mrb[0].mxu0
        %v1470 = vadd.f32 0.0, %v1469
        %v1471 = vpop.f32.mrb[0].mxu0
        %v1472 = vadd.f32 0.0, %v1471
        %v1473 = vpop.f32.mrb[0].mxu0
        %v1474 = vadd.f32 0.0, %v1473
        %1475 = vmatprep.mubr.bf16.mxu0 0
        %1476 = vmatmul.mubr.bf16.gmra.mrb[0].mxu0 %v661
        %v1477 = vpop.f32.mrb[0].mxu0
        %v1478 = vadd.f32 0.0, %v1477
        %v1479 = vpop.f32.mrb[0].mxu0
        %v1480 = vadd.f32 0.0, %v1479
        %v1481 = vpop.f32.mrb[0].mxu0
        %v1482 = vadd.f32 0.0, %v1481
        %v1483 = vpop.f32.mrb[0].mxu0
        %v1484 = vadd.f32 0.0, %v1483
        %1485 = vmatprep.mubr.bf16.mxu0 0
        %1486 = vmatmul.mubr.bf16.gmra.mrb[0].mxu0 %v662
        %v1487 = vpop.f32.mrb[0].mxu0
        %v1488 = vadd.f32 0.0, %v1487
        %v1489 = vpop.f32.mrb[0].mxu0
        %v1490 = vadd.f32 0.0, %v1489
        %v1491 = vpop.f32.mrb[0].mxu0
        %v1492 = vadd.f32 0.0, %v1491
        %v1493 = vpop.f32.mrb[0].mxu0
        %v1494 = vadd.f32 0.0, %v1493
        %1495 = vmatprep.mubr.bf16.mxu0 0
        %1496 = vmatmul.mubr.bf16.gmra.mrb[0].mxu0 %v663
        %v1497 = vpop.f32.mrb[0].mxu0
        %v1498 = vadd.f32 0.0, %v1497
        %v1499 = vpop.f32.mrb[0].mxu0
        %v1500 = vadd.f32 0.0, %v1499
        %v1501 = vpop.f32.mrb[0].mxu0
        %v1502 = vadd.f32 0.0, %v1501
        %v1503 = vpop.f32.mrb[0].mxu0
        %v1504 = vadd.f32 0.0, %v1503
        %1505 = vmatprep.mubr.bf16.mxu0 0
        %1506 = vmatmul.mubr.bf16.gmra.mrb[0].mxu0 %v664
        %v1507 = vpop.f32.mrb[0].mxu0
        %v1508 = vadd.f32 0.0, %v1507
        %v1509 = vpop.f32.mrb[0].mxu0
        %v1510 = vadd.f32 0.0, %v1509
        %v1511 = vpop.f32.mrb[0].mxu0
        %v1512 = vadd.f32 0.0, %v1511
        %v1513 = vpop.f32.mrb[0].mxu0
        %v1514 = vadd.f32 0.0, %v1513
        %1515 = vmatprep.mubr.bf16.mxu0 0
        %1516 = vmatmul.mubr.bf16.gmra.mrb[0].mxu0 %v665
        %v1517 = vpop.f32.mrb[0].mxu0
        %v1518 = vadd.f32 0.0, %v1517
        %v1519 = vpop.f32.mrb[0].mxu0
        %v1520 = vadd.f32 0.0, %v1519
        %v1521 = vpop.f32.mrb[0].mxu0
        %v1522 = vadd.f32 0.0, %v1521
        %v1523 = vpop.f32.mrb[0].mxu0
        %v1524 = vadd.f32 0.0, %v1523
        %1525 = vmatprep.mubr.bf16.mxu0 0
        %1526 = vmatmul.mubr.bf16.gmra.mrb[0].mxu0 %v666
        %v1527 = vpop.f32.mrb[0].mxu0
        %v1528 = vadd.f32 0.0, %v1527
        %v1529 = vpop.f32.mrb[0].mxu0
        %v1530 = vadd.f32 0.0, %v1529
        %v1531 = vpop.f32.mrb[0].mxu0
        %v1532 = vadd.f32 0.0, %v1531
        %v1533 = vpop.f32.mrb[0].mxu0
        %v1534 = vadd.f32 0.0, %v1533
        %1535 = vmatprep.mubr.bf16.mxu0 0
        %1536 = vmatmul.mubr.bf16.gmra.mrb[0].mxu0 %v667
        %v1537 = vpop.f32.mrb[0].mxu0
        %v1538 = vadd.f32 0.0, %v1537
        %v1539 = vpop.f32.mrb[0].mxu0
        %v1540 = vadd.f32 0.0, %v1539
        %v1541 = vpop.f32.mrb[0].mxu0
        %v1542 = vadd.f32 0.0, %v1541
        %v1543 = vpop.f32.mrb[0].mxu0
        %v1544 = vadd.f32 0.0, %v1543
        %1545 = vmatprep.mubr.bf16.mxu0 0
        %1546 = vmatmul.mubr.bf16.gmra.mrb[0].mxu0 %v668
        %v1547 = vpop.f32.mrb[0].mxu0
        %v1548 = vadd.f32 0.0, %v1547
        %v1549 = vpop.f32.mrb[0].mxu0
        %v1550 = vadd.f32 0.0, %v1549
        %v1551 = vpop.f32.mrb[0].mxu0
        %v1552 = vadd.f32 0.0, %v1551
        %v1553 = vpop.f32.mrb[0].mxu0
        %v1554 = vadd.f32 0.0, %v1553
        %1555 = vmatprep.mubr.bf16.mxu0 0
        %1556 = vmatmul.mubr.bf16.gmra.mrb[0].mxu0 %v669
        %v1557 = vpop.f32.mrb[0].mxu0
        %v1558 = vadd.f32 0.0, %v1557
        %v1559 = vpop.f32.mrb[0].mxu0
        %v1560 = vadd.f32 0.0, %v1559
        %v1561 = vpop.f32.mrb[0].mxu0
        %v1562 = vadd.f32 0.0, %v1561
        %v1563 = vpop.f32.mrb[0].mxu0
        %v1564 = vadd.f32 0.0, %v1563
        %1565 = vmatprep.mubr.bf16.mxu0 0
        %1566 = vmatmul.mubr.bf16.gmra.mrb[0].mxu0 %v670
        %v1567 = vpop.f32.mrb[0].mxu0
        %v1568 = vadd.f32 0.0, %v1567
        %v1569 = vpop.f32.mrb[0].mxu0
        %v1570 = vadd.f32 0.0, %v1569
        %v1571 = vpop.f32.mrb[0].mxu0
        %v1572 = vadd.f32 0.0, %v1571
        %v1573 = vpop.f32.mrb[0].mxu0
        %v1574 = vadd.f32 0.0, %v1573
        %1575 = vmatprep.mubr.bf16.mxu0 0
        %1576 = vmatmul.mubr.bf16.gmra.mrb[0].mxu0 %v671
        %v1577 = vpop.f32.mrb[0].mxu0
        %v1578 = vadd.f32 0.0, %v1577
        %v1579 = vpop.f32.mrb[0].mxu0
        %v1580 = vadd.f32 0.0, %v1579
        %v1581 = vpop.f32.mrb[0].mxu0
        %v1582 = vadd.f32 0.0, %v1581
        %v1583 = vpop.f32.mrb[0].mxu0
        %v1584 = vadd.f32 0.0, %v1583
        %1585 = vmatprep.mubr.bf16.mxu0 0
        %1586 = vmatmul.mubr.bf16.gmra.mrb[0].mxu0 %v672
        %v1587 = vpop.f32.mrb[0].mxu0
        %v1588 = vadd.f32 0.0, %v1587
        %v1589 = vpop.f32.mrb[0].mxu0
        %v1590 = vadd.f32 0.0, %v1589
        %v1591 = vpop.f32.mrb[0].mxu0
        %v1592 = vadd.f32 0.0, %v1591
        %v1593 = vpop.f32.mrb[0].mxu0
        %v1594 = vadd.f32 0.0, %v1593
        %1595 = vmatprep.mubr.bf16.mxu0 0
        %1596 = vmatmul.mubr.bf16.gmra.mrb[0].mxu0 %v673
        %v1597 = vpop.f32.mrb[0].mxu0
        %v1598 = vadd.f32 0.0, %v1597
        %v1599 = vpop.f32.mrb[0].mxu0
        %v1600 = vadd.f32 0.0, %v1599
        %v1601 = vpop.f32.mrb[0].mxu0
        %v1602 = vadd.f32 0.0, %v1601
        %v1603 = vpop.f32.mrb[0].mxu0
        %v1604 = vadd.f32 0.0, %v1603
        %1605 = vmatprep.mubr.bf16.mxu0 0
        %1606 = vmatmul.mubr.bf16.gmra.mrb[0].mxu0 %v674
        %v1607 = vpop.f32.mrb[0].mxu0
        %v1608 = vadd.f32 0.0, %v1607
        %v1609 = vpop.f32.mrb[0].mxu0
        %v1610 = vadd.f32 0.0, %v1609
        %v1611 = vpop.f32.mrb[0].mxu0
        %v1612 = vadd.f32 0.0, %v1611
        %v1613 = vpop.f32.mrb[0].mxu0
        %v1614 = vadd.f32 0.0, %v1613
        %1615 = vmatprep.mubr.bf16.mxu0 0
        %1616 = vmatmul.mubr.bf16.gmra.mrb[0].mxu0 %v675
        %v1617 = vpop.f32.mrb[0].mxu0
        %v1618 = vadd.f32 0.0, %v1617
        %v1619 = vpop.f32.mrb[0].mxu0
        %v1620 = vadd.f32 0.0, %v1619
        %v1621 = vpop.f32.mrb[0].mxu0
        %v1622 = vadd.f32 0.0, %v1621
        %v1623 = vpop.f32.mrb[0].mxu0
        %v1624 = vadd.f32 0.0, %v1623
        %1625 = vmatprep.mubr.bf16.mxu0 0
        %1626 = vmatmul.mubr.bf16.gmra.mrb[0].mxu0 %v676
        %v1627 = vpop.f32.mrb[0].mxu0
        %v1628 = vadd.f32 0.0, %v1627
        %v1629 = vpop.f32.mrb[0].mxu0
        %v1630 = vadd.f32 0.0, %v1629
        %v1631 = vpop.f32.mrb[0].mxu0
        %v1632 = vadd.f32 0.0, %v1631
        %v1633 = vpop.f32.mrb[0].mxu0
        %v1634 = vadd.f32 0.0, %v1633
        %1635 = vmatprep.mubr.bf16.mxu0 0
        %1636 = vmatmul.mubr.bf16.gmra.mrb[0].mxu0 %v677
        %v1637 = vpop.f32.mrb[0].mxu0
        %v1638 = vadd.f32 0.0, %v1637
        %v1639 = vpop.f32.mrb[0].mxu0
        %v1640 = vadd.f32 0.0, %v1639
        %v1641 = vpop.f32.mrb[0].mxu0
        %v1642 = vadd.f32 0.0, %v1641
        %v1643 = vpop.f32.mrb[0].mxu0
        %v1644 = vadd.f32 0.0, %v1643
        %1645 = vmatprep.mubr.bf16.mxu0 0
        %1646 = vmatmul.mubr.bf16.gmra.mrb[0].mxu0 %v678
        %v1647 = vpop.f32.mrb[0].mxu0
        %v1648 = vadd.f32 0.0, %v1647
        %v1649 = vpop.f32.mrb[0].mxu0
        %v1650 = vadd.f32 0.0, %v1649
        %v1651 = vpop.f32.mrb[0].mxu0
        %v1652 = vadd.f32 0.0, %v1651
        %v1653 = vpop.f32.mrb[0].mxu0
        %v1654 = vadd.f32 0.0, %v1653
        %1655 = vmatprep.mubr.bf16.mxu0 0
        %1656 = vmatmul.mubr.bf16.gmra.mrb[0].mxu0 %v679
        %v1657 = vpop.f32.mrb[0].mxu0
        %v1658 = vadd.f32 0.0, %v1657
        %v1659 = vpop.f32.mrb[0].mxu0
        %v1660 = vadd.f32 0.0, %v1659
        %v1661 = vpop.f32.mrb[0].mxu0
        %v1662 = vadd.f32 0.0, %v1661
        %v1663 = vpop.f32.mrb[0].mxu0
        %v1664 = vadd.f32 0.0, %v1663
        %1665 = vmatprep.mubr.bf16.mxu0 0
        %1666 = vmatmul.mubr.bf16.gmra.mrb[0].mxu0 %v680
        %v1667 = vpop.f32.mrb[0].mxu0
        %v1668 = vadd.f32 0.0, %v1667
        %v1669 = vpop.f32.mrb[0].mxu0
        %v1670 = vadd.f32 0.0, %v1669
        %v1671 = vpop.f32.mrb[0].mxu0
        %v1672 = vadd.f32 0.0, %v1671
        %v1673 = vpop.f32.mrb[0].mxu0
        %v1674 = vadd.f32 0.0, %v1673
        %1675 = vmatprep.mubr.bf16.mxu0 0
        %1676 = vmatmul.mubr.bf16.gmra.mrb[0].mxu0 %v681
        %v1677 = vpop.f32.mrb[0].mxu0
        %v1678 = vadd.f32 0.0, %v1677
        %v1679 = vpop.f32.mrb[0].mxu0
        %v1680 = vadd.f32 0.0, %v1679
        %v1681 = vpop.f32.mrb[0].mxu0
        %v1682 = vadd.f32 0.0, %v1681
        %v1683 = vpop.f32.mrb[0].mxu0
        %v1684 = vadd.f32 0.0, %v1683
        %1685 = vmatprep.mubr.bf16.mxu0 0
        %1686 = vmatmul.mubr.bf16.gmra.mrb[0].mxu0 %v682
        %v1687 = vpop.f32.mrb[0].mxu0
        %v1688 = vadd.f32 0.0, %v1687
        %v1689 = vpop.f32.mrb[0].mxu0
        %v1690 = vadd.f32 0.0, %v1689
        %v1691 = vpop.f32.mrb[0].mxu0
        %v1692 = vadd.f32 0.0, %v1691
        %v1693 = vpop.f32.mrb[0].mxu0
        %v1694 = vadd.f32 0.0, %v1693
        %1695 = vmatprep.mubr.bf16.mxu0 0
        %1696 = vmatmul.mubr.bf16.gmra.mrb[0].mxu0 %v683
        %v1697 = vpop.f32.mrb[0].mxu0
        %v1698 = vadd.f32 0.0, %v1697
        %v1699 = vpop.f32.mrb[0].mxu0
        %v1700 = vadd.f32 0.0, %v1699
        %v1701 = vpop.f32.mrb[0].mxu0
        %v1702 = vadd.f32 0.0, %v1701
        %v1703 = vpop.f32.mrb[0].mxu0
        %v1704 = vadd.f32 0.0, %v1703
        %1705 = vmatprep.mubr.bf16.mxu0 0
        %1706 = vmatmul.mubr.bf16.gmra.mrb[0].mxu0 %v684
        %v1707 = vpop.f32.mrb[0].mxu0
        %v1708 = vadd.f32 0.0, %v1707
        %v1709 = vpop.f32.mrb[0].mxu0
        %v1710 = vadd.f32 0.0, %v1709
        %v1711 = vpop.f32.mrb[0].mxu0
        %v1712 = vadd.f32 0.0, %v1711
        %v1713 = vpop.f32.mrb[0].mxu0
        %v1714 = vadd.f32 0.0, %v1713
        %1715 = vmatprep.mubr.bf16.mxu0 0
        %1716 = vmatmul.mubr.bf16.gmra.mrb[0].mxu0 %v685
        %v1717 = vpop.f32.mrb[0].mxu0
        %v1718 = vadd.f32 0.0, %v1717
        %v1719 = vpop.f32.mrb[0].mxu0
        %v1720 = vadd.f32 0.0, %v1719
        %v1721 = vpop.f32.mrb[0].mxu0
        %v1722 = vadd.f32 0.0, %v1721
        %v1723 = vpop.f32.mrb[0].mxu0
        %v1724 = vadd.f32 0.0, %v1723
        %1725 = vmatprep.mubr.bf16.mxu0 0
        %1726 = vmatmul.mubr.bf16.gmra.mrb[0].mxu0 %v686
        %v1727 = vpop.f32.mrb[0].mxu0
        %v1728 = vadd.f32 0.0, %v1727
        %v1729 = vpop.f32.mrb[0].mxu0
        %v1730 = vadd.f32 0.0, %v1729
        %v1731 = vpop.f32.mrb[0].mxu0
        %v1732 = vadd.f32 0.0, %v1731
        %v1733 = vpop.f32.mrb[0].mxu0
        %v1734 = vadd.f32 0.0, %v1733
        %1735 = vmatprep.mubr.bf16.mxu0 0
        %1736 = vmatmul.mubr.bf16.gmra.mrb[0].mxu0 %v687
        %v1737 = vpop.f32.mrb[0].mxu0
        %v1738 = vadd.f32 0.0, %v1737
        %v1739 = vpop.f32.mrb[0].mxu0
        %v1740 = vadd.f32 0.0, %v1739
        %v1741 = vpop.f32.mrb[0].mxu0
        %v1742 = vadd.f32 0.0, %v1741
        %v1743 = vpop.f32.mrb[0].mxu0
        %v1744 = vadd.f32 0.0, %v1743
        %1745 = vdwg.mxu0
        %1746 = vmatprep.subr.bf16.mxu0 %v917
        %1747 = vmatpush1.bf16.msra.mxu0 %v916
        %1748 = vmatprep.subr.bf16.mxu0 %v925
        %1749 = vmatpush1.bf16.msra.mxu0 %v924
        %1750 = vmatprep.subr.bf16.mxu0 %v933
        %1751 = vmatpush1.bf16.msra.mxu0 %v932
        %1752 = vmatprep.subr.bf16.mxu0 %v941
        %1753 = vmatpush1.bf16.msra.mxu0 %v940
        %1754 = vmatprep.subr.bf16.mxu0 %v949
        %1755 = vmatpush1.bf16.msra.mxu0 %v948
        %1756 = vmatprep.subr.bf16.mxu0 %v957
        %1757 = vmatpush1.bf16.msra.mxu0 %v956
        %1758 = vmatprep.subr.bf16.mxu0 %v965
        %1759 = vmatpush1.bf16.msra.mxu0 %v964
        %1760 = vmatprep.subr.bf16.mxu0 %v973
        %1761 = vmatpush1.bf16.msra.mxu0 %v972
        %1762 = vmatprep.subr.bf16.mxu0 0
        %1763 = vmatpush1.bf16.msra.mxu0 0
        %1764 = vmatprep.subr.bf16.mxu0 0
        %1765 = vmatpush1.bf16.msra.mxu0 0
        %1766 = vmatprep.subr.bf16.mxu0 0
        %1767 = vmatpush1.bf16.msra.mxu0 0
        %1768 = vmatprep.subr.bf16.mxu0 0
        %1769 = vmatpush1.bf16.msra.mxu0 0
        %1770 = vmatprep.subr.bf16.mxu0 0
        %1771 = vmatpush1.bf16.msra.mxu0 0
        %1772 = vmatprep.subr.bf16.mxu0 0
        %1773 = vmatpush1.bf16.msra.mxu0 0
        %1774 = vmatprep.subr.bf16.mxu0 0
        %1775 = vmatpush1.bf16.msra.mxu0 0
        %1776 = vmatprep.subr.bf16.mxu0 0
        %1777 = vmatpush1.bf16.msra.mxu0 0
        %1778 = vmatprep.mubr.bf16.mxu0 0
        %1779 = vmatmul.mubr.bf16.gmra.mrb[0].mxu0 %v656
        %v1780 = vpop.f32.mrb[0].mxu0
        %v1781 = vadd.f32 0.0, %v1780
        %v1782 = vpop.f32.mrb[0].mxu0
        %v1783 = vadd.f32 0.0, %v1782
        %v1784 = vpop.f32.mrb[0].mxu0
        %v1785 = vadd.f32 0.0, %v1784
        %v1786 = vpop.f32.mrb[0].mxu0
        %v1787 = vadd.f32 0.0, %v1786
        %1788 = vmatprep.mubr.bf16.mxu0 0
        %1789 = vmatmul.mubr.bf16.gmra.mrb[0].mxu0 %v657
        %v1790 = vpop.f32.mrb[0].mxu0
        %v1791 = vadd.f32 0.0, %v1790
        %v1792 = vpop.f32.mrb[0].mxu0
        %v1793 = vadd.f32 0.0, %v1792
        %v1794 = vpop.f32.mrb[0].mxu0
        %v1795 = vadd.f32 0.0, %v1794
        %v1796 = vpop.f32.mrb[0].mxu0
        %v1797 = vadd.f32 0.0, %v1796
        %1798 = vmatprep.mubr.bf16.mxu0 0
        %1799 = vmatmul.mubr.bf16.gmra.mrb[0].mxu0 %v658
        %v1800 = vpop.f32.mrb[0].mxu0
        %v1801 = vadd.f32 0.0, %v1800
        %v1802 = vpop.f32.mrb[0].mxu0
        %v1803 = vadd.f32 0.0, %v1802
        %v1804 = vpop.f32.mrb[0].mxu0
        %v1805 = vadd.f32 0.0, %v1804
        %v1806 = vpop.f32.mrb[0].mxu0
        %v1807 = vadd.f32 0.0, %v1806
        %1808 = vmatprep.mubr.bf16.mxu0 0
        %1809 = vmatmul.mubr.bf16.gmra.mrb[0].mxu0 %v659
        %v1810 = vpop.f32.mrb[0].mxu0
        %v1811 = vadd.f32 0.0, %v1810
        %v1812 = vpop.f32.mrb[0].mxu0
        %v1813 = vadd.f32 0.0, %v1812
        %v1814 = vpop.f32.mrb[0].mxu0
        %v1815 = vadd.f32 0.0, %v1814
        %v1816 = vpop.f32.mrb[0].mxu0
        %v1817 = vadd.f32 0.0, %v1816
        %1818 = vmatprep.mubr.bf16.mxu0 0
        %1819 = vmatmul.mubr.bf16.gmra.mrb[0].mxu0 %v660
        %v1820 = vpop.f32.mrb[0].mxu0
        %v1821 = vadd.f32 0.0, %v1820
        %v1822 = vpop.f32.mrb[0].mxu0
        %v1823 = vadd.f32 0.0, %v1822
        %v1824 = vpop.f32.mrb[0].mxu0
        %v1825 = vadd.f32 0.0, %v1824
        %v1826 = vpop.f32.mrb[0].mxu0
        %v1827 = vadd.f32 0.0, %v1826
        %1828 = vmatprep.mubr.bf16.mxu0 0
        %1829 = vmatmul.mubr.bf16.gmra.mrb[0].mxu0 %v661
        %v1830 = vpop.f32.mrb[0].mxu0
        %v1831 = vadd.f32 0.0, %v1830
        %v1832 = vpop.f32.mrb[0].mxu0
        %v1833 = vadd.f32 0.0, %v1832
        %v1834 = vpop.f32.mrb[0].mxu0
        %v1835 = vadd.f32 0.0, %v1834
        %v1836 = vpop.f32.mrb[0].mxu0
        %v1837 = vadd.f32 0.0, %v1836
        %1838 = vmatprep.mubr.bf16.mxu0 0
        %1839 = vmatmul.mubr.bf16.gmra.mrb[0].mxu0 %v662
        %v1840 = vpop.f32.mrb[0].mxu0
        %v1841 = vadd.f32 0.0, %v1840
        %v1842 = vpop.f32.mrb[0].mxu0
        %v1843 = vadd.f32 0.0, %v1842
        %v1844 = vpop.f32.mrb[0].mxu0
        %v1845 = vadd.f32 0.0, %v1844
        %v1846 = vpop.f32.mrb[0].mxu0
        %v1847 = vadd.f32 0.0, %v1846
        %1848 = vmatprep.mubr.bf16.mxu0 0
        %1849 = vmatmul.mubr.bf16.gmra.mrb[0].mxu0 %v663
        %v1850 = vpop.f32.mrb[0].mxu0
        %v1851 = vadd.f32 0.0, %v1850
        %v1852 = vpop.f32.mrb[0].mxu0
        %v1853 = vadd.f32 0.0, %v1852
        %v1854 = vpop.f32.mrb[0].mxu0
        %v1855 = vadd.f32 0.0, %v1854
        %v1856 = vpop.f32.mrb[0].mxu0
        %v1857 = vadd.f32 0.0, %v1856
        %1858 = vmatprep.mubr.bf16.mxu0 0
        %1859 = vmatmul.mubr.bf16.gmra.mrb[0].mxu0 %v664
        %v1860 = vpop.f32.mrb[0].mxu0
        %v1861 = vadd.f32 0.0, %v1860
        %v1862 = vpop.f32.mrb[0].mxu0
        %v1863 = vadd.f32 0.0, %v1862
        %v1864 = vpop.f32.mrb[0].mxu0
        %v1865 = vadd.f32 0.0, %v1864
        %v1866 = vpop.f32.mrb[0].mxu0
        %v1867 = vadd.f32 0.0, %v1866
        %1868 = vmatprep.mubr.bf16.mxu0 0
        %1869 = vmatmul.mubr.bf16.gmra.mrb[0].mxu0 %v665
        %v1870 = vpop.f32.mrb[0].mxu0
        %v1871 = vadd.f32 0.0, %v1870
        %v1872 = vpop.f32.mrb[0].mxu0
        %v1873 = vadd.f32 0.0, %v1872
        %v1874 = vpop.f32.mrb[0].mxu0
        %v1875 = vadd.f32 0.0, %v1874
        %v1876 = vpop.f32.mrb[0].mxu0
        %v1877 = vadd.f32 0.0, %v1876
        %1878 = vmatprep.mubr.bf16.mxu0 0
        %1879 = vmatmul.mubr.bf16.gmra.mrb[0].mxu0 %v666
        %v1880 = vpop.f32.mrb[0].mxu0
        %v1881 = vadd.f32 0.0, %v1880
        %v1882 = vpop.f32.mrb[0].mxu0
        %v1883 = vadd.f32 0.0, %v1882
        %v1884 = vpop.f32.mrb[0].mxu0
        %v1885 = vadd.f32 0.0, %v1884
        %v1886 = vpop.f32.mrb[0].mxu0
        %v1887 = vadd.f32 0.0, %v1886
        %1888 = vmatprep.mubr.bf16.mxu0 0
        %1889 = vmatmul.mubr.bf16.gmra.mrb[0].mxu0 %v667
        %v1890 = vpop.f32.mrb[0].mxu0
        %v1891 = vadd.f32 0.0, %v1890
        %v1892 = vpop.f32.mrb[0].mxu0
        %v1893 = vadd.f32 0.0, %v1892
        %v1894 = vpop.f32.mrb[0].mxu0
        %v1895 = vadd.f32 0.0, %v1894
        %v1896 = vpop.f32.mrb[0].mxu0
        %v1897 = vadd.f32 0.0, %v1896
        %1898 = vmatprep.mubr.bf16.mxu0 0
        %1899 = vmatmul.mubr.bf16.gmra.mrb[0].mxu0 %v668
        %v1900 = vpop.f32.mrb[0].mxu0
        %v1901 = vadd.f32 0.0, %v1900
        %v1902 = vpop.f32.mrb[0].mxu0
        %v1903 = vadd.f32 0.0, %v1902
        %v1904 = vpop.f32.mrb[0].mxu0
        %v1905 = vadd.f32 0.0, %v1904
        %v1906 = vpop.f32.mrb[0].mxu0
        %v1907 = vadd.f32 0.0, %v1906
        %1908 = vmatprep.mubr.bf16.mxu0 0
        %1909 = vmatmul.mubr.bf16.gmra.mrb[0].mxu0 %v669
        %v1910 = vpop.f32.mrb[0].mxu0
        %v1911 = vadd.f32 0.0, %v1910
        %v1912 = vpop.f32.mrb[0].mxu0
        %v1913 = vadd.f32 0.0, %v1912
        %v1914 = vpop.f32.mrb[0].mxu0
        %v1915 = vadd.f32 0.0, %v1914
        %v1916 = vpop.f32.mrb[0].mxu0
        %v1917 = vadd.f32 0.0, %v1916
        %1918 = vmatprep.mubr.bf16.mxu0 0
        %1919 = vmatmul.mubr.bf16.gmra.mrb[0].mxu0 %v670
        %v1920 = vpop.f32.mrb[0].mxu0
        %v1921 = vadd.f32 0.0, %v1920
        %v1922 = vpop.f32.mrb[0].mxu0
        %v1923 = vadd.f32 0.0, %v1922
        %v1924 = vpop.f32.mrb[0].mxu0
        %v1925 = vadd.f32 0.0, %v1924
        %v1926 = vpop.f32.mrb[0].mxu0
        %v1927 = vadd.f32 0.0, %v1926
        %1928 = vmatprep.mubr.bf16.mxu0 0
        %1929 = vmatmul.mubr.bf16.gmra.mrb[0].mxu0 %v671
        %v1930 = vpop.f32.mrb[0].mxu0
        %v1931 = vadd.f32 0.0, %v1930
        %v1932 = vpop.f32.mrb[0].mxu0
        %v1933 = vadd.f32 0.0, %v1932
        %v1934 = vpop.f32.mrb[0].mxu0
        %v1935 = vadd.f32 0.0, %v1934
        %v1936 = vpop.f32.mrb[0].mxu0
        %v1937 = vadd.f32 0.0, %v1936
        %1938 = vmatprep.mubr.bf16.mxu0 0
        %1939 = vmatmul.mubr.bf16.gmra.mrb[0].mxu0 %v672
        %v1940 = vpop.f32.mrb[0].mxu0
        %v1941 = vadd.f32 0.0, %v1940
        %v1942 = vpop.f32.mrb[0].mxu0
        %v1943 = vadd.f32 0.0, %v1942
        %v1944 = vpop.f32.mrb[0].mxu0
        %v1945 = vadd.f32 0.0, %v1944
        %v1946 = vpop.f32.mrb[0].mxu0
        %v1947 = vadd.f32 0.0, %v1946
        %1948 = vmatprep.mubr.bf16.mxu0 0
        %1949 = vmatmul.mubr.bf16.gmra.mrb[0].mxu0 %v673
        %v1950 = vpop.f32.mrb[0].mxu0
        %v1951 = vadd.f32 0.0, %v1950
        %v1952 = vpop.f32.mrb[0].mxu0
        %v1953 = vadd.f32 0.0, %v1952
        %v1954 = vpop.f32.mrb[0].mxu0
        %v1955 = vadd.f32 0.0, %v1954
        %v1956 = vpop.f32.mrb[0].mxu0
        %v1957 = vadd.f32 0.0, %v1956
        %1958 = vmatprep.mubr.bf16.mxu0 0
        %1959 = vmatmul.mubr.bf16.gmra.mrb[0].mxu0 %v674
        %v1960 = vpop.f32.mrb[0].mxu0
        %v1961 = vadd.f32 0.0, %v1960
        %v1962 = vpop.f32.mrb[0].mxu0
        %v1963 = vadd.f32 0.0, %v1962
        %v1964 = vpop.f32.mrb[0].mxu0
        %v1965 = vadd.f32 0.0, %v1964
        %v1966 = vpop.f32.mrb[0].mxu0
        %v1967 = vadd.f32 0.0, %v1966
        %1968 = vmatprep.mubr.bf16.mxu0 0
        %1969 = vmatmul.mubr.bf16.gmra.mrb[0].mxu0 %v675
        %v1970 = vpop.f32.mrb[0].mxu0
        %v1971 = vadd.f32 0.0, %v1970
        %v1972 = vpop.f32.mrb[0].mxu0
        %v1973 = vadd.f32 0.0, %v1972
        %v1974 = vpop.f32.mrb[0].mxu0
        %v1975 = vadd.f32 0.0, %v1974
        %v1976 = vpop.f32.mrb[0].mxu0
        %v1977 = vadd.f32 0.0, %v1976
        %1978 = vmatprep.mubr.bf16.mxu0 0
        %1979 = vmatmul.mubr.bf16.gmra.mrb[0].mxu0 %v676
        %v1980 = vpop.f32.mrb[0].mxu0
        %v1981 = vadd.f32 0.0, %v1980
        %v1982 = vpop.f32.mrb[0].mxu0
        %v1983 = vadd.f32 0.0, %v1982
        %v1984 = vpop.f32.mrb[0].mxu0
        %v1985 = vadd.f32 0.0, %v1984
        %v1986 = vpop.f32.mrb[0].mxu0
        %v1987 = vadd.f32 0.0, %v1986
        %1988 = vmatprep.mubr.bf16.mxu0 0
        %1989 = vmatmul.mubr.bf16.gmra.mrb[0].mxu0 %v677
        %v1990 = vpop.f32.mrb[0].mxu0
        %v1991 = vadd.f32 0.0, %v1990
        %v1992 = vpop.f32.mrb[0].mxu0
        %v1993 = vadd.f32 0.0, %v1992
        %v1994 = vpop.f32.mrb[0].mxu0
        %v1995 = vadd.f32 0.0, %v1994
        %v1996 = vpop.f32.mrb[0].mxu0
        %v1997 = vadd.f32 0.0, %v1996
        %1998 = vmatprep.mubr.bf16.mxu0 0
        %1999 = vmatmul.mubr.bf16.gmra.mrb[0].mxu0 %v678
        %v2000 = vpop.f32.mrb[0].mxu0
        %v2001 = vadd.f32 0.0, %v2000
        %v2002 = vpop.f32.mrb[0].mxu0
        %v2003 = vadd.f32 0.0, %v2002
        %v2004 = vpop.f32.mrb[0].mxu0
        %v2005 = vadd.f32 0.0, %v2004
        %v2006 = vpop.f32.mrb[0].mxu0
        %v2007 = vadd.f32 0.0, %v2006
        %2008 = vmatprep.mubr.bf16.mxu0 0
        %2009 = vmatmul.mubr.bf16.gmra.mrb[0].mxu0 %v679
        %v2010 = vpop.f32.mrb[0].mxu0
        %v2011 = vadd.f32 0.0, %v2010
        %v2012 = vpop.f32.mrb[0].mxu0
        %v2013 = vadd.f32 0.0, %v2012
        %v2014 = vpop.f32.mrb[0].mxu0
        %v2015 = vadd.f32 0.0, %v2014
        %v2016 = vpop.f32.mrb[0].mxu0
        %v2017 = vadd.f32 0.0, %v2016
        %2018 = vmatprep.mubr.bf16.mxu0 0
        %2019 = vmatmul.mubr.bf16.gmra.mrb[0].mxu0 %v680
        %v2020 = vpop.f32.mrb[0].mxu0
        %v2021 = vadd.f32 0.0, %v2020
        %v2022 = vpop.f32.mrb[0].mxu0
        %v2023 = vadd.f32 0.0, %v2022
        %v2024 = vpop.f32.mrb[0].mxu0
        %v2025 = vadd.f32 0.0, %v2024
        %v2026 = vpop.f32.mrb[0].mxu0
        %v2027 = vadd.f32 0.0, %v2026
        %2028 = vmatprep.mubr.bf16.mxu0 0
        %2029 = vmatmul.mubr.bf16.gmra.mrb[0].mxu0 %v681
        %v2030 = vpop.f32.mrb[0].mxu0
        %v2031 = vadd.f32 0.0, %v2030
        %v2032 = vpop.f32.mrb[0].mxu0
        %v2033 = vadd.f32 0.0, %v2032
        %v2034 = vpop.f32.mrb[0].mxu0
        %v2035 = vadd.f32 0.0, %v2034
        %v2036 = vpop.f32.mrb[0].mxu0
        %v2037 = vadd.f32 0.0, %v2036
        %2038 = vmatprep.mubr.bf16.mxu0 0
        %2039 = vmatmul.mubr.bf16.gmra.mrb[0].mxu0 %v682
        %v2040 = vpop.f32.mrb[0].mxu0
        %v2041 = vadd.f32 0.0, %v2040
        %v2042 = vpop.f32.mrb[0].mxu0
        %v2043 = vadd.f32 0.0, %v2042
        %v2044 = vpop.f32.mrb[0].mxu0
        %v2045 = vadd.f32 0.0, %v2044
        %v2046 = vpop.f32.mrb[0].mxu0
        %v2047 = vadd.f32 0.0, %v2046
        %2048 = vmatprep.mubr.bf16.mxu0 0
        %2049 = vmatmul.mubr.bf16.gmra.mrb[0].mxu0 %v683
        %v2050 = vpop.f32.mrb[0].mxu0
        %v2051 = vadd.f32 0.0, %v2050
        %v2052 = vpop.f32.mrb[0].mxu0
        %v2053 = vadd.f32 0.0, %v2052
        %v2054 = vpop.f32.mrb[0].mxu0
        %v2055 = vadd.f32 0.0, %v2054
        %v2056 = vpop.f32.mrb[0].mxu0
        %v2057 = vadd.f32 0.0, %v2056
        %2058 = vmatprep.mubr.bf16.mxu0 0
        %2059 = vmatmul.mubr.bf16.gmra.mrb[0].mxu0 %v684
        %v2060 = vpop.f32.mrb[0].mxu0
        %v2061 = vadd.f32 0.0, %v2060
        %v2062 = vpop.f32.mrb[0].mxu0
        %v2063 = vadd.f32 0.0, %v2062
        %v2064 = vpop.f32.mrb[0].mxu0
        %v2065 = vadd.f32 0.0, %v2064
        %v2066 = vpop.f32.mrb[0].mxu0
        %v2067 = vadd.f32 0.0, %v2066
        %2068 = vmatprep.mubr.bf16.mxu0 0
        %2069 = vmatmul.mubr.bf16.gmra.mrb[0].mxu0 %v685
        %v2070 = vpop.f32.mrb[0].mxu0
        %v2071 = vadd.f32 0.0, %v2070
        %v2072 = vpop.f32.mrb[0].mxu0
        %v2073 = vadd.f32 0.0, %v2072
        %v2074 = vpop.f32.mrb[0].mxu0
        %v2075 = vadd.f32 0.0, %v2074
        %v2076 = vpop.f32.mrb[0].mxu0
        %v2077 = vadd.f32 0.0, %v2076
        %2078 = vmatprep.mubr.bf16.mxu0 0
        %2079 = vmatmul.mubr.bf16.gmra.mrb[0].mxu0 %v686
        %v2080 = vpop.f32.mrb[0].mxu0
        %v2081 = vadd.f32 0.0, %v2080
        %v2082 = vpop.f32.mrb[0].mxu0
        %v2083 = vadd.f32 0.0, %v2082
        %v2084 = vpop.f32.mrb[0].mxu0
        %v2085 = vadd.f32 0.0, %v2084
        %v2086 = vpop.f32.mrb[0].mxu0
        %v2087 = vadd.f32 0.0, %v2086
        %2088 = vmatprep.mubr.bf16.mxu0 0
        %2089 = vmatmul.mubr.bf16.gmra.mrb[0].mxu0 %v687
        %v2090 = vpop.f32.mrb[0].mxu0
        %v2091 = vadd.f32 0.0, %v2090
        %v2092 = vpop.f32.mrb[0].mxu0
        %v2093 = vadd.f32 0.0, %v2092
        %v2094 = vpop.f32.mrb[0].mxu0
        %v2095 = vadd.f32 0.0, %v2094
        %v2096 = vpop.f32.mrb[0].mxu0
        %v2097 = vadd.f32 0.0, %v2096
        %2098 = vdwg.mxu0
        %2099 = vmatprep.subr.bf16.mxu0 %v919
        %2100 = vmatpush1.bf16.msra.mxu0 %v918
        %2101 = vmatprep.subr.bf16.mxu0 %v927
        %2102 = vmatpush1.bf16.msra.mxu0 %v926
        %2103 = vmatprep.subr.bf16.mxu0 %v935
        %2104 = vmatpush1.bf16.msra.mxu0 %v934
        %2105 = vmatprep.subr.bf16.mxu0 %v943
        %2106 = vmatpush1.bf16.msra.mxu0 %v942
        %2107 = vmatprep.subr.bf16.mxu0 %v951
        %2108 = vmatpush1.bf16.msra.mxu0 %v950
        %2109 = vmatprep.subr.bf16.mxu0 %v959
        %2110 = vmatpush1.bf16.msra.mxu0 %v958
        %2111 = vmatprep.subr.bf16.mxu0 %v967
        %2112 = vmatpush1.bf16.msra.mxu0 %v966
        %2113 = vmatprep.subr.bf16.mxu0 %v975
        %2114 = vmatpush1.bf16.msra.mxu0 %v974
        %2115 = vmatprep.subr.bf16.mxu0 0
        %2116 = vmatpush1.bf16.msra.mxu0 0
        %2117 = vmatprep.subr.bf16.mxu0 0
        %2118 = vmatpush1.bf16.msra.mxu0 0
        %2119 = vmatprep.subr.bf16.mxu0 0
        %2120 = vmatpush1.bf16.msra.mxu0 0
        %2121 = vmatprep.subr.bf16.mxu0 0
        %2122 = vmatpush1.bf16.msra.mxu0 0
        %2123 = vmatprep.subr.bf16.mxu0 0
        %2124 = vmatpush1.bf16.msra.mxu0 0
        %2125 = vmatprep.subr.bf16.mxu0 0
        %2126 = vmatpush1.bf16.msra.mxu0 0
        %2127 = vmatprep.subr.bf16.mxu0 0
        %2128 = vmatpush1.bf16.msra.mxu0 0
        %2129 = vmatprep.subr.bf16.mxu0 0
        %2130 = vmatpush1.bf16.msra.mxu0 0
        %2131 = vmatprep.mubr.bf16.mxu0 0
        %2132 = vmatmul.mubr.bf16.gmra.mrb[0].mxu0 %v656
        %v2133 = vpop.f32.mrb[0].mxu0
        %v2134 = vadd.f32 0.0, %v2133
        %v2135 = vpop.f32.mrb[0].mxu0
        %v2136 = vadd.f32 0.0, %v2135
        %v2137 = vpop.f32.mrb[0].mxu0
        %v2138 = vadd.f32 0.0, %v2137
        %v2139 = vpop.f32.mrb[0].mxu0
        %v2140 = vadd.f32 0.0, %v2139
        %2141 = vmatprep.mubr.bf16.mxu0 0
        %2142 = vmatmul.mubr.bf16.gmra.mrb[0].mxu0 %v657
        %v2143 = vpop.f32.mrb[0].mxu0
        %v2144 = vadd.f32 0.0, %v2143
        %v2145 = vpop.f32.mrb[0].mxu0
        %v2146 = vadd.f32 0.0, %v2145
        %v2147 = vpop.f32.mrb[0].mxu0
        %v2148 = vadd.f32 0.0, %v2147
        %v2149 = vpop.f32.mrb[0].mxu0
        %v2150 = vadd.f32 0.0, %v2149
        %2151 = vmatprep.mubr.bf16.mxu0 0
        %2152 = vmatmul.mubr.bf16.gmra.mrb[0].mxu0 %v658
        %v2153 = vpop.f32.mrb[0].mxu0
        %v2154 = vadd.f32 0.0, %v2153
        %v2155 = vpop.f32.mrb[0].mxu0
        %v2156 = vadd.f32 0.0, %v2155
        %v2157 = vpop.f32.mrb[0].mxu0
        %v2158 = vadd.f32 0.0, %v2157
        %v2159 = vpop.f32.mrb[0].mxu0
        %v2160 = vadd.f32 0.0, %v2159
        %2161 = vmatprep.mubr.bf16.mxu0 0
        %2162 = vmatmul.mubr.bf16.gmra.mrb[0].mxu0 %v659
        %v2163 = vpop.f32.mrb[0].mxu0
        %v2164 = vadd.f32 0.0, %v2163
        %v2165 = vpop.f32.mrb[0].mxu0
        %v2166 = vadd.f32 0.0, %v2165
        %v2167 = vpop.f32.mrb[0].mxu0
        %v2168 = vadd.f32 0.0, %v2167
        %v2169 = vpop.f32.mrb[0].mxu0
        %v2170 = vadd.f32 0.0, %v2169
        %2171 = vmatprep.mubr.bf16.mxu0 0
        %2172 = vmatmul.mubr.bf16.gmra.mrb[0].mxu0 %v660
        %v2173 = vpop.f32.mrb[0].mxu0
        %v2174 = vadd.f32 0.0, %v2173
        %v2175 = vpop.f32.mrb[0].mxu0
        %v2176 = vadd.f32 0.0, %v2175
        %v2177 = vpop.f32.mrb[0].mxu0
        %v2178 = vadd.f32 0.0, %v2177
        %v2179 = vpop.f32.mrb[0].mxu0
        %v2180 = vadd.f32 0.0, %v2179
        %2181 = vmatprep.mubr.bf16.mxu0 0
        %2182 = vmatmul.mubr.bf16.gmra.mrb[0].mxu0 %v661
        %v2183 = vpop.f32.mrb[0].mxu0
        %v2184 = vadd.f32 0.0, %v2183
        %v2185 = vpop.f32.mrb[0].mxu0
        %v2186 = vadd.f32 0.0, %v2185
        %v2187 = vpop.f32.mrb[0].mxu0
        %v2188 = vadd.f32 0.0, %v2187
        %v2189 = vpop.f32.mrb[0].mxu0
        %v2190 = vadd.f32 0.0, %v2189
        %2191 = vmatprep.mubr.bf16.mxu0 0
        %2192 = vmatmul.mubr.bf16.gmra.mrb[0].mxu0 %v662
        %v2193 = vpop.f32.mrb[0].mxu0
        %v2194 = vadd.f32 0.0, %v2193
        %v2195 = vpop.f32.mrb[0].mxu0
        %v2196 = vadd.f32 0.0, %v2195
        %v2197 = vpop.f32.mrb[0].mxu0
        %v2198 = vadd.f32 0.0, %v2197
        %v2199 = vpop.f32.mrb[0].mxu0
        %v2200 = vadd.f32 0.0, %v2199
        %2201 = vmatprep.mubr.bf16.mxu0 0
        %2202 = vmatmul.mubr.bf16.gmra.mrb[0].mxu0 %v663
        %v2203 = vpop.f32.mrb[0].mxu0
        %v2204 = vadd.f32 0.0, %v2203
        %v2205 = vpop.f32.mrb[0].mxu0
        %v2206 = vadd.f32 0.0, %v2205
        %v2207 = vpop.f32.mrb[0].mxu0
        %v2208 = vadd.f32 0.0, %v2207
        %v2209 = vpop.f32.mrb[0].mxu0
        %v2210 = vadd.f32 0.0, %v2209
        %2211 = vmatprep.mubr.bf16.mxu0 0
        %2212 = vmatmul.mubr.bf16.gmra.mrb[0].mxu0 %v664
        %v2213 = vpop.f32.mrb[0].mxu0
        %v2214 = vadd.f32 0.0, %v2213
        %v2215 = vpop.f32.mrb[0].mxu0
        %v2216 = vadd.f32 0.0, %v2215
        %v2217 = vpop.f32.mrb[0].mxu0
        %v2218 = vadd.f32 0.0, %v2217
        %v2219 = vpop.f32.mrb[0].mxu0
        %v2220 = vadd.f32 0.0, %v2219
        %2221 = vmatprep.mubr.bf16.mxu0 0
        %2222 = vmatmul.mubr.bf16.gmra.mrb[0].mxu0 %v665
        %v2223 = vpop.f32.mrb[0].mxu0
        %v2224 = vadd.f32 0.0, %v2223
        %v2225 = vpop.f32.mrb[0].mxu0
        %v2226 = vadd.f32 0.0, %v2225
        %v2227 = vpop.f32.mrb[0].mxu0
        %v2228 = vadd.f32 0.0, %v2227
        %v2229 = vpop.f32.mrb[0].mxu0
        %v2230 = vadd.f32 0.0, %v2229
        %2231 = vmatprep.mubr.bf16.mxu0 0
        %2232 = vmatmul.mubr.bf16.gmra.mrb[0].mxu0 %v666
        %v2233 = vpop.f32.mrb[0].mxu0
        %v2234 = vadd.f32 0.0, %v2233
        %v2235 = vpop.f32.mrb[0].mxu0
        %v2236 = vadd.f32 0.0, %v2235
        %v2237 = vpop.f32.mrb[0].mxu0
        %v2238 = vadd.f32 0.0, %v2237
        %v2239 = vpop.f32.mrb[0].mxu0
        %v2240 = vadd.f32 0.0, %v2239
        %2241 = vmatprep.mubr.bf16.mxu0 0
        %2242 = vmatmul.mubr.bf16.gmra.mrb[0].mxu0 %v667
        %v2243 = vpop.f32.mrb[0].mxu0
        %v2244 = vadd.f32 0.0, %v2243
        %v2245 = vpop.f32.mrb[0].mxu0
        %v2246 = vadd.f32 0.0, %v2245
        %v2247 = vpop.f32.mrb[0].mxu0
        %v2248 = vadd.f32 0.0, %v2247
        %v2249 = vpop.f32.mrb[0].mxu0
        %v2250 = vadd.f32 0.0, %v2249
        %2251 = vmatprep.mubr.bf16.mxu0 0
        %2252 = vmatmul.mubr.bf16.gmra.mrb[0].mxu0 %v668
        %v2253 = vpop.f32.mrb[0].mxu0
        %v2254 = vadd.f32 0.0, %v2253
        %v2255 = vpop.f32.mrb[0].mxu0
        %v2256 = vadd.f32 0.0, %v2255
        %v2257 = vpop.f32.mrb[0].mxu0
        %v2258 = vadd.f32 0.0, %v2257
        %v2259 = vpop.f32.mrb[0].mxu0
        %v2260 = vadd.f32 0.0, %v2259
        %2261 = vmatprep.mubr.bf16.mxu0 0
        %2262 = vmatmul.mubr.bf16.gmra.mrb[0].mxu0 %v669
        %v2263 = vpop.f32.mrb[0].mxu0
        %v2264 = vadd.f32 0.0, %v2263
        %v2265 = vpop.f32.mrb[0].mxu0
        %v2266 = vadd.f32 0.0, %v2265
        %v2267 = vpop.f32.mrb[0].mxu0
        %v2268 = vadd.f32 0.0, %v2267
        %v2269 = vpop.f32.mrb[0].mxu0
        %v2270 = vadd.f32 0.0, %v2269
        %2271 = vmatprep.mubr.bf16.mxu0 0
        %2272 = vmatmul.mubr.bf16.gmra.mrb[0].mxu0 %v670
        %v2273 = vpop.f32.mrb[0].mxu0
        %v2274 = vadd.f32 0.0, %v2273
        %v2275 = vpop.f32.mrb[0].mxu0
        %v2276 = vadd.f32 0.0, %v2275
        %v2277 = vpop.f32.mrb[0].mxu0
        %v2278 = vadd.f32 0.0, %v2277
        %v2279 = vpop.f32.mrb[0].mxu0
        %v2280 = vadd.f32 0.0, %v2279
        %2281 = vmatprep.mubr.bf16.mxu0 0
        %2282 = vmatmul.mubr.bf16.gmra.mrb[0].mxu0 %v671
        %v2283 = vpop.f32.mrb[0].mxu0
        %v2284 = vadd.f32 0.0, %v2283
        %v2285 = vpop.f32.mrb[0].mxu0
        %v2286 = vadd.f32 0.0, %v2285
        %v2287 = vpop.f32.mrb[0].mxu0
        %v2288 = vadd.f32 0.0, %v2287
        %v2289 = vpop.f32.mrb[0].mxu0
        %v2290 = vadd.f32 0.0, %v2289
        %2291 = vmatprep.mubr.bf16.mxu0 0
        %2292 = vmatmul.mubr.bf16.gmra.mrb[0].mxu0 %v672
        %v2293 = vpop.f32.mrb[0].mxu0
        %v2294 = vadd.f32 0.0, %v2293
        %v2295 = vpop.f32.mrb[0].mxu0
        %v2296 = vadd.f32 0.0, %v2295
        %v2297 = vpop.f32.mrb[0].mxu0
        %v2298 = vadd.f32 0.0, %v2297
        %v2299 = vpop.f32.mrb[0].mxu0
        %v2300 = vadd.f32 0.0, %v2299
        %2301 = vmatprep.mubr.bf16.mxu0 0
        %2302 = vmatmul.mubr.bf16.gmra.mrb[0].mxu0 %v673
        %v2303 = vpop.f32.mrb[0].mxu0
        %v2304 = vadd.f32 0.0, %v2303
        %v2305 = vpop.f32.mrb[0].mxu0
        %v2306 = vadd.f32 0.0, %v2305
        %v2307 = vpop.f32.mrb[0].mxu0
        %v2308 = vadd.f32 0.0, %v2307
        %v2309 = vpop.f32.mrb[0].mxu0
        %v2310 = vadd.f32 0.0, %v2309
        %2311 = vmatprep.mubr.bf16.mxu0 0
        %2312 = vmatmul.mubr.bf16.gmra.mrb[0].mxu0 %v674
        %v2313 = vpop.f32.mrb[0].mxu0
        %v2314 = vadd.f32 0.0, %v2313
        %v2315 = vpop.f32.mrb[0].mxu0
        %v2316 = vadd.f32 0.0, %v2315
        %v2317 = vpop.f32.mrb[0].mxu0
        %v2318 = vadd.f32 0.0, %v2317
        %v2319 = vpop.f32.mrb[0].mxu0
        %v2320 = vadd.f32 0.0, %v2319
        %2321 = vmatprep.mubr.bf16.mxu0 0
        %2322 = vmatmul.mubr.bf16.gmra.mrb[0].mxu0 %v675
        %v2323 = vpop.f32.mrb[0].mxu0
        %v2324 = vadd.f32 0.0, %v2323
        %v2325 = vpop.f32.mrb[0].mxu0
        %v2326 = vadd.f32 0.0, %v2325
        %v2327 = vpop.f32.mrb[0].mxu0
        %v2328 = vadd.f32 0.0, %v2327
        %v2329 = vpop.f32.mrb[0].mxu0
        %v2330 = vadd.f32 0.0, %v2329
        %2331 = vmatprep.mubr.bf16.mxu0 0
        %2332 = vmatmul.mubr.bf16.gmra.mrb[0].mxu0 %v676
        %v2333 = vpop.f32.mrb[0].mxu0
        %v2334 = vadd.f32 0.0, %v2333
        %v2335 = vpop.f32.mrb[0].mxu0
        %v2336 = vadd.f32 0.0, %v2335
        %v2337 = vpop.f32.mrb[0].mxu0
        %v2338 = vadd.f32 0.0, %v2337
        %v2339 = vpop.f32.mrb[0].mxu0
        %v2340 = vadd.f32 0.0, %v2339
        %2341 = vmatprep.mubr.bf16.mxu0 0
        %2342 = vmatmul.mubr.bf16.gmra.mrb[0].mxu0 %v677
        %v2343 = vpop.f32.mrb[0].mxu0
        %v2344 = vadd.f32 0.0, %v2343
        %v2345 = vpop.f32.mrb[0].mxu0
        %v2346 = vadd.f32 0.0, %v2345
        %v2347 = vpop.f32.mrb[0].mxu0
        %v2348 = vadd.f32 0.0, %v2347
        %v2349 = vpop.f32.mrb[0].mxu0
        %v2350 = vadd.f32 0.0, %v2349
        %2351 = vmatprep.mubr.bf16.mxu0 0
        %2352 = vmatmul.mubr.bf16.gmra.mrb[0].mxu0 %v678
        %v2353 = vpop.f32.mrb[0].mxu0
        %v2354 = vadd.f32 0.0, %v2353
        %v2355 = vpop.f32.mrb[0].mxu0
        %v2356 = vadd.f32 0.0, %v2355
        %v2357 = vpop.f32.mrb[0].mxu0
        %v2358 = vadd.f32 0.0, %v2357
        %v2359 = vpop.f32.mrb[0].mxu0
        %v2360 = vadd.f32 0.0, %v2359
        %2361 = vmatprep.mubr.bf16.mxu0 0
        %2362 = vmatmul.mubr.bf16.gmra.mrb[0].mxu0 %v679
        %v2363 = vpop.f32.mrb[0].mxu0
        %v2364 = vadd.f32 0.0, %v2363
        %v2365 = vpop.f32.mrb[0].mxu0
        %v2366 = vadd.f32 0.0, %v2365
        %v2367 = vpop.f32.mrb[0].mxu0
        %v2368 = vadd.f32 0.0, %v2367
        %v2369 = vpop.f32.mrb[0].mxu0
        %v2370 = vadd.f32 0.0, %v2369
        %2371 = vmatprep.mubr.bf16.mxu0 0
        %2372 = vmatmul.mubr.bf16.gmra.mrb[0].mxu0 %v680
        %v2373 = vpop.f32.mrb[0].mxu0
        %v2374 = vadd.f32 0.0, %v2373
        %v2375 = vpop.f32.mrb[0].mxu0
        %v2376 = vadd.f32 0.0, %v2375
        %v2377 = vpop.f32.mrb[0].mxu0
        %v2378 = vadd.f32 0.0, %v2377
        %v2379 = vpop.f32.mrb[0].mxu0
        %v2380 = vadd.f32 0.0, %v2379
        %2381 = vmatprep.mubr.bf16.mxu0 0
        %2382 = vmatmul.mubr.bf16.gmra.mrb[0].mxu0 %v681
        %v2383 = vpop.f32.mrb[0].mxu0
        %v2384 = vadd.f32 0.0, %v2383
        %v2385 = vpop.f32.mrb[0].mxu0
        %v2386 = vadd.f32 0.0, %v2385
        %v2387 = vpop.f32.mrb[0].mxu0
        %v2388 = vadd.f32 0.0, %v2387
        %v2389 = vpop.f32.mrb[0].mxu0
        %v2390 = vadd.f32 0.0, %v2389
        %2391 = vmatprep.mubr.bf16.mxu0 0
        %2392 = vmatmul.mubr.bf16.gmra.mrb[0].mxu0 %v682
        %v2393 = vpop.f32.mrb[0].mxu0
        %v2394 = vadd.f32 0.0, %v2393
        %v2395 = vpop.f32.mrb[0].mxu0
        %v2396 = vadd.f32 0.0, %v2395
        %v2397 = vpop.f32.mrb[0].mxu0
        %v2398 = vadd.f32 0.0, %v2397
        %v2399 = vpop.f32.mrb[0].mxu0
        %v2400 = vadd.f32 0.0, %v2399
        %2401 = vmatprep.mubr.bf16.mxu0 0
        %2402 = vmatmul.mubr.bf16.gmra.mrb[0].mxu0 %v683
        %v2403 = vpop.f32.mrb[0].mxu0
        %v2404 = vadd.f32 0.0, %v2403
        %v2405 = vpop.f32.mrb[0].mxu0
        %v2406 = vadd.f32 0.0, %v2405
        %v2407 = vpop.f32.mrb[0].mxu0
        %v2408 = vadd.f32 0.0, %v2407
        %v2409 = vpop.f32.mrb[0].mxu0
        %v2410 = vadd.f32 0.0, %v2409
        %2411 = vmatprep.mubr.bf16.mxu0 0
        %2412 = vmatmul.mubr.bf16.gmra.mrb[0].mxu0 %v684
        %v2413 = vpop.f32.mrb[0].mxu0
        %v2414 = vadd.f32 0.0, %v2413
        %v2415 = vpop.f32.mrb[0].mxu0
        %v2416 = vadd.f32 0.0, %v2415
        %v2417 = vpop.f32.mrb[0].mxu0
        %v2418 = vadd.f32 0.0, %v2417
        %v2419 = vpop.f32.mrb[0].mxu0
        %v2420 = vadd.f32 0.0, %v2419
        %2421 = vmatprep.mubr.bf16.mxu0 0
        %2422 = vmatmul.mubr.bf16.gmra.mrb[0].mxu0 %v685
        %v2423 = vpop.f32.mrb[0].mxu0
        %v2424 = vadd.f32 0.0, %v2423
        %v2425 = vpop.f32.mrb[0].mxu0
        %v2426 = vadd.f32 0.0, %v2425
        %v2427 = vpop.f32.mrb[0].mxu0
        %v2428 = vadd.f32 0.0, %v2427
        %v2429 = vpop.f32.mrb[0].mxu0
        %v2430 = vadd.f32 0.0, %v2429
        %2431 = vmatprep.mubr.bf16.mxu0 0
        %2432 = vmatmul.mubr.bf16.gmra.mrb[0].mxu0 %v686
        %v2433 = vpop.f32.mrb[0].mxu0
        %v2434 = vadd.f32 0.0, %v2433
        %v2435 = vpop.f32.mrb[0].mxu0
        %v2436 = vadd.f32 0.0, %v2435
        %v2437 = vpop.f32.mrb[0].mxu0
        %v2438 = vadd.f32 0.0, %v2437
        %v2439 = vpop.f32.mrb[0].mxu0
        %v2440 = vadd.f32 0.0, %v2439
        %2441 = vmatprep.mubr.bf16.mxu0 0
        %2442 = vmatmul.mubr.bf16.gmra.mrb[0].mxu0 %v687
        %v2443 = vpop.f32.mrb[0].mxu0
        %v2444 = vadd.f32 0.0, %v2443
        %v2445 = vpop.f32.mrb[0].mxu0
        %v2446 = vadd.f32 0.0, %v2445
        %v2447 = vpop.f32.mrb[0].mxu0
        %v2448 = vadd.f32 0.0, %v2447
        %v2449 = vpop.f32.mrb[0].mxu0
        %v2450 = vadd.f32 0.0, %v2449
        %2451 = vdwg.mxu0
        %v2452 = vpack.c.bf16 %v1079, %v1075
        %v2453 = vpack.c.bf16 %v1081, %v1077
        %v2454 = vpack.c.bf16 %v1432, %v1428
        %v2455 = vpack.c.bf16 %v1434, %v1430
        %v2456 = vpack.c.bf16 %v1785, %v1781
        %v2457 = vpack.c.bf16 %v1787, %v1783
        %v2458 = vpack.c.bf16 %v2138, %v2134
        %v2459 = vpack.c.bf16 %v2140, %v2136
        %v2460 = vpack.c.bf16 %v1089, %v1085
        %v2461 = vpack.c.bf16 %v1091, %v1087
        %v2462 = vpack.c.bf16 %v1442, %v1438
        %v2463 = vpack.c.bf16 %v1444, %v1440
        %v2464 = vpack.c.bf16 %v1795, %v1791
        %v2465 = vpack.c.bf16 %v1797, %v1793
        %v2466 = vpack.c.bf16 %v2148, %v2144
        %v2467 = vpack.c.bf16 %v2150, %v2146
        %v2468 = vpack.c.bf16 %v1099, %v1095
        %v2469 = vpack.c.bf16 %v1101, %v1097
        %v2470 = vpack.c.bf16 %v1452, %v1448
        %v2471 = vpack.c.bf16 %v1454, %v1450
        %v2472 = vpack.c.bf16 %v1805, %v1801
        %v2473 = vpack.c.bf16 %v1807, %v1803
        %v2474 = vpack.c.bf16 %v2158, %v2154
        %v2475 = vpack.c.bf16 %v2160, %v2156
        %v2476 = vpack.c.bf16 %v1109, %v1105
        %v2477 = vpack.c.bf16 %v1111, %v1107
        %v2478 = vpack.c.bf16 %v1462, %v1458
        %v2479 = vpack.c.bf16 %v1464, %v1460
        %v2480 = vpack.c.bf16 %v1815, %v1811
        %v2481 = vpack.c.bf16 %v1817, %v1813
        %v2482 = vpack.c.bf16 %v2168, %v2164
        %v2483 = vpack.c.bf16 %v2170, %v2166
        %v2484 = vpack.c.bf16 %v1119, %v1115
        %v2485 = vpack.c.bf16 %v1121, %v1117
        %v2486 = vpack.c.bf16 %v1472, %v1468
        %v2487 = vpack.c.bf16 %v1474, %v1470
        %v2488 = vpack.c.bf16 %v1825, %v1821
        %v2489 = vpack.c.bf16 %v1827, %v1823
        %v2490 = vpack.c.bf16 %v2178, %v2174
        %v2491 = vpack.c.bf16 %v2180, %v2176
        %v2492 = vpack.c.bf16 %v1129, %v1125
        %v2493 = vpack.c.bf16 %v1131, %v1127
        %v2494 = vpack.c.bf16 %v1482, %v1478
        %v2495 = vpack.c.bf16 %v1484, %v1480
        %v2496 = vpack.c.bf16 %v1835, %v1831
        %v2497 = vpack.c.bf16 %v1837, %v1833
        %v2498 = vpack.c.bf16 %v2188, %v2184
        %v2499 = vpack.c.bf16 %v2190, %v2186
        %v2500 = vpack.c.bf16 %v1139, %v1135
        %v2501 = vpack.c.bf16 %v1141, %v1137
        %v2502 = vpack.c.bf16 %v1492, %v1488
        %v2503 = vpack.c.bf16 %v1494, %v1490
        %v2504 = vpack.c.bf16 %v1845, %v1841
        %v2505 = vpack.c.bf16 %v1847, %v1843
        %v2506 = vpack.c.bf16 %v2198, %v2194
        %v2507 = vpack.c.bf16 %v2200, %v2196
        %v2508 = vpack.c.bf16 %v1149, %v1145
        %v2509 = vpack.c.bf16 %v1151, %v1147
        %v2510 = vpack.c.bf16 %v1502, %v1498
        %v2511 = vpack.c.bf16 %v1504, %v1500
        %v2512 = vpack.c.bf16 %v1855, %v1851
        %v2513 = vpack.c.bf16 %v1857, %v1853
        %v2514 = vpack.c.bf16 %v2208, %v2204
        %v2515 = vpack.c.bf16 %v2210, %v2206
        %v2516 = vpack.c.bf16 %v1159, %v1155
        %v2517 = vpack.c.bf16 %v1161, %v1157
        %v2518 = vpack.c.bf16 %v1512, %v1508
        %v2519 = vpack.c.bf16 %v1514, %v1510
        %v2520 = vpack.c.bf16 %v1865, %v1861
        %v2521 = vpack.c.bf16 %v1867, %v1863
        %v2522 = vpack.c.bf16 %v2218, %v2214
        %v2523 = vpack.c.bf16 %v2220, %v2216
        %v2524 = vpack.c.bf16 %v1169, %v1165
        %v2525 = vpack.c.bf16 %v1171, %v1167
        %v2526 = vpack.c.bf16 %v1522, %v1518
        %v2527 = vpack.c.bf16 %v1524, %v1520
        %v2528 = vpack.c.bf16 %v1875, %v1871
        %v2529 = vpack.c.bf16 %v1877, %v1873
        %v2530 = vpack.c.bf16 %v2228, %v2224
        %v2531 = vpack.c.bf16 %v2230, %v2226
        %v2532 = vpack.c.bf16 %v1179, %v1175
        %v2533 = vpack.c.bf16 %v1181, %v1177
        %v2534 = vpack.c.bf16 %v1532, %v1528
        %v2535 = vpack.c.bf16 %v1534, %v1530
        %v2536 = vpack.c.bf16 %v1885, %v1881
        %v2537 = vpack.c.bf16 %v1887, %v1883
        %v2538 = vpack.c.bf16 %v2238, %v2234
        %v2539 = vpack.c.bf16 %v2240, %v2236
        %v2540 = vpack.c.bf16 %v1189, %v1185
        %v2541 = vpack.c.bf16 %v1191, %v1187
        %v2542 = vpack.c.bf16 %v1542, %v1538
        %v2543 = vpack.c.bf16 %v1544, %v1540
        %v2544 = vpack.c.bf16 %v1895, %v1891
        %v2545 = vpack.c.bf16 %v1897, %v1893
        %v2546 = vpack.c.bf16 %v2248, %v2244
        %v2547 = vpack.c.bf16 %v2250, %v2246
        %v2548 = vpack.c.bf16 %v1199, %v1195
        %v2549 = vpack.c.bf16 %v1201, %v1197
        %v2550 = vpack.c.bf16 %v1552, %v1548
        %v2551 = vpack.c.bf16 %v1554, %v1550
        %v2552 = vpack.c.bf16 %v1905, %v1901
        %v2553 = vpack.c.bf16 %v1907, %v1903
        %v2554 = vpack.c.bf16 %v2258, %v2254
        %v2555 = vpack.c.bf16 %v2260, %v2256
        %v2556 = vpack.c.bf16 %v1209, %v1205
        %v2557 = vpack.c.bf16 %v1211, %v1207
        %v2558 = vpack.c.bf16 %v1562, %v1558
        %v2559 = vpack.c.bf16 %v1564, %v1560
        %v2560 = vpack.c.bf16 %v1915, %v1911
        %v2561 = vpack.c.bf16 %v1917, %v1913
        %v2562 = vpack.c.bf16 %v2268, %v2264
        %v2563 = vpack.c.bf16 %v2270, %v2266
        %v2564 = vpack.c.bf16 %v1219, %v1215
        %v2565 = vpack.c.bf16 %v1221, %v1217
        %v2566 = vpack.c.bf16 %v1572, %v1568
        %v2567 = vpack.c.bf16 %v1574, %v1570
        %v2568 = vpack.c.bf16 %v1925, %v1921
        %v2569 = vpack.c.bf16 %v1927, %v1923
        %v2570 = vpack.c.bf16 %v2278, %v2274
        %v2571 = vpack.c.bf16 %v2280, %v2276
        %v2572 = vpack.c.bf16 %v1229, %v1225
        %v2573 = vpack.c.bf16 %v1231, %v1227
        %v2574 = vpack.c.bf16 %v1582, %v1578
        %v2575 = vpack.c.bf16 %v1584, %v1580
        %v2576 = vpack.c.bf16 %v1935, %v1931
        %v2577 = vpack.c.bf16 %v1937, %v1933
        %v2578 = vpack.c.bf16 %v2288, %v2284
        %v2579 = vpack.c.bf16 %v2290, %v2286
        %v2580 = vpack.c.bf16 %v1239, %v1235
        %v2581 = vpack.c.bf16 %v1241, %v1237
        %v2582 = vpack.c.bf16 %v1592, %v1588
        %v2583 = vpack.c.bf16 %v1594, %v1590
        %v2584 = vpack.c.bf16 %v1945, %v1941
        %v2585 = vpack.c.bf16 %v1947, %v1943
        %v2586 = vpack.c.bf16 %v2298, %v2294
        %v2587 = vpack.c.bf16 %v2300, %v2296
        %v2588 = vpack.c.bf16 %v1249, %v1245
        %v2589 = vpack.c.bf16 %v1251, %v1247
        %v2590 = vpack.c.bf16 %v1602, %v1598
        %v2591 = vpack.c.bf16 %v1604, %v1600
        %v2592 = vpack.c.bf16 %v1955, %v1951
        %v2593 = vpack.c.bf16 %v1957, %v1953
        %v2594 = vpack.c.bf16 %v2308, %v2304
        %v2595 = vpack.c.bf16 %v2310, %v2306
        %v2596 = vpack.c.bf16 %v1259, %v1255
        %v2597 = vpack.c.bf16 %v1261, %v1257
        %v2598 = vpack.c.bf16 %v1612, %v1608
        %v2599 = vpack.c.bf16 %v1614, %v1610
        %v2600 = vpack.c.bf16 %v1965, %v1961
        %v2601 = vpack.c.bf16 %v1967, %v1963
        %v2602 = vpack.c.bf16 %v2318, %v2314
        %v2603 = vpack.c.bf16 %v2320, %v2316
        %v2604 = vpack.c.bf16 %v1269, %v1265
        %v2605 = vpack.c.bf16 %v1271, %v1267
        %v2606 = vpack.c.bf16 %v1622, %v1618
        %v2607 = vpack.c.bf16 %v1624, %v1620
        %v2608 = vpack.c.bf16 %v1975, %v1971
        %v2609 = vpack.c.bf16 %v1977, %v1973
        %v2610 = vpack.c.bf16 %v2328, %v2324
        %v2611 = vpack.c.bf16 %v2330, %v2326
        %v2612 = vpack.c.bf16 %v1279, %v1275
        %v2613 = vpack.c.bf16 %v1281, %v1277
        %v2614 = vpack.c.bf16 %v1632, %v1628
        %v2615 = vpack.c.bf16 %v1634, %v1630
        %v2616 = vpack.c.bf16 %v1985, %v1981
        %v2617 = vpack.c.bf16 %v1987, %v1983
        %v2618 = vpack.c.bf16 %v2338, %v2334
        %v2619 = vpack.c.bf16 %v2340, %v2336
        %v2620 = vpack.c.bf16 %v1289, %v1285
        %v2621 = vpack.c.bf16 %v1291, %v1287
        %v2622 = vpack.c.bf16 %v1642, %v1638
        %v2623 = vpack.c.bf16 %v1644, %v1640
        %v2624 = vpack.c.bf16 %v1995, %v1991
        %v2625 = vpack.c.bf16 %v1997, %v1993
        %v2626 = vpack.c.bf16 %v2348, %v2344
        %v2627 = vpack.c.bf16 %v2350, %v2346
        %v2628 = vpack.c.bf16 %v1299, %v1295
        %v2629 = vpack.c.bf16 %v1301, %v1297
        %v2630 = vpack.c.bf16 %v1652, %v1648
        %v2631 = vpack.c.bf16 %v1654, %v1650
        %v2632 = vpack.c.bf16 %v2005, %v2001
        %v2633 = vpack.c.bf16 %v2007, %v2003
        %v2634 = vpack.c.bf16 %v2358, %v2354
        %v2635 = vpack.c.bf16 %v2360, %v2356
        %v2636 = vpack.c.bf16 %v1309, %v1305
        %v2637 = vpack.c.bf16 %v1311, %v1307
        %v2638 = vpack.c.bf16 %v1662, %v1658
        %v2639 = vpack.c.bf16 %v1664, %v1660
        %v2640 = vpack.c.bf16 %v2015, %v2011
        %v2641 = vpack.c.bf16 %v2017, %v2013
        %v2642 = vpack.c.bf16 %v2368, %v2364
        %v2643 = vpack.c.bf16 %v2370, %v2366
        %v2644 = vpack.c.bf16 %v1319, %v1315
        %v2645 = vpack.c.bf16 %v1321, %v1317
        %v2646 = vpack.c.bf16 %v1672, %v1668
        %v2647 = vpack.c.bf16 %v1674, %v1670
        %v2648 = vpack.c.bf16 %v2025, %v2021
        %v2649 = vpack.c.bf16 %v2027, %v2023
        %v2650 = vpack.c.bf16 %v2378, %v2374
        %v2651 = vpack.c.bf16 %v2380, %v2376
        %v2652 = vpack.c.bf16 %v1329, %v1325
        %v2653 = vpack.c.bf16 %v1331, %v1327
        %v2654 = vpack.c.bf16 %v1682, %v1678
        %v2655 = vpack.c.bf16 %v1684, %v1680
        %v2656 = vpack.c.bf16 %v2035, %v2031
        %v2657 = vpack.c.bf16 %v2037, %v2033
        %v2658 = vpack.c.bf16 %v2388, %v2384
        %v2659 = vpack.c.bf16 %v2390, %v2386
        %v2660 = vpack.c.bf16 %v1339, %v1335
        %v2661 = vpack.c.bf16 %v1341, %v1337
        %v2662 = vpack.c.bf16 %v1692, %v1688
        %v2663 = vpack.c.bf16 %v1694, %v1690
        %v2664 = vpack.c.bf16 %v2045, %v2041
        %v2665 = vpack.c.bf16 %v2047, %v2043
        %v2666 = vpack.c.bf16 %v2398, %v2394
        %v2667 = vpack.c.bf16 %v2400, %v2396
        %v2668 = vpack.c.bf16 %v1349, %v1345
        %v2669 = vpack.c.bf16 %v1351, %v1347
        %v2670 = vpack.c.bf16 %v1702, %v1698
        %v2671 = vpack.c.bf16 %v1704, %v1700
        %v2672 = vpack.c.bf16 %v2055, %v2051
        %v2673 = vpack.c.bf16 %v2057, %v2053
        %v2674 = vpack.c.bf16 %v2408, %v2404
        %v2675 = vpack.c.bf16 %v2410, %v2406
        %v2676 = vpack.c.bf16 %v1359, %v1355
        %v2677 = vpack.c.bf16 %v1361, %v1357
        %v2678 = vpack.c.bf16 %v1712, %v1708
        %v2679 = vpack.c.bf16 %v1714, %v1710
        %v2680 = vpack.c.bf16 %v2065, %v2061
        %v2681 = vpack.c.bf16 %v2067, %v2063
        %v2682 = vpack.c.bf16 %v2418, %v2414
        %v2683 = vpack.c.bf16 %v2420, %v2416
        %v2684 = vpack.c.bf16 %v1369, %v1365
        %v2685 = vpack.c.bf16 %v1371, %v1367
        %v2686 = vpack.c.bf16 %v1722, %v1718
        %v2687 = vpack.c.bf16 %v1724, %v1720
        %v2688 = vpack.c.bf16 %v2075, %v2071
        %v2689 = vpack.c.bf16 %v2077, %v2073
        %v2690 = vpack.c.bf16 %v2428, %v2424
        %v2691 = vpack.c.bf16 %v2430, %v2426
        %v2692 = vpack.c.bf16 %v1379, %v1375
        %v2693 = vpack.c.bf16 %v1381, %v1377
        %v2694 = vpack.c.bf16 %v1732, %v1728
        %v2695 = vpack.c.bf16 %v1734, %v1730
        %v2696 = vpack.c.bf16 %v2085, %v2081
        %v2697 = vpack.c.bf16 %v2087, %v2083
        %v2698 = vpack.c.bf16 %v2438, %v2434
        %v2699 = vpack.c.bf16 %v2440, %v2436
        %v2700 = vpack.c.bf16 %v1389, %v1385
        %v2701 = vpack.c.bf16 %v1391, %v1387
        %v2702 = vpack.c.bf16 %v1742, %v1738
        %v2703 = vpack.c.bf16 %v1744, %v1740
        %v2704 = vpack.c.bf16 %v2095, %v2091
        %v2705 = vpack.c.bf16 %v2097, %v2093
        %v2706 = vpack.c.bf16 %v2448, %v2444
        %v2707 = vpack.c.bf16 %v2450, %v2446
        %v2708 = vld [vmem:[%s2] sm:$0xff]
        %v2710 = vcombine.high %v2708, %v2708
        %v2712 = vunpack.c.l.s4 1966171168
        %v2713 = vunpack.c.0.s8 %v2712
        %v2714 = vlaneseq
        %v2715 = vshrl.u32 %v2714, 7
        %v2716 = vsub.s32 %v2713, %v2715
        %v2717 = vrot.slane %v2708, %v2716
        %v2719 = vunpack.c.l.s4 1966171168
        %v2720 = vunpack.c.0.s8 %v2719
        %v2721 = vlaneseq
        %v2722 = vshrl.u32 %v2721, 7
        %v2723 = vsub.s32 %v2720, %v2722
        %v2724 = vrot.slane %v2710, %v2723
        %v2725 = vcombine.high %v2717, %v2717
        %v2726 = vcombine.high %v2724, %v2724
        %v2728 = vunpack.c.l.s4 1966171168
        %v2729 = vunpack.c.0.s8 %v2728
        %v2730 = vlaneseq
        %v2731 = vshrl.u32 %v2730, 7
        %v2732 = vsub.s32 %v2729, %v2731
        %v2733 = vrot.slane %v2717, %v2732
        %v2735 = vunpack.c.l.s4 1966171168
        %v2736 = vunpack.c.0.s8 %v2735
        %v2737 = vlaneseq
        %v2738 = vshrl.u32 %v2737, 7
        %v2739 = vsub.s32 %v2736, %v2738
        %v2740 = vrot.slane %v2724, %v2739
        %v2742 = vunpack.c.l.s4 1966171168
        %v2743 = vunpack.c.0.s8 %v2742
        %v2744 = vlaneseq
        %v2745 = vshrl.u32 %v2744, 7
        %v2746 = vsub.s32 %v2743, %v2745
        %v2747 = vrot.slane %v2725, %v2746
        %v2749 = vunpack.c.l.s4 1966171168
        %v2750 = vunpack.c.0.s8 %v2749
        %v2751 = vlaneseq
        %v2752 = vshrl.u32 %v2751, 7
        %v2753 = vsub.s32 %v2750, %v2752
        %v2754 = vrot.slane %v2726, %v2753
        %v2755 = vcombine.high %v2733, %v2733
        %v2756 = vcombine.high %v2740, %v2740
        %v2757 = vcombine.high %v2747, %v2747
        %v2758 = vcombine.high %v2754, %v2754
        %v2760 = vpack.i.b16 %v2733, %v2733
        %v2762 = vlaneseq
        %v2763 = vshrl.u32 %v2762, 7
        %v2764 = vsub.s32 0, %v2763
        %v2765 = vrot.slane %v2760, %v2764
        %v2767 = vpack.i.b16 %v2747, %v2747
        %v2769 = vlaneseq
        %v2770 = vshrl.u32 %v2769, 7
        %v2771 = vsub.s32 0, %v2770
        %v2772 = vrot.slane %v2767, %v2771
        %v2774 = vpack.i.b16 %v2755, %v2755
        %v2776 = vlaneseq
        %v2777 = vshrl.u32 %v2776, 7
        %v2778 = vsub.s32 0, %v2777
        %v2779 = vrot.slane %v2774, %v2778
        %v2781 = vpack.i.b16 %v2757, %v2757
        %v2783 = vlaneseq
        %v2784 = vshrl.u32 %v2783, 7
        %v2785 = vsub.s32 0, %v2784
        %v2786 = vrot.slane %v2781, %v2785
        %v2788 = vpack.i.b16 %v2740, %v2740
        %v2790 = vlaneseq
        %v2791 = vshrl.u32 %v2790, 7
        %v2792 = vsub.s32 0, %v2791
        %v2793 = vrot.slane %v2788, %v2792
        %v2795 = vpack.i.b16 %v2754, %v2754
        %v2797 = vlaneseq
        %v2798 = vshrl.u32 %v2797, 7
        %v2799 = vsub.s32 0, %v2798
        %v2800 = vrot.slane %v2795, %v2799
        %v2802 = vpack.i.b16 %v2756, %v2756
        %v2804 = vlaneseq
        %v2805 = vshrl.u32 %v2804, 7
        %v2806 = vsub.s32 0, %v2805
        %v2807 = vrot.slane %v2802, %v2806
        %v2809 = vpack.i.b16 %v2758, %v2758
        %v2811 = vlaneseq
        %v2812 = vshrl.u32 %v2811, 7
        %v2813 = vsub.s32 0, %v2812
        %v2814 = vrot.slane %v2809, %v2813
        %v2815 = vadd.bf16 %v2452, %v2765
        %v2816 = vadd.bf16 %v2453, %v2772
        %v2817 = vadd.bf16 %v2454, %v2779
        %v2818 = vadd.bf16 %v2455, %v2786
        %v2819 = vadd.bf16 %v2456, %v2793
        %v2820 = vadd.bf16 %v2457, %v2800
        %v2821 = vadd.bf16 %v2458, %v2807
        %v2822 = vadd.bf16 %v2459, %v2814
        %v2823 = vadd.bf16 %v2460, %v2765
        %v2824 = vadd.bf16 %v2461, %v2772
        %v2825 = vadd.bf16 %v2462, %v2779
        %v2826 = vadd.bf16 %v2463, %v2786
        %v2827 = vadd.bf16 %v2464, %v2793
        %v2828 = vadd.bf16 %v2465, %v2800
        %v2829 = vadd.bf16 %v2466, %v2807
        %v2830 = vadd.bf16 %v2467, %v2814
        %v2831 = vadd.bf16 %v2468, %v2765
        %v2832 = vadd.bf16 %v2469, %v2772
        %v2833 = vadd.bf16 %v2470, %v2779
        %v2834 = vadd.bf16 %v2471, %v2786
        %v2835 = vadd.bf16 %v2472, %v2793
        %v2836 = vadd.bf16 %v2473, %v2800
        %v2837 = vadd.bf16 %v2474, %v2807
        %v2838 = vadd.bf16 %v2475, %v2814
        %v2839 = vadd.bf16 %v2476, %v2765
        %v2840 = vadd.bf16 %v2477, %v2772
        %v2841 = vadd.bf16 %v2478, %v2779
        %v2842 = vadd.bf16 %v2479, %v2786
        %v2843 = vadd.bf16 %v2480, %v2793
        %v2844 = vadd.bf16 %v2481, %v2800
        %v2845 = vadd.bf16 %v2482, %v2807
        %v2846 = vadd.bf16 %v2483, %v2814
        %v2847 = vadd.bf16 %v2484, %v2765
        %v2848 = vadd.bf16 %v2485, %v2772
        %v2849 = vadd.bf16 %v2486, %v2779
        %v2850 = vadd.bf16 %v2487, %v2786
        %v2851 = vadd.bf16 %v2488, %v2793
        %v2852 = vadd.bf16 %v2489, %v2800
        %v2853 = vadd.bf16 %v2490, %v2807
        %v2854 = vadd.bf16 %v2491, %v2814
        %v2855 = vadd.bf16 %v2492, %v2765
        %v2856 = vadd.bf16 %v2493, %v2772
        %v2857 = vadd.bf16 %v2494, %v2779
        %v2858 = vadd.bf16 %v2495, %v2786
        %v2859 = vadd.bf16 %v2496, %v2793
        %v2860 = vadd.bf16 %v2497, %v2800
        %v2861 = vadd.bf16 %v2498, %v2807
        %v2862 = vadd.bf16 %v2499, %v2814
        %v2863 = vadd.bf16 %v2500, %v2765
        %v2864 = vadd.bf16 %v2501, %v2772
        %v2865 = vadd.bf16 %v2502, %v2779
        %v2866 = vadd.bf16 %v2503, %v2786
        %v2867 = vadd.bf16 %v2504, %v2793
        %v2868 = vadd.bf16 %v2505, %v2800
        %v2869 = vadd.bf16 %v2506, %v2807
        %v2870 = vadd.bf16 %v2507, %v2814
        %v2871 = vadd.bf16 %v2508, %v2765
        %v2872 = vadd.bf16 %v2509, %v2772
        %v2873 = vadd.bf16 %v2510, %v2779
        %v2874 = vadd.bf16 %v2511, %v2786
        %v2875 = vadd.bf16 %v2512, %v2793
        %v2876 = vadd.bf16 %v2513, %v2800
        %v2877 = vadd.bf16 %v2514, %v2807
        %v2878 = vadd.bf16 %v2515, %v2814
        %v2879 = vadd.bf16 %v2516, %v2765
        %v2880 = vadd.bf16 %v2517, %v2772
        %v2881 = vadd.bf16 %v2518, %v2779
        %v2882 = vadd.bf16 %v2519, %v2786
        %v2883 = vadd.bf16 %v2520, %v2793
        %v2884 = vadd.bf16 %v2521, %v2800
        %v2885 = vadd.bf16 %v2522, %v2807
        %v2886 = vadd.bf16 %v2523, %v2814
        %v2887 = vadd.bf16 %v2524, %v2765
        %v2888 = vadd.bf16 %v2525, %v2772
        %v2889 = vadd.bf16 %v2526, %v2779
        %v2890 = vadd.bf16 %v2527, %v2786
        %v2891 = vadd.bf16 %v2528, %v2793
        %v2892 = vadd.bf16 %v2529, %v2800
        %v2893 = vadd.bf16 %v2530, %v2807
        %v2894 = vadd.bf16 %v2531, %v2814
        %v2895 = vadd.bf16 %v2532, %v2765
        %v2896 = vadd.bf16 %v2533, %v2772
        %v2897 = vadd.bf16 %v2534, %v2779
        %v2898 = vadd.bf16 %v2535, %v2786
        %v2899 = vadd.bf16 %v2536, %v2793
        %v2900 = vadd.bf16 %v2537, %v2800
        %v2901 = vadd.bf16 %v2538, %v2807
        %v2902 = vadd.bf16 %v2539, %v2814
        %v2903 = vadd.bf16 %v2540, %v2765
        %v2904 = vadd.bf16 %v2541, %v2772
        %v2905 = vadd.bf16 %v2542, %v2779
        %v2906 = vadd.bf16 %v2543, %v2786
        %v2907 = vadd.bf16 %v2544, %v2793
        %v2908 = vadd.bf16 %v2545, %v2800
        %v2909 = vadd.bf16 %v2546, %v2807
        %v2910 = vadd.bf16 %v2547, %v2814
        %v2911 = vadd.bf16 %v2548, %v2765
        %v2912 = vadd.bf16 %v2549, %v2772
        %v2913 = vadd.bf16 %v2550, %v2779
        %v2914 = vadd.bf16 %v2551, %v2786
        %v2915 = vadd.bf16 %v2552, %v2793
        %v2916 = vadd.bf16 %v2553, %v2800
        %v2917 = vadd.bf16 %v2554, %v2807
        %v2918 = vadd.bf16 %v2555, %v2814
        %v2919 = vadd.bf16 %v2556, %v2765
        %v2920 = vadd.bf16 %v2557, %v2772
        %v2921 = vadd.bf16 %v2558, %v2779
        %v2922 = vadd.bf16 %v2559, %v2786
        %v2923 = vadd.bf16 %v2560, %v2793
        %v2924 = vadd.bf16 %v2561, %v2800
        %v2925 = vadd.bf16 %v2562, %v2807
        %v2926 = vadd.bf16 %v2563, %v2814
        %v2927 = vadd.bf16 %v2564, %v2765
        %v2928 = vadd.bf16 %v2565, %v2772
        %v2929 = vadd.bf16 %v2566, %v2779
        %v2930 = vadd.bf16 %v2567, %v2786
        %v2931 = vadd.bf16 %v2568, %v2793
        %v2932 = vadd.bf16 %v2569, %v2800
        %v2933 = vadd.bf16 %v2570, %v2807
        %v2934 = vadd.bf16 %v2571, %v2814
        %v2935 = vadd.bf16 %v2572, %v2765
        %v2936 = vadd.bf16 %v2573, %v2772
        %v2937 = vadd.bf16 %v2574, %v2779
        %v2938 = vadd.bf16 %v2575, %v2786
        %v2939 = vadd.bf16 %v2576, %v2793
        %v2940 = vadd.bf16 %v2577, %v2800
        %v2941 = vadd.bf16 %v2578, %v2807
        %v2942 = vadd.bf16 %v2579, %v2814
        %v2943 = vadd.bf16 %v2580, %v2765
        %v2944 = vadd.bf16 %v2581, %v2772
        %v2945 = vadd.bf16 %v2582, %v2779
        %v2946 = vadd.bf16 %v2583, %v2786
        %v2947 = vadd.bf16 %v2584, %v2793
        %v2948 = vadd.bf16 %v2585, %v2800
        %v2949 = vadd.bf16 %v2586, %v2807
        %v2950 = vadd.bf16 %v2587, %v2814
        %v2951 = vadd.bf16 %v2588, %v2765
        %v2952 = vadd.bf16 %v2589, %v2772
        %v2953 = vadd.bf16 %v2590, %v2779
        %v2954 = vadd.bf16 %v2591, %v2786
        %v2955 = vadd.bf16 %v2592, %v2793
        %v2956 = vadd.bf16 %v2593, %v2800
        %v2957 = vadd.bf16 %v2594, %v2807
        %v2958 = vadd.bf16 %v2595, %v2814
        %v2959 = vadd.bf16 %v2596, %v2765
        %v2960 = vadd.bf16 %v2597, %v2772
        %v2961 = vadd.bf16 %v2598, %v2779
        %v2962 = vadd.bf16 %v2599, %v2786
        %v2963 = vadd.bf16 %v2600, %v2793
        %v2964 = vadd.bf16 %v2601, %v2800
        %v2965 = vadd.bf16 %v2602, %v2807
        %v2966 = vadd.bf16 %v2603, %v2814
        %v2967 = vadd.bf16 %v2604, %v2765
        %v2968 = vadd.bf16 %v2605, %v2772
        %v2969 = vadd.bf16 %v2606, %v2779
        %v2970 = vadd.bf16 %v2607, %v2786
        %v2971 = vadd.bf16 %v2608, %v2793
        %v2972 = vadd.bf16 %v2609, %v2800
        %v2973 = vadd.bf16 %v2610, %v2807
        %v2974 = vadd.bf16 %v2611, %v2814
        %v2975 = vadd.bf16 %v2612, %v2765
        %v2976 = vadd.bf16 %v2613, %v2772
        %v2977 = vadd.bf16 %v2614, %v2779
        %v2978 = vadd.bf16 %v2615, %v2786
        %v2979 = vadd.bf16 %v2616, %v2793
        %v2980 = vadd.bf16 %v2617, %v2800
        %v2981 = vadd.bf16 %v2618, %v2807
        %v2982 = vadd.bf16 %v2619, %v2814
        %v2983 = vadd.bf16 %v2620, %v2765
        %v2984 = vadd.bf16 %v2621, %v2772
        %v2985 = vadd.bf16 %v2622, %v2779
        %v2986 = vadd.bf16 %v2623, %v2786
        %v2987 = vadd.bf16 %v2624, %v2793
        %v2988 = vadd.bf16 %v2625, %v2800
        %v2989 = vadd.bf16 %v2626, %v2807
        %v2990 = vadd.bf16 %v2627, %v2814
        %v2991 = vadd.bf16 %v2628, %v2765
        %v2992 = vadd.bf16 %v2629, %v2772
        %v2993 = vadd.bf16 %v2630, %v2779
        %v2994 = vadd.bf16 %v2631, %v2786
        %v2995 = vadd.bf16 %v2632, %v2793
        %v2996 = vadd.bf16 %v2633, %v2800
        %v2997 = vadd.bf16 %v2634, %v2807
        %v2998 = vadd.bf16 %v2635, %v2814
        %v2999 = vadd.bf16 %v2636, %v2765
        %v3000 = vadd.bf16 %v2637, %v2772
        %v3001 = vadd.bf16 %v2638, %v2779
        %v3002 = vadd.bf16 %v2639, %v2786
        %v3003 = vadd.bf16 %v2640, %v2793
        %v3004 = vadd.bf16 %v2641, %v2800
        %v3005 = vadd.bf16 %v2642, %v2807
        %v3006 = vadd.bf16 %v2643, %v2814
        %v3007 = vadd.bf16 %v2644, %v2765
        %v3008 = vadd.bf16 %v2645, %v2772
        %v3009 = vadd.bf16 %v2646, %v2779
        %v3010 = vadd.bf16 %v2647, %v2786
        %v3011 = vadd.bf16 %v2648, %v2793
        %v3012 = vadd.bf16 %v2649, %v2800
        %v3013 = vadd.bf16 %v2650, %v2807
        %v3014 = vadd.bf16 %v2651, %v2814
        %v3015 = vadd.bf16 %v2652, %v2765
        %v3016 = vadd.bf16 %v2653, %v2772
        %v3017 = vadd.bf16 %v2654, %v2779
        %v3018 = vadd.bf16 %v2655, %v2786
        %v3019 = vadd.bf16 %v2656, %v2793
        %v3020 = vadd.bf16 %v2657, %v2800
        %v3021 = vadd.bf16 %v2658, %v2807
        %v3022 = vadd.bf16 %v2659, %v2814
        %v3023 = vadd.bf16 %v2660, %v2765
        %v3024 = vadd.bf16 %v2661, %v2772
        %v3025 = vadd.bf16 %v2662, %v2779
        %v3026 = vadd.bf16 %v2663, %v2786
        %v3027 = vadd.bf16 %v2664, %v2793
        %v3028 = vadd.bf16 %v2665, %v2800
        %v3029 = vadd.bf16 %v2666, %v2807
        %v3030 = vadd.bf16 %v2667, %v2814
        %v3031 = vadd.bf16 %v2668, %v2765
        %v3032 = vadd.bf16 %v2669, %v2772
        %v3033 = vadd.bf16 %v2670, %v2779
        %v3034 = vadd.bf16 %v2671, %v2786
        %v3035 = vadd.bf16 %v2672, %v2793
        %v3036 = vadd.bf16 %v2673, %v2800
        %v3037 = vadd.bf16 %v2674, %v2807
        %v3038 = vadd.bf16 %v2675, %v2814
        %v3039 = vadd.bf16 %v2676, %v2765
        %v3040 = vadd.bf16 %v2677, %v2772
        %v3041 = vadd.bf16 %v2678, %v2779
        %v3042 = vadd.bf16 %v2679, %v2786
        %v3043 = vadd.bf16 %v2680, %v2793
        %v3044 = vadd.bf16 %v2681, %v2800
        %v3045 = vadd.bf16 %v2682, %v2807
        %v3046 = vadd.bf16 %v2683, %v2814
        %v3047 = vadd.bf16 %v2684, %v2765
        %v3048 = vadd.bf16 %v2685, %v2772
        %v3049 = vadd.bf16 %v2686, %v2779
        %v3050 = vadd.bf16 %v2687, %v2786
        %v3051 = vadd.bf16 %v2688, %v2793
        %v3052 = vadd.bf16 %v2689, %v2800
        %v3053 = vadd.bf16 %v2690, %v2807
        %v3054 = vadd.bf16 %v2691, %v2814
        %v3055 = vadd.bf16 %v2692, %v2765
        %v3056 = vadd.bf16 %v2693, %v2772
        %v3057 = vadd.bf16 %v2694, %v2779
        %v3058 = vadd.bf16 %v2695, %v2786
        %v3059 = vadd.bf16 %v2696, %v2793
        %v3060 = vadd.bf16 %v2697, %v2800
        %v3061 = vadd.bf16 %v2698, %v2807
        %v3062 = vadd.bf16 %v2699, %v2814
        %v3063 = vadd.bf16 %v2700, %v2765
        %v3064 = vadd.bf16 %v2701, %v2772
        %v3065 = vadd.bf16 %v2702, %v2779
        %v3066 = vadd.bf16 %v2703, %v2786
        %v3067 = vadd.bf16 %v2704, %v2793
        %v3068 = vadd.bf16 %v2705, %v2800
        %v3069 = vadd.bf16 %v2706, %v2807
        %v3070 = vadd.bf16 %v2707, %v2814
        %v3071 = vmax.bf16 %v2815, 0
        %v3072 = vmax.bf16 %v2816, 0
        %v3073 = vmax.bf16 %v2817, 0
        %v3074 = vmax.bf16 %v2818, 0
        %v3075 = vmax.bf16 %v2819, 0
        %v3076 = vmax.bf16 %v2820, 0
        %v3077 = vmax.bf16 %v2821, 0
        %v3078 = vmax.bf16 %v2822, 0
        %v3079 = vmax.bf16 %v2823, 0
        %v3080 = vmax.bf16 %v2824, 0
        %v3081 = vmax.bf16 %v2825, 0
        %v3082 = vmax.bf16 %v2826, 0
        %v3083 = vmax.bf16 %v2827, 0
        %v3084 = vmax.bf16 %v2828, 0
        %v3085 = vmax.bf16 %v2829, 0
        %v3086 = vmax.bf16 %v2830, 0
        %v3087 = vmax.bf16 %v2831, 0
        %v3088 = vmax.bf16 %v2832, 0
        %v3089 = vmax.bf16 %v2833, 0
        %v3090 = vmax.bf16 %v2834, 0
        %v3091 = vmax.bf16 %v2835, 0
        %v3092 = vmax.bf16 %v2836, 0
        %v3093 = vmax.bf16 %v2837, 0
        %v3094 = vmax.bf16 %v2838, 0
        %v3095 = vmax.bf16 %v2839, 0
        %v3096 = vmax.bf16 %v2840, 0
        %v3097 = vmax.bf16 %v2841, 0
        %v3098 = vmax.bf16 %v2842, 0
        %v3099 = vmax.bf16 %v2843, 0
        %v3100 = vmax.bf16 %v2844, 0
        %v3101 = vmax.bf16 %v2845, 0
        %v3102 = vmax.bf16 %v2846, 0
        %v3103 = vmax.bf16 %v2847, 0
        %v3104 = vmax.bf16 %v2848, 0
        %v3105 = vmax.bf16 %v2849, 0
        %v3106 = vmax.bf16 %v2850, 0
        %v3107 = vmax.bf16 %v2851, 0
        %v3108 = vmax.bf16 %v2852, 0
        %v3109 = vmax.bf16 %v2853, 0
        %v3110 = vmax.bf16 %v2854, 0
        %v3111 = vmax.bf16 %v2855, 0
        %v3112 = vmax.bf16 %v2856, 0
        %v3113 = vmax.bf16 %v2857, 0
        %v3114 = vmax.bf16 %v2858, 0
        %v3115 = vmax.bf16 %v2859, 0
        %v3116 = vmax.bf16 %v2860, 0
        %v3117 = vmax.bf16 %v2861, 0
        %v3118 = vmax.bf16 %v2862, 0
        %v3119 = vmax.bf16 %v2863, 0
        %v3120 = vmax.bf16 %v2864, 0
        %v3121 = vmax.bf16 %v2865, 0
        %v3122 = vmax.bf16 %v2866, 0
        %v3123 = vmax.bf16 %v2867, 0
        %v3124 = vmax.bf16 %v2868, 0
        %v3125 = vmax.bf16 %v2869, 0
        %v3126 = vmax.bf16 %v2870, 0
        %v3127 = vmax.bf16 %v2871, 0
        %v3128 = vmax.bf16 %v2872, 0
        %v3129 = vmax.bf16 %v2873, 0
        %v3130 = vmax.bf16 %v2874, 0
        %v3131 = vmax.bf16 %v2875, 0
        %v3132 = vmax.bf16 %v2876, 0
        %v3133 = vmax.bf16 %v2877, 0
        %v3134 = vmax.bf16 %v2878, 0
        %v3135 = vmax.bf16 %v2879, 0
        %v3136 = vmax.bf16 %v2880, 0
        %v3137 = vmax.bf16 %v2881, 0
        %v3138 = vmax.bf16 %v2882, 0
        %v3139 = vmax.bf16 %v2883, 0
        %v3140 = vmax.bf16 %v2884, 0
        %v3141 = vmax.bf16 %v2885, 0
        %v3142 = vmax.bf16 %v2886, 0
        %v3143 = vmax.bf16 %v2887, 0
        %v3144 = vmax.bf16 %v2888, 0
        %v3145 = vmax.bf16 %v2889, 0
        %v3146 = vmax.bf16 %v2890, 0
        %v3147 = vmax.bf16 %v2891, 0
        %v3148 = vmax.bf16 %v2892, 0
        %v3149 = vmax.bf16 %v2893, 0
        %v3150 = vmax.bf16 %v2894, 0
        %v3151 = vmax.bf16 %v2895, 0
        %v3152 = vmax.bf16 %v2896, 0
        %v3153 = vmax.bf16 %v2897, 0
        %v3154 = vmax.bf16 %v2898, 0
        %v3155 = vmax.bf16 %v2899, 0
        %v3156 = vmax.bf16 %v2900, 0
        %v3157 = vmax.bf16 %v2901, 0
        %v3158 = vmax.bf16 %v2902, 0
        %v3159 = vmax.bf16 %v2903, 0
        %v3160 = vmax.bf16 %v2904, 0
        %v3161 = vmax.bf16 %v2905, 0
        %v3162 = vmax.bf16 %v2906, 0
        %v3163 = vmax.bf16 %v2907, 0
        %v3164 = vmax.bf16 %v2908, 0
        %v3165 = vmax.bf16 %v2909, 0
        %v3166 = vmax.bf16 %v2910, 0
        %v3167 = vmax.bf16 %v2911, 0
        %v3168 = vmax.bf16 %v2912, 0
        %v3169 = vmax.bf16 %v2913, 0
        %v3170 = vmax.bf16 %v2914, 0
        %v3171 = vmax.bf16 %v2915, 0
        %v3172 = vmax.bf16 %v2916, 0
        %v3173 = vmax.bf16 %v2917, 0
        %v3174 = vmax.bf16 %v2918, 0
        %v3175 = vmax.bf16 %v2919, 0
        %v3176 = vmax.bf16 %v2920, 0
        %v3177 = vmax.bf16 %v2921, 0
        %v3178 = vmax.bf16 %v2922, 0
        %v3179 = vmax.bf16 %v2923, 0
        %v3180 = vmax.bf16 %v2924, 0
        %v3181 = vmax.bf16 %v2925, 0
        %v3182 = vmax.bf16 %v2926, 0
        %v3183 = vmax.bf16 %v2927, 0
        %v3184 = vmax.bf16 %v2928, 0
        %v3185 = vmax.bf16 %v2929, 0
        %v3186 = vmax.bf16 %v2930, 0
        %v3187 = vmax.bf16 %v2931, 0
        %v3188 = vmax.bf16 %v2932, 0
        %v3189 = vmax.bf16 %v2933, 0
        %v3190 = vmax.bf16 %v2934, 0
        %v3191 = vmax.bf16 %v2935, 0
        %v3192 = vmax.bf16 %v2936, 0
        %v3193 = vmax.bf16 %v2937, 0
        %v3194 = vmax.bf16 %v2938, 0
        %v3195 = vmax.bf16 %v2939, 0
        %v3196 = vmax.bf16 %v2940, 0
        %v3197 = vmax.bf16 %v2941, 0
        %v3198 = vmax.bf16 %v2942, 0
        %v3199 = vmax.bf16 %v2943, 0
        %v3200 = vmax.bf16 %v2944, 0
        %v3201 = vmax.bf16 %v2945, 0
        %v3202 = vmax.bf16 %v2946, 0
        %v3203 = vmax.bf16 %v2947, 0
        %v3204 = vmax.bf16 %v2948, 0
        %v3205 = vmax.bf16 %v2949, 0
        %v3206 = vmax.bf16 %v2950, 0
        %v3207 = vmax.bf16 %v2951, 0
        %v3208 = vmax.bf16 %v2952, 0
        %v3209 = vmax.bf16 %v2953, 0
        %v3210 = vmax.bf16 %v2954, 0
        %v3211 = vmax.bf16 %v2955, 0
        %v3212 = vmax.bf16 %v2956, 0
        %v3213 = vmax.bf16 %v2957, 0
        %v3214 = vmax.bf16 %v2958, 0
        %v3215 = vmax.bf16 %v2959, 0
        %v3216 = vmax.bf16 %v2960, 0
        %v3217 = vmax.bf16 %v2961, 0
        %v3218 = vmax.bf16 %v2962, 0
        %v3219 = vmax.bf16 %v2963, 0
        %v3220 = vmax.bf16 %v2964, 0
        %v3221 = vmax.bf16 %v2965, 0
        %v3222 = vmax.bf16 %v2966, 0
        %v3223 = vmax.bf16 %v2967, 0
        %v3224 = vmax.bf16 %v2968, 0
        %v3225 = vmax.bf16 %v2969, 0
        %v3226 = vmax.bf16 %v2970, 0
        %v3227 = vmax.bf16 %v2971, 0
        %v3228 = vmax.bf16 %v2972, 0
        %v3229 = vmax.bf16 %v2973, 0
        %v3230 = vmax.bf16 %v2974, 0
        %v3231 = vmax.bf16 %v2975, 0
        %v3232 = vmax.bf16 %v2976, 0
        %v3233 = vmax.bf16 %v2977, 0
        %v3234 = vmax.bf16 %v2978, 0
        %v3235 = vmax.bf16 %v2979, 0
        %v3236 = vmax.bf16 %v2980, 0
        %v3237 = vmax.bf16 %v2981, 0
        %v3238 = vmax.bf16 %v2982, 0
        %v3239 = vmax.bf16 %v2983, 0
        %v3240 = vmax.bf16 %v2984, 0
        %v3241 = vmax.bf16 %v2985, 0
        %v3242 = vmax.bf16 %v2986, 0
        %v3243 = vmax.bf16 %v2987, 0
        %v3244 = vmax.bf16 %v2988, 0
        %v3245 = vmax.bf16 %v2989, 0
        %v3246 = vmax.bf16 %v2990, 0
        %v3247 = vmax.bf16 %v2991, 0
        %v3248 = vmax.bf16 %v2992, 0
        %v3249 = vmax.bf16 %v2993, 0
        %v3250 = vmax.bf16 %v2994, 0
        %v3251 = vmax.bf16 %v2995, 0
        %v3252 = vmax.bf16 %v2996, 0
        %v3253 = vmax.bf16 %v2997, 0
        %v3254 = vmax.bf16 %v2998, 0
        %v3255 = vmax.bf16 %v2999, 0
        %v3256 = vmax.bf16 %v3000, 0
        %v3257 = vmax.bf16 %v3001, 0
        %v3258 = vmax.bf16 %v3002, 0
        %v3259 = vmax.bf16 %v3003, 0
        %v3260 = vmax.bf16 %v3004, 0
        %v3261 = vmax.bf16 %v3005, 0
        %v3262 = vmax.bf16 %v3006, 0
        %v3263 = vmax.bf16 %v3007, 0
        %v3264 = vmax.bf16 %v3008, 0
        %v3265 = vmax.bf16 %v3009, 0
        %v3266 = vmax.bf16 %v3010, 0
        %v3267 = vmax.bf16 %v3011, 0
        %v3268 = vmax.bf16 %v3012, 0
        %v3269 = vmax.bf16 %v3013, 0
        %v3270 = vmax.bf16 %v3014, 0
        %v3271 = vmax.bf16 %v3015, 0
        %v3272 = vmax.bf16 %v3016, 0
        %v3273 = vmax.bf16 %v3017, 0
        %v3274 = vmax.bf16 %v3018, 0
        %v3275 = vmax.bf16 %v3019, 0
        %v3276 = vmax.bf16 %v3020, 0
        %v3277 = vmax.bf16 %v3021, 0
        %v3278 = vmax.bf16 %v3022, 0
        %v3279 = vmax.bf16 %v3023, 0
        %v3280 = vmax.bf16 %v3024, 0
        %v3281 = vmax.bf16 %v3025, 0
        %v3282 = vmax.bf16 %v3026, 0
        %v3283 = vmax.bf16 %v3027, 0
        %v3284 = vmax.bf16 %v3028, 0
        %v3285 = vmax.bf16 %v3029, 0
        %v3286 = vmax.bf16 %v3030, 0
        %v3287 = vmax.bf16 %v3031, 0
        %v3288 = vmax.bf16 %v3032, 0
        %v3289 = vmax.bf16 %v3033, 0
        %v3290 = vmax.bf16 %v3034, 0
        %v3291 = vmax.bf16 %v3035, 0
        %v3292 = vmax.bf16 %v3036, 0
        %v3293 = vmax.bf16 %v3037, 0
        %v3294 = vmax.bf16 %v3038, 0
        %v3295 = vmax.bf16 %v3039, 0
        %v3296 = vmax.bf16 %v3040, 0
        %v3297 = vmax.bf16 %v3041, 0
        %v3298 = vmax.bf16 %v3042, 0
        %v3299 = vmax.bf16 %v3043, 0
        %v3300 = vmax.bf16 %v3044, 0
        %v3301 = vmax.bf16 %v3045, 0
        %v3302 = vmax.bf16 %v3046, 0
        %v3303 = vmax.bf16 %v3047, 0
        %v3304 = vmax.bf16 %v3048, 0
        %v3305 = vmax.bf16 %v3049, 0
        %v3306 = vmax.bf16 %v3050, 0
        %v3307 = vmax.bf16 %v3051, 0
        %v3308 = vmax.bf16 %v3052, 0
        %v3309 = vmax.bf16 %v3053, 0
        %v3310 = vmax.bf16 %v3054, 0
        %v3311 = vmax.bf16 %v3055, 0
        %v3312 = vmax.bf16 %v3056, 0
        %v3313 = vmax.bf16 %v3057, 0
        %v3314 = vmax.bf16 %v3058, 0
        %v3315 = vmax.bf16 %v3059, 0
        %v3316 = vmax.bf16 %v3060, 0
        %v3317 = vmax.bf16 %v3061, 0
        %v3318 = vmax.bf16 %v3062, 0
        %v3319 = vmax.bf16 %v3063, 0
        %v3320 = vmax.bf16 %v3064, 0
        %v3321 = vmax.bf16 %v3065, 0
        %v3322 = vmax.bf16 %v3066, 0
        %v3323 = vmax.bf16 %v3067, 0
        %v3324 = vmax.bf16 %v3068, 0
        %v3325 = vmax.bf16 %v3069, 0
        %v3326 = vmax.bf16 %v3070, 0
        %v3327 = vld [vmem:[#allocation8] sm:$0xff]
        %v3328 = vld [vmem:[#allocation8 + $0x8] sm:$0xff]
        %v3329 = vld [vmem:[#allocation8 + $0x10] sm:$0xff]
        %v3330 = vld [vmem:[#allocation8 + $0x18] sm:$0xff]
        %v3331 = vld [vmem:[#allocation8 + $0x20] sm:$0xff]
        %v3332 = vld [vmem:[#allocation8 + $0x28] sm:$0xff]
        %v3333 = vld [vmem:[#allocation8 + $0x30] sm:$0xff]
        %v3334 = vld [vmem:[#allocation8 + $0x38] sm:$0xff]
        %v3335 = vld [vmem:[#allocation8 + $0x40] sm:$0xff]
        %v3336 = vld [vmem:[#allocation8 + $0x48] sm:$0xff]
        %v3337 = vld [vmem:[#allocation8 + $0x50] sm:$0xff]
        %v3338 = vld [vmem:[#allocation8 + $0x58] sm:$0xff]
        %v3339 = vld [vmem:[#allocation8 + $0x60] sm:$0xff]
        %v3340 = vld [vmem:[#allocation8 + $0x68] sm:$0xff]
        %v3341 = vld [vmem:[#allocation8 + $0x70] sm:$0xff]
        %v3342 = vld [vmem:[#allocation8 + $0x78] sm:$0xff]
        %v3343 = vld [vmem:[#allocation8 + $0x80] sm:$0xff]
        %v3344 = vld [vmem:[#allocation8 + $0x88] sm:$0xff]
        %v3345 = vld [vmem:[#allocation8 + $0x90] sm:$0xff]
        %v3346 = vld [vmem:[#allocation8 + $0x98] sm:$0xff]
        %v3347 = vld [vmem:[#allocation8 + $0xa0] sm:$0xff]
        %v3348 = vld [vmem:[#allocation8 + $0xa8] sm:$0xff]
        %v3349 = vld [vmem:[#allocation8 + $0xb0] sm:$0xff]
        %v3350 = vld [vmem:[#allocation8 + $0xb8] sm:$0xff]
        %v3351 = vld [vmem:[#allocation8 + $0xc0] sm:$0xff]
        %v3352 = vld [vmem:[#allocation8 + $0xc8] sm:$0xff]
        %v3353 = vld [vmem:[#allocation8 + $0xd0] sm:$0xff]
        %v3354 = vld [vmem:[#allocation8 + $0xd8] sm:$0xff]
        %v3355 = vld [vmem:[#allocation8 + $0xe0] sm:$0xff]
        %v3356 = vld [vmem:[#allocation8 + $0xe8] sm:$0xff]
        %v3357 = vld [vmem:[#allocation8 + $0xf0] sm:$0xff]
        %v3358 = vld [vmem:[#allocation8 + $0xf8] sm:$0xff]
        %v3359 = vld [vmem:[#allocation8 + $0x100] sm:$0xff]
        %v3360 = vld [vmem:[#allocation8 + $0x108] sm:$0xff]
        %v3361 = vld [vmem:[#allocation8 + $0x110] sm:$0xff]
        %v3362 = vld [vmem:[#allocation8 + $0x118] sm:$0xff]
        %v3363 = vld [vmem:[#allocation8 + $0x120] sm:$0xff]
        %v3364 = vld [vmem:[#allocation8 + $0x128] sm:$0xff]
        %v3365 = vld [vmem:[#allocation8 + $0x130] sm:$0xff]
        %v3366 = vld [vmem:[#allocation8 + $0x138] sm:$0xff]
        %v3367 = vld [vmem:[#allocation8 + $0x140] sm:$0xff]
        %v3368 = vld [vmem:[#allocation8 + $0x148] sm:$0xff]
        %v3369 = vld [vmem:[#allocation8 + $0x150] sm:$0xff]
        %v3370 = vld [vmem:[#allocation8 + $0x158] sm:$0xff]
        %v3371 = vld [vmem:[#allocation8 + $0x160] sm:$0xff]
        %v3372 = vld [vmem:[#allocation8 + $0x168] sm:$0xff]
        %v3373 = vld [vmem:[#allocation8 + $0x170] sm:$0xff]
        %v3374 = vld [vmem:[#allocation8 + $0x178] sm:$0xff]
        %v3375 = vld [vmem:[#allocation8 + $0x180] sm:$0xff]
        %v3376 = vld [vmem:[#allocation8 + $0x188] sm:$0xff]
        %v3377 = vld [vmem:[#allocation8 + $0x190] sm:$0xff]
        %v3378 = vld [vmem:[#allocation8 + $0x198] sm:$0xff]
        %v3379 = vld [vmem:[#allocation8 + $0x1a0] sm:$0xff]
        %v3380 = vld [vmem:[#allocation8 + $0x1a8] sm:$0xff]
        %v3381 = vld [vmem:[#allocation8 + $0x1b0] sm:$0xff]
        %v3382 = vld [vmem:[#allocation8 + $0x1b8] sm:$0xff]
        %v3383 = vld [vmem:[#allocation8 + $0x1c0] sm:$0xff]
        %v3384 = vld [vmem:[#allocation8 + $0x1c8] sm:$0xff]
        %v3385 = vld [vmem:[#allocation8 + $0x1d0] sm:$0xff]
        %v3386 = vld [vmem:[#allocation8 + $0x1d8] sm:$0xff]
        %v3387 = vld [vmem:[#allocation8 + $0x1e0] sm:$0xff]
        %v3388 = vld [vmem:[#allocation8 + $0x1e8] sm:$0xff]
        %v3389 = vld [vmem:[#allocation8 + $0x1f0] sm:$0xff]
        %v3390 = vld [vmem:[#allocation8 + $0x1f8] sm:$0xff]
        %v3391 = vld [vmem:[#allocation8 + $0x200] sm:$0xff]
        %v3392 = vld [vmem:[#allocation8 + $0x208] sm:$0xff]
        %v3393 = vld [vmem:[#allocation8 + $0x210] sm:$0xff]
        %v3394 = vld [vmem:[#allocation8 + $0x218] sm:$0xff]
        %v3395 = vld [vmem:[#allocation8 + $0x220] sm:$0xff]
        %v3396 = vld [vmem:[#allocation8 + $0x228] sm:$0xff]
        %v3397 = vld [vmem:[#allocation8 + $0x230] sm:$0xff]
        %v3398 = vld [vmem:[#allocation8 + $0x238] sm:$0xff]
        %v3399 = vld [vmem:[#allocation8 + $0x240] sm:$0xff]
        %v3400 = vld [vmem:[#allocation8 + $0x248] sm:$0xff]
        %v3401 = vld [vmem:[#allocation8 + $0x250] sm:$0xff]
        %v3402 = vld [vmem:[#allocation8 + $0x258] sm:$0xff]
        %v3403 = vld [vmem:[#allocation8 + $0x260] sm:$0xff]
        %v3404 = vld [vmem:[#allocation8 + $0x268] sm:$0xff]
        %v3405 = vld [vmem:[#allocation8 + $0x270] sm:$0xff]
        %v3406 = vld [vmem:[#allocation8 + $0x278] sm:$0xff]
        %v3407 = vld [vmem:[#allocation8 + $0x280] sm:$0xff]
        %v3408 = vld [vmem:[#allocation8 + $0x288] sm:$0xff]
        %v3409 = vld [vmem:[#allocation8 + $0x290] sm:$0xff]
        %v3410 = vld [vmem:[#allocation8 + $0x298] sm:$0xff]
        %v3411 = vld [vmem:[#allocation8 + $0x2a0] sm:$0xff]
        %v3412 = vld [vmem:[#allocation8 + $0x2a8] sm:$0xff]
        %v3413 = vld [vmem:[#allocation8 + $0x2b0] sm:$0xff]
        %v3414 = vld [vmem:[#allocation8 + $0x2b8] sm:$0xff]
        %v3415 = vld [vmem:[#allocation8 + $0x2c0] sm:$0xff]
        %v3416 = vld [vmem:[#allocation8 + $0x2c8] sm:$0xff]
        %v3417 = vld [vmem:[#allocation8 + $0x2d0] sm:$0xff]
        %v3418 = vld [vmem:[#allocation8 + $0x2d8] sm:$0xff]
        %v3419 = vld [vmem:[#allocation8 + $0x2e0] sm:$0xff]
        %v3420 = vld [vmem:[#allocation8 + $0x2e8] sm:$0xff]
        %v3421 = vld [vmem:[#allocation8 + $0x2f0] sm:$0xff]
        %v3422 = vld [vmem:[#allocation8 + $0x2f8] sm:$0xff]
        %v3423 = vld [vmem:[#allocation8 + $0x300] sm:$0xff]
        %v3424 = vld [vmem:[#allocation8 + $0x308] sm:$0xff]
        %v3425 = vld [vmem:[#allocation8 + $0x310] sm:$0xff]
        %v3426 = vld [vmem:[#allocation8 + $0x318] sm:$0xff]
        %v3427 = vld [vmem:[#allocation8 + $0x320] sm:$0xff]
        %v3428 = vld [vmem:[#allocation8 + $0x328] sm:$0xff]
        %v3429 = vld [vmem:[#allocation8 + $0x330] sm:$0xff]
        %v3430 = vld [vmem:[#allocation8 + $0x338] sm:$0xff]
        %v3431 = vld [vmem:[#allocation8 + $0x340] sm:$0xff]
        %v3432 = vld [vmem:[#allocation8 + $0x348] sm:$0xff]
        %v3433 = vld [vmem:[#allocation8 + $0x350] sm:$0xff]
        %v3434 = vld [vmem:[#allocation8 + $0x358] sm:$0xff]
        %v3435 = vld [vmem:[#allocation8 + $0x360] sm:$0xff]
        %v3436 = vld [vmem:[#allocation8 + $0x368] sm:$0xff]
        %v3437 = vld [vmem:[#allocation8 + $0x370] sm:$0xff]
        %v3438 = vld [vmem:[#allocation8 + $0x378] sm:$0xff]
        %v3439 = vld [vmem:[#allocation8 + $0x380] sm:$0xff]
        %v3440 = vld [vmem:[#allocation8 + $0x388] sm:$0xff]
        %v3441 = vld [vmem:[#allocation8 + $0x390] sm:$0xff]
        %v3442 = vld [vmem:[#allocation8 + $0x398] sm:$0xff]
        %v3443 = vld [vmem:[#allocation8 + $0x3a0] sm:$0xff]
        %v3444 = vld [vmem:[#allocation8 + $0x3a8] sm:$0xff]
        %v3445 = vld [vmem:[#allocation8 + $0x3b0] sm:$0xff]
        %v3446 = vld [vmem:[#allocation8 + $0x3b8] sm:$0xff]
        %v3447 = vld [vmem:[#allocation8 + $0x3c0] sm:$0xff]
        %v3448 = vld [vmem:[#allocation8 + $0x3c8] sm:$0xff]
        %v3449 = vld [vmem:[#allocation8 + $0x3d0] sm:$0xff]
        %v3450 = vld [vmem:[#allocation8 + $0x3d8] sm:$0xff]
        %v3451 = vld [vmem:[#allocation8 + $0x3e0] sm:$0xff]
        %v3452 = vld [vmem:[#allocation8 + $0x3e8] sm:$0xff]
        %v3453 = vld [vmem:[#allocation8 + $0x3f0] sm:$0xff]
        %v3454 = vld [vmem:[#allocation8 + $0x3f8] sm:$0xff]
        %v3455 = vld [vmem:[#allocation8 + $0x400] sm:$0xff]
        %v3456 = vld [vmem:[#allocation8 + $0x408] sm:$0xff]
        %v3457 = vld [vmem:[#allocation8 + $0x410] sm:$0xff]
        %v3458 = vld [vmem:[#allocation8 + $0x418] sm:$0xff]
        %v3459 = vld [vmem:[#allocation8 + $0x420] sm:$0xff]
        %v3460 = vld [vmem:[#allocation8 + $0x428] sm:$0xff]
        %v3461 = vld [vmem:[#allocation8 + $0x430] sm:$0xff]
        %v3462 = vld [vmem:[#allocation8 + $0x438] sm:$0xff]
        %v3463 = vld [vmem:[#allocation8 + $0x440] sm:$0xff]
        %v3464 = vld [vmem:[#allocation8 + $0x448] sm:$0xff]
        %v3465 = vld [vmem:[#allocation8 + $0x450] sm:$0xff]
        %v3466 = vld [vmem:[#allocation8 + $0x458] sm:$0xff]
        %v3467 = vld [vmem:[#allocation8 + $0x460] sm:$0xff]
        %v3468 = vld [vmem:[#allocation8 + $0x468] sm:$0xff]
        %v3469 = vld [vmem:[#allocation8 + $0x470] sm:$0xff]
        %v3470 = vld [vmem:[#allocation8 + $0x478] sm:$0xff]
        %v3471 = vld [vmem:[#allocation8 + $0x480] sm:$0xff]
        %v3472 = vld [vmem:[#allocation8 + $0x488] sm:$0xff]
        %v3473 = vld [vmem:[#allocation8 + $0x490] sm:$0xff]
        %v3474 = vld [vmem:[#allocation8 + $0x498] sm:$0xff]
        %v3475 = vld [vmem:[#allocation8 + $0x4a0] sm:$0xff]
        %v3476 = vld [vmem:[#allocation8 + $0x4a8] sm:$0xff]
        %v3477 = vld [vmem:[#allocation8 + $0x4b0] sm:$0xff]
        %v3478 = vld [vmem:[#allocation8 + $0x4b8] sm:$0xff]
        %v3479 = vld [vmem:[#allocation8 + $0x4c0] sm:$0xff]
        %v3480 = vld [vmem:[#allocation8 + $0x4c8] sm:$0xff]
        %v3481 = vld [vmem:[#allocation8 + $0x4d0] sm:$0xff]
        %v3482 = vld [vmem:[#allocation8 + $0x4d8] sm:$0xff]
        %v3483 = vld [vmem:[#allocation8 + $0x4e0] sm:$0xff]
        %v3484 = vld [vmem:[#allocation8 + $0x4e8] sm:$0xff]
        %v3485 = vld [vmem:[#allocation8 + $0x4f0] sm:$0xff]
        %v3486 = vld [vmem:[#allocation8 + $0x4f8] sm:$0xff]
        %v3487 = vld [vmem:[#allocation8 + $0x500] sm:$0xff]
        %v3488 = vld [vmem:[#allocation8 + $0x508] sm:$0xff]
        %v3489 = vld [vmem:[#allocation8 + $0x510] sm:$0xff]
        %v3490 = vld [vmem:[#allocation8 + $0x518] sm:$0xff]
        %v3491 = vld [vmem:[#allocation8 + $0x520] sm:$0xff]
        %v3492 = vld [vmem:[#allocation8 + $0x528] sm:$0xff]
        %v3493 = vld [vmem:[#allocation8 + $0x530] sm:$0xff]
        %v3494 = vld [vmem:[#allocation8 + $0x538] sm:$0xff]
        %v3495 = vld [vmem:[#allocation8 + $0x540] sm:$0xff]
        %v3496 = vld [vmem:[#allocation8 + $0x548] sm:$0xff]
        %v3497 = vld [vmem:[#allocation8 + $0x550] sm:$0xff]
        %v3498 = vld [vmem:[#allocation8 + $0x558] sm:$0xff]
        %v3499 = vld [vmem:[#allocation8 + $0x560] sm:$0xff]
        %v3500 = vld [vmem:[#allocation8 + $0x568] sm:$0xff]
        %v3501 = vld [vmem:[#allocation8 + $0x570] sm:$0xff]
        %v3502 = vld [vmem:[#allocation8 + $0x578] sm:$0xff]
        %v3503 = vld [vmem:[#allocation8 + $0x580] sm:$0xff]
        %v3504 = vld [vmem:[#allocation8 + $0x588] sm:$0xff]
        %v3505 = vld [vmem:[#allocation8 + $0x590] sm:$0xff]
        %v3506 = vld [vmem:[#allocation8 + $0x598] sm:$0xff]
        %v3507 = vld [vmem:[#allocation8 + $0x5a0] sm:$0xff]
        %v3508 = vld [vmem:[#allocation8 + $0x5a8] sm:$0xff]
        %v3509 = vld [vmem:[#allocation8 + $0x5b0] sm:$0xff]
        %v3510 = vld [vmem:[#allocation8 + $0x5b8] sm:$0xff]
        %v3511 = vld [vmem:[#allocation8 + $0x5c0] sm:$0xff]
        %v3512 = vld [vmem:[#allocation8 + $0x5c8] sm:$0xff]
        %v3513 = vld [vmem:[#allocation8 + $0x5d0] sm:$0xff]
        %v3514 = vld [vmem:[#allocation8 + $0x5d8] sm:$0xff]
        %v3515 = vld [vmem:[#allocation8 + $0x5e0] sm:$0xff]
        %v3516 = vld [vmem:[#allocation8 + $0x5e8] sm:$0xff]
        %v3517 = vld [vmem:[#allocation8 + $0x5f0] sm:$0xff]
        %v3518 = vld [vmem:[#allocation8 + $0x5f8] sm:$0xff]
        %v3519 = vld [vmem:[#allocation8 + $0x600] sm:$0xff]
        %v3520 = vld [vmem:[#allocation8 + $0x608] sm:$0xff]
        %v3521 = vld [vmem:[#allocation8 + $0x610] sm:$0xff]
        %v3522 = vld [vmem:[#allocation8 + $0x618] sm:$0xff]
        %v3523 = vld [vmem:[#allocation8 + $0x620] sm:$0xff]
        %v3524 = vld [vmem:[#allocation8 + $0x628] sm:$0xff]
        %v3525 = vld [vmem:[#allocation8 + $0x630] sm:$0xff]
        %v3526 = vld [vmem:[#allocation8 + $0x638] sm:$0xff]
        %v3527 = vld [vmem:[#allocation8 + $0x640] sm:$0xff]
        %v3528 = vld [vmem:[#allocation8 + $0x648] sm:$0xff]
        %v3529 = vld [vmem:[#allocation8 + $0x650] sm:$0xff]
        %v3530 = vld [vmem:[#allocation8 + $0x658] sm:$0xff]
        %v3531 = vld [vmem:[#allocation8 + $0x660] sm:$0xff]
        %v3532 = vld [vmem:[#allocation8 + $0x668] sm:$0xff]
        %v3533 = vld [vmem:[#allocation8 + $0x670] sm:$0xff]
        %v3534 = vld [vmem:[#allocation8 + $0x678] sm:$0xff]
        %v3535 = vld [vmem:[#allocation8 + $0x680] sm:$0xff]
        %v3536 = vld [vmem:[#allocation8 + $0x688] sm:$0xff]
        %v3537 = vld [vmem:[#allocation8 + $0x690] sm:$0xff]
        %v3538 = vld [vmem:[#allocation8 + $0x698] sm:$0xff]
        %v3539 = vld [vmem:[#allocation8 + $0x6a0] sm:$0xff]
        %v3540 = vld [vmem:[#allocation8 + $0x6a8] sm:$0xff]
        %v3541 = vld [vmem:[#allocation8 + $0x6b0] sm:$0xff]
        %v3542 = vld [vmem:[#allocation8 + $0x6b8] sm:$0xff]
        %v3543 = vld [vmem:[#allocation8 + $0x6c0] sm:$0xff]
        %v3544 = vld [vmem:[#allocation8 + $0x6c8] sm:$0xff]
        %v3545 = vld [vmem:[#allocation8 + $0x6d0] sm:$0xff]
        %v3546 = vld [vmem:[#allocation8 + $0x6d8] sm:$0xff]
        %v3547 = vld [vmem:[#allocation8 + $0x6e0] sm:$0xff]
        %v3548 = vld [vmem:[#allocation8 + $0x6e8] sm:$0xff]
        %v3549 = vld [vmem:[#allocation8 + $0x6f0] sm:$0xff]
        %v3550 = vld [vmem:[#allocation8 + $0x6f8] sm:$0xff]
        %v3551 = vld [vmem:[#allocation8 + $0x700] sm:$0xff]
        %v3552 = vld [vmem:[#allocation8 + $0x708] sm:$0xff]
        %v3553 = vld [vmem:[#allocation8 + $0x710] sm:$0xff]
        %v3554 = vld [vmem:[#allocation8 + $0x718] sm:$0xff]
        %v3555 = vld [vmem:[#allocation8 + $0x720] sm:$0xff]
        %v3556 = vld [vmem:[#allocation8 + $0x728] sm:$0xff]
        %v3557 = vld [vmem:[#allocation8 + $0x730] sm:$0xff]
        %v3558 = vld [vmem:[#allocation8 + $0x738] sm:$0xff]
        %v3559 = vld [vmem:[#allocation8 + $0x740] sm:$0xff]
        %v3560 = vld [vmem:[#allocation8 + $0x748] sm:$0xff]
        %v3561 = vld [vmem:[#allocation8 + $0x750] sm:$0xff]
        %v3562 = vld [vmem:[#allocation8 + $0x758] sm:$0xff]
        %v3563 = vld [vmem:[#allocation8 + $0x760] sm:$0xff]
        %v3564 = vld [vmem:[#allocation8 + $0x768] sm:$0xff]
        %v3565 = vld [vmem:[#allocation8 + $0x770] sm:$0xff]
        %v3566 = vld [vmem:[#allocation8 + $0x778] sm:$0xff]
        %v3567 = vld [vmem:[#allocation8 + $0x780] sm:$0xff]
        %v3568 = vld [vmem:[#allocation8 + $0x788] sm:$0xff]
        %v3569 = vld [vmem:[#allocation8 + $0x790] sm:$0xff]
        %v3570 = vld [vmem:[#allocation8 + $0x798] sm:$0xff]
        %v3571 = vld [vmem:[#allocation8 + $0x7a0] sm:$0xff]
        %v3572 = vld [vmem:[#allocation8 + $0x7a8] sm:$0xff]
        %v3573 = vld [vmem:[#allocation8 + $0x7b0] sm:$0xff]
        %v3574 = vld [vmem:[#allocation8 + $0x7b8] sm:$0xff]
        %v3575 = vld [vmem:[#allocation8 + $0x7c0] sm:$0xff]
        %v3576 = vld [vmem:[#allocation8 + $0x7c8] sm:$0xff]
        %v3577 = vld [vmem:[#allocation8 + $0x7d0] sm:$0xff]
        %v3578 = vld [vmem:[#allocation8 + $0x7d8] sm:$0xff]
        %v3579 = vld [vmem:[#allocation8 + $0x7e0] sm:$0xff]
        %v3580 = vld [vmem:[#allocation8 + $0x7e8] sm:$0xff]
        %v3581 = vld [vmem:[#allocation8 + $0x7f0] sm:$0xff]
        %v3582 = vld [vmem:[#allocation8 + $0x7f8] sm:$0xff]
        %v3839 = vunpack.c.l.b16 %v3327
        %v3840 = vunpack.c.h.b16 %v3327
        %v3841 = vunpack.c.l.b16 %v3328
        %v3842 = vunpack.c.h.b16 %v3328
        %v3843 = vunpack.c.l.b16 %v3329
        %v3844 = vunpack.c.h.b16 %v3329
        %v3845 = vunpack.c.l.b16 %v3330
        %v3846 = vunpack.c.h.b16 %v3330
        %v3847 = vunpack.c.l.b16 %v3331
        %v3848 = vunpack.c.h.b16 %v3331
        %v3849 = vunpack.c.l.b16 %v3332
        %v3850 = vunpack.c.h.b16 %v3332
        %v3851 = vunpack.c.l.b16 %v3333
        %v3852 = vunpack.c.h.b16 %v3333
        %v3853 = vunpack.c.l.b16 %v3334
        %v3854 = vunpack.c.h.b16 %v3334
        %v3855 = vunpack.c.l.b16 %v3335
        %v3856 = vunpack.c.h.b16 %v3335
        %v3857 = vunpack.c.l.b16 %v3336
        %v3858 = vunpack.c.h.b16 %v3336
        %v3859 = vunpack.c.l.b16 %v3337
        %v3860 = vunpack.c.h.b16 %v3337
        %v3861 = vunpack.c.l.b16 %v3338
        %v3862 = vunpack.c.h.b16 %v3338
        %v3863 = vunpack.c.l.b16 %v3339
        %v3864 = vunpack.c.h.b16 %v3339
        %v3865 = vunpack.c.l.b16 %v3340
        %v3866 = vunpack.c.h.b16 %v3340
        %v3867 = vunpack.c.l.b16 %v3341
        %v3868 = vunpack.c.h.b16 %v3341
        %v3869 = vunpack.c.l.b16 %v3342
        %v3870 = vunpack.c.h.b16 %v3342
        %v3871 = vunpack.c.l.b16 %v3343
        %v3872 = vunpack.c.h.b16 %v3343
        %v3873 = vunpack.c.l.b16 %v3344
        %v3874 = vunpack.c.h.b16 %v3344
        %v3875 = vunpack.c.l.b16 %v3345
        %v3876 = vunpack.c.h.b16 %v3345
        %v3877 = vunpack.c.l.b16 %v3346
        %v3878 = vunpack.c.h.b16 %v3346
        %v3879 = vunpack.c.l.b16 %v3347
        %v3880 = vunpack.c.h.b16 %v3347
        %v3881 = vunpack.c.l.b16 %v3348
        %v3882 = vunpack.c.h.b16 %v3348
        %v3883 = vunpack.c.l.b16 %v3349
        %v3884 = vunpack.c.h.b16 %v3349
        %v3885 = vunpack.c.l.b16 %v3350
        %v3886 = vunpack.c.h.b16 %v3350
        %v3887 = vunpack.c.l.b16 %v3351
        %v3888 = vunpack.c.h.b16 %v3351
        %v3889 = vunpack.c.l.b16 %v3352
        %v3890 = vunpack.c.h.b16 %v3352
        %v3891 = vunpack.c.l.b16 %v3353
        %v3892 = vunpack.c.h.b16 %v3353
        %v3893 = vunpack.c.l.b16 %v3354
        %v3894 = vunpack.c.h.b16 %v3354
        %v3895 = vunpack.c.l.b16 %v3355
        %v3896 = vunpack.c.h.b16 %v3355
        %v3897 = vunpack.c.l.b16 %v3356
        %v3898 = vunpack.c.h.b16 %v3356
        %v3899 = vunpack.c.l.b16 %v3357
        %v3900 = vunpack.c.h.b16 %v3357
        %v3901 = vunpack.c.l.b16 %v3358
        %v3902 = vunpack.c.h.b16 %v3358
        %v3903 = vunpack.c.l.b16 %v3359
        %v3904 = vunpack.c.h.b16 %v3359
        %v3905 = vunpack.c.l.b16 %v3360
        %v3906 = vunpack.c.h.b16 %v3360
        %v3907 = vunpack.c.l.b16 %v3361
        %v3908 = vunpack.c.h.b16 %v3361
        %v3909 = vunpack.c.l.b16 %v3362
        %v3910 = vunpack.c.h.b16 %v3362
        %v3911 = vunpack.c.l.b16 %v3363
        %v3912 = vunpack.c.h.b16 %v3363
        %v3913 = vunpack.c.l.b16 %v3364
        %v3914 = vunpack.c.h.b16 %v3364
        %v3915 = vunpack.c.l.b16 %v3365
        %v3916 = vunpack.c.h.b16 %v3365
        %v3917 = vunpack.c.l.b16 %v3366
        %v3918 = vunpack.c.h.b16 %v3366
        %v3919 = vunpack.c.l.b16 %v3367
        %v3920 = vunpack.c.h.b16 %v3367
        %v3921 = vunpack.c.l.b16 %v3368
        %v3922 = vunpack.c.h.b16 %v3368
        %v3923 = vunpack.c.l.b16 %v3369
        %v3924 = vunpack.c.h.b16 %v3369
        %v3925 = vunpack.c.l.b16 %v3370
        %v3926 = vunpack.c.h.b16 %v3370
        %v3927 = vunpack.c.l.b16 %v3371
        %v3928 = vunpack.c.h.b16 %v3371
        %v3929 = vunpack.c.l.b16 %v3372
        %v3930 = vunpack.c.h.b16 %v3372
        %v3931 = vunpack.c.l.b16 %v3373
        %v3932 = vunpack.c.h.b16 %v3373
        %v3933 = vunpack.c.l.b16 %v3374
        %v3934 = vunpack.c.h.b16 %v3374
        %v3935 = vunpack.c.l.b16 %v3375
        %v3936 = vunpack.c.h.b16 %v3375
        %v3937 = vunpack.c.l.b16 %v3376
        %v3938 = vunpack.c.h.b16 %v3376
        %v3939 = vunpack.c.l.b16 %v3377
        %v3940 = vunpack.c.h.b16 %v3377
        %v3941 = vunpack.c.l.b16 %v3378
        %v3942 = vunpack.c.h.b16 %v3378
        %v3943 = vunpack.c.l.b16 %v3379
        %v3944 = vunpack.c.h.b16 %v3379
        %v3945 = vunpack.c.l.b16 %v3380
        %v3946 = vunpack.c.h.b16 %v3380
        %v3947 = vunpack.c.l.b16 %v3381
        %v3948 = vunpack.c.h.b16 %v3381
        %v3949 = vunpack.c.l.b16 %v3382
        %v3950 = vunpack.c.h.b16 %v3382
        %v3951 = vunpack.c.l.b16 %v3383
        %v3952 = vunpack.c.h.b16 %v3383
        %v3953 = vunpack.c.l.b16 %v3384
        %v3954 = vunpack.c.h.b16 %v3384
        %v3955 = vunpack.c.l.b16 %v3385
        %v3956 = vunpack.c.h.b16 %v3385
        %v3957 = vunpack.c.l.b16 %v3386
        %v3958 = vunpack.c.h.b16 %v3386
        %v3959 = vunpack.c.l.b16 %v3387
        %v3960 = vunpack.c.h.b16 %v3387
        %v3961 = vunpack.c.l.b16 %v3388
        %v3962 = vunpack.c.h.b16 %v3388
        %v3963 = vunpack.c.l.b16 %v3389
        %v3964 = vunpack.c.h.b16 %v3389
        %v3965 = vunpack.c.l.b16 %v3390
        %v3966 = vunpack.c.h.b16 %v3390
        %v3967 = vunpack.c.l.b16 %v3391
        %v3968 = vunpack.c.h.b16 %v3391
        %v3969 = vunpack.c.l.b16 %v3392
        %v3970 = vunpack.c.h.b16 %v3392
        %v3971 = vunpack.c.l.b16 %v3393
        %v3972 = vunpack.c.h.b16 %v3393
        %v3973 = vunpack.c.l.b16 %v3394
        %v3974 = vunpack.c.h.b16 %v3394
        %v3975 = vunpack.c.l.b16 %v3395
        %v3976 = vunpack.c.h.b16 %v3395
        %v3977 = vunpack.c.l.b16 %v3396
        %v3978 = vunpack.c.h.b16 %v3396
        %v3979 = vunpack.c.l.b16 %v3397
        %v3980 = vunpack.c.h.b16 %v3397
        %v3981 = vunpack.c.l.b16 %v3398
        %v3982 = vunpack.c.h.b16 %v3398
        %v3983 = vunpack.c.l.b16 %v3399
        %v3984 = vunpack.c.h.b16 %v3399
        %v3985 = vunpack.c.l.b16 %v3400
        %v3986 = vunpack.c.h.b16 %v3400
        %v3987 = vunpack.c.l.b16 %v3401
        %v3988 = vunpack.c.h.b16 %v3401
        %v3989 = vunpack.c.l.b16 %v3402
        %v3990 = vunpack.c.h.b16 %v3402
        %v3991 = vunpack.c.l.b16 %v3403
        %v3992 = vunpack.c.h.b16 %v3403
        %v3993 = vunpack.c.l.b16 %v3404
        %v3994 = vunpack.c.h.b16 %v3404
        %v3995 = vunpack.c.l.b16 %v3405
        %v3996 = vunpack.c.h.b16 %v3405
        %v3997 = vunpack.c.l.b16 %v3406
        %v3998 = vunpack.c.h.b16 %v3406
        %v3999 = vunpack.c.l.b16 %v3407
        %v4000 = vunpack.c.h.b16 %v3407
        %v4001 = vunpack.c.l.b16 %v3408
        %v4002 = vunpack.c.h.b16 %v3408
        %v4003 = vunpack.c.l.b16 %v3409
        %v4004 = vunpack.c.h.b16 %v3409
        %v4005 = vunpack.c.l.b16 %v3410
        %v4006 = vunpack.c.h.b16 %v3410
        %v4007 = vunpack.c.l.b16 %v3411
        %v4008 = vunpack.c.h.b16 %v3411
        %v4009 = vunpack.c.l.b16 %v3412
        %v4010 = vunpack.c.h.b16 %v3412
        %v4011 = vunpack.c.l.b16 %v3413
        %v4012 = vunpack.c.h.b16 %v3413
        %v4013 = vunpack.c.l.b16 %v3414
        %v4014 = vunpack.c.h.b16 %v3414
        %v4015 = vunpack.c.l.b16 %v3415
        %v4016 = vunpack.c.h.b16 %v3415
        %v4017 = vunpack.c.l.b16 %v3416
        %v4018 = vunpack.c.h.b16 %v3416
        %v4019 = vunpack.c.l.b16 %v3417
        %v4020 = vunpack.c.h.b16 %v3417
        %v4021 = vunpack.c.l.b16 %v3418
        %v4022 = vunpack.c.h.b16 %v3418
        %v4023 = vunpack.c.l.b16 %v3419
        %v4024 = vunpack.c.h.b16 %v3419
        %v4025 = vunpack.c.l.b16 %v3420
        %v4026 = vunpack.c.h.b16 %v3420
        %v4027 = vunpack.c.l.b16 %v3421
        %v4028 = vunpack.c.h.b16 %v3421
        %v4029 = vunpack.c.l.b16 %v3422
        %v4030 = vunpack.c.h.b16 %v3422
        %v4031 = vunpack.c.l.b16 %v3423
        %v4032 = vunpack.c.h.b16 %v3423
        %v4033 = vunpack.c.l.b16 %v3424
        %v4034 = vunpack.c.h.b16 %v3424
        %v4035 = vunpack.c.l.b16 %v3425
        %v4036 = vunpack.c.h.b16 %v3425
        %v4037 = vunpack.c.l.b16 %v3426
        %v4038 = vunpack.c.h.b16 %v3426
        %v4039 = vunpack.c.l.b16 %v3427
        %v4040 = vunpack.c.h.b16 %v3427
        %v4041 = vunpack.c.l.b16 %v3428
        %v4042 = vunpack.c.h.b16 %v3428
        %v4043 = vunpack.c.l.b16 %v3429
        %v4044 = vunpack.c.h.b16 %v3429
        %v4045 = vunpack.c.l.b16 %v3430
        %v4046 = vunpack.c.h.b16 %v3430
        %v4047 = vunpack.c.l.b16 %v3431
        %v4048 = vunpack.c.h.b16 %v3431
        %v4049 = vunpack.c.l.b16 %v3432
        %v4050 = vunpack.c.h.b16 %v3432
        %v4051 = vunpack.c.l.b16 %v3433
        %v4052 = vunpack.c.h.b16 %v3433
        %v4053 = vunpack.c.l.b16 %v3434
        %v4054 = vunpack.c.h.b16 %v3434
        %v4055 = vunpack.c.l.b16 %v3435
        %v4056 = vunpack.c.h.b16 %v3435
        %v4057 = vunpack.c.l.b16 %v3436
        %v4058 = vunpack.c.h.b16 %v3436
        %v4059 = vunpack.c.l.b16 %v3437
        %v4060 = vunpack.c.h.b16 %v3437
        %v4061 = vunpack.c.l.b16 %v3438
        %v4062 = vunpack.c.h.b16 %v3438
        %v4063 = vunpack.c.l.b16 %v3439
        %v4064 = vunpack.c.h.b16 %v3439
        %v4065 = vunpack.c.l.b16 %v3440
        %v4066 = vunpack.c.h.b16 %v3440
        %v4067 = vunpack.c.l.b16 %v3441
        %v4068 = vunpack.c.h.b16 %v3441
        %v4069 = vunpack.c.l.b16 %v3442
        %v4070 = vunpack.c.h.b16 %v3442
        %v4071 = vunpack.c.l.b16 %v3443
        %v4072 = vunpack.c.h.b16 %v3443
        %v4073 = vunpack.c.l.b16 %v3444
        %v4074 = vunpack.c.h.b16 %v3444
        %v4075 = vunpack.c.l.b16 %v3445
        %v4076 = vunpack.c.h.b16 %v3445
        %v4077 = vunpack.c.l.b16 %v3446
        %v4078 = vunpack.c.h.b16 %v3446
        %v4079 = vunpack.c.l.b16 %v3447
        %v4080 = vunpack.c.h.b16 %v3447
        %v4081 = vunpack.c.l.b16 %v3448
        %v4082 = vunpack.c.h.b16 %v3448
        %v4083 = vunpack.c.l.b16 %v3449
        %v4084 = vunpack.c.h.b16 %v3449
        %v4085 = vunpack.c.l.b16 %v3450
        %v4086 = vunpack.c.h.b16 %v3450
        %v4087 = vunpack.c.l.b16 %v3451
        %v4088 = vunpack.c.h.b16 %v3451
        %v4089 = vunpack.c.l.b16 %v3452
        %v4090 = vunpack.c.h.b16 %v3452
        %v4091 = vunpack.c.l.b16 %v3453
        %v4092 = vunpack.c.h.b16 %v3453
        %v4093 = vunpack.c.l.b16 %v3454
        %v4094 = vunpack.c.h.b16 %v3454
        %v4095 = vunpack.c.l.b16 %v3455
        %v4096 = vunpack.c.h.b16 %v3455
        %v4097 = vunpack.c.l.b16 %v3456
        %v4098 = vunpack.c.h.b16 %v3456
        %v4099 = vunpack.c.l.b16 %v3457
        %v4100 = vunpack.c.h.b16 %v3457
        %v4101 = vunpack.c.l.b16 %v3458
        %v4102 = vunpack.c.h.b16 %v3458
        %v4103 = vunpack.c.l.b16 %v3459
        %v4104 = vunpack.c.h.b16 %v3459
        %v4105 = vunpack.c.l.b16 %v3460
        %v4106 = vunpack.c.h.b16 %v3460
        %v4107 = vunpack.c.l.b16 %v3461
        %v4108 = vunpack.c.h.b16 %v3461
        %v4109 = vunpack.c.l.b16 %v3462
        %v4110 = vunpack.c.h.b16 %v3462
        %v4111 = vunpack.c.l.b16 %v3463
        %v4112 = vunpack.c.h.b16 %v3463
        %v4113 = vunpack.c.l.b16 %v3464
        %v4114 = vunpack.c.h.b16 %v3464
        %v4115 = vunpack.c.l.b16 %v3465
        %v4116 = vunpack.c.h.b16 %v3465
        %v4117 = vunpack.c.l.b16 %v3466
        %v4118 = vunpack.c.h.b16 %v3466
        %v4119 = vunpack.c.l.b16 %v3467
        %v4120 = vunpack.c.h.b16 %v3467
        %v4121 = vunpack.c.l.b16 %v3468
        %v4122 = vunpack.c.h.b16 %v3468
        %v4123 = vunpack.c.l.b16 %v3469
        %v4124 = vunpack.c.h.b16 %v3469
        %v4125 = vunpack.c.l.b16 %v3470
        %v4126 = vunpack.c.h.b16 %v3470
        %v4127 = vunpack.c.l.b16 %v3471
        %v4128 = vunpack.c.h.b16 %v3471
        %v4129 = vunpack.c.l.b16 %v3472
        %v4130 = vunpack.c.h.b16 %v3472
        %v4131 = vunpack.c.l.b16 %v3473
        %v4132 = vunpack.c.h.b16 %v3473
        %v4133 = vunpack.c.l.b16 %v3474
        %v4134 = vunpack.c.h.b16 %v3474
        %v4135 = vunpack.c.l.b16 %v3475
        %v4136 = vunpack.c.h.b16 %v3475
        %v4137 = vunpack.c.l.b16 %v3476
        %v4138 = vunpack.c.h.b16 %v3476
        %v4139 = vunpack.c.l.b16 %v3477
        %v4140 = vunpack.c.h.b16 %v3477
        %v4141 = vunpack.c.l.b16 %v3478
        %v4142 = vunpack.c.h.b16 %v3478
        %v4143 = vunpack.c.l.b16 %v3479
        %v4144 = vunpack.c.h.b16 %v3479
        %v4145 = vunpack.c.l.b16 %v3480
        %v4146 = vunpack.c.h.b16 %v3480
        %v4147 = vunpack.c.l.b16 %v3481
        %v4148 = vunpack.c.h.b16 %v3481
        %v4149 = vunpack.c.l.b16 %v3482
        %v4150 = vunpack.c.h.b16 %v3482
        %v4151 = vunpack.c.l.b16 %v3483
        %v4152 = vunpack.c.h.b16 %v3483
        %v4153 = vunpack.c.l.b16 %v3484
        %v4154 = vunpack.c.h.b16 %v3484
        %v4155 = vunpack.c.l.b16 %v3485
        %v4156 = vunpack.c.h.b16 %v3485
        %v4157 = vunpack.c.l.b16 %v3486
        %v4158 = vunpack.c.h.b16 %v3486
        %v4159 = vunpack.c.l.b16 %v3487
        %v4160 = vunpack.c.h.b16 %v3487
        %v4161 = vunpack.c.l.b16 %v3488
        %v4162 = vunpack.c.h.b16 %v3488
        %v4163 = vunpack.c.l.b16 %v3489
        %v4164 = vunpack.c.h.b16 %v3489
        %v4165 = vunpack.c.l.b16 %v3490
        %v4166 = vunpack.c.h.b16 %v3490
        %v4167 = vunpack.c.l.b16 %v3491
        %v4168 = vunpack.c.h.b16 %v3491
        %v4169 = vunpack.c.l.b16 %v3492
        %v4170 = vunpack.c.h.b16 %v3492
        %v4171 = vunpack.c.l.b16 %v3493
        %v4172 = vunpack.c.h.b16 %v3493
        %v4173 = vunpack.c.l.b16 %v3494
        %v4174 = vunpack.c.h.b16 %v3494
        %v4175 = vunpack.c.l.b16 %v3495
        %v4176 = vunpack.c.h.b16 %v3495
        %v4177 = vunpack.c.l.b16 %v3496
        %v4178 = vunpack.c.h.b16 %v3496
        %v4179 = vunpack.c.l.b16 %v3497
        %v4180 = vunpack.c.h.b16 %v3497
        %v4181 = vunpack.c.l.b16 %v3498
        %v4182 = vunpack.c.h.b16 %v3498
        %v4183 = vunpack.c.l.b16 %v3499
        %v4184 = vunpack.c.h.b16 %v3499
        %v4185 = vunpack.c.l.b16 %v3500
        %v4186 = vunpack.c.h.b16 %v3500
        %v4187 = vunpack.c.l.b16 %v3501
        %v4188 = vunpack.c.h.b16 %v3501
        %v4189 = vunpack.c.l.b16 %v3502
        %v4190 = vunpack.c.h.b16 %v3502
        %v4191 = vunpack.c.l.b16 %v3503
        %v4192 = vunpack.c.h.b16 %v3503
        %v4193 = vunpack.c.l.b16 %v3504
        %v4194 = vunpack.c.h.b16 %v3504
        %v4195 = vunpack.c.l.b16 %v3505
        %v4196 = vunpack.c.h.b16 %v3505
        %v4197 = vunpack.c.l.b16 %v3506
        %v4198 = vunpack.c.h.b16 %v3506
        %v4199 = vunpack.c.l.b16 %v3507
        %v4200 = vunpack.c.h.b16 %v3507
        %v4201 = vunpack.c.l.b16 %v3508
        %v4202 = vunpack.c.h.b16 %v3508
        %v4203 = vunpack.c.l.b16 %v3509
        %v4204 = vunpack.c.h.b16 %v3509
        %v4205 = vunpack.c.l.b16 %v3510
        %v4206 = vunpack.c.h.b16 %v3510
        %v4207 = vunpack.c.l.b16 %v3511
        %v4208 = vunpack.c.h.b16 %v3511
        %v4209 = vunpack.c.l.b16 %v3512
        %v4210 = vunpack.c.h.b16 %v3512
        %v4211 = vunpack.c.l.b16 %v3513
        %v4212 = vunpack.c.h.b16 %v3513
        %v4213 = vunpack.c.l.b16 %v3514
        %v4214 = vunpack.c.h.b16 %v3514
        %v4215 = vunpack.c.l.b16 %v3515
        %v4216 = vunpack.c.h.b16 %v3515
        %v4217 = vunpack.c.l.b16 %v3516
        %v4218 = vunpack.c.h.b16 %v3516
        %v4219 = vunpack.c.l.b16 %v3517
        %v4220 = vunpack.c.h.b16 %v3517
        %v4221 = vunpack.c.l.b16 %v3518
        %v4222 = vunpack.c.h.b16 %v3518
        %v4223 = vunpack.c.l.b16 %v3519
        %v4224 = vunpack.c.h.b16 %v3519
        %v4225 = vunpack.c.l.b16 %v3520
        %v4226 = vunpack.c.h.b16 %v3520
        %v4227 = vunpack.c.l.b16 %v3521
        %v4228 = vunpack.c.h.b16 %v3521
        %v4229 = vunpack.c.l.b16 %v3522
        %v4230 = vunpack.c.h.b16 %v3522
        %v4231 = vunpack.c.l.b16 %v3523
        %v4232 = vunpack.c.h.b16 %v3523
        %v4233 = vunpack.c.l.b16 %v3524
        %v4234 = vunpack.c.h.b16 %v3524
        %v4235 = vunpack.c.l.b16 %v3525
        %v4236 = vunpack.c.h.b16 %v3525
        %v4237 = vunpack.c.l.b16 %v3526
        %v4238 = vunpack.c.h.b16 %v3526
        %v4239 = vunpack.c.l.b16 %v3527
        %v4240 = vunpack.c.h.b16 %v3527
        %v4241 = vunpack.c.l.b16 %v3528
        %v4242 = vunpack.c.h.b16 %v3528
        %v4243 = vunpack.c.l.b16 %v3529
        %v4244 = vunpack.c.h.b16 %v3529
        %v4245 = vunpack.c.l.b16 %v3530
        %v4246 = vunpack.c.h.b16 %v3530
        %v4247 = vunpack.c.l.b16 %v3531
        %v4248 = vunpack.c.h.b16 %v3531
        %v4249 = vunpack.c.l.b16 %v3532
        %v4250 = vunpack.c.h.b16 %v3532
        %v4251 = vunpack.c.l.b16 %v3533
        %v4252 = vunpack.c.h.b16 %v3533
        %v4253 = vunpack.c.l.b16 %v3534
        %v4254 = vunpack.c.h.b16 %v3534
        %v4255 = vunpack.c.l.b16 %v3535
        %v4256 = vunpack.c.h.b16 %v3535
        %v4257 = vunpack.c.l.b16 %v3536
        %v4258 = vunpack.c.h.b16 %v3536
        %v4259 = vunpack.c.l.b16 %v3537
        %v4260 = vunpack.c.h.b16 %v3537
        %v4261 = vunpack.c.l.b16 %v3538
        %v4262 = vunpack.c.h.b16 %v3538
        %v4263 = vunpack.c.l.b16 %v3539
        %v4264 = vunpack.c.h.b16 %v3539
        %v4265 = vunpack.c.l.b16 %v3540
        %v4266 = vunpack.c.h.b16 %v3540
        %v4267 = vunpack.c.l.b16 %v3541
        %v4268 = vunpack.c.h.b16 %v3541
        %v4269 = vunpack.c.l.b16 %v3542
        %v4270 = vunpack.c.h.b16 %v3542
        %v4271 = vunpack.c.l.b16 %v3543
        %v4272 = vunpack.c.h.b16 %v3543
        %v4273 = vunpack.c.l.b16 %v3544
        %v4274 = vunpack.c.h.b16 %v3544
        %v4275 = vunpack.c.l.b16 %v3545
        %v4276 = vunpack.c.h.b16 %v3545
        %v4277 = vunpack.c.l.b16 %v3546
        %v4278 = vunpack.c.h.b16 %v3546
        %v4279 = vunpack.c.l.b16 %v3547
        %v4280 = vunpack.c.h.b16 %v3547
        %v4281 = vunpack.c.l.b16 %v3548
        %v4282 = vunpack.c.h.b16 %v3548
        %v4283 = vunpack.c.l.b16 %v3549
        %v4284 = vunpack.c.h.b16 %v3549
        %v4285 = vunpack.c.l.b16 %v3550
        %v4286 = vunpack.c.h.b16 %v3550
        %v4287 = vunpack.c.l.b16 %v3551
        %v4288 = vunpack.c.h.b16 %v3551
        %v4289 = vunpack.c.l.b16 %v3552
        %v4290 = vunpack.c.h.b16 %v3552
        %v4291 = vunpack.c.l.b16 %v3553
        %v4292 = vunpack.c.h.b16 %v3553
        %v4293 = vunpack.c.l.b16 %v3554
        %v4294 = vunpack.c.h.b16 %v3554
        %v4295 = vunpack.c.l.b16 %v3555
        %v4296 = vunpack.c.h.b16 %v3555
        %v4297 = vunpack.c.l.b16 %v3556
        %v4298 = vunpack.c.h.b16 %v3556
        %v4299 = vunpack.c.l.b16 %v3557
        %v4300 = vunpack.c.h.b16 %v3557
        %v4301 = vunpack.c.l.b16 %v3558
        %v4302 = vunpack.c.h.b16 %v3558
        %v4303 = vunpack.c.l.b16 %v3559
        %v4304 = vunpack.c.h.b16 %v3559
        %v4305 = vunpack.c.l.b16 %v3560
        %v4306 = vunpack.c.h.b16 %v3560
        %v4307 = vunpack.c.l.b16 %v3561
        %v4308 = vunpack.c.h.b16 %v3561
        %v4309 = vunpack.c.l.b16 %v3562
        %v4310 = vunpack.c.h.b16 %v3562
        %v4311 = vunpack.c.l.b16 %v3563
        %v4312 = vunpack.c.h.b16 %v3563
        %v4313 = vunpack.c.l.b16 %v3564
        %v4314 = vunpack.c.h.b16 %v3564
        %v4315 = vunpack.c.l.b16 %v3565
        %v4316 = vunpack.c.h.b16 %v3565
        %v4317 = vunpack.c.l.b16 %v3566
        %v4318 = vunpack.c.h.b16 %v3566
        %v4319 = vunpack.c.l.b16 %v3567
        %v4320 = vunpack.c.h.b16 %v3567
        %v4321 = vunpack.c.l.b16 %v3568
        %v4322 = vunpack.c.h.b16 %v3568
        %v4323 = vunpack.c.l.b16 %v3569
        %v4324 = vunpack.c.h.b16 %v3569
        %v4325 = vunpack.c.l.b16 %v3570
        %v4326 = vunpack.c.h.b16 %v3570
        %v4327 = vunpack.c.l.b16 %v3571
        %v4328 = vunpack.c.h.b16 %v3571
        %v4329 = vunpack.c.l.b16 %v3572
        %v4330 = vunpack.c.h.b16 %v3572
        %v4331 = vunpack.c.l.b16 %v3573
        %v4332 = vunpack.c.h.b16 %v3573
        %v4333 = vunpack.c.l.b16 %v3574
        %v4334 = vunpack.c.h.b16 %v3574
        %v4335 = vunpack.c.l.b16 %v3575
        %v4336 = vunpack.c.h.b16 %v3575
        %v4337 = vunpack.c.l.b16 %v3576
        %v4338 = vunpack.c.h.b16 %v3576
        %v4339 = vunpack.c.l.b16 %v3577
        %v4340 = vunpack.c.h.b16 %v3577
        %v4341 = vunpack.c.l.b16 %v3578
        %v4342 = vunpack.c.h.b16 %v3578
        %v4343 = vunpack.c.l.b16 %v3579
        %v4344 = vunpack.c.h.b16 %v3579
        %v4345 = vunpack.c.l.b16 %v3580
        %v4346 = vunpack.c.h.b16 %v3580
        %v4347 = vunpack.c.l.b16 %v3581
        %v4348 = vunpack.c.h.b16 %v3581
        %v4349 = vunpack.c.l.b16 %v3582
        %v4350 = vunpack.c.h.b16 %v3582
        %v4351 = vpack.c.b16 %v3843, %v3839
        %v4352 = vpack.c.b16 %v3844, %v3840
        %v4353 = vpack.c.b16 %v3845, %v3841
        %v4354 = vpack.c.b16 %v3846, %v3842
        %v4355 = vpack.c.b16 %v3851, %v3847
        %v4356 = vpack.c.b16 %v3852, %v3848
        %v4357 = vpack.c.b16 %v3853, %v3849
        %v4358 = vpack.c.b16 %v3854, %v3850
        %v4359 = vpack.c.b16 %v3859, %v3855
        %v4360 = vpack.c.b16 %v3860, %v3856
        %v4361 = vpack.c.b16 %v3861, %v3857
        %v4362 = vpack.c.b16 %v3862, %v3858
        %v4363 = vpack.c.b16 %v3867, %v3863
        %v4364 = vpack.c.b16 %v3868, %v3864
        %v4365 = vpack.c.b16 %v3869, %v3865
        %v4366 = vpack.c.b16 %v3870, %v3866
        %v4367 = vpack.c.b16 %v3875, %v3871
        %v4368 = vpack.c.b16 %v3876, %v3872
        %v4369 = vpack.c.b16 %v3877, %v3873
        %v4370 = vpack.c.b16 %v3878, %v3874
        %v4371 = vpack.c.b16 %v3883, %v3879
        %v4372 = vpack.c.b16 %v3884, %v3880
        %v4373 = vpack.c.b16 %v3885, %v3881
        %v4374 = vpack.c.b16 %v3886, %v3882
        %v4375 = vpack.c.b16 %v3891, %v3887
        %v4376 = vpack.c.b16 %v3892, %v3888
        %v4377 = vpack.c.b16 %v3893, %v3889
        %v4378 = vpack.c.b16 %v3894, %v3890
        %v4379 = vpack.c.b16 %v3899, %v3895
        %v4380 = vpack.c.b16 %v3900, %v3896
        %v4381 = vpack.c.b16 %v3901, %v3897
        %v4382 = vpack.c.b16 %v3902, %v3898
        %v4383 = vpack.c.b16 %v3907, %v3903
        %v4384 = vpack.c.b16 %v3908, %v3904
        %v4385 = vpack.c.b16 %v3909, %v3905
        %v4386 = vpack.c.b16 %v3910, %v3906
        %v4387 = vpack.c.b16 %v3915, %v3911
        %v4388 = vpack.c.b16 %v3916, %v3912
        %v4389 = vpack.c.b16 %v3917, %v3913
        %v4390 = vpack.c.b16 %v3918, %v3914
        %v4391 = vpack.c.b16 %v3923, %v3919
        %v4392 = vpack.c.b16 %v3924, %v3920
        %v4393 = vpack.c.b16 %v3925, %v3921
        %v4394 = vpack.c.b16 %v3926, %v3922
        %v4395 = vpack.c.b16 %v3931, %v3927
        %v4396 = vpack.c.b16 %v3932, %v3928
        %v4397 = vpack.c.b16 %v3933, %v3929
        %v4398 = vpack.c.b16 %v3934, %v3930
        %v4399 = vpack.c.b16 %v3939, %v3935
        %v4400 = vpack.c.b16 %v3940, %v3936
        %v4401 = vpack.c.b16 %v3941, %v3937
        %v4402 = vpack.c.b16 %v3942, %v3938
        %v4403 = vpack.c.b16 %v3947, %v3943
        %v4404 = vpack.c.b16 %v3948, %v3944
        %v4405 = vpack.c.b16 %v3949, %v3945
        %v4406 = vpack.c.b16 %v3950, %v3946
        %v4407 = vpack.c.b16 %v3955, %v3951
        %v4408 = vpack.c.b16 %v3956, %v3952
        %v4409 = vpack.c.b16 %v3957, %v3953
        %v4410 = vpack.c.b16 %v3958, %v3954
        %v4411 = vpack.c.b16 %v3963, %v3959
        %v4412 = vpack.c.b16 %v3964, %v3960
        %v4413 = vpack.c.b16 %v3965, %v3961
        %v4414 = vpack.c.b16 %v3966, %v3962
        %v4415 = vpack.c.b16 %v3971, %v3967
        %v4416 = vpack.c.b16 %v3972, %v3968
        %v4417 = vpack.c.b16 %v3973, %v3969
        %v4418 = vpack.c.b16 %v3974, %v3970
        %v4419 = vpack.c.b16 %v3979, %v3975
        %v4420 = vpack.c.b16 %v3980, %v3976
        %v4421 = vpack.c.b16 %v3981, %v3977
        %v4422 = vpack.c.b16 %v3982, %v3978
        %v4423 = vpack.c.b16 %v3987, %v3983
        %v4424 = vpack.c.b16 %v3988, %v3984
        %v4425 = vpack.c.b16 %v3989, %v3985
        %v4426 = vpack.c.b16 %v3990, %v3986
        %v4427 = vpack.c.b16 %v3995, %v3991
        %v4428 = vpack.c.b16 %v3996, %v3992
        %v4429 = vpack.c.b16 %v3997, %v3993
        %v4430 = vpack.c.b16 %v3998, %v3994
        %v4431 = vpack.c.b16 %v4003, %v3999
        %v4432 = vpack.c.b16 %v4004, %v4000
        %v4433 = vpack.c.b16 %v4005, %v4001
        %v4434 = vpack.c.b16 %v4006, %v4002
        %v4435 = vpack.c.b16 %v4011, %v4007
        %v4436 = vpack.c.b16 %v4012, %v4008
        %v4437 = vpack.c.b16 %v4013, %v4009
        %v4438 = vpack.c.b16 %v4014, %v4010
        %v4439 = vpack.c.b16 %v4019, %v4015
        %v4440 = vpack.c.b16 %v4020, %v4016
        %v4441 = vpack.c.b16 %v4021, %v4017
        %v4442 = vpack.c.b16 %v4022, %v4018
        %v4443 = vpack.c.b16 %v4027, %v4023
        %v4444 = vpack.c.b16 %v4028, %v4024
        %v4445 = vpack.c.b16 %v4029, %v4025
        %v4446 = vpack.c.b16 %v4030, %v4026
        %v4447 = vpack.c.b16 %v4035, %v4031
        %v4448 = vpack.c.b16 %v4036, %v4032
        %v4449 = vpack.c.b16 %v4037, %v4033
        %v4450 = vpack.c.b16 %v4038, %v4034
        %v4451 = vpack.c.b16 %v4043, %v4039
        %v4452 = vpack.c.b16 %v4044, %v4040
        %v4453 = vpack.c.b16 %v4045, %v4041
        %v4454 = vpack.c.b16 %v4046, %v4042
        %v4455 = vpack.c.b16 %v4051, %v4047
        %v4456 = vpack.c.b16 %v4052, %v4048
        %v4457 = vpack.c.b16 %v4053, %v4049
        %v4458 = vpack.c.b16 %v4054, %v4050
        %v4459 = vpack.c.b16 %v4059, %v4055
        %v4460 = vpack.c.b16 %v4060, %v4056
        %v4461 = vpack.c.b16 %v4061, %v4057
        %v4462 = vpack.c.b16 %v4062, %v4058
        %v4463 = vpack.c.b16 %v4067, %v4063
        %v4464 = vpack.c.b16 %v4068, %v4064
        %v4465 = vpack.c.b16 %v4069, %v4065
        %v4466 = vpack.c.b16 %v4070, %v4066
        %v4467 = vpack.c.b16 %v4075, %v4071
        %v4468 = vpack.c.b16 %v4076, %v4072
        %v4469 = vpack.c.b16 %v4077, %v4073
        %v4470 = vpack.c.b16 %v4078, %v4074
        %v4471 = vpack.c.b16 %v4083, %v4079
        %v4472 = vpack.c.b16 %v4084, %v4080
        %v4473 = vpack.c.b16 %v4085, %v4081
        %v4474 = vpack.c.b16 %v4086, %v4082
        %v4475 = vpack.c.b16 %v4091, %v4087
        %v4476 = vpack.c.b16 %v4092, %v4088
        %v4477 = vpack.c.b16 %v4093, %v4089
        %v4478 = vpack.c.b16 %v4094, %v4090
        %v4479 = vpack.c.b16 %v4099, %v4095
        %v4480 = vpack.c.b16 %v4100, %v4096
        %v4481 = vpack.c.b16 %v4101, %v4097
        %v4482 = vpack.c.b16 %v4102, %v4098
        %v4483 = vpack.c.b16 %v4107, %v4103
        %v4484 = vpack.c.b16 %v4108, %v4104
        %v4485 = vpack.c.b16 %v4109, %v4105
        %v4486 = vpack.c.b16 %v4110, %v4106
        %v4487 = vpack.c.b16 %v4115, %v4111
        %v4488 = vpack.c.b16 %v4116, %v4112
        %v4489 = vpack.c.b16 %v4117, %v4113
        %v4490 = vpack.c.b16 %v4118, %v4114
        %v4491 = vpack.c.b16 %v4123, %v4119
        %v4492 = vpack.c.b16 %v4124, %v4120
        %v4493 = vpack.c.b16 %v4125, %v4121
        %v4494 = vpack.c.b16 %v4126, %v4122
        %v4495 = vpack.c.b16 %v4131, %v4127
        %v4496 = vpack.c.b16 %v4132, %v4128
        %v4497 = vpack.c.b16 %v4133, %v4129
        %v4498 = vpack.c.b16 %v4134, %v4130
        %v4499 = vpack.c.b16 %v4139, %v4135
        %v4500 = vpack.c.b16 %v4140, %v4136
        %v4501 = vpack.c.b16 %v4141, %v4137
        %v4502 = vpack.c.b16 %v4142, %v4138
        %v4503 = vpack.c.b16 %v4147, %v4143
        %v4504 = vpack.c.b16 %v4148, %v4144
        %v4505 = vpack.c.b16 %v4149, %v4145
        %v4506 = vpack.c.b16 %v4150, %v4146
        %v4507 = vpack.c.b16 %v4155, %v4151
        %v4508 = vpack.c.b16 %v4156, %v4152
        %v4509 = vpack.c.b16 %v4157, %v4153
        %v4510 = vpack.c.b16 %v4158, %v4154
        %v4511 = vpack.c.b16 %v4163, %v4159
        %v4512 = vpack.c.b16 %v4164, %v4160
        %v4513 = vpack.c.b16 %v4165, %v4161
        %v4514 = vpack.c.b16 %v4166, %v4162
        %v4515 = vpack.c.b16 %v4171, %v4167
        %v4516 = vpack.c.b16 %v4172, %v4168
        %v4517 = vpack.c.b16 %v4173, %v4169
        %v4518 = vpack.c.b16 %v4174, %v4170
        %v4519 = vpack.c.b16 %v4179, %v4175
        %v4520 = vpack.c.b16 %v4180, %v4176
        %v4521 = vpack.c.b16 %v4181, %v4177
        %v4522 = vpack.c.b16 %v4182, %v4178
        %v4523 = vpack.c.b16 %v4187, %v4183
        %v4524 = vpack.c.b16 %v4188, %v4184
        %v4525 = vpack.c.b16 %v4189, %v4185
        %v4526 = vpack.c.b16 %v4190, %v4186
        %v4527 = vpack.c.b16 %v4195, %v4191
        %v4528 = vpack.c.b16 %v4196, %v4192
        %v4529 = vpack.c.b16 %v4197, %v4193
        %v4530 = vpack.c.b16 %v4198, %v4194
        %v4531 = vpack.c.b16 %v4203, %v4199
        %v4532 = vpack.c.b16 %v4204, %v4200
        %v4533 = vpack.c.b16 %v4205, %v4201
        %v4534 = vpack.c.b16 %v4206, %v4202
        %v4535 = vpack.c.b16 %v4211, %v4207
        %v4536 = vpack.c.b16 %v4212, %v4208
        %v4537 = vpack.c.b16 %v4213, %v4209
        %v4538 = vpack.c.b16 %v4214, %v4210
        %v4539 = vpack.c.b16 %v4219, %v4215
        %v4540 = vpack.c.b16 %v4220, %v4216
        %v4541 = vpack.c.b16 %v4221, %v4217
        %v4542 = vpack.c.b16 %v4222, %v4218
        %v4543 = vpack.c.b16 %v4227, %v4223
        %v4544 = vpack.c.b16 %v4228, %v4224
        %v4545 = vpack.c.b16 %v4229, %v4225
        %v4546 = vpack.c.b16 %v4230, %v4226
        %v4547 = vpack.c.b16 %v4235, %v4231
        %v4548 = vpack.c.b16 %v4236, %v4232
        %v4549 = vpack.c.b16 %v4237, %v4233
        %v4550 = vpack.c.b16 %v4238, %v4234
        %v4551 = vpack.c.b16 %v4243, %v4239
        %v4552 = vpack.c.b16 %v4244, %v4240
        %v4553 = vpack.c.b16 %v4245, %v4241
        %v4554 = vpack.c.b16 %v4246, %v4242
        %v4555 = vpack.c.b16 %v4251, %v4247
        %v4556 = vpack.c.b16 %v4252, %v4248
        %v4557 = vpack.c.b16 %v4253, %v4249
        %v4558 = vpack.c.b16 %v4254, %v4250
        %v4559 = vpack.c.b16 %v4259, %v4255
        %v4560 = vpack.c.b16 %v4260, %v4256
        %v4561 = vpack.c.b16 %v4261, %v4257
        %v4562 = vpack.c.b16 %v4262, %v4258
        %v4563 = vpack.c.b16 %v4267, %v4263
        %v4564 = vpack.c.b16 %v4268, %v4264
        %v4565 = vpack.c.b16 %v4269, %v4265
        %v4566 = vpack.c.b16 %v4270, %v4266
        %v4567 = vpack.c.b16 %v4275, %v4271
        %v4568 = vpack.c.b16 %v4276, %v4272
        %v4569 = vpack.c.b16 %v4277, %v4273
        %v4570 = vpack.c.b16 %v4278, %v4274
        %v4571 = vpack.c.b16 %v4283, %v4279
        %v4572 = vpack.c.b16 %v4284, %v4280
        %v4573 = vpack.c.b16 %v4285, %v4281
        %v4574 = vpack.c.b16 %v4286, %v4282
        %v4575 = vpack.c.b16 %v4291, %v4287
        %v4576 = vpack.c.b16 %v4292, %v4288
        %v4577 = vpack.c.b16 %v4293, %v4289
        %v4578 = vpack.c.b16 %v4294, %v4290
        %v4579 = vpack.c.b16 %v4299, %v4295
        %v4580 = vpack.c.b16 %v4300, %v4296
        %v4581 = vpack.c.b16 %v4301, %v4297
        %v4582 = vpack.c.b16 %v4302, %v4298
        %v4583 = vpack.c.b16 %v4307, %v4303
        %v4584 = vpack.c.b16 %v4308, %v4304
        %v4585 = vpack.c.b16 %v4309, %v4305
        %v4586 = vpack.c.b16 %v4310, %v4306
        %v4587 = vpack.c.b16 %v4315, %v4311
        %v4588 = vpack.c.b16 %v4316, %v4312
        %v4589 = vpack.c.b16 %v4317, %v4313
        %v4590 = vpack.c.b16 %v4318, %v4314
        %v4591 = vpack.c.b16 %v4323, %v4319
        %v4592 = vpack.c.b16 %v4324, %v4320
        %v4593 = vpack.c.b16 %v4325, %v4321
        %v4594 = vpack.c.b16 %v4326, %v4322
        %v4595 = vpack.c.b16 %v4331, %v4327
        %v4596 = vpack.c.b16 %v4332, %v4328
        %v4597 = vpack.c.b16 %v4333, %v4329
        %v4598 = vpack.c.b16 %v4334, %v4330
        %v4599 = vpack.c.b16 %v4339, %v4335
        %v4600 = vpack.c.b16 %v4340, %v4336
        %v4601 = vpack.c.b16 %v4341, %v4337
        %v4602 = vpack.c.b16 %v4342, %v4338
        %v4603 = vpack.c.b16 %v4347, %v4343
        %v4604 = vpack.c.b16 %v4348, %v4344
        %v4605 = vpack.c.b16 %v4349, %v4345
        %v4606 = vpack.c.b16 %v4350, %v4346
        %4863 = vmatprep.subr.bf16.mxu0 %v4352
        %4864 = vmatpush1.bf16.msra.mxu0 %v4351
        %4865 = vmatprep.subr.bf16.mxu0 %v4356
        %4866 = vmatpush1.bf16.msra.mxu0 %v4355
        %4867 = vmatprep.subr.bf16.mxu0 %v4360
        %4868 = vmatpush1.bf16.msra.mxu0 %v4359
        %4869 = vmatprep.subr.bf16.mxu0 %v4364
        %4870 = vmatpush1.bf16.msra.mxu0 %v4363
        %4871 = vmatprep.subr.bf16.mxu0 %v4368
        %4872 = vmatpush1.bf16.msra.mxu0 %v4367
        %4873 = vmatprep.subr.bf16.mxu0 %v4372
        %4874 = vmatpush1.bf16.msra.mxu0 %v4371
        %4875 = vmatprep.subr.bf16.mxu0 %v4376
        %4876 = vmatpush1.bf16.msra.mxu0 %v4375
        %4877 = vmatprep.subr.bf16.mxu0 %v4380
        %4878 = vmatpush1.bf16.msra.mxu0 %v4379
        %4879 = vmatprep.subr.bf16.mxu0 %v4384
        %4880 = vmatpush1.bf16.msra.mxu0 %v4383
        %4881 = vmatprep.subr.bf16.mxu0 %v4388
        %4882 = vmatpush1.bf16.msra.mxu0 %v4387
        %4883 = vmatprep.subr.bf16.mxu0 %v4392
        %4884 = vmatpush1.bf16.msra.mxu0 %v4391
        %4885 = vmatprep.subr.bf16.mxu0 %v4396
        %4886 = vmatpush1.bf16.msra.mxu0 %v4395
        %4887 = vmatprep.subr.bf16.mxu0 %v4400
        %4888 = vmatpush1.bf16.msra.mxu0 %v4399
        %4889 = vmatprep.subr.bf16.mxu0 %v4404
        %4890 = vmatpush1.bf16.msra.mxu0 %v4403
        %4891 = vmatprep.subr.bf16.mxu0 %v4408
        %4892 = vmatpush1.bf16.msra.mxu0 %v4407
        %4893 = vmatprep.subr.bf16.mxu0 %v4412
        %4894 = vmatpush1.bf16.msra.mxu0 %v4411
        %4895 = vmatprep.mubr.bf16.mxu0 %v3072
        %4896 = vmatmul.mubr.bf16.gmra.mrb[0].mxu0 %v3071
        %v4897 = vpop.f32.mrb[0].mxu0
        %v4898 = vadd.f32 0.0, %v4897
        %v4899 = vpop.f32.mrb[0].mxu0
        %v4900 = vadd.f32 0.0, %v4899
        %v4901 = vpop.f32.mrb[0].mxu0
        %v4902 = vadd.f32 0.0, %v4901
        %v4903 = vpop.f32.mrb[0].mxu0
        %v4904 = vadd.f32 0.0, %v4903
        %4905 = vmatprep.mubr.bf16.mxu0 %v3080
        %4906 = vmatmul.mubr.bf16.gmra.mrb[0].mxu0 %v3079
        %v4907 = vpop.f32.mrb[0].mxu0
        %v4908 = vadd.f32 0.0, %v4907
        %v4909 = vpop.f32.mrb[0].mxu0
        %v4910 = vadd.f32 0.0, %v4909
        %v4911 = vpop.f32.mrb[0].mxu0
        %v4912 = vadd.f32 0.0, %v4911
        %v4913 = vpop.f32.mrb[0].mxu0
        %v4914 = vadd.f32 0.0, %v4913
        %4915 = vmatprep.mubr.bf16.mxu0 %v3088
        %4916 = vmatmul.mubr.bf16.gmra.mrb[0].mxu0 %v3087
        %v4917 = vpop.f32.mrb[0].mxu0
        %v4918 = vadd.f32 0.0, %v4917
        %v4919 = vpop.f32.mrb[0].mxu0
        %v4920 = vadd.f32 0.0, %v4919
        %v4921 = vpop.f32.mrb[0].mxu0
        %v4922 = vadd.f32 0.0, %v4921
        %v4923 = vpop.f32.mrb[0].mxu0
        %v4924 = vadd.f32 0.0, %v4923
        %4925 = vmatprep.mubr.bf16.mxu0 %v3096
        %4926 = vmatmul.mubr.bf16.gmra.mrb[0].mxu0 %v3095
        %v4927 = vpop.f32.mrb[0].mxu0
        %v4928 = vadd.f32 0.0, %v4927
        %v4929 = vpop.f32.mrb[0].mxu0
        %v4930 = vadd.f32 0.0, %v4929
        %v4931 = vpop.f32.mrb[0].mxu0
        %v4932 = vadd.f32 0.0, %v4931
        %v4933 = vpop.f32.mrb[0].mxu0
        %v4934 = vadd.f32 0.0, %v4933
        %4935 = vmatprep.mubr.bf16.mxu0 %v3104
        %4936 = vmatmul.mubr.bf16.gmra.mrb[0].mxu0 %v3103
        %v4937 = vpop.f32.mrb[0].mxu0
        %v4938 = vadd.f32 0.0, %v4937
        %v4939 = vpop.f32.mrb[0].mxu0
        %v4940 = vadd.f32 0.0, %v4939
        %v4941 = vpop.f32.mrb[0].mxu0
        %v4942 = vadd.f32 0.0, %v4941
        %v4943 = vpop.f32.mrb[0].mxu0
        %v4944 = vadd.f32 0.0, %v4943
        %4945 = vmatprep.mubr.bf16.mxu0 %v3112
        %4946 = vmatmul.mubr.bf16.gmra.mrb[0].mxu0 %v3111
        %v4947 = vpop.f32.mrb[0].mxu0
        %v4948 = vadd.f32 0.0, %v4947
        %v4949 = vpop.f32.mrb[0].mxu0
        %v4950 = vadd.f32 0.0, %v4949
        %v4951 = vpop.f32.mrb[0].mxu0
        %v4952 = vadd.f32 0.0, %v4951
        %v4953 = vpop.f32.mrb[0].mxu0
        %v4954 = vadd.f32 0.0, %v4953
        %4955 = vmatprep.mubr.bf16.mxu0 %v3120
        %4956 = vmatmul.mubr.bf16.gmra.mrb[0].mxu0 %v3119
        %v4957 = vpop.f32.mrb[0].mxu0
        %v4958 = vadd.f32 0.0, %v4957
        %v4959 = vpop.f32.mrb[0].mxu0
        %v4960 = vadd.f32 0.0, %v4959
        %v4961 = vpop.f32.mrb[0].mxu0
        %v4962 = vadd.f32 0.0, %v4961
        %v4963 = vpop.f32.mrb[0].mxu0
        %v4964 = vadd.f32 0.0, %v4963
        %4965 = vmatprep.mubr.bf16.mxu0 %v3128
        %4966 = vmatmul.mubr.bf16.gmra.mrb[0].mxu0 %v3127
        %v4967 = vpop.f32.mrb[0].mxu0
        %v4968 = vadd.f32 0.0, %v4967
        %v4969 = vpop.f32.mrb[0].mxu0
        %v4970 = vadd.f32 0.0, %v4969
        %v4971 = vpop.f32.mrb[0].mxu0
        %v4972 = vadd.f32 0.0, %v4971
        %v4973 = vpop.f32.mrb[0].mxu0
        %v4974 = vadd.f32 0.0, %v4973
        %4975 = vmatprep.mubr.bf16.mxu0 %v3136
        %4976 = vmatmul.mubr.bf16.gmra.mrb[0].mxu0 %v3135
        %v4977 = vpop.f32.mrb[0].mxu0
        %v4978 = vadd.f32 0.0, %v4977
        %v4979 = vpop.f32.mrb[0].mxu0
        %v4980 = vadd.f32 0.0, %v4979
        %v4981 = vpop.f32.mrb[0].mxu0
        %v4982 = vadd.f32 0.0, %v4981
        %v4983 = vpop.f32.mrb[0].mxu0
        %v4984 = vadd.f32 0.0, %v4983
        %4985 = vmatprep.mubr.bf16.mxu0 %v3144
        %4986 = vmatmul.mubr.bf16.gmra.mrb[0].mxu0 %v3143
        %v4987 = vpop.f32.mrb[0].mxu0
        %v4988 = vadd.f32 0.0, %v4987
        %v4989 = vpop.f32.mrb[0].mxu0
        %v4990 = vadd.f32 0.0, %v4989
        %v4991 = vpop.f32.mrb[0].mxu0
        %v4992 = vadd.f32 0.0, %v4991
        %v4993 = vpop.f32.mrb[0].mxu0
        %v4994 = vadd.f32 0.0, %v4993
        %4995 = vmatprep.mubr.bf16.mxu0 %v3152
        %4996 = vmatmul.mubr.bf16.gmra.mrb[0].mxu0 %v3151
        %v4997 = vpop.f32.mrb[0].mxu0
        %v4998 = vadd.f32 0.0, %v4997
        %v4999 = vpop.f32.mrb[0].mxu0
        %v5000 = vadd.f32 0.0, %v4999
        %v5001 = vpop.f32.mrb[0].mxu0
        %v5002 = vadd.f32 0.0, %v5001
        %v5003 = vpop.f32.mrb[0].mxu0
        %v5004 = vadd.f32 0.0, %v5003
        %5005 = vmatprep.mubr.bf16.mxu0 %v3160
        %5006 = vmatmul.mubr.bf16.gmra.mrb[0].mxu0 %v3159
        %v5007 = vpop.f32.mrb[0].mxu0
        %v5008 = vadd.f32 0.0, %v5007
        %v5009 = vpop.f32.mrb[0].mxu0
        %v5010 = vadd.f32 0.0, %v5009
        %v5011 = vpop.f32.mrb[0].mxu0
        %v5012 = vadd.f32 0.0, %v5011
        %v5013 = vpop.f32.mrb[0].mxu0
        %v5014 = vadd.f32 0.0, %v5013
        %5015 = vmatprep.mubr.bf16.mxu0 %v3168
        %5016 = vmatmul.mubr.bf16.gmra.mrb[0].mxu0 %v3167
        %v5017 = vpop.f32.mrb[0].mxu0
        %v5018 = vadd.f32 0.0, %v5017
        %v5019 = vpop.f32.mrb[0].mxu0
        %v5020 = vadd.f32 0.0, %v5019
        %v5021 = vpop.f32.mrb[0].mxu0
        %v5022 = vadd.f32 0.0, %v5021
        %v5023 = vpop.f32.mrb[0].mxu0
        %v5024 = vadd.f32 0.0, %v5023
        %5025 = vmatprep.mubr.bf16.mxu0 %v3176
        %5026 = vmatmul.mubr.bf16.gmra.mrb[0].mxu0 %v3175
        %v5027 = vpop.f32.mrb[0].mxu0
        %v5028 = vadd.f32 0.0, %v5027
        %v5029 = vpop.f32.mrb[0].mxu0
        %v5030 = vadd.f32 0.0, %v5029
        %v5031 = vpop.f32.mrb[0].mxu0
        %v5032 = vadd.f32 0.0, %v5031
        %v5033 = vpop.f32.mrb[0].mxu0
        %v5034 = vadd.f32 0.0, %v5033
        %5035 = vmatprep.mubr.bf16.mxu0 %v3184
        %5036 = vmatmul.mubr.bf16.gmra.mrb[0].mxu0 %v3183
        %v5037 = vpop.f32.mrb[0].mxu0
        %v5038 = vadd.f32 0.0, %v5037
        %v5039 = vpop.f32.mrb[0].mxu0
        %v5040 = vadd.f32 0.0, %v5039
        %v5041 = vpop.f32.mrb[0].mxu0
        %v5042 = vadd.f32 0.0, %v5041
        %v5043 = vpop.f32.mrb[0].mxu0
        %v5044 = vadd.f32 0.0, %v5043
        %5045 = vmatprep.mubr.bf16.mxu0 %v3192
        %5046 = vmatmul.mubr.bf16.gmra.mrb[0].mxu0 %v3191
        %v5047 = vpop.f32.mrb[0].mxu0
        %v5048 = vadd.f32 0.0, %v5047
        %v5049 = vpop.f32.mrb[0].mxu0
        %v5050 = vadd.f32 0.0, %v5049
        %v5051 = vpop.f32.mrb[0].mxu0
        %v5052 = vadd.f32 0.0, %v5051
        %v5053 = vpop.f32.mrb[0].mxu0
        %v5054 = vadd.f32 0.0, %v5053
        %5055 = vmatprep.mubr.bf16.mxu0 %v3200
        %5056 = vmatmul.mubr.bf16.gmra.mrb[0].mxu0 %v3199
        %v5057 = vpop.f32.mrb[0].mxu0
        %v5058 = vadd.f32 0.0, %v5057
        %v5059 = vpop.f32.mrb[0].mxu0
        %v5060 = vadd.f32 0.0, %v5059
        %v5061 = vpop.f32.mrb[0].mxu0
        %v5062 = vadd.f32 0.0, %v5061
        %v5063 = vpop.f32.mrb[0].mxu0
        %v5064 = vadd.f32 0.0, %v5063
        %5065 = vmatprep.mubr.bf16.mxu0 %v3208
        %5066 = vmatmul.mubr.bf16.gmra.mrb[0].mxu0 %v3207
        %v5067 = vpop.f32.mrb[0].mxu0
        %v5068 = vadd.f32 0.0, %v5067
        %v5069 = vpop.f32.mrb[0].mxu0
        %v5070 = vadd.f32 0.0, %v5069
        %v5071 = vpop.f32.mrb[0].mxu0
        %v5072 = vadd.f32 0.0, %v5071
        %v5073 = vpop.f32.mrb[0].mxu0
        %v5074 = vadd.f32 0.0, %v5073
        %5075 = vmatprep.mubr.bf16.mxu0 %v3216
        %5076 = vmatmul.mubr.bf16.gmra.mrb[0].mxu0 %v3215
        %v5077 = vpop.f32.mrb[0].mxu0
        %v5078 = vadd.f32 0.0, %v5077
        %v5079 = vpop.f32.mrb[0].mxu0
        %v5080 = vadd.f32 0.0, %v5079
        %v5081 = vpop.f32.mrb[0].mxu0
        %v5082 = vadd.f32 0.0, %v5081
        %v5083 = vpop.f32.mrb[0].mxu0
        %v5084 = vadd.f32 0.0, %v5083
        %5085 = vmatprep.mubr.bf16.mxu0 %v3224
        %5086 = vmatmul.mubr.bf16.gmra.mrb[0].mxu0 %v3223
        %v5087 = vpop.f32.mrb[0].mxu0
        %v5088 = vadd.f32 0.0, %v5087
        %v5089 = vpop.f32.mrb[0].mxu0
        %v5090 = vadd.f32 0.0, %v5089
        %v5091 = vpop.f32.mrb[0].mxu0
        %v5092 = vadd.f32 0.0, %v5091
        %v5093 = vpop.f32.mrb[0].mxu0
        %v5094 = vadd.f32 0.0, %v5093
        %5095 = vmatprep.mubr.bf16.mxu0 %v3232
        %5096 = vmatmul.mubr.bf16.gmra.mrb[0].mxu0 %v3231
        %v5097 = vpop.f32.mrb[0].mxu0
        %v5098 = vadd.f32 0.0, %v5097
        %v5099 = vpop.f32.mrb[0].mxu0
        %v5100 = vadd.f32 0.0, %v5099
        %v5101 = vpop.f32.mrb[0].mxu0
        %v5102 = vadd.f32 0.0, %v5101
        %v5103 = vpop.f32.mrb[0].mxu0
        %v5104 = vadd.f32 0.0, %v5103
        %5105 = vmatprep.mubr.bf16.mxu0 %v3240
        %5106 = vmatmul.mubr.bf16.gmra.mrb[0].mxu0 %v3239
        %v5107 = vpop.f32.mrb[0].mxu0
        %v5108 = vadd.f32 0.0, %v5107
        %v5109 = vpop.f32.mrb[0].mxu0
        %v5110 = vadd.f32 0.0, %v5109
        %v5111 = vpop.f32.mrb[0].mxu0
        %v5112 = vadd.f32 0.0, %v5111
        %v5113 = vpop.f32.mrb[0].mxu0
        %v5114 = vadd.f32 0.0, %v5113
        %5115 = vmatprep.mubr.bf16.mxu0 %v3248
        %5116 = vmatmul.mubr.bf16.gmra.mrb[0].mxu0 %v3247
        %v5117 = vpop.f32.mrb[0].mxu0
        %v5118 = vadd.f32 0.0, %v5117
        %v5119 = vpop.f32.mrb[0].mxu0
        %v5120 = vadd.f32 0.0, %v5119
        %v5121 = vpop.f32.mrb[0].mxu0
        %v5122 = vadd.f32 0.0, %v5121
        %v5123 = vpop.f32.mrb[0].mxu0
        %v5124 = vadd.f32 0.0, %v5123
        %5125 = vmatprep.mubr.bf16.mxu0 %v3256
        %5126 = vmatmul.mubr.bf16.gmra.mrb[0].mxu0 %v3255
        %v5127 = vpop.f32.mrb[0].mxu0
        %v5128 = vadd.f32 0.0, %v5127
        %v5129 = vpop.f32.mrb[0].mxu0
        %v5130 = vadd.f32 0.0, %v5129
        %v5131 = vpop.f32.mrb[0].mxu0
        %v5132 = vadd.f32 0.0, %v5131
        %v5133 = vpop.f32.mrb[0].mxu0
        %v5134 = vadd.f32 0.0, %v5133
        %5135 = vmatprep.mubr.bf16.mxu0 %v3264
        %5136 = vmatmul.mubr.bf16.gmra.mrb[0].mxu0 %v3263
        %v5137 = vpop.f32.mrb[0].mxu0
        %v5138 = vadd.f32 0.0, %v5137
        %v5139 = vpop.f32.mrb[0].mxu0
        %v5140 = vadd.f32 0.0, %v5139
        %v5141 = vpop.f32.mrb[0].mxu0
        %v5142 = vadd.f32 0.0, %v5141
        %v5143 = vpop.f32.mrb[0].mxu0
        %v5144 = vadd.f32 0.0, %v5143
        %5145 = vmatprep.mubr.bf16.mxu0 %v3272
        %5146 = vmatmul.mubr.bf16.gmra.mrb[0].mxu0 %v3271
        %v5147 = vpop.f32.mrb[0].mxu0
        %v5148 = vadd.f32 0.0, %v5147
        %v5149 = vpop.f32.mrb[0].mxu0
        %v5150 = vadd.f32 0.0, %v5149
        %v5151 = vpop.f32.mrb[0].mxu0
        %v5152 = vadd.f32 0.0, %v5151
        %v5153 = vpop.f32.mrb[0].mxu0
        %v5154 = vadd.f32 0.0, %v5153
        %5155 = vmatprep.mubr.bf16.mxu0 %v3280
        %5156 = vmatmul.mubr.bf16.gmra.mrb[0].mxu0 %v3279
        %v5157 = vpop.f32.mrb[0].mxu0
        %v5158 = vadd.f32 0.0, %v5157
        %v5159 = vpop.f32.mrb[0].mxu0
        %v5160 = vadd.f32 0.0, %v5159
        %v5161 = vpop.f32.mrb[0].mxu0
        %v5162 = vadd.f32 0.0, %v5161
        %v5163 = vpop.f32.mrb[0].mxu0
        %v5164 = vadd.f32 0.0, %v5163
        %5165 = vmatprep.mubr.bf16.mxu0 %v3288
        %5166 = vmatmul.mubr.bf16.gmra.mrb[0].mxu0 %v3287
        %v5167 = vpop.f32.mrb[0].mxu0
        %v5168 = vadd.f32 0.0, %v5167
        %v5169 = vpop.f32.mrb[0].mxu0
        %v5170 = vadd.f32 0.0, %v5169
        %v5171 = vpop.f32.mrb[0].mxu0
        %v5172 = vadd.f32 0.0, %v5171
        %v5173 = vpop.f32.mrb[0].mxu0
        %v5174 = vadd.f32 0.0, %v5173
        %5175 = vmatprep.mubr.bf16.mxu0 %v3296
        %5176 = vmatmul.mubr.bf16.gmra.mrb[0].mxu0 %v3295
        %v5177 = vpop.f32.mrb[0].mxu0
        %v5178 = vadd.f32 0.0, %v5177
        %v5179 = vpop.f32.mrb[0].mxu0
        %v5180 = vadd.f32 0.0, %v5179
        %v5181 = vpop.f32.mrb[0].mxu0
        %v5182 = vadd.f32 0.0, %v5181
        %v5183 = vpop.f32.mrb[0].mxu0
        %v5184 = vadd.f32 0.0, %v5183
        %5185 = vmatprep.mubr.bf16.mxu0 %v3304
        %5186 = vmatmul.mubr.bf16.gmra.mrb[0].mxu0 %v3303
        %v5187 = vpop.f32.mrb[0].mxu0
        %v5188 = vadd.f32 0.0, %v5187
        %v5189 = vpop.f32.mrb[0].mxu0
        %v5190 = vadd.f32 0.0, %v5189
        %v5191 = vpop.f32.mrb[0].mxu0
        %v5192 = vadd.f32 0.0, %v5191
        %v5193 = vpop.f32.mrb[0].mxu0
        %v5194 = vadd.f32 0.0, %v5193
        %5195 = vmatprep.mubr.bf16.mxu0 %v3312
        %5196 = vmatmul.mubr.bf16.gmra.mrb[0].mxu0 %v3311
        %v5197 = vpop.f32.mrb[0].mxu0
        %v5198 = vadd.f32 0.0, %v5197
        %v5199 = vpop.f32.mrb[0].mxu0
        %v5200 = vadd.f32 0.0, %v5199
        %v5201 = vpop.f32.mrb[0].mxu0
        %v5202 = vadd.f32 0.0, %v5201
        %v5203 = vpop.f32.mrb[0].mxu0
        %v5204 = vadd.f32 0.0, %v5203
        %5205 = vmatprep.mubr.bf16.mxu0 %v3320
        %5206 = vmatmul.mubr.bf16.gmra.mrb[0].mxu0 %v3319
        %v5207 = vpop.f32.mrb[0].mxu0
        %v5208 = vadd.f32 0.0, %v5207
        %v5209 = vpop.f32.mrb[0].mxu0
        %v5210 = vadd.f32 0.0, %v5209
        %v5211 = vpop.f32.mrb[0].mxu0
        %v5212 = vadd.f32 0.0, %v5211
        %v5213 = vpop.f32.mrb[0].mxu0
        %v5214 = vadd.f32 0.0, %v5213
        %5215 = vdwg.mxu0
        %5216 = vmatprep.subr.bf16.mxu0 %v4416
        %5217 = vmatpush1.bf16.msra.mxu0 %v4415
        %5218 = vmatprep.subr.bf16.mxu0 %v4420
        %5219 = vmatpush1.bf16.msra.mxu0 %v4419
        %5220 = vmatprep.subr.bf16.mxu0 %v4424
        %5221 = vmatpush1.bf16.msra.mxu0 %v4423
        %5222 = vmatprep.subr.bf16.mxu0 %v4428
        %5223 = vmatpush1.bf16.msra.mxu0 %v4427
        %5224 = vmatprep.subr.bf16.mxu0 %v4432
        %5225 = vmatpush1.bf16.msra.mxu0 %v4431
        %5226 = vmatprep.subr.bf16.mxu0 %v4436
        %5227 = vmatpush1.bf16.msra.mxu0 %v4435
        %5228 = vmatprep.subr.bf16.mxu0 %v4440
        %5229 = vmatpush1.bf16.msra.mxu0 %v4439
        %5230 = vmatprep.subr.bf16.mxu0 %v4444
        %5231 = vmatpush1.bf16.msra.mxu0 %v4443
        %5232 = vmatprep.subr.bf16.mxu0 %v4448
        %5233 = vmatpush1.bf16.msra.mxu0 %v4447
        %5234 = vmatprep.subr.bf16.mxu0 %v4452
        %5235 = vmatpush1.bf16.msra.mxu0 %v4451
        %5236 = vmatprep.subr.bf16.mxu0 %v4456
        %5237 = vmatpush1.bf16.msra.mxu0 %v4455
        %5238 = vmatprep.subr.bf16.mxu0 %v4460
        %5239 = vmatpush1.bf16.msra.mxu0 %v4459
        %5240 = vmatprep.subr.bf16.mxu0 %v4464
        %5241 = vmatpush1.bf16.msra.mxu0 %v4463
        %5242 = vmatprep.subr.bf16.mxu0 %v4468
        %5243 = vmatpush1.bf16.msra.mxu0 %v4467
        %5244 = vmatprep.subr.bf16.mxu0 %v4472
        %5245 = vmatpush1.bf16.msra.mxu0 %v4471
        %5246 = vmatprep.subr.bf16.mxu0 %v4476
        %5247 = vmatpush1.bf16.msra.mxu0 %v4475
        %5248 = vmatprep.mubr.bf16.mxu0 %v3074
        %5249 = vmatmul.mubr.bf16.gmra.mrb[0].mxu0 %v3073
        %v5250 = vpop.f32.mrb[0].mxu0
        %v5251 = vadd.f32 %v4898, %v5250
        %v5252 = vpop.f32.mrb[0].mxu0
        %v5253 = vadd.f32 %v4900, %v5252
        %v5254 = vpop.f32.mrb[0].mxu0
        %v5255 = vadd.f32 %v4902, %v5254
        %v5256 = vpop.f32.mrb[0].mxu0
        %v5257 = vadd.f32 %v4904, %v5256
        %5258 = vmatprep.mubr.bf16.mxu0 %v3082
        %5259 = vmatmul.mubr.bf16.gmra.mrb[0].mxu0 %v3081
        %v5260 = vpop.f32.mrb[0].mxu0
        %v5261 = vadd.f32 %v4908, %v5260
        %v5262 = vpop.f32.mrb[0].mxu0
        %v5263 = vadd.f32 %v4910, %v5262
        %v5264 = vpop.f32.mrb[0].mxu0
        %v5265 = vadd.f32 %v4912, %v5264
        %v5266 = vpop.f32.mrb[0].mxu0
        %v5267 = vadd.f32 %v4914, %v5266
        %5268 = vmatprep.mubr.bf16.mxu0 %v3090
        %5269 = vmatmul.mubr.bf16.gmra.mrb[0].mxu0 %v3089
        %v5270 = vpop.f32.mrb[0].mxu0
        %v5271 = vadd.f32 %v4918, %v5270
        %v5272 = vpop.f32.mrb[0].mxu0
        %v5273 = vadd.f32 %v4920, %v5272
        %v5274 = vpop.f32.mrb[0].mxu0
        %v5275 = vadd.f32 %v4922, %v5274
        %v5276 = vpop.f32.mrb[0].mxu0
        %v5277 = vadd.f32 %v4924, %v5276
        %5278 = vmatprep.mubr.bf16.mxu0 %v3098
        %5279 = vmatmul.mubr.bf16.gmra.mrb[0].mxu0 %v3097
        %v5280 = vpop.f32.mrb[0].mxu0
        %v5281 = vadd.f32 %v4928, %v5280
        %v5282 = vpop.f32.mrb[0].mxu0
        %v5283 = vadd.f32 %v4930, %v5282
        %v5284 = vpop.f32.mrb[0].mxu0
        %v5285 = vadd.f32 %v4932, %v5284
        %v5286 = vpop.f32.mrb[0].mxu0
        %v5287 = vadd.f32 %v4934, %v5286
        %5288 = vmatprep.mubr.bf16.mxu0 %v3106
        %5289 = vmatmul.mubr.bf16.gmra.mrb[0].mxu0 %v3105
        %v5290 = vpop.f32.mrb[0].mxu0
        %v5291 = vadd.f32 %v4938, %v5290
        %v5292 = vpop.f32.mrb[0].mxu0
        %v5293 = vadd.f32 %v4940, %v5292
        %v5294 = vpop.f32.mrb[0].mxu0
        %v5295 = vadd.f32 %v4942, %v5294
        %v5296 = vpop.f32.mrb[0].mxu0
        %v5297 = vadd.f32 %v4944, %v5296
        %5298 = vmatprep.mubr.bf16.mxu0 %v3114
        %5299 = vmatmul.mubr.bf16.gmra.mrb[0].mxu0 %v3113
        %v5300 = vpop.f32.mrb[0].mxu0
        %v5301 = vadd.f32 %v4948, %v5300
        %v5302 = vpop.f32.mrb[0].mxu0
        %v5303 = vadd.f32 %v4950, %v5302
        %v5304 = vpop.f32.mrb[0].mxu0
        %v5305 = vadd.f32 %v4952, %v5304
        %v5306 = vpop.f32.mrb[0].mxu0
        %v5307 = vadd.f32 %v4954, %v5306
        %5308 = vmatprep.mubr.bf16.mxu0 %v3122
        %5309 = vmatmul.mubr.bf16.gmra.mrb[0].mxu0 %v3121
        %v5310 = vpop.f32.mrb[0].mxu0
        %v5311 = vadd.f32 %v4958, %v5310
        %v5312 = vpop.f32.mrb[0].mxu0
        %v5313 = vadd.f32 %v4960, %v5312
        %v5314 = vpop.f32.mrb[0].mxu0
        %v5315 = vadd.f32 %v4962, %v5314
        %v5316 = vpop.f32.mrb[0].mxu0
        %v5317 = vadd.f32 %v4964, %v5316
        %5318 = vmatprep.mubr.bf16.mxu0 %v3130
        %5319 = vmatmul.mubr.bf16.gmra.mrb[0].mxu0 %v3129
        %v5320 = vpop.f32.mrb[0].mxu0
        %v5321 = vadd.f32 %v4968, %v5320
        %v5322 = vpop.f32.mrb[0].mxu0
        %v5323 = vadd.f32 %v4970, %v5322
        %v5324 = vpop.f32.mrb[0].mxu0
        %v5325 = vadd.f32 %v4972, %v5324
        %v5326 = vpop.f32.mrb[0].mxu0
        %v5327 = vadd.f32 %v4974, %v5326
        %5328 = vmatprep.mubr.bf16.mxu0 %v3138
        %5329 = vmatmul.mubr.bf16.gmra.mrb[0].mxu0 %v3137
        %v5330 = vpop.f32.mrb[0].mxu0
        %v5331 = vadd.f32 %v4978, %v5330
        %v5332 = vpop.f32.mrb[0].mxu0
        %v5333 = vadd.f32 %v4980, %v5332
        %v5334 = vpop.f32.mrb[0].mxu0
        %v5335 = vadd.f32 %v4982, %v5334
        %v5336 = vpop.f32.mrb[0].mxu0
        %v5337 = vadd.f32 %v4984, %v5336
        %5338 = vmatprep.mubr.bf16.mxu0 %v3146
        %5339 = vmatmul.mubr.bf16.gmra.mrb[0].mxu0 %v3145
        %v5340 = vpop.f32.mrb[0].mxu0
        %v5341 = vadd.f32 %v4988, %v5340
        %v5342 = vpop.f32.mrb[0].mxu0
        %v5343 = vadd.f32 %v4990, %v5342
        %v5344 = vpop.f32.mrb[0].mxu0
        %v5345 = vadd.f32 %v4992, %v5344
        %v5346 = vpop.f32.mrb[0].mxu0
        %v5347 = vadd.f32 %v4994, %v5346
        %5348 = vmatprep.mubr.bf16.mxu0 %v3154
        %5349 = vmatmul.mubr.bf16.gmra.mrb[0].mxu0 %v3153
        %v5350 = vpop.f32.mrb[0].mxu0
        %v5351 = vadd.f32 %v4998, %v5350
        %v5352 = vpop.f32.mrb[0].mxu0
        %v5353 = vadd.f32 %v5000, %v5352
        %v5354 = vpop.f32.mrb[0].mxu0
        %v5355 = vadd.f32 %v5002, %v5354
        %v5356 = vpop.f32.mrb[0].mxu0
        %v5357 = vadd.f32 %v5004, %v5356
        %5358 = vmatprep.mubr.bf16.mxu0 %v3162
        %5359 = vmatmul.mubr.bf16.gmra.mrb[0].mxu0 %v3161
        %v5360 = vpop.f32.mrb[0].mxu0
        %v5361 = vadd.f32 %v5008, %v5360
        %v5362 = vpop.f32.mrb[0].mxu0
        %v5363 = vadd.f32 %v5010, %v5362
        %v5364 = vpop.f32.mrb[0].mxu0
        %v5365 = vadd.f32 %v5012, %v5364
        %v5366 = vpop.f32.mrb[0].mxu0
        %v5367 = vadd.f32 %v5014, %v5366
        %5368 = vmatprep.mubr.bf16.mxu0 %v3170
        %5369 = vmatmul.mubr.bf16.gmra.mrb[0].mxu0 %v3169
        %v5370 = vpop.f32.mrb[0].mxu0
        %v5371 = vadd.f32 %v5018, %v5370
        %v5372 = vpop.f32.mrb[0].mxu0
        %v5373 = vadd.f32 %v5020, %v5372
        %v5374 = vpop.f32.mrb[0].mxu0
        %v5375 = vadd.f32 %v5022, %v5374
        %v5376 = vpop.f32.mrb[0].mxu0
        %v5377 = vadd.f32 %v5024, %v5376
        %5378 = vmatprep.mubr.bf16.mxu0 %v3178
        %5379 = vmatmul.mubr.bf16.gmra.mrb[0].mxu0 %v3177
        %v5380 = vpop.f32.mrb[0].mxu0
        %v5381 = vadd.f32 %v5028, %v5380
        %v5382 = vpop.f32.mrb[0].mxu0
        %v5383 = vadd.f32 %v5030, %v5382
        %v5384 = vpop.f32.mrb[0].mxu0
        %v5385 = vadd.f32 %v5032, %v5384
        %v5386 = vpop.f32.mrb[0].mxu0
        %v5387 = vadd.f32 %v5034, %v5386
        %5388 = vmatprep.mubr.bf16.mxu0 %v3186
        %5389 = vmatmul.mubr.bf16.gmra.mrb[0].mxu0 %v3185
        %v5390 = vpop.f32.mrb[0].mxu0
        %v5391 = vadd.f32 %v5038, %v5390
        %v5392 = vpop.f32.mrb[0].mxu0
        %v5393 = vadd.f32 %v5040, %v5392
        %v5394 = vpop.f32.mrb[0].mxu0
        %v5395 = vadd.f32 %v5042, %v5394
        %v5396 = vpop.f32.mrb[0].mxu0
        %v5397 = vadd.f32 %v5044, %v5396
        %5398 = vmatprep.mubr.bf16.mxu0 %v3194
        %5399 = vmatmul.mubr.bf16.gmra.mrb[0].mxu0 %v3193
        %v5400 = vpop.f32.mrb[0].mxu0
        %v5401 = vadd.f32 %v5048, %v5400
        %v5402 = vpop.f32.mrb[0].mxu0
        %v5403 = vadd.f32 %v5050, %v5402
        %v5404 = vpop.f32.mrb[0].mxu0
        %v5405 = vadd.f32 %v5052, %v5404
        %v5406 = vpop.f32.mrb[0].mxu0
        %v5407 = vadd.f32 %v5054, %v5406
        %5408 = vmatprep.mubr.bf16.mxu0 %v3202
        %5409 = vmatmul.mubr.bf16.gmra.mrb[0].mxu0 %v3201
        %v5410 = vpop.f32.mrb[0].mxu0
        %v5411 = vadd.f32 %v5058, %v5410
        %v5412 = vpop.f32.mrb[0].mxu0
        %v5413 = vadd.f32 %v5060, %v5412
        %v5414 = vpop.f32.mrb[0].mxu0
        %v5415 = vadd.f32 %v5062, %v5414
        %v5416 = vpop.f32.mrb[0].mxu0
        %v5417 = vadd.f32 %v5064, %v5416
        %5418 = vmatprep.mubr.bf16.mxu0 %v3210
        %5419 = vmatmul.mubr.bf16.gmra.mrb[0].mxu0 %v3209
        %v5420 = vpop.f32.mrb[0].mxu0
        %v5421 = vadd.f32 %v5068, %v5420
        %v5422 = vpop.f32.mrb[0].mxu0
        %v5423 = vadd.f32 %v5070, %v5422
        %v5424 = vpop.f32.mrb[0].mxu0
        %v5425 = vadd.f32 %v5072, %v5424
        %v5426 = vpop.f32.mrb[0].mxu0
        %v5427 = vadd.f32 %v5074, %v5426
        %5428 = vmatprep.mubr.bf16.mxu0 %v3218
        %5429 = vmatmul.mubr.bf16.gmra.mrb[0].mxu0 %v3217
        %v5430 = vpop.f32.mrb[0].mxu0
        %v5431 = vadd.f32 %v5078, %v5430
        %v5432 = vpop.f32.mrb[0].mxu0
        %v5433 = vadd.f32 %v5080, %v5432
        %v5434 = vpop.f32.mrb[0].mxu0
        %v5435 = vadd.f32 %v5082, %v5434
        %v5436 = vpop.f32.mrb[0].mxu0
        %v5437 = vadd.f32 %v5084, %v5436
        %5438 = vmatprep.mubr.bf16.mxu0 %v3226
        %5439 = vmatmul.mubr.bf16.gmra.mrb[0].mxu0 %v3225
        %v5440 = vpop.f32.mrb[0].mxu0
        %v5441 = vadd.f32 %v5088, %v5440
        %v5442 = vpop.f32.mrb[0].mxu0
        %v5443 = vadd.f32 %v5090, %v5442
        %v5444 = vpop.f32.mrb[0].mxu0
        %v5445 = vadd.f32 %v5092, %v5444
        %v5446 = vpop.f32.mrb[0].mxu0
        %v5447 = vadd.f32 %v5094, %v5446
        %5448 = vmatprep.mubr.bf16.mxu0 %v3234
        %5449 = vmatmul.mubr.bf16.gmra.mrb[0].mxu0 %v3233
        %v5450 = vpop.f32.mrb[0].mxu0
        %v5451 = vadd.f32 %v5098, %v5450
        %v5452 = vpop.f32.mrb[0].mxu0
        %v5453 = vadd.f32 %v5100, %v5452
        %v5454 = vpop.f32.mrb[0].mxu0
        %v5455 = vadd.f32 %v5102, %v5454
        %v5456 = vpop.f32.mrb[0].mxu0
        %v5457 = vadd.f32 %v5104, %v5456
        %5458 = vmatprep.mubr.bf16.mxu0 %v3242
        %5459 = vmatmul.mubr.bf16.gmra.mrb[0].mxu0 %v3241
        %v5460 = vpop.f32.mrb[0].mxu0
        %v5461 = vadd.f32 %v5108, %v5460
        %v5462 = vpop.f32.mrb[0].mxu0
        %v5463 = vadd.f32 %v5110, %v5462
        %v5464 = vpop.f32.mrb[0].mxu0
        %v5465 = vadd.f32 %v5112, %v5464
        %v5466 = vpop.f32.mrb[0].mxu0
        %v5467 = vadd.f32 %v5114, %v5466
        %5468 = vmatprep.mubr.bf16.mxu0 %v3250
        %5469 = vmatmul.mubr.bf16.gmra.mrb[0].mxu0 %v3249
        %v5470 = vpop.f32.mrb[0].mxu0
        %v5471 = vadd.f32 %v5118, %v5470
        %v5472 = vpop.f32.mrb[0].mxu0
        %v5473 = vadd.f32 %v5120, %v5472
        %v5474 = vpop.f32.mrb[0].mxu0
        %v5475 = vadd.f32 %v5122, %v5474
        %v5476 = vpop.f32.mrb[0].mxu0
        %v5477 = vadd.f32 %v5124, %v5476
        %5478 = vmatprep.mubr.bf16.mxu0 %v3258
        %5479 = vmatmul.mubr.bf16.gmra.mrb[0].mxu0 %v3257
        %v5480 = vpop.f32.mrb[0].mxu0
        %v5481 = vadd.f32 %v5128, %v5480
        %v5482 = vpop.f32.mrb[0].mxu0
        %v5483 = vadd.f32 %v5130, %v5482
        %v5484 = vpop.f32.mrb[0].mxu0
        %v5485 = vadd.f32 %v5132, %v5484
        %v5486 = vpop.f32.mrb[0].mxu0
        %v5487 = vadd.f32 %v5134, %v5486
        %5488 = vmatprep.mubr.bf16.mxu0 %v3266
        %5489 = vmatmul.mubr.bf16.gmra.mrb[0].mxu0 %v3265
        %v5490 = vpop.f32.mrb[0].mxu0
        %v5491 = vadd.f32 %v5138, %v5490
        %v5492 = vpop.f32.mrb[0].mxu0
        %v5493 = vadd.f32 %v5140, %v5492
        %v5494 = vpop.f32.mrb[0].mxu0
        %v5495 = vadd.f32 %v5142, %v5494
        %v5496 = vpop.f32.mrb[0].mxu0
        %v5497 = vadd.f32 %v5144, %v5496
        %5498 = vmatprep.mubr.bf16.mxu0 %v3274
        %5499 = vmatmul.mubr.bf16.gmra.mrb[0].mxu0 %v3273
        %v5500 = vpop.f32.mrb[0].mxu0
        %v5501 = vadd.f32 %v5148, %v5500
        %v5502 = vpop.f32.mrb[0].mxu0
        %v5503 = vadd.f32 %v5150, %v5502
        %v5504 = vpop.f32.mrb[0].mxu0
        %v5505 = vadd.f32 %v5152, %v5504
        %v5506 = vpop.f32.mrb[0].mxu0
        %v5507 = vadd.f32 %v5154, %v5506
        %5508 = vmatprep.mubr.bf16.mxu0 %v3282
        %5509 = vmatmul.mubr.bf16.gmra.mrb[0].mxu0 %v3281
        %v5510 = vpop.f32.mrb[0].mxu0
        %v5511 = vadd.f32 %v5158, %v5510
        %v5512 = vpop.f32.mrb[0].mxu0
        %v5513 = vadd.f32 %v5160, %v5512
        %v5514 = vpop.f32.mrb[0].mxu0
        %v5515 = vadd.f32 %v5162, %v5514
        %v5516 = vpop.f32.mrb[0].mxu0
        %v5517 = vadd.f32 %v5164, %v5516
        %5518 = vmatprep.mubr.bf16.mxu0 %v3290
        %5519 = vmatmul.mubr.bf16.gmra.mrb[0].mxu0 %v3289
        %v5520 = vpop.f32.mrb[0].mxu0
        %v5521 = vadd.f32 %v5168, %v5520
        %v5522 = vpop.f32.mrb[0].mxu0
        %v5523 = vadd.f32 %v5170, %v5522
        %v5524 = vpop.f32.mrb[0].mxu0
        %v5525 = vadd.f32 %v5172, %v5524
        %v5526 = vpop.f32.mrb[0].mxu0
        %v5527 = vadd.f32 %v5174, %v5526
        %5528 = vmatprep.mubr.bf16.mxu0 %v3298
        %5529 = vmatmul.mubr.bf16.gmra.mrb[0].mxu0 %v3297
        %v5530 = vpop.f32.mrb[0].mxu0
        %v5531 = vadd.f32 %v5178, %v5530
        %v5532 = vpop.f32.mrb[0].mxu0
        %v5533 = vadd.f32 %v5180, %v5532
        %v5534 = vpop.f32.mrb[0].mxu0
        %v5535 = vadd.f32 %v5182, %v5534
        %v5536 = vpop.f32.mrb[0].mxu0
        %v5537 = vadd.f32 %v5184, %v5536
        %5538 = vmatprep.mubr.bf16.mxu0 %v3306
        %5539 = vmatmul.mubr.bf16.gmra.mrb[0].mxu0 %v3305
        %v5540 = vpop.f32.mrb[0].mxu0
        %v5541 = vadd.f32 %v5188, %v5540
        %v5542 = vpop.f32.mrb[0].mxu0
        %v5543 = vadd.f32 %v5190, %v5542
        %v5544 = vpop.f32.mrb[0].mxu0
        %v5545 = vadd.f32 %v5192, %v5544
        %v5546 = vpop.f32.mrb[0].mxu0
        %v5547 = vadd.f32 %v5194, %v5546
        %5548 = vmatprep.mubr.bf16.mxu0 %v3314
        %5549 = vmatmul.mubr.bf16.gmra.mrb[0].mxu0 %v3313
        %v5550 = vpop.f32.mrb[0].mxu0
        %v5551 = vadd.f32 %v5198, %v5550
        %v5552 = vpop.f32.mrb[0].mxu0
        %v5553 = vadd.f32 %v5200, %v5552
        %v5554 = vpop.f32.mrb[0].mxu0
        %v5555 = vadd.f32 %v5202, %v5554
        %v5556 = vpop.f32.mrb[0].mxu0
        %v5557 = vadd.f32 %v5204, %v5556
        %5558 = vmatprep.mubr.bf16.mxu0 %v3322
        %5559 = vmatmul.mubr.bf16.gmra.mrb[0].mxu0 %v3321
        %v5560 = vpop.f32.mrb[0].mxu0
        %v5561 = vadd.f32 %v5208, %v5560
        %v5562 = vpop.f32.mrb[0].mxu0
        %v5563 = vadd.f32 %v5210, %v5562
        %v5564 = vpop.f32.mrb[0].mxu0
        %v5565 = vadd.f32 %v5212, %v5564
        %v5566 = vpop.f32.mrb[0].mxu0
        %v5567 = vadd.f32 %v5214, %v5566
        %5568 = vdwg.mxu0
        %5569 = vmatprep.subr.bf16.mxu0 %v4480
        %5570 = vmatpush1.bf16.msra.mxu0 %v4479
        %5571 = vmatprep.subr.bf16.mxu0 %v4484
        %5572 = vmatpush1.bf16.msra.mxu0 %v4483
        %5573 = vmatprep.subr.bf16.mxu0 %v4488
        %5574 = vmatpush1.bf16.msra.mxu0 %v4487
        %5575 = vmatprep.subr.bf16.mxu0 %v4492
        %5576 = vmatpush1.bf16.msra.mxu0 %v4491
        %5577 = vmatprep.subr.bf16.mxu0 %v4496
        %5578 = vmatpush1.bf16.msra.mxu0 %v4495
        %5579 = vmatprep.subr.bf16.mxu0 %v4500
        %5580 = vmatpush1.bf16.msra.mxu0 %v4499
        %5581 = vmatprep.subr.bf16.mxu0 %v4504
        %5582 = vmatpush1.bf16.msra.mxu0 %v4503
        %5583 = vmatprep.subr.bf16.mxu0 %v4508
        %5584 = vmatpush1.bf16.msra.mxu0 %v4507
        %5585 = vmatprep.subr.bf16.mxu0 %v4512
        %5586 = vmatpush1.bf16.msra.mxu0 %v4511
        %5587 = vmatprep.subr.bf16.mxu0 %v4516
        %5588 = vmatpush1.bf16.msra.mxu0 %v4515
        %5589 = vmatprep.subr.bf16.mxu0 %v4520
        %5590 = vmatpush1.bf16.msra.mxu0 %v4519
        %5591 = vmatprep.subr.bf16.mxu0 %v4524
        %5592 = vmatpush1.bf16.msra.mxu0 %v4523
        %5593 = vmatprep.subr.bf16.mxu0 %v4528
        %5594 = vmatpush1.bf16.msra.mxu0 %v4527
        %5595 = vmatprep.subr.bf16.mxu0 %v4532
        %5596 = vmatpush1.bf16.msra.mxu0 %v4531
        %5597 = vmatprep.subr.bf16.mxu0 %v4536
        %5598 = vmatpush1.bf16.msra.mxu0 %v4535
        %5599 = vmatprep.subr.bf16.mxu0 %v4540
        %5600 = vmatpush1.bf16.msra.mxu0 %v4539
        %5601 = vmatprep.mubr.bf16.mxu0 %v3076
        %5602 = vmatmul.mubr.bf16.gmra.mrb[0].mxu0 %v3075
        %v5603 = vpop.f32.mrb[0].mxu0
        %v5604 = vadd.f32 %v5251, %v5603
        %v5605 = vpop.f32.mrb[0].mxu0
        %v5606 = vadd.f32 %v5253, %v5605
        %v5607 = vpop.f32.mrb[0].mxu0
        %v5608 = vadd.f32 %v5255, %v5607
        %v5609 = vpop.f32.mrb[0].mxu0
        %v5610 = vadd.f32 %v5257, %v5609
        %5611 = vmatprep.mubr.bf16.mxu0 %v3084
        %5612 = vmatmul.mubr.bf16.gmra.mrb[0].mxu0 %v3083
        %v5613 = vpop.f32.mrb[0].mxu0
        %v5614 = vadd.f32 %v5261, %v5613
        %v5615 = vpop.f32.mrb[0].mxu0
        %v5616 = vadd.f32 %v5263, %v5615
        %v5617 = vpop.f32.mrb[0].mxu0
        %v5618 = vadd.f32 %v5265, %v5617
        %v5619 = vpop.f32.mrb[0].mxu0
        %v5620 = vadd.f32 %v5267, %v5619
        %5621 = vmatprep.mubr.bf16.mxu0 %v3092
        %5622 = vmatmul.mubr.bf16.gmra.mrb[0].mxu0 %v3091
        %v5623 = vpop.f32.mrb[0].mxu0
        %v5624 = vadd.f32 %v5271, %v5623
        %v5625 = vpop.f32.mrb[0].mxu0
        %v5626 = vadd.f32 %v5273, %v5625
        %v5627 = vpop.f32.mrb[0].mxu0
        %v5628 = vadd.f32 %v5275, %v5627
        %v5629 = vpop.f32.mrb[0].mxu0
        %v5630 = vadd.f32 %v5277, %v5629
        %5631 = vmatprep.mubr.bf16.mxu0 %v3100
        %5632 = vmatmul.mubr.bf16.gmra.mrb[0].mxu0 %v3099
        %v5633 = vpop.f32.mrb[0].mxu0
        %v5634 = vadd.f32 %v5281, %v5633
        %v5635 = vpop.f32.mrb[0].mxu0
        %v5636 = vadd.f32 %v5283, %v5635
        %v5637 = vpop.f32.mrb[0].mxu0
        %v5638 = vadd.f32 %v5285, %v5637
        %v5639 = vpop.f32.mrb[0].mxu0
        %v5640 = vadd.f32 %v5287, %v5639
        %5641 = vmatprep.mubr.bf16.mxu0 %v3108
        %5642 = vmatmul.mubr.bf16.gmra.mrb[0].mxu0 %v3107
        %v5643 = vpop.f32.mrb[0].mxu0
        %v5644 = vadd.f32 %v5291, %v5643
        %v5645 = vpop.f32.mrb[0].mxu0
        %v5646 = vadd.f32 %v5293, %v5645
        %v5647 = vpop.f32.mrb[0].mxu0
        %v5648 = vadd.f32 %v5295, %v5647
        %v5649 = vpop.f32.mrb[0].mxu0
        %v5650 = vadd.f32 %v5297, %v5649
        %5651 = vmatprep.mubr.bf16.mxu0 %v3116
        %5652 = vmatmul.mubr.bf16.gmra.mrb[0].mxu0 %v3115
        %v5653 = vpop.f32.mrb[0].mxu0
        %v5654 = vadd.f32 %v5301, %v5653
        %v5655 = vpop.f32.mrb[0].mxu0
        %v5656 = vadd.f32 %v5303, %v5655
        %v5657 = vpop.f32.mrb[0].mxu0
        %v5658 = vadd.f32 %v5305, %v5657
        %v5659 = vpop.f32.mrb[0].mxu0
        %v5660 = vadd.f32 %v5307, %v5659
        %5661 = vmatprep.mubr.bf16.mxu0 %v3124
        %5662 = vmatmul.mubr.bf16.gmra.mrb[0].mxu0 %v3123
        %v5663 = vpop.f32.mrb[0].mxu0
        %v5664 = vadd.f32 %v5311, %v5663
        %v5665 = vpop.f32.mrb[0].mxu0
        %v5666 = vadd.f32 %v5313, %v5665
        %v5667 = vpop.f32.mrb[0].mxu0
        %v5668 = vadd.f32 %v5315, %v5667
        %v5669 = vpop.f32.mrb[0].mxu0
        %v5670 = vadd.f32 %v5317, %v5669
        %5671 = vmatprep.mubr.bf16.mxu0 %v3132
        %5672 = vmatmul.mubr.bf16.gmra.mrb[0].mxu0 %v3131
        %v5673 = vpop.f32.mrb[0].mxu0
        %v5674 = vadd.f32 %v5321, %v5673
        %v5675 = vpop.f32.mrb[0].mxu0
        %v5676 = vadd.f32 %v5323, %v5675
        %v5677 = vpop.f32.mrb[0].mxu0
        %v5678 = vadd.f32 %v5325, %v5677
        %v5679 = vpop.f32.mrb[0].mxu0
        %v5680 = vadd.f32 %v5327, %v5679
        %5681 = vmatprep.mubr.bf16.mxu0 %v3140
        %5682 = vmatmul.mubr.bf16.gmra.mrb[0].mxu0 %v3139
        %v5683 = vpop.f32.mrb[0].mxu0
        %v5684 = vadd.f32 %v5331, %v5683
        %v5685 = vpop.f32.mrb[0].mxu0
        %v5686 = vadd.f32 %v5333, %v5685
        %v5687 = vpop.f32.mrb[0].mxu0
        %v5688 = vadd.f32 %v5335, %v5687
        %v5689 = vpop.f32.mrb[0].mxu0
        %v5690 = vadd.f32 %v5337, %v5689
        %5691 = vmatprep.mubr.bf16.mxu0 %v3148
        %5692 = vmatmul.mubr.bf16.gmra.mrb[0].mxu0 %v3147
        %v5693 = vpop.f32.mrb[0].mxu0
        %v5694 = vadd.f32 %v5341, %v5693
        %v5695 = vpop.f32.mrb[0].mxu0
        %v5696 = vadd.f32 %v5343, %v5695
        %v5697 = vpop.f32.mrb[0].mxu0
        %v5698 = vadd.f32 %v5345, %v5697
        %v5699 = vpop.f32.mrb[0].mxu0
        %v5700 = vadd.f32 %v5347, %v5699
        %5701 = vmatprep.mubr.bf16.mxu0 %v3156
        %5702 = vmatmul.mubr.bf16.gmra.mrb[0].mxu0 %v3155
        %v5703 = vpop.f32.mrb[0].mxu0
        %v5704 = vadd.f32 %v5351, %v5703
        %v5705 = vpop.f32.mrb[0].mxu0
        %v5706 = vadd.f32 %v5353, %v5705
        %v5707 = vpop.f32.mrb[0].mxu0
        %v5708 = vadd.f32 %v5355, %v5707
        %v5709 = vpop.f32.mrb[0].mxu0
        %v5710 = vadd.f32 %v5357, %v5709
        %5711 = vmatprep.mubr.bf16.mxu0 %v3164
        %5712 = vmatmul.mubr.bf16.gmra.mrb[0].mxu0 %v3163
        %v5713 = vpop.f32.mrb[0].mxu0
        %v5714 = vadd.f32 %v5361, %v5713
        %v5715 = vpop.f32.mrb[0].mxu0
        %v5716 = vadd.f32 %v5363, %v5715
        %v5717 = vpop.f32.mrb[0].mxu0
        %v5718 = vadd.f32 %v5365, %v5717
        %v5719 = vpop.f32.mrb[0].mxu0
        %v5720 = vadd.f32 %v5367, %v5719
        %5721 = vmatprep.mubr.bf16.mxu0 %v3172
        %5722 = vmatmul.mubr.bf16.gmra.mrb[0].mxu0 %v3171
        %v5723 = vpop.f32.mrb[0].mxu0
        %v5724 = vadd.f32 %v5371, %v5723
        %v5725 = vpop.f32.mrb[0].mxu0
        %v5726 = vadd.f32 %v5373, %v5725
        %v5727 = vpop.f32.mrb[0].mxu0
        %v5728 = vadd.f32 %v5375, %v5727
        %v5729 = vpop.f32.mrb[0].mxu0
        %v5730 = vadd.f32 %v5377, %v5729
        %5731 = vmatprep.mubr.bf16.mxu0 %v3180
        %5732 = vmatmul.mubr.bf16.gmra.mrb[0].mxu0 %v3179
        %v5733 = vpop.f32.mrb[0].mxu0
        %v5734 = vadd.f32 %v5381, %v5733
        %v5735 = vpop.f32.mrb[0].mxu0
        %v5736 = vadd.f32 %v5383, %v5735
        %v5737 = vpop.f32.mrb[0].mxu0
        %v5738 = vadd.f32 %v5385, %v5737
        %v5739 = vpop.f32.mrb[0].mxu0
        %v5740 = vadd.f32 %v5387, %v5739
        %5741 = vmatprep.mubr.bf16.mxu0 %v3188
        %5742 = vmatmul.mubr.bf16.gmra.mrb[0].mxu0 %v3187
        %v5743 = vpop.f32.mrb[0].mxu0
        %v5744 = vadd.f32 %v5391, %v5743
        %v5745 = vpop.f32.mrb[0].mxu0
        %v5746 = vadd.f32 %v5393, %v5745
        %v5747 = vpop.f32.mrb[0].mxu0
        %v5748 = vadd.f32 %v5395, %v5747
        %v5749 = vpop.f32.mrb[0].mxu0
        %v5750 = vadd.f32 %v5397, %v5749
        %5751 = vmatprep.mubr.bf16.mxu0 %v3196
        %5752 = vmatmul.mubr.bf16.gmra.mrb[0].mxu0 %v3195
        %v5753 = vpop.f32.mrb[0].mxu0
        %v5754 = vadd.f32 %v5401, %v5753
        %v5755 = vpop.f32.mrb[0].mxu0
        %v5756 = vadd.f32 %v5403, %v5755
        %v5757 = vpop.f32.mrb[0].mxu0
        %v5758 = vadd.f32 %v5405, %v5757
        %v5759 = vpop.f32.mrb[0].mxu0
        %v5760 = vadd.f32 %v5407, %v5759
        %5761 = vmatprep.mubr.bf16.mxu0 %v3204
        %5762 = vmatmul.mubr.bf16.gmra.mrb[0].mxu0 %v3203
        %v5763 = vpop.f32.mrb[0].mxu0
        %v5764 = vadd.f32 %v5411, %v5763
        %v5765 = vpop.f32.mrb[0].mxu0
        %v5766 = vadd.f32 %v5413, %v5765
        %v5767 = vpop.f32.mrb[0].mxu0
        %v5768 = vadd.f32 %v5415, %v5767
        %v5769 = vpop.f32.mrb[0].mxu0
        %v5770 = vadd.f32 %v5417, %v5769
        %5771 = vmatprep.mubr.bf16.mxu0 %v3212
        %5772 = vmatmul.mubr.bf16.gmra.mrb[0].mxu0 %v3211
        %v5773 = vpop.f32.mrb[0].mxu0
        %v5774 = vadd.f32 %v5421, %v5773
        %v5775 = vpop.f32.mrb[0].mxu0
        %v5776 = vadd.f32 %v5423, %v5775
        %v5777 = vpop.f32.mrb[0].mxu0
        %v5778 = vadd.f32 %v5425, %v5777
        %v5779 = vpop.f32.mrb[0].mxu0
        %v5780 = vadd.f32 %v5427, %v5779
        %5781 = vmatprep.mubr.bf16.mxu0 %v3220
        %5782 = vmatmul.mubr.bf16.gmra.mrb[0].mxu0 %v3219
        %v5783 = vpop.f32.mrb[0].mxu0
        %v5784 = vadd.f32 %v5431, %v5783
        %v5785 = vpop.f32.mrb[0].mxu0
        %v5786 = vadd.f32 %v5433, %v5785
        %v5787 = vpop.f32.mrb[0].mxu0
        %v5788 = vadd.f32 %v5435, %v5787
        %v5789 = vpop.f32.mrb[0].mxu0
        %v5790 = vadd.f32 %v5437, %v5789
        %5791 = vmatprep.mubr.bf16.mxu0 %v3228
        %5792 = vmatmul.mubr.bf16.gmra.mrb[0].mxu0 %v3227
        %v5793 = vpop.f32.mrb[0].mxu0
        %v5794 = vadd.f32 %v5441, %v5793
        %v5795 = vpop.f32.mrb[0].mxu0
        %v5796 = vadd.f32 %v5443, %v5795
        %v5797 = vpop.f32.mrb[0].mxu0
        %v5798 = vadd.f32 %v5445, %v5797
        %v5799 = vpop.f32.mrb[0].mxu0
        %v5800 = vadd.f32 %v5447, %v5799
        %5801 = vmatprep.mubr.bf16.mxu0 %v3236
        %5802 = vmatmul.mubr.bf16.gmra.mrb[0].mxu0 %v3235
        %v5803 = vpop.f32.mrb[0].mxu0
        %v5804 = vadd.f32 %v5451, %v5803
        %v5805 = vpop.f32.mrb[0].mxu0
        %v5806 = vadd.f32 %v5453, %v5805
        %v5807 = vpop.f32.mrb[0].mxu0
        %v5808 = vadd.f32 %v5455, %v5807
        %v5809 = vpop.f32.mrb[0].mxu0
        %v5810 = vadd.f32 %v5457, %v5809
        %5811 = vmatprep.mubr.bf16.mxu0 %v3244
        %5812 = vmatmul.mubr.bf16.gmra.mrb[0].mxu0 %v3243
        %v5813 = vpop.f32.mrb[0].mxu0
        %v5814 = vadd.f32 %v5461, %v5813
        %v5815 = vpop.f32.mrb[0].mxu0
        %v5816 = vadd.f32 %v5463, %v5815
        %v5817 = vpop.f32.mrb[0].mxu0
        %v5818 = vadd.f32 %v5465, %v5817
        %v5819 = vpop.f32.mrb[0].mxu0
        %v5820 = vadd.f32 %v5467, %v5819
        %5821 = vmatprep.mubr.bf16.mxu0 %v3252
        %5822 = vmatmul.mubr.bf16.gmra.mrb[0].mxu0 %v3251
        %v5823 = vpop.f32.mrb[0].mxu0
        %v5824 = vadd.f32 %v5471, %v5823
        %v5825 = vpop.f32.mrb[0].mxu0
        %v5826 = vadd.f32 %v5473, %v5825
        %v5827 = vpop.f32.mrb[0].mxu0
        %v5828 = vadd.f32 %v5475, %v5827
        %v5829 = vpop.f32.mrb[0].mxu0
        %v5830 = vadd.f32 %v5477, %v5829
        %5831 = vmatprep.mubr.bf16.mxu0 %v3260
        %5832 = vmatmul.mubr.bf16.gmra.mrb[0].mxu0 %v3259
        %v5833 = vpop.f32.mrb[0].mxu0
        %v5834 = vadd.f32 %v5481, %v5833
        %v5835 = vpop.f32.mrb[0].mxu0
        %v5836 = vadd.f32 %v5483, %v5835
        %v5837 = vpop.f32.mrb[0].mxu0
        %v5838 = vadd.f32 %v5485, %v5837
        %v5839 = vpop.f32.mrb[0].mxu0
        %v5840 = vadd.f32 %v5487, %v5839
        %5841 = vmatprep.mubr.bf16.mxu0 %v3268
        %5842 = vmatmul.mubr.bf16.gmra.mrb[0].mxu0 %v3267
        %v5843 = vpop.f32.mrb[0].mxu0
        %v5844 = vadd.f32 %v5491, %v5843
        %v5845 = vpop.f32.mrb[0].mxu0
        %v5846 = vadd.f32 %v5493, %v5845
        %v5847 = vpop.f32.mrb[0].mxu0
        %v5848 = vadd.f32 %v5495, %v5847
        %v5849 = vpop.f32.mrb[0].mxu0
        %v5850 = vadd.f32 %v5497, %v5849
        %5851 = vmatprep.mubr.bf16.mxu0 %v3276
        %5852 = vmatmul.mubr.bf16.gmra.mrb[0].mxu0 %v3275
        %v5853 = vpop.f32.mrb[0].mxu0
        %v5854 = vadd.f32 %v5501, %v5853
        %v5855 = vpop.f32.mrb[0].mxu0
        %v5856 = vadd.f32 %v5503, %v5855
        %v5857 = vpop.f32.mrb[0].mxu0
        %v5858 = vadd.f32 %v5505, %v5857
        %v5859 = vpop.f32.mrb[0].mxu0
        %v5860 = vadd.f32 %v5507, %v5859
        %5861 = vmatprep.mubr.bf16.mxu0 %v3284
        %5862 = vmatmul.mubr.bf16.gmra.mrb[0].mxu0 %v3283
        %v5863 = vpop.f32.mrb[0].mxu0
        %v5864 = vadd.f32 %v5511, %v5863
        %v5865 = vpop.f32.mrb[0].mxu0
        %v5866 = vadd.f32 %v5513, %v5865
        %v5867 = vpop.f32.mrb[0].mxu0
        %v5868 = vadd.f32 %v5515, %v5867
        %v5869 = vpop.f32.mrb[0].mxu0
        %v5870 = vadd.f32 %v5517, %v5869
        %5871 = vmatprep.mubr.bf16.mxu0 %v3292
        %5872 = vmatmul.mubr.bf16.gmra.mrb[0].mxu0 %v3291
        %v5873 = vpop.f32.mrb[0].mxu0
        %v5874 = vadd.f32 %v5521, %v5873
        %v5875 = vpop.f32.mrb[0].mxu0
        %v5876 = vadd.f32 %v5523, %v5875
        %v5877 = vpop.f32.mrb[0].mxu0
        %v5878 = vadd.f32 %v5525, %v5877
        %v5879 = vpop.f32.mrb[0].mxu0
        %v5880 = vadd.f32 %v5527, %v5879
        %5881 = vmatprep.mubr.bf16.mxu0 %v3300
        %5882 = vmatmul.mubr.bf16.gmra.mrb[0].mxu0 %v3299
        %v5883 = vpop.f32.mrb[0].mxu0
        %v5884 = vadd.f32 %v5531, %v5883
        %v5885 = vpop.f32.mrb[0].mxu0
        %v5886 = vadd.f32 %v5533, %v5885
        %v5887 = vpop.f32.mrb[0].mxu0
        %v5888 = vadd.f32 %v5535, %v5887
        %v5889 = vpop.f32.mrb[0].mxu0
        %v5890 = vadd.f32 %v5537, %v5889
        %5891 = vmatprep.mubr.bf16.mxu0 %v3308
        %5892 = vmatmul.mubr.bf16.gmra.mrb[0].mxu0 %v3307
        %v5893 = vpop.f32.mrb[0].mxu0
        %v5894 = vadd.f32 %v5541, %v5893
        %v5895 = vpop.f32.mrb[0].mxu0
        %v5896 = vadd.f32 %v5543, %v5895
        %v5897 = vpop.f32.mrb[0].mxu0
        %v5898 = vadd.f32 %v5545, %v5897
        %v5899 = vpop.f32.mrb[0].mxu0
        %v5900 = vadd.f32 %v5547, %v5899
        %5901 = vmatprep.mubr.bf16.mxu0 %v3316
        %5902 = vmatmul.mubr.bf16.gmra.mrb[0].mxu0 %v3315
        %v5903 = vpop.f32.mrb[0].mxu0
        %v5904 = vadd.f32 %v5551, %v5903
        %v5905 = vpop.f32.mrb[0].mxu0
        %v5906 = vadd.f32 %v5553, %v5905
        %v5907 = vpop.f32.mrb[0].mxu0
        %v5908 = vadd.f32 %v5555, %v5907
        %v5909 = vpop.f32.mrb[0].mxu0
        %v5910 = vadd.f32 %v5557, %v5909
        %5911 = vmatprep.mubr.bf16.mxu0 %v3324
        %5912 = vmatmul.mubr.bf16.gmra.mrb[0].mxu0 %v3323
        %v5913 = vpop.f32.mrb[0].mxu0
        %v5914 = vadd.f32 %v5561, %v5913
        %v5915 = vpop.f32.mrb[0].mxu0
        %v5916 = vadd.f32 %v5563, %v5915
        %v5917 = vpop.f32.mrb[0].mxu0
        %v5918 = vadd.f32 %v5565, %v5917
        %v5919 = vpop.f32.mrb[0].mxu0
        %v5920 = vadd.f32 %v5567, %v5919
        %5921 = vdwg.mxu0
        %5922 = vmatprep.subr.bf16.mxu0 %v4544
        %5923 = vmatpush1.bf16.msra.mxu0 %v4543
        %5924 = vmatprep.subr.bf16.mxu0 %v4548
        %5925 = vmatpush1.bf16.msra.mxu0 %v4547
        %5926 = vmatprep.subr.bf16.mxu0 %v4552
        %5927 = vmatpush1.bf16.msra.mxu0 %v4551
        %5928 = vmatprep.subr.bf16.mxu0 %v4556
        %5929 = vmatpush1.bf16.msra.mxu0 %v4555
        %5930 = vmatprep.subr.bf16.mxu0 %v4560
        %5931 = vmatpush1.bf16.msra.mxu0 %v4559
        %5932 = vmatprep.subr.bf16.mxu0 %v4564
        %5933 = vmatpush1.bf16.msra.mxu0 %v4563
        %5934 = vmatprep.subr.bf16.mxu0 %v4568
        %5935 = vmatpush1.bf16.msra.mxu0 %v4567
        %5936 = vmatprep.subr.bf16.mxu0 %v4572
        %5937 = vmatpush1.bf16.msra.mxu0 %v4571
        %5938 = vmatprep.subr.bf16.mxu0 %v4576
        %5939 = vmatpush1.bf16.msra.mxu0 %v4575
        %5940 = vmatprep.subr.bf16.mxu0 %v4580
        %5941 = vmatpush1.bf16.msra.mxu0 %v4579
        %5942 = vmatprep.subr.bf16.mxu0 %v4584
        %5943 = vmatpush1.bf16.msra.mxu0 %v4583
        %5944 = vmatprep.subr.bf16.mxu0 %v4588
        %5945 = vmatpush1.bf16.msra.mxu0 %v4587
        %5946 = vmatprep.subr.bf16.mxu0 %v4592
        %5947 = vmatpush1.bf16.msra.mxu0 %v4591
        %5948 = vmatprep.subr.bf16.mxu0 %v4596
        %5949 = vmatpush1.bf16.msra.mxu0 %v4595
        %5950 = vmatprep.subr.bf16.mxu0 %v4600
        %5951 = vmatpush1.bf16.msra.mxu0 %v4599
        %5952 = vmatprep.subr.bf16.mxu0 %v4604
        %5953 = vmatpush1.bf16.msra.mxu0 %v4603
        %5954 = vmatprep.mubr.bf16.mxu0 %v3078
        %5955 = vmatmul.mubr.bf16.gmra.mrb[0].mxu0 %v3077
        %v5956 = vpop.f32.mrb[0].mxu0
        %v5957 = vadd.f32 %v5604, %v5956
        %v5958 = vpop.f32.mrb[0].mxu0
        %v5959 = vadd.f32 %v5606, %v5958
        %v5960 = vpop.f32.mrb[0].mxu0
        %v5961 = vadd.f32 %v5608, %v5960
        %v5962 = vpop.f32.mrb[0].mxu0
        %v5963 = vadd.f32 %v5610, %v5962
        %5964 = vmatprep.mubr.bf16.mxu0 %v3086
        %5965 = vmatmul.mubr.bf16.gmra.mrb[0].mxu0 %v3085
        %v5966 = vpop.f32.mrb[0].mxu0
        %v5967 = vadd.f32 %v5614, %v5966
        %v5968 = vpop.f32.mrb[0].mxu0
        %v5969 = vadd.f32 %v5616, %v5968
        %v5970 = vpop.f32.mrb[0].mxu0
        %v5971 = vadd.f32 %v5618, %v5970
        %v5972 = vpop.f32.mrb[0].mxu0
        %v5973 = vadd.f32 %v5620, %v5972
        %5974 = vmatprep.mubr.bf16.mxu0 %v3094
        %5975 = vmatmul.mubr.bf16.gmra.mrb[0].mxu0 %v3093
        %v5976 = vpop.f32.mrb[0].mxu0
        %v5977 = vadd.f32 %v5624, %v5976
        %v5978 = vpop.f32.mrb[0].mxu0
        %v5979 = vadd.f32 %v5626, %v5978
        %v5980 = vpop.f32.mrb[0].mxu0
        %v5981 = vadd.f32 %v5628, %v5980
        %v5982 = vpop.f32.mrb[0].mxu0
        %v5983 = vadd.f32 %v5630, %v5982
        %5984 = vmatprep.mubr.bf16.mxu0 %v3102
        %5985 = vmatmul.mubr.bf16.gmra.mrb[0].mxu0 %v3101
        %v5986 = vpop.f32.mrb[0].mxu0
        %v5987 = vadd.f32 %v5634, %v5986
        %v5988 = vpop.f32.mrb[0].mxu0
        %v5989 = vadd.f32 %v5636, %v5988
        %v5990 = vpop.f32.mrb[0].mxu0
        %v5991 = vadd.f32 %v5638, %v5990
        %v5992 = vpop.f32.mrb[0].mxu0
        %v5993 = vadd.f32 %v5640, %v5992
        %5994 = vmatprep.mubr.bf16.mxu0 %v3110
        %5995 = vmatmul.mubr.bf16.gmra.mrb[0].mxu0 %v3109
        %v5996 = vpop.f32.mrb[0].mxu0
        %v5997 = vadd.f32 %v5644, %v5996
        %v5998 = vpop.f32.mrb[0].mxu0
        %v5999 = vadd.f32 %v5646, %v5998
        %v6000 = vpop.f32.mrb[0].mxu0
        %v6001 = vadd.f32 %v5648, %v6000
        %v6002 = vpop.f32.mrb[0].mxu0
        %v6003 = vadd.f32 %v5650, %v6002
        %6004 = vmatprep.mubr.bf16.mxu0 %v3118
        %6005 = vmatmul.mubr.bf16.gmra.mrb[0].mxu0 %v3117
        %v6006 = vpop.f32.mrb[0].mxu0
        %v6007 = vadd.f32 %v5654, %v6006
        %v6008 = vpop.f32.mrb[0].mxu0
        %v6009 = vadd.f32 %v5656, %v6008
        %v6010 = vpop.f32.mrb[0].mxu0
        %v6011 = vadd.f32 %v5658, %v6010
        %v6012 = vpop.f32.mrb[0].mxu0
        %v6013 = vadd.f32 %v5660, %v6012
        %6014 = vmatprep.mubr.bf16.mxu0 %v3126
        %6015 = vmatmul.mubr.bf16.gmra.mrb[0].mxu0 %v3125
        %v6016 = vpop.f32.mrb[0].mxu0
        %v6017 = vadd.f32 %v5664, %v6016
        %v6018 = vpop.f32.mrb[0].mxu0
        %v6019 = vadd.f32 %v5666, %v6018
        %v6020 = vpop.f32.mrb[0].mxu0
        %v6021 = vadd.f32 %v5668, %v6020
        %v6022 = vpop.f32.mrb[0].mxu0
        %v6023 = vadd.f32 %v5670, %v6022
        %6024 = vmatprep.mubr.bf16.mxu0 %v3134
        %6025 = vmatmul.mubr.bf16.gmra.mrb[0].mxu0 %v3133
        %v6026 = vpop.f32.mrb[0].mxu0
        %v6027 = vadd.f32 %v5674, %v6026
        %v6028 = vpop.f32.mrb[0].mxu0
        %v6029 = vadd.f32 %v5676, %v6028
        %v6030 = vpop.f32.mrb[0].mxu0
        %v6031 = vadd.f32 %v5678, %v6030
        %v6032 = vpop.f32.mrb[0].mxu0
        %v6033 = vadd.f32 %v5680, %v6032
        %6034 = vmatprep.mubr.bf16.mxu0 %v3142
        %6035 = vmatmul.mubr.bf16.gmra.mrb[0].mxu0 %v3141
        %v6036 = vpop.f32.mrb[0].mxu0
        %v6037 = vadd.f32 %v5684, %v6036
        %v6038 = vpop.f32.mrb[0].mxu0
        %v6039 = vadd.f32 %v5686, %v6038
        %v6040 = vpop.f32.mrb[0].mxu0
        %v6041 = vadd.f32 %v5688, %v6040
        %v6042 = vpop.f32.mrb[0].mxu0
        %v6043 = vadd.f32 %v5690, %v6042
        %6044 = vmatprep.mubr.bf16.mxu0 %v3150
        %6045 = vmatmul.mubr.bf16.gmra.mrb[0].mxu0 %v3149
        %v6046 = vpop.f32.mrb[0].mxu0
        %v6047 = vadd.f32 %v5694, %v6046
        %v6048 = vpop.f32.mrb[0].mxu0
        %v6049 = vadd.f32 %v5696, %v6048
        %v6050 = vpop.f32.mrb[0].mxu0
        %v6051 = vadd.f32 %v5698, %v6050
        %v6052 = vpop.f32.mrb[0].mxu0
        %v6053 = vadd.f32 %v5700, %v6052
        %6054 = vmatprep.mubr.bf16.mxu0 %v3158
        %6055 = vmatmul.mubr.bf16.gmra.mrb[0].mxu0 %v3157
        %v6056 = vpop.f32.mrb[0].mxu0
        %v6057 = vadd.f32 %v5704, %v6056
        %v6058 = vpop.f32.mrb[0].mxu0
        %v6059 = vadd.f32 %v5706, %v6058
        %v6060 = vpop.f32.mrb[0].mxu0
        %v6061 = vadd.f32 %v5708, %v6060
        %v6062 = vpop.f32.mrb[0].mxu0
        %v6063 = vadd.f32 %v5710, %v6062
        %6064 = vmatprep.mubr.bf16.mxu0 %v3166
        %6065 = vmatmul.mubr.bf16.gmra.mrb[0].mxu0 %v3165
        %v6066 = vpop.f32.mrb[0].mxu0
        %v6067 = vadd.f32 %v5714, %v6066
        %v6068 = vpop.f32.mrb[0].mxu0
        %v6069 = vadd.f32 %v5716, %v6068
        %v6070 = vpop.f32.mrb[0].mxu0
        %v6071 = vadd.f32 %v5718, %v6070
        %v6072 = vpop.f32.mrb[0].mxu0
        %v6073 = vadd.f32 %v5720, %v6072
        %6074 = vmatprep.mubr.bf16.mxu0 %v3174
        %6075 = vmatmul.mubr.bf16.gmra.mrb[0].mxu0 %v3173
        %v6076 = vpop.f32.mrb[0].mxu0
        %v6077 = vadd.f32 %v5724, %v6076
        %v6078 = vpop.f32.mrb[0].mxu0
        %v6079 = vadd.f32 %v5726, %v6078
        %v6080 = vpop.f32.mrb[0].mxu0
        %v6081 = vadd.f32 %v5728, %v6080
        %v6082 = vpop.f32.mrb[0].mxu0
        %v6083 = vadd.f32 %v5730, %v6082
        %6084 = vmatprep.mubr.bf16.mxu0 %v3182
        %6085 = vmatmul.mubr.bf16.gmra.mrb[0].mxu0 %v3181
        %v6086 = vpop.f32.mrb[0].mxu0
        %v6087 = vadd.f32 %v5734, %v6086
        %v6088 = vpop.f32.mrb[0].mxu0
        %v6089 = vadd.f32 %v5736, %v6088
        %v6090 = vpop.f32.mrb[0].mxu0
        %v6091 = vadd.f32 %v5738, %v6090
        %v6092 = vpop.f32.mrb[0].mxu0
        %v6093 = vadd.f32 %v5740, %v6092
        %6094 = vmatprep.mubr.bf16.mxu0 %v3190
        %6095 = vmatmul.mubr.bf16.gmra.mrb[0].mxu0 %v3189
        %v6096 = vpop.f32.mrb[0].mxu0
        %v6097 = vadd.f32 %v5744, %v6096
        %v6098 = vpop.f32.mrb[0].mxu0
        %v6099 = vadd.f32 %v5746, %v6098
        %v6100 = vpop.f32.mrb[0].mxu0
        %v6101 = vadd.f32 %v5748, %v6100
        %v6102 = vpop.f32.mrb[0].mxu0
        %v6103 = vadd.f32 %v5750, %v6102
        %6104 = vmatprep.mubr.bf16.mxu0 %v3198
        %6105 = vmatmul.mubr.bf16.gmra.mrb[0].mxu0 %v3197
        %v6106 = vpop.f32.mrb[0].mxu0
        %v6107 = vadd.f32 %v5754, %v6106
        %v6108 = vpop.f32.mrb[0].mxu0
        %v6109 = vadd.f32 %v5756, %v6108
        %v6110 = vpop.f32.mrb[0].mxu0
        %v6111 = vadd.f32 %v5758, %v6110
        %v6112 = vpop.f32.mrb[0].mxu0
        %v6113 = vadd.f32 %v5760, %v6112
        %6114 = vmatprep.mubr.bf16.mxu0 %v3206
        %6115 = vmatmul.mubr.bf16.gmra.mrb[0].mxu0 %v3205
        %v6116 = vpop.f32.mrb[0].mxu0
        %v6117 = vadd.f32 %v5764, %v6116
        %v6118 = vpop.f32.mrb[0].mxu0
        %v6119 = vadd.f32 %v5766, %v6118
        %v6120 = vpop.f32.mrb[0].mxu0
        %v6121 = vadd.f32 %v5768, %v6120
        %v6122 = vpop.f32.mrb[0].mxu0
        %v6123 = vadd.f32 %v5770, %v6122
        %6124 = vmatprep.mubr.bf16.mxu0 %v3214
        %6125 = vmatmul.mubr.bf16.gmra.mrb[0].mxu0 %v3213
        %v6126 = vpop.f32.mrb[0].mxu0
        %v6127 = vadd.f32 %v5774, %v6126
        %v6128 = vpop.f32.mrb[0].mxu0
        %v6129 = vadd.f32 %v5776, %v6128
        %v6130 = vpop.f32.mrb[0].mxu0
        %v6131 = vadd.f32 %v5778, %v6130
        %v6132 = vpop.f32.mrb[0].mxu0
        %v6133 = vadd.f32 %v5780, %v6132
        %6134 = vmatprep.mubr.bf16.mxu0 %v3222
        %6135 = vmatmul.mubr.bf16.gmra.mrb[0].mxu0 %v3221
        %v6136 = vpop.f32.mrb[0].mxu0
        %v6137 = vadd.f32 %v5784, %v6136
        %v6138 = vpop.f32.mrb[0].mxu0
        %v6139 = vadd.f32 %v5786, %v6138
        %v6140 = vpop.f32.mrb[0].mxu0
        %v6141 = vadd.f32 %v5788, %v6140
        %v6142 = vpop.f32.mrb[0].mxu0
        %v6143 = vadd.f32 %v5790, %v6142
        %6144 = vmatprep.mubr.bf16.mxu0 %v3230
        %6145 = vmatmul.mubr.bf16.gmra.mrb[0].mxu0 %v3229
        %v6146 = vpop.f32.mrb[0].mxu0
        %v6147 = vadd.f32 %v5794, %v6146
        %v6148 = vpop.f32.mrb[0].mxu0
        %v6149 = vadd.f32 %v5796, %v6148
        %v6150 = vpop.f32.mrb[0].mxu0
        %v6151 = vadd.f32 %v5798, %v6150
        %v6152 = vpop.f32.mrb[0].mxu0
        %v6153 = vadd.f32 %v5800, %v6152
        %6154 = vmatprep.mubr.bf16.mxu0 %v3238
        %6155 = vmatmul.mubr.bf16.gmra.mrb[0].mxu0 %v3237
        %v6156 = vpop.f32.mrb[0].mxu0
        %v6157 = vadd.f32 %v5804, %v6156
        %v6158 = vpop.f32.mrb[0].mxu0
        %v6159 = vadd.f32 %v5806, %v6158
        %v6160 = vpop.f32.mrb[0].mxu0
        %v6161 = vadd.f32 %v5808, %v6160
        %v6162 = vpop.f32.mrb[0].mxu0
        %v6163 = vadd.f32 %v5810, %v6162
        %6164 = vmatprep.mubr.bf16.mxu0 %v3246
        %6165 = vmatmul.mubr.bf16.gmra.mrb[0].mxu0 %v3245
        %v6166 = vpop.f32.mrb[0].mxu0
        %v6167 = vadd.f32 %v5814, %v6166
        %v6168 = vpop.f32.mrb[0].mxu0
        %v6169 = vadd.f32 %v5816, %v6168
        %v6170 = vpop.f32.mrb[0].mxu0
        %v6171 = vadd.f32 %v5818, %v6170
        %v6172 = vpop.f32.mrb[0].mxu0
        %v6173 = vadd.f32 %v5820, %v6172
        %6174 = vmatprep.mubr.bf16.mxu0 %v3254
        %6175 = vmatmul.mubr.bf16.gmra.mrb[0].mxu0 %v3253
        %v6176 = vpop.f32.mrb[0].mxu0
        %v6177 = vadd.f32 %v5824, %v6176
        %v6178 = vpop.f32.mrb[0].mxu0
        %v6179 = vadd.f32 %v5826, %v6178
        %v6180 = vpop.f32.mrb[0].mxu0
        %v6181 = vadd.f32 %v5828, %v6180
        %v6182 = vpop.f32.mrb[0].mxu0
        %v6183 = vadd.f32 %v5830, %v6182
        %6184 = vmatprep.mubr.bf16.mxu0 %v3262
        %6185 = vmatmul.mubr.bf16.gmra.mrb[0].mxu0 %v3261
        %v6186 = vpop.f32.mrb[0].mxu0
        %v6187 = vadd.f32 %v5834, %v6186
        %v6188 = vpop.f32.mrb[0].mxu0
        %v6189 = vadd.f32 %v5836, %v6188
        %v6190 = vpop.f32.mrb[0].mxu0
        %v6191 = vadd.f32 %v5838, %v6190
        %v6192 = vpop.f32.mrb[0].mxu0
        %v6193 = vadd.f32 %v5840, %v6192
        %6194 = vmatprep.mubr.bf16.mxu0 %v3270
        %6195 = vmatmul.mubr.bf16.gmra.mrb[0].mxu0 %v3269
        %v6196 = vpop.f32.mrb[0].mxu0
        %v6197 = vadd.f32 %v5844, %v6196
        %v6198 = vpop.f32.mrb[0].mxu0
        %v6199 = vadd.f32 %v5846, %v6198
        %v6200 = vpop.f32.mrb[0].mxu0
        %v6201 = vadd.f32 %v5848, %v6200
        %v6202 = vpop.f32.mrb[0].mxu0
        %v6203 = vadd.f32 %v5850, %v6202
        %6204 = vmatprep.mubr.bf16.mxu0 %v3278
        %6205 = vmatmul.mubr.bf16.gmra.mrb[0].mxu0 %v3277
        %v6206 = vpop.f32.mrb[0].mxu0
        %v6207 = vadd.f32 %v5854, %v6206
        %v6208 = vpop.f32.mrb[0].mxu0
        %v6209 = vadd.f32 %v5856, %v6208
        %v6210 = vpop.f32.mrb[0].mxu0
        %v6211 = vadd.f32 %v5858, %v6210
        %v6212 = vpop.f32.mrb[0].mxu0
        %v6213 = vadd.f32 %v5860, %v6212
        %6214 = vmatprep.mubr.bf16.mxu0 %v3286
        %6215 = vmatmul.mubr.bf16.gmra.mrb[0].mxu0 %v3285
        %v6216 = vpop.f32.mrb[0].mxu0
        %v6217 = vadd.f32 %v5864, %v6216
        %v6218 = vpop.f32.mrb[0].mxu0
        %v6219 = vadd.f32 %v5866, %v6218
        %v6220 = vpop.f32.mrb[0].mxu0
        %v6221 = vadd.f32 %v5868, %v6220
        %v6222 = vpop.f32.mrb[0].mxu0
        %v6223 = vadd.f32 %v5870, %v6222
        %6224 = vmatprep.mubr.bf16.mxu0 %v3294
        %6225 = vmatmul.mubr.bf16.gmra.mrb[0].mxu0 %v3293
        %v6226 = vpop.f32.mrb[0].mxu0
        %v6227 = vadd.f32 %v5874, %v6226
        %v6228 = vpop.f32.mrb[0].mxu0
        %v6229 = vadd.f32 %v5876, %v6228
        %v6230 = vpop.f32.mrb[0].mxu0
        %v6231 = vadd.f32 %v5878, %v6230
        %v6232 = vpop.f32.mrb[0].mxu0
        %v6233 = vadd.f32 %v5880, %v6232
        %6234 = vmatprep.mubr.bf16.mxu0 %v3302
        %6235 = vmatmul.mubr.bf16.gmra.mrb[0].mxu0 %v3301
        %v6236 = vpop.f32.mrb[0].mxu0
        %v6237 = vadd.f32 %v5884, %v6236
        %v6238 = vpop.f32.mrb[0].mxu0
        %v6239 = vadd.f32 %v5886, %v6238
        %v6240 = vpop.f32.mrb[0].mxu0
        %v6241 = vadd.f32 %v5888, %v6240
        %v6242 = vpop.f32.mrb[0].mxu0
        %v6243 = vadd.f32 %v5890, %v6242
        %6244 = vmatprep.mubr.bf16.mxu0 %v3310
        %6245 = vmatmul.mubr.bf16.gmra.mrb[0].mxu0 %v3309
        %v6246 = vpop.f32.mrb[0].mxu0
        %v6247 = vadd.f32 %v5894, %v6246
        %v6248 = vpop.f32.mrb[0].mxu0
        %v6249 = vadd.f32 %v5896, %v6248
        %v6250 = vpop.f32.mrb[0].mxu0
        %v6251 = vadd.f32 %v5898, %v6250
        %v6252 = vpop.f32.mrb[0].mxu0
        %v6253 = vadd.f32 %v5900, %v6252
        %6254 = vmatprep.mubr.bf16.mxu0 %v3318
        %6255 = vmatmul.mubr.bf16.gmra.mrb[0].mxu0 %v3317
        %v6256 = vpop.f32.mrb[0].mxu0
        %v6257 = vadd.f32 %v5904, %v6256
        %v6258 = vpop.f32.mrb[0].mxu0
        %v6259 = vadd.f32 %v5906, %v6258
        %v6260 = vpop.f32.mrb[0].mxu0
        %v6261 = vadd.f32 %v5908, %v6260
        %v6262 = vpop.f32.mrb[0].mxu0
        %v6263 = vadd.f32 %v5910, %v6262
        %6264 = vmatprep.mubr.bf16.mxu0 %v3326
        %6265 = vmatmul.mubr.bf16.gmra.mrb[0].mxu0 %v3325
        %v6266 = vpop.f32.mrb[0].mxu0
        %v6267 = vadd.f32 %v5914, %v6266
        %v6268 = vpop.f32.mrb[0].mxu0
        %v6269 = vadd.f32 %v5916, %v6268
        %v6270 = vpop.f32.mrb[0].mxu0
        %v6271 = vadd.f32 %v5918, %v6270
        %v6272 = vpop.f32.mrb[0].mxu0
        %v6273 = vadd.f32 %v5920, %v6272
        %6274 = vdwg.mxu0
        %6275 = vmatprep.subr.bf16.mxu0 %v4354
        %6276 = vmatpush1.bf16.msra.mxu0 %v4353
        %6277 = vmatprep.subr.bf16.mxu0 %v4358
        %6278 = vmatpush1.bf16.msra.mxu0 %v4357
        %6279 = vmatprep.subr.bf16.mxu0 %v4362
        %6280 = vmatpush1.bf16.msra.mxu0 %v4361
        %6281 = vmatprep.subr.bf16.mxu0 %v4366
        %6282 = vmatpush1.bf16.msra.mxu0 %v4365
        %6283 = vmatprep.subr.bf16.mxu0 %v4370
        %6284 = vmatpush1.bf16.msra.mxu0 %v4369
        %6285 = vmatprep.subr.bf16.mxu0 %v4374
        %6286 = vmatpush1.bf16.msra.mxu0 %v4373
        %6287 = vmatprep.subr.bf16.mxu0 %v4378
        %6288 = vmatpush1.bf16.msra.mxu0 %v4377
        %6289 = vmatprep.subr.bf16.mxu0 %v4382
        %6290 = vmatpush1.bf16.msra.mxu0 %v4381
        %6291 = vmatprep.subr.bf16.mxu0 %v4386
        %6292 = vmatpush1.bf16.msra.mxu0 %v4385
        %6293 = vmatprep.subr.bf16.mxu0 %v4390
        %6294 = vmatpush1.bf16.msra.mxu0 %v4389
        %6295 = vmatprep.subr.bf16.mxu0 %v4394
        %6296 = vmatpush1.bf16.msra.mxu0 %v4393
        %6297 = vmatprep.subr.bf16.mxu0 %v4398
        %6298 = vmatpush1.bf16.msra.mxu0 %v4397
        %6299 = vmatprep.subr.bf16.mxu0 %v4402
        %6300 = vmatpush1.bf16.msra.mxu0 %v4401
        %6301 = vmatprep.subr.bf16.mxu0 %v4406
        %6302 = vmatpush1.bf16.msra.mxu0 %v4405
        %6303 = vmatprep.subr.bf16.mxu0 %v4410
        %6304 = vmatpush1.bf16.msra.mxu0 %v4409
        %6305 = vmatprep.subr.bf16.mxu0 %v4414
        %6306 = vmatpush1.bf16.msra.mxu0 %v4413
        %6307 = vmatprep.mubr.bf16.mxu0 %v3072
        %6308 = vmatmul.mubr.bf16.gmra.mrb[0].mxu0 %v3071
        %v6309 = vpop.f32.mrb[0].mxu0
        %v6310 = vadd.f32 0.0, %v6309
        %v6311 = vpop.f32.mrb[0].mxu0
        %v6312 = vadd.f32 0.0, %v6311
        %v6313 = vpop.f32.mrb[0].mxu0
        %v6314 = vadd.f32 0.0, %v6313
        %v6315 = vpop.f32.mrb[0].mxu0
        %v6316 = vadd.f32 0.0, %v6315
        %6317 = vmatprep.mubr.bf16.mxu0 %v3080
        %6318 = vmatmul.mubr.bf16.gmra.mrb[0].mxu0 %v3079
        %v6319 = vpop.f32.mrb[0].mxu0
        %v6320 = vadd.f32 0.0, %v6319
        %v6321 = vpop.f32.mrb[0].mxu0
        %v6322 = vadd.f32 0.0, %v6321
        %v6323 = vpop.f32.mrb[0].mxu0
        %v6324 = vadd.f32 0.0, %v6323
        %v6325 = vpop.f32.mrb[0].mxu0
        %v6326 = vadd.f32 0.0, %v6325
        %6327 = vmatprep.mubr.bf16.mxu0 %v3088
        %6328 = vmatmul.mubr.bf16.gmra.mrb[0].mxu0 %v3087
        %v6329 = vpop.f32.mrb[0].mxu0
        %v6330 = vadd.f32 0.0, %v6329
        %v6331 = vpop.f32.mrb[0].mxu0
        %v6332 = vadd.f32 0.0, %v6331
        %v6333 = vpop.f32.mrb[0].mxu0
        %v6334 = vadd.f32 0.0, %v6333
        %v6335 = vpop.f32.mrb[0].mxu0
        %v6336 = vadd.f32 0.0, %v6335
        %6337 = vmatprep.mubr.bf16.mxu0 %v3096
        %6338 = vmatmul.mubr.bf16.gmra.mrb[0].mxu0 %v3095
        %v6339 = vpop.f32.mrb[0].mxu0
        %v6340 = vadd.f32 0.0, %v6339
        %v6341 = vpop.f32.mrb[0].mxu0
        %v6342 = vadd.f32 0.0, %v6341
        %v6343 = vpop.f32.mrb[0].mxu0
        %v6344 = vadd.f32 0.0, %v6343
        %v6345 = vpop.f32.mrb[0].mxu0
        %v6346 = vadd.f32 0.0, %v6345
        %6347 = vmatprep.mubr.bf16.mxu0 %v3104
        %6348 = vmatmul.mubr.bf16.gmra.mrb[0].mxu0 %v3103
        %v6349 = vpop.f32.mrb[0].mxu0
        %v6350 = vadd.f32 0.0, %v6349
        %v6351 = vpop.f32.mrb[0].mxu0
        %v6352 = vadd.f32 0.0, %v6351
        %v6353 = vpop.f32.mrb[0].mxu0
        %v6354 = vadd.f32 0.0, %v6353
        %v6355 = vpop.f32.mrb[0].mxu0
        %v6356 = vadd.f32 0.0, %v6355
        %6357 = vmatprep.mubr.bf16.mxu0 %v3112
        %6358 = vmatmul.mubr.bf16.gmra.mrb[0].mxu0 %v3111
        %v6359 = vpop.f32.mrb[0].mxu0
        %v6360 = vadd.f32 0.0, %v6359
        %v6361 = vpop.f32.mrb[0].mxu0
        %v6362 = vadd.f32 0.0, %v6361
        %v6363 = vpop.f32.mrb[0].mxu0
        %v6364 = vadd.f32 0.0, %v6363
        %v6365 = vpop.f32.mrb[0].mxu0
        %v6366 = vadd.f32 0.0, %v6365
        %6367 = vmatprep.mubr.bf16.mxu0 %v3120
        %6368 = vmatmul.mubr.bf16.gmra.mrb[0].mxu0 %v3119
        %v6369 = vpop.f32.mrb[0].mxu0
        %v6370 = vadd.f32 0.0, %v6369
        %v6371 = vpop.f32.mrb[0].mxu0
        %v6372 = vadd.f32 0.0, %v6371
        %v6373 = vpop.f32.mrb[0].mxu0
        %v6374 = vadd.f32 0.0, %v6373
        %v6375 = vpop.f32.mrb[0].mxu0
        %v6376 = vadd.f32 0.0, %v6375
        %6377 = vmatprep.mubr.bf16.mxu0 %v3128
        %6378 = vmatmul.mubr.bf16.gmra.mrb[0].mxu0 %v3127
        %v6379 = vpop.f32.mrb[0].mxu0
        %v6380 = vadd.f32 0.0, %v6379
        %v6381 = vpop.f32.mrb[0].mxu0
        %v6382 = vadd.f32 0.0, %v6381
        %v6383 = vpop.f32.mrb[0].mxu0
        %v6384 = vadd.f32 0.0, %v6383
        %v6385 = vpop.f32.mrb[0].mxu0
        %v6386 = vadd.f32 0.0, %v6385
        %6387 = vmatprep.mubr.bf16.mxu0 %v3136
        %6388 = vmatmul.mubr.bf16.gmra.mrb[0].mxu0 %v3135
        %v6389 = vpop.f32.mrb[0].mxu0
        %v6390 = vadd.f32 0.0, %v6389
        %v6391 = vpop.f32.mrb[0].mxu0
        %v6392 = vadd.f32 0.0, %v6391
        %v6393 = vpop.f32.mrb[0].mxu0
        %v6394 = vadd.f32 0.0, %v6393
        %v6395 = vpop.f32.mrb[0].mxu0
        %v6396 = vadd.f32 0.0, %v6395
        %6397 = vmatprep.mubr.bf16.mxu0 %v3144
        %6398 = vmatmul.mubr.bf16.gmra.mrb[0].mxu0 %v3143
        %v6399 = vpop.f32.mrb[0].mxu0
        %v6400 = vadd.f32 0.0, %v6399
        %v6401 = vpop.f32.mrb[0].mxu0
        %v6402 = vadd.f32 0.0, %v6401
        %v6403 = vpop.f32.mrb[0].mxu0
        %v6404 = vadd.f32 0.0, %v6403
        %v6405 = vpop.f32.mrb[0].mxu0
        %v6406 = vadd.f32 0.0, %v6405
        %6407 = vmatprep.mubr.bf16.mxu0 %v3152
        %6408 = vmatmul.mubr.bf16.gmra.mrb[0].mxu0 %v3151
        %v6409 = vpop.f32.mrb[0].mxu0
        %v6410 = vadd.f32 0.0, %v6409
        %v6411 = vpop.f32.mrb[0].mxu0
        %v6412 = vadd.f32 0.0, %v6411
        %v6413 = vpop.f32.mrb[0].mxu0
        %v6414 = vadd.f32 0.0, %v6413
        %v6415 = vpop.f32.mrb[0].mxu0
        %v6416 = vadd.f32 0.0, %v6415
        %6417 = vmatprep.mubr.bf16.mxu0 %v3160
        %6418 = vmatmul.mubr.bf16.gmra.mrb[0].mxu0 %v3159
        %v6419 = vpop.f32.mrb[0].mxu0
        %v6420 = vadd.f32 0.0, %v6419
        %v6421 = vpop.f32.mrb[0].mxu0
        %v6422 = vadd.f32 0.0, %v6421
        %v6423 = vpop.f32.mrb[0].mxu0
        %v6424 = vadd.f32 0.0, %v6423
        %v6425 = vpop.f32.mrb[0].mxu0
        %v6426 = vadd.f32 0.0, %v6425
        %6427 = vmatprep.mubr.bf16.mxu0 %v3168
        %6428 = vmatmul.mubr.bf16.gmra.mrb[0].mxu0 %v3167
        %v6429 = vpop.f32.mrb[0].mxu0
        %v6430 = vadd.f32 0.0, %v6429
        %v6431 = vpop.f32.mrb[0].mxu0
        %v6432 = vadd.f32 0.0, %v6431
        %v6433 = vpop.f32.mrb[0].mxu0
        %v6434 = vadd.f32 0.0, %v6433
        %v6435 = vpop.f32.mrb[0].mxu0
        %v6436 = vadd.f32 0.0, %v6435
        %6437 = vmatprep.mubr.bf16.mxu0 %v3176
        %6438 = vmatmul.mubr.bf16.gmra.mrb[0].mxu0 %v3175
        %v6439 = vpop.f32.mrb[0].mxu0
        %v6440 = vadd.f32 0.0, %v6439
        %v6441 = vpop.f32.mrb[0].mxu0
        %v6442 = vadd.f32 0.0, %v6441
        %v6443 = vpop.f32.mrb[0].mxu0
        %v6444 = vadd.f32 0.0, %v6443
        %v6445 = vpop.f32.mrb[0].mxu0
        %v6446 = vadd.f32 0.0, %v6445
        %6447 = vmatprep.mubr.bf16.mxu0 %v3184
        %6448 = vmatmul.mubr.bf16.gmra.mrb[0].mxu0 %v3183
        %v6449 = vpop.f32.mrb[0].mxu0
        %v6450 = vadd.f32 0.0, %v6449
        %v6451 = vpop.f32.mrb[0].mxu0
        %v6452 = vadd.f32 0.0, %v6451
        %v6453 = vpop.f32.mrb[0].mxu0
        %v6454 = vadd.f32 0.0, %v6453
        %v6455 = vpop.f32.mrb[0].mxu0
        %v6456 = vadd.f32 0.0, %v6455
        %6457 = vmatprep.mubr.bf16.mxu0 %v3192
        %6458 = vmatmul.mubr.bf16.gmra.mrb[0].mxu0 %v3191
        %v6459 = vpop.f32.mrb[0].mxu0
        %v6460 = vadd.f32 0.0, %v6459
        %v6461 = vpop.f32.mrb[0].mxu0
        %v6462 = vadd.f32 0.0, %v6461
        %v6463 = vpop.f32.mrb[0].mxu0
        %v6464 = vadd.f32 0.0, %v6463
        %v6465 = vpop.f32.mrb[0].mxu0
        %v6466 = vadd.f32 0.0, %v6465
        %6467 = vmatprep.mubr.bf16.mxu0 %v3200
        %6468 = vmatmul.mubr.bf16.gmra.mrb[0].mxu0 %v3199
        %v6469 = vpop.f32.mrb[0].mxu0
        %v6470 = vadd.f32 0.0, %v6469
        %v6471 = vpop.f32.mrb[0].mxu0
        %v6472 = vadd.f32 0.0, %v6471
        %v6473 = vpop.f32.mrb[0].mxu0
        %v6474 = vadd.f32 0.0, %v6473
        %v6475 = vpop.f32.mrb[0].mxu0
        %v6476 = vadd.f32 0.0, %v6475
        %6477 = vmatprep.mubr.bf16.mxu0 %v3208
        %6478 = vmatmul.mubr.bf16.gmra.mrb[0].mxu0 %v3207
        %v6479 = vpop.f32.mrb[0].mxu0
        %v6480 = vadd.f32 0.0, %v6479
        %v6481 = vpop.f32.mrb[0].mxu0
        %v6482 = vadd.f32 0.0, %v6481
        %v6483 = vpop.f32.mrb[0].mxu0
        %v6484 = vadd.f32 0.0, %v6483
        %v6485 = vpop.f32.mrb[0].mxu0
        %v6486 = vadd.f32 0.0, %v6485
        %6487 = vmatprep.mubr.bf16.mxu0 %v3216
        %6488 = vmatmul.mubr.bf16.gmra.mrb[0].mxu0 %v3215
        %v6489 = vpop.f32.mrb[0].mxu0
        %v6490 = vadd.f32 0.0, %v6489
        %v6491 = vpop.f32.mrb[0].mxu0
        %v6492 = vadd.f32 0.0, %v6491
        %v6493 = vpop.f32.mrb[0].mxu0
        %v6494 = vadd.f32 0.0, %v6493
        %v6495 = vpop.f32.mrb[0].mxu0
        %v6496 = vadd.f32 0.0, %v6495
        %6497 = vmatprep.mubr.bf16.mxu0 %v3224
        %6498 = vmatmul.mubr.bf16.gmra.mrb[0].mxu0 %v3223
        %v6499 = vpop.f32.mrb[0].mxu0
        %v6500 = vadd.f32 0.0, %v6499
        %v6501 = vpop.f32.mrb[0].mxu0
        %v6502 = vadd.f32 0.0, %v6501
        %v6503 = vpop.f32.mrb[0].mxu0
        %v6504 = vadd.f32 0.0, %v6503
        %v6505 = vpop.f32.mrb[0].mxu0
        %v6506 = vadd.f32 0.0, %v6505
        %6507 = vmatprep.mubr.bf16.mxu0 %v3232
        %6508 = vmatmul.mubr.bf16.gmra.mrb[0].mxu0 %v3231
        %v6509 = vpop.f32.mrb[0].mxu0
        %v6510 = vadd.f32 0.0, %v6509
        %v6511 = vpop.f32.mrb[0].mxu0
        %v6512 = vadd.f32 0.0, %v6511
        %v6513 = vpop.f32.mrb[0].mxu0
        %v6514 = vadd.f32 0.0, %v6513
        %v6515 = vpop.f32.mrb[0].mxu0
        %v6516 = vadd.f32 0.0, %v6515
        %6517 = vmatprep.mubr.bf16.mxu0 %v3240
        %6518 = vmatmul.mubr.bf16.gmra.mrb[0].mxu0 %v3239
        %v6519 = vpop.f32.mrb[0].mxu0
        %v6520 = vadd.f32 0.0, %v6519
        %v6521 = vpop.f32.mrb[0].mxu0
        %v6522 = vadd.f32 0.0, %v6521
        %v6523 = vpop.f32.mrb[0].mxu0
        %v6524 = vadd.f32 0.0, %v6523
        %v6525 = vpop.f32.mrb[0].mxu0
        %v6526 = vadd.f32 0.0, %v6525
        %6527 = vmatprep.mubr.bf16.mxu0 %v3248
        %6528 = vmatmul.mubr.bf16.gmra.mrb[0].mxu0 %v3247
        %v6529 = vpop.f32.mrb[0].mxu0
        %v6530 = vadd.f32 0.0, %v6529
        %v6531 = vpop.f32.mrb[0].mxu0
        %v6532 = vadd.f32 0.0, %v6531
        %v6533 = vpop.f32.mrb[0].mxu0
        %v6534 = vadd.f32 0.0, %v6533
        %v6535 = vpop.f32.mrb[0].mxu0
        %v6536 = vadd.f32 0.0, %v6535
        %6537 = vmatprep.mubr.bf16.mxu0 %v3256
        %6538 = vmatmul.mubr.bf16.gmra.mrb[0].mxu0 %v3255
        %v6539 = vpop.f32.mrb[0].mxu0
        %v6540 = vadd.f32 0.0, %v6539
        %v6541 = vpop.f32.mrb[0].mxu0
        %v6542 = vadd.f32 0.0, %v6541
        %v6543 = vpop.f32.mrb[0].mxu0
        %v6544 = vadd.f32 0.0, %v6543
        %v6545 = vpop.f32.mrb[0].mxu0
        %v6546 = vadd.f32 0.0, %v6545
        %6547 = vmatprep.mubr.bf16.mxu0 %v3264
        %6548 = vmatmul.mubr.bf16.gmra.mrb[0].mxu0 %v3263
        %v6549 = vpop.f32.mrb[0].mxu0
        %v6550 = vadd.f32 0.0, %v6549
        %v6551 = vpop.f32.mrb[0].mxu0
        %v6552 = vadd.f32 0.0, %v6551
        %v6553 = vpop.f32.mrb[0].mxu0
        %v6554 = vadd.f32 0.0, %v6553
        %v6555 = vpop.f32.mrb[0].mxu0
        %v6556 = vadd.f32 0.0, %v6555
        %6557 = vmatprep.mubr.bf16.mxu0 %v3272
        %6558 = vmatmul.mubr.bf16.gmra.mrb[0].mxu0 %v3271
        %v6559 = vpop.f32.mrb[0].mxu0
        %v6560 = vadd.f32 0.0, %v6559
        %v6561 = vpop.f32.mrb[0].mxu0
        %v6562 = vadd.f32 0.0, %v6561
        %v6563 = vpop.f32.mrb[0].mxu0
        %v6564 = vadd.f32 0.0, %v6563
        %v6565 = vpop.f32.mrb[0].mxu0
        %v6566 = vadd.f32 0.0, %v6565
        %6567 = vmatprep.mubr.bf16.mxu0 %v3280
        %6568 = vmatmul.mubr.bf16.gmra.mrb[0].mxu0 %v3279
        %v6569 = vpop.f32.mrb[0].mxu0
        %v6570 = vadd.f32 0.0, %v6569
        %v6571 = vpop.f32.mrb[0].mxu0
        %v6572 = vadd.f32 0.0, %v6571
        %v6573 = vpop.f32.mrb[0].mxu0
        %v6574 = vadd.f32 0.0, %v6573
        %v6575 = vpop.f32.mrb[0].mxu0
        %v6576 = vadd.f32 0.0, %v6575
        %6577 = vmatprep.mubr.bf16.mxu0 %v3288
        %6578 = vmatmul.mubr.bf16.gmra.mrb[0].mxu0 %v3287
        %v6579 = vpop.f32.mrb[0].mxu0
        %v6580 = vadd.f32 0.0, %v6579
        %v6581 = vpop.f32.mrb[0].mxu0
        %v6582 = vadd.f32 0.0, %v6581
        %v6583 = vpop.f32.mrb[0].mxu0
        %v6584 = vadd.f32 0.0, %v6583
        %v6585 = vpop.f32.mrb[0].mxu0
        %v6586 = vadd.f32 0.0, %v6585
        %6587 = vmatprep.mubr.bf16.mxu0 %v3296
        %6588 = vmatmul.mubr.bf16.gmra.mrb[0].mxu0 %v3295
        %v6589 = vpop.f32.mrb[0].mxu0
        %v6590 = vadd.f32 0.0, %v6589
        %v6591 = vpop.f32.mrb[0].mxu0
        %v6592 = vadd.f32 0.0, %v6591
        %v6593 = vpop.f32.mrb[0].mxu0
        %v6594 = vadd.f32 0.0, %v6593
        %v6595 = vpop.f32.mrb[0].mxu0
        %v6596 = vadd.f32 0.0, %v6595
        %6597 = vmatprep.mubr.bf16.mxu0 %v3304
        %6598 = vmatmul.mubr.bf16.gmra.mrb[0].mxu0 %v3303
        %v6599 = vpop.f32.mrb[0].mxu0
        %v6600 = vadd.f32 0.0, %v6599
        %v6601 = vpop.f32.mrb[0].mxu0
        %v6602 = vadd.f32 0.0, %v6601
        %v6603 = vpop.f32.mrb[0].mxu0
        %v6604 = vadd.f32 0.0, %v6603
        %v6605 = vpop.f32.mrb[0].mxu0
        %v6606 = vadd.f32 0.0, %v6605
        %6607 = vmatprep.mubr.bf16.mxu0 %v3312
        %6608 = vmatmul.mubr.bf16.gmra.mrb[0].mxu0 %v3311
        %v6609 = vpop.f32.mrb[0].mxu0
        %v6610 = vadd.f32 0.0, %v6609
        %v6611 = vpop.f32.mrb[0].mxu0
        %v6612 = vadd.f32 0.0, %v6611
        %v6613 = vpop.f32.mrb[0].mxu0
        %v6614 = vadd.f32 0.0, %v6613
        %v6615 = vpop.f32.mrb[0].mxu0
        %v6616 = vadd.f32 0.0, %v6615
        %6617 = vmatprep.mubr.bf16.mxu0 %v3320
        %6618 = vmatmul.mubr.bf16.gmra.mrb[0].mxu0 %v3319
        %v6619 = vpop.f32.mrb[0].mxu0
        %v6620 = vadd.f32 0.0, %v6619
        %v6621 = vpop.f32.mrb[0].mxu0
        %v6622 = vadd.f32 0.0, %v6621
        %v6623 = vpop.f32.mrb[0].mxu0
        %v6624 = vadd.f32 0.0, %v6623
        %v6625 = vpop.f32.mrb[0].mxu0
        %v6626 = vadd.f32 0.0, %v6625
        %6627 = vdwg.mxu0
        %6628 = vmatprep.subr.bf16.mxu0 %v4418
        %6629 = vmatpush1.bf16.msra.mxu0 %v4417
        %6630 = vmatprep.subr.bf16.mxu0 %v4422
        %6631 = vmatpush1.bf16.msra.mxu0 %v4421
        %6632 = vmatprep.subr.bf16.mxu0 %v4426
        %6633 = vmatpush1.bf16.msra.mxu0 %v4425
        %6634 = vmatprep.subr.bf16.mxu0 %v4430
        %6635 = vmatpush1.bf16.msra.mxu0 %v4429
        %6636 = vmatprep.subr.bf16.mxu0 %v4434
        %6637 = vmatpush1.bf16.msra.mxu0 %v4433
        %6638 = vmatprep.subr.bf16.mxu0 %v4438
        %6639 = vmatpush1.bf16.msra.mxu0 %v4437
        %6640 = vmatprep.subr.bf16.mxu0 %v4442
        %6641 = vmatpush1.bf16.msra.mxu0 %v4441
        %6642 = vmatprep.subr.bf16.mxu0 %v4446
        %6643 = vmatpush1.bf16.msra.mxu0 %v4445
        %6644 = vmatprep.subr.bf16.mxu0 %v4450
        %6645 = vmatpush1.bf16.msra.mxu0 %v4449
        %6646 = vmatprep.subr.bf16.mxu0 %v4454
        %6647 = vmatpush1.bf16.msra.mxu0 %v4453
        %6648 = vmatprep.subr.bf16.mxu0 %v4458
        %6649 = vmatpush1.bf16.msra.mxu0 %v4457
        %6650 = vmatprep.subr.bf16.mxu0 %v4462
        %6651 = vmatpush1.bf16.msra.mxu0 %v4461
        %6652 = vmatprep.subr.bf16.mxu0 %v4466
        %6653 = vmatpush1.bf16.msra.mxu0 %v4465
        %6654 = vmatprep.subr.bf16.mxu0 %v4470
        %6655 = vmatpush1.bf16.msra.mxu0 %v4469
        %6656 = vmatprep.subr.bf16.mxu0 %v4474
        %6657 = vmatpush1.bf16.msra.mxu0 %v4473
        %6658 = vmatprep.subr.bf16.mxu0 %v4478
        %6659 = vmatpush1.bf16.msra.mxu0 %v4477
        %6660 = vmatprep.mubr.bf16.mxu0 %v3074
        %6661 = vmatmul.mubr.bf16.gmra.mrb[0].mxu0 %v3073
        %v6662 = vpop.f32.mrb[0].mxu0
        %v6663 = vadd.f32 %v6310, %v6662
        %v6664 = vpop.f32.mrb[0].mxu0
        %v6665 = vadd.f32 %v6312, %v6664
        %v6666 = vpop.f32.mrb[0].mxu0
        %v6667 = vadd.f32 %v6314, %v6666
        %v6668 = vpop.f32.mrb[0].mxu0
        %v6669 = vadd.f32 %v6316, %v6668
        %6670 = vmatprep.mubr.bf16.mxu0 %v3082
        %6671 = vmatmul.mubr.bf16.gmra.mrb[0].mxu0 %v3081
        %v6672 = vpop.f32.mrb[0].mxu0
        %v6673 = vadd.f32 %v6320, %v6672
        %v6674 = vpop.f32.mrb[0].mxu0
        %v6675 = vadd.f32 %v6322, %v6674
        %v6676 = vpop.f32.mrb[0].mxu0
        %v6677 = vadd.f32 %v6324, %v6676
        %v6678 = vpop.f32.mrb[0].mxu0
        %v6679 = vadd.f32 %v6326, %v6678
        %6680 = vmatprep.mubr.bf16.mxu0 %v3090
        %6681 = vmatmul.mubr.bf16.gmra.mrb[0].mxu0 %v3089
        %v6682 = vpop.f32.mrb[0].mxu0
        %v6683 = vadd.f32 %v6330, %v6682
        %v6684 = vpop.f32.mrb[0].mxu0
        %v6685 = vadd.f32 %v6332, %v6684
        %v6686 = vpop.f32.mrb[0].mxu0
        %v6687 = vadd.f32 %v6334, %v6686
        %v6688 = vpop.f32.mrb[0].mxu0
        %v6689 = vadd.f32 %v6336, %v6688
        %6690 = vmatprep.mubr.bf16.mxu0 %v3098
        %6691 = vmatmul.mubr.bf16.gmra.mrb[0].mxu0 %v3097
        %v6692 = vpop.f32.mrb[0].mxu0
        %v6693 = vadd.f32 %v6340, %v6692
        %v6694 = vpop.f32.mrb[0].mxu0
        %v6695 = vadd.f32 %v6342, %v6694
        %v6696 = vpop.f32.mrb[0].mxu0
        %v6697 = vadd.f32 %v6344, %v6696
        %v6698 = vpop.f32.mrb[0].mxu0
        %v6699 = vadd.f32 %v6346, %v6698
        %6700 = vmatprep.mubr.bf16.mxu0 %v3106
        %6701 = vmatmul.mubr.bf16.gmra.mrb[0].mxu0 %v3105
        %v6702 = vpop.f32.mrb[0].mxu0
        %v6703 = vadd.f32 %v6350, %v6702
        %v6704 = vpop.f32.mrb[0].mxu0
        %v6705 = vadd.f32 %v6352, %v6704
        %v6706 = vpop.f32.mrb[0].mxu0
        %v6707 = vadd.f32 %v6354, %v6706
        %v6708 = vpop.f32.mrb[0].mxu0
        %v6709 = vadd.f32 %v6356, %v6708
        %6710 = vmatprep.mubr.bf16.mxu0 %v3114
        %6711 = vmatmul.mubr.bf16.gmra.mrb[0].mxu0 %v3113
        %v6712 = vpop.f32.mrb[0].mxu0
        %v6713 = vadd.f32 %v6360, %v6712
        %v6714 = vpop.f32.mrb[0].mxu0
        %v6715 = vadd.f32 %v6362, %v6714
        %v6716 = vpop.f32.mrb[0].mxu0
        %v6717 = vadd.f32 %v6364, %v6716
        %v6718 = vpop.f32.mrb[0].mxu0
        %v6719 = vadd.f32 %v6366, %v6718
        %6720 = vmatprep.mubr.bf16.mxu0 %v3122
        %6721 = vmatmul.mubr.bf16.gmra.mrb[0].mxu0 %v3121
        %v6722 = vpop.f32.mrb[0].mxu0
        %v6723 = vadd.f32 %v6370, %v6722
        %v6724 = vpop.f32.mrb[0].mxu0
        %v6725 = vadd.f32 %v6372, %v6724
        %v6726 = vpop.f32.mrb[0].mxu0
        %v6727 = vadd.f32 %v6374, %v6726
        %v6728 = vpop.f32.mrb[0].mxu0
        %v6729 = vadd.f32 %v6376, %v6728
        %6730 = vmatprep.mubr.bf16.mxu0 %v3130
        %6731 = vmatmul.mubr.bf16.gmra.mrb[0].mxu0 %v3129
        %v6732 = vpop.f32.mrb[0].mxu0
        %v6733 = vadd.f32 %v6380, %v6732
        %v6734 = vpop.f32.mrb[0].mxu0
        %v6735 = vadd.f32 %v6382, %v6734
        %v6736 = vpop.f32.mrb[0].mxu0
        %v6737 = vadd.f32 %v6384, %v6736
        %v6738 = vpop.f32.mrb[0].mxu0
        %v6739 = vadd.f32 %v6386, %v6738
        %6740 = vmatprep.mubr.bf16.mxu0 %v3138
        %6741 = vmatmul.mubr.bf16.gmra.mrb[0].mxu0 %v3137
        %v6742 = vpop.f32.mrb[0].mxu0
        %v6743 = vadd.f32 %v6390, %v6742
        %v6744 = vpop.f32.mrb[0].mxu0
        %v6745 = vadd.f32 %v6392, %v6744
        %v6746 = vpop.f32.mrb[0].mxu0
        %v6747 = vadd.f32 %v6394, %v6746
        %v6748 = vpop.f32.mrb[0].mxu0
        %v6749 = vadd.f32 %v6396, %v6748
        %6750 = vmatprep.mubr.bf16.mxu0 %v3146
        %6751 = vmatmul.mubr.bf16.gmra.mrb[0].mxu0 %v3145
        %v6752 = vpop.f32.mrb[0].mxu0
        %v6753 = vadd.f32 %v6400, %v6752
        %v6754 = vpop.f32.mrb[0].mxu0
        %v6755 = vadd.f32 %v6402, %v6754
        %v6756 = vpop.f32.mrb[0].mxu0
        %v6757 = vadd.f32 %v6404, %v6756
        %v6758 = vpop.f32.mrb[0].mxu0
        %v6759 = vadd.f32 %v6406, %v6758
        %6760 = vmatprep.mubr.bf16.mxu0 %v3154
        %6761 = vmatmul.mubr.bf16.gmra.mrb[0].mxu0 %v3153
        %v6762 = vpop.f32.mrb[0].mxu0
        %v6763 = vadd.f32 %v6410, %v6762
        %v6764 = vpop.f32.mrb[0].mxu0
        %v6765 = vadd.f32 %v6412, %v6764
        %v6766 = vpop.f32.mrb[0].mxu0
        %v6767 = vadd.f32 %v6414, %v6766
        %v6768 = vpop.f32.mrb[0].mxu0
        %v6769 = vadd.f32 %v6416, %v6768
        %6770 = vmatprep.mubr.bf16.mxu0 %v3162
        %6771 = vmatmul.mubr.bf16.gmra.mrb[0].mxu0 %v3161
        %v6772 = vpop.f32.mrb[0].mxu0
        %v6773 = vadd.f32 %v6420, %v6772
        %v6774 = vpop.f32.mrb[0].mxu0
        %v6775 = vadd.f32 %v6422, %v6774
        %v6776 = vpop.f32.mrb[0].mxu0
        %v6777 = vadd.f32 %v6424, %v6776
        %v6778 = vpop.f32.mrb[0].mxu0
        %v6779 = vadd.f32 %v6426, %v6778
        %6780 = vmatprep.mubr.bf16.mxu0 %v3170
        %6781 = vmatmul.mubr.bf16.gmra.mrb[0].mxu0 %v3169
        %v6782 = vpop.f32.mrb[0].mxu0
        %v6783 = vadd.f32 %v6430, %v6782
        %v6784 = vpop.f32.mrb[0].mxu0
        %v6785 = vadd.f32 %v6432, %v6784
        %v6786 = vpop.f32.mrb[0].mxu0
        %v6787 = vadd.f32 %v6434, %v6786
        %v6788 = vpop.f32.mrb[0].mxu0
        %v6789 = vadd.f32 %v6436, %v6788
        %6790 = vmatprep.mubr.bf16.mxu0 %v3178
        %6791 = vmatmul.mubr.bf16.gmra.mrb[0].mxu0 %v3177
        %v6792 = vpop.f32.mrb[0].mxu0
        %v6793 = vadd.f32 %v6440, %v6792
        %v6794 = vpop.f32.mrb[0].mxu0
        %v6795 = vadd.f32 %v6442, %v6794
        %v6796 = vpop.f32.mrb[0].mxu0
        %v6797 = vadd.f32 %v6444, %v6796
        %v6798 = vpop.f32.mrb[0].mxu0
        %v6799 = vadd.f32 %v6446, %v6798
        %6800 = vmatprep.mubr.bf16.mxu0 %v3186
        %6801 = vmatmul.mubr.bf16.gmra.mrb[0].mxu0 %v3185
        %v6802 = vpop.f32.mrb[0].mxu0
        %v6803 = vadd.f32 %v6450, %v6802
        %v6804 = vpop.f32.mrb[0].mxu0
        %v6805 = vadd.f32 %v6452, %v6804
        %v6806 = vpop.f32.mrb[0].mxu0
        %v6807 = vadd.f32 %v6454, %v6806
        %v6808 = vpop.f32.mrb[0].mxu0
        %v6809 = vadd.f32 %v6456, %v6808
        %6810 = vmatprep.mubr.bf16.mxu0 %v3194
        %6811 = vmatmul.mubr.bf16.gmra.mrb[0].mxu0 %v3193
        %v6812 = vpop.f32.mrb[0].mxu0
        %v6813 = vadd.f32 %v6460, %v6812
        %v6814 = vpop.f32.mrb[0].mxu0
        %v6815 = vadd.f32 %v6462, %v6814
        %v6816 = vpop.f32.mrb[0].mxu0
        %v6817 = vadd.f32 %v6464, %v6816
        %v6818 = vpop.f32.mrb[0].mxu0
        %v6819 = vadd.f32 %v6466, %v6818
        %6820 = vmatprep.mubr.bf16.mxu0 %v3202
        %6821 = vmatmul.mubr.bf16.gmra.mrb[0].mxu0 %v3201
        %v6822 = vpop.f32.mrb[0].mxu0
        %v6823 = vadd.f32 %v6470, %v6822
        %v6824 = vpop.f32.mrb[0].mxu0
        %v6825 = vadd.f32 %v6472, %v6824
        %v6826 = vpop.f32.mrb[0].mxu0
        %v6827 = vadd.f32 %v6474, %v6826
        %v6828 = vpop.f32.mrb[0].mxu0
        %v6829 = vadd.f32 %v6476, %v6828
        %6830 = vmatprep.mubr.bf16.mxu0 %v3210
        %6831 = vmatmul.mubr.bf16.gmra.mrb[0].mxu0 %v3209
        %v6832 = vpop.f32.mrb[0].mxu0
        %v6833 = vadd.f32 %v6480, %v6832
        %v6834 = vpop.f32.mrb[0].mxu0
        %v6835 = vadd.f32 %v6482, %v6834
        %v6836 = vpop.f32.mrb[0].mxu0
        %v6837 = vadd.f32 %v6484, %v6836
        %v6838 = vpop.f32.mrb[0].mxu0
        %v6839 = vadd.f32 %v6486, %v6838
        %6840 = vmatprep.mubr.bf16.mxu0 %v3218
        %6841 = vmatmul.mubr.bf16.gmra.mrb[0].mxu0 %v3217
        %v6842 = vpop.f32.mrb[0].mxu0
        %v6843 = vadd.f32 %v6490, %v6842
        %v6844 = vpop.f32.mrb[0].mxu0
        %v6845 = vadd.f32 %v6492, %v6844
        %v6846 = vpop.f32.mrb[0].mxu0
        %v6847 = vadd.f32 %v6494, %v6846
        %v6848 = vpop.f32.mrb[0].mxu0
        %v6849 = vadd.f32 %v6496, %v6848
        %6850 = vmatprep.mubr.bf16.mxu0 %v3226
        %6851 = vmatmul.mubr.bf16.gmra.mrb[0].mxu0 %v3225
        %v6852 = vpop.f32.mrb[0].mxu0
        %v6853 = vadd.f32 %v6500, %v6852
        %v6854 = vpop.f32.mrb[0].mxu0
        %v6855 = vadd.f32 %v6502, %v6854
        %v6856 = vpop.f32.mrb[0].mxu0
        %v6857 = vadd.f32 %v6504, %v6856
        %v6858 = vpop.f32.mrb[0].mxu0
        %v6859 = vadd.f32 %v6506, %v6858
        %6860 = vmatprep.mubr.bf16.mxu0 %v3234
        %6861 = vmatmul.mubr.bf16.gmra.mrb[0].mxu0 %v3233
        %v6862 = vpop.f32.mrb[0].mxu0
        %v6863 = vadd.f32 %v6510, %v6862
        %v6864 = vpop.f32.mrb[0].mxu0
        %v6865 = vadd.f32 %v6512, %v6864
        %v6866 = vpop.f32.mrb[0].mxu0
        %v6867 = vadd.f32 %v6514, %v6866
        %v6868 = vpop.f32.mrb[0].mxu0
        %v6869 = vadd.f32 %v6516, %v6868
        %6870 = vmatprep.mubr.bf16.mxu0 %v3242
        %6871 = vmatmul.mubr.bf16.gmra.mrb[0].mxu0 %v3241
        %v6872 = vpop.f32.mrb[0].mxu0
        %v6873 = vadd.f32 %v6520, %v6872
        %v6874 = vpop.f32.mrb[0].mxu0
        %v6875 = vadd.f32 %v6522, %v6874
        %v6876 = vpop.f32.mrb[0].mxu0
        %v6877 = vadd.f32 %v6524, %v6876
        %v6878 = vpop.f32.mrb[0].mxu0
        %v6879 = vadd.f32 %v6526, %v6878
        %6880 = vmatprep.mubr.bf16.mxu0 %v3250
        %6881 = vmatmul.mubr.bf16.gmra.mrb[0].mxu0 %v3249
        %v6882 = vpop.f32.mrb[0].mxu0
        %v6883 = vadd.f32 %v6530, %v6882
        %v6884 = vpop.f32.mrb[0].mxu0
        %v6885 = vadd.f32 %v6532, %v6884
        %v6886 = vpop.f32.mrb[0].mxu0
        %v6887 = vadd.f32 %v6534, %v6886
        %v6888 = vpop.f32.mrb[0].mxu0
        %v6889 = vadd.f32 %v6536, %v6888
        %6890 = vmatprep.mubr.bf16.mxu0 %v3258
        %6891 = vmatmul.mubr.bf16.gmra.mrb[0].mxu0 %v3257
        %v6892 = vpop.f32.mrb[0].mxu0
        %v6893 = vadd.f32 %v6540, %v6892
        %v6894 = vpop.f32.mrb[0].mxu0
        %v6895 = vadd.f32 %v6542, %v6894
        %v6896 = vpop.f32.mrb[0].mxu0
        %v6897 = vadd.f32 %v6544, %v6896
        %v6898 = vpop.f32.mrb[0].mxu0
        %v6899 = vadd.f32 %v6546, %v6898
        %6900 = vmatprep.mubr.bf16.mxu0 %v3266
        %6901 = vmatmul.mubr.bf16.gmra.mrb[0].mxu0 %v3265
        %v6902 = vpop.f32.mrb[0].mxu0
        %v6903 = vadd.f32 %v6550, %v6902
        %v6904 = vpop.f32.mrb[0].mxu0
        %v6905 = vadd.f32 %v6552, %v6904
        %v6906 = vpop.f32.mrb[0].mxu0
        %v6907 = vadd.f32 %v6554, %v6906
        %v6908 = vpop.f32.mrb[0].mxu0
        %v6909 = vadd.f32 %v6556, %v6908
        %6910 = vmatprep.mubr.bf16.mxu0 %v3274
        %6911 = vmatmul.mubr.bf16.gmra.mrb[0].mxu0 %v3273
        %v6912 = vpop.f32.mrb[0].mxu0
        %v6913 = vadd.f32 %v6560, %v6912
        %v6914 = vpop.f32.mrb[0].mxu0
        %v6915 = vadd.f32 %v6562, %v6914
        %v6916 = vpop.f32.mrb[0].mxu0
        %v6917 = vadd.f32 %v6564, %v6916
        %v6918 = vpop.f32.mrb[0].mxu0
        %v6919 = vadd.f32 %v6566, %v6918
        %6920 = vmatprep.mubr.bf16.mxu0 %v3282
        %6921 = vmatmul.mubr.bf16.gmra.mrb[0].mxu0 %v3281
        %v6922 = vpop.f32.mrb[0].mxu0
        %v6923 = vadd.f32 %v6570, %v6922
        %v6924 = vpop.f32.mrb[0].mxu0
        %v6925 = vadd.f32 %v6572, %v6924
        %v6926 = vpop.f32.mrb[0].mxu0
        %v6927 = vadd.f32 %v6574, %v6926
        %v6928 = vpop.f32.mrb[0].mxu0
        %v6929 = vadd.f32 %v6576, %v6928
        %6930 = vmatprep.mubr.bf16.mxu0 %v3290
        %6931 = vmatmul.mubr.bf16.gmra.mrb[0].mxu0 %v3289
        %v6932 = vpop.f32.mrb[0].mxu0
        %v6933 = vadd.f32 %v6580, %v6932
        %v6934 = vpop.f32.mrb[0].mxu0
        %v6935 = vadd.f32 %v6582, %v6934
        %v6936 = vpop.f32.mrb[0].mxu0
        %v6937 = vadd.f32 %v6584, %v6936
        %v6938 = vpop.f32.mrb[0].mxu0
        %v6939 = vadd.f32 %v6586, %v6938
        %6940 = vmatprep.mubr.bf16.mxu0 %v3298
        %6941 = vmatmul.mubr.bf16.gmra.mrb[0].mxu0 %v3297
        %v6942 = vpop.f32.mrb[0].mxu0
        %v6943 = vadd.f32 %v6590, %v6942
        %v6944 = vpop.f32.mrb[0].mxu0
        %v6945 = vadd.f32 %v6592, %v6944
        %v6946 = vpop.f32.mrb[0].mxu0
        %v6947 = vadd.f32 %v6594, %v6946
        %v6948 = vpop.f32.mrb[0].mxu0
        %v6949 = vadd.f32 %v6596, %v6948
        %6950 = vmatprep.mubr.bf16.mxu0 %v3306
        %6951 = vmatmul.mubr.bf16.gmra.mrb[0].mxu0 %v3305
        %v6952 = vpop.f32.mrb[0].mxu0
        %v6953 = vadd.f32 %v6600, %v6952
        %v6954 = vpop.f32.mrb[0].mxu0
        %v6955 = vadd.f32 %v6602, %v6954
        %v6956 = vpop.f32.mrb[0].mxu0
        %v6957 = vadd.f32 %v6604, %v6956
        %v6958 = vpop.f32.mrb[0].mxu0
        %v6959 = vadd.f32 %v6606, %v6958
        %6960 = vmatprep.mubr.bf16.mxu0 %v3314
        %6961 = vmatmul.mubr.bf16.gmra.mrb[0].mxu0 %v3313
        %v6962 = vpop.f32.mrb[0].mxu0
        %v6963 = vadd.f32 %v6610, %v6962
        %v6964 = vpop.f32.mrb[0].mxu0
        %v6965 = vadd.f32 %v6612, %v6964
        %v6966 = vpop.f32.mrb[0].mxu0
        %v6967 = vadd.f32 %v6614, %v6966
        %v6968 = vpop.f32.mrb[0].mxu0
        %v6969 = vadd.f32 %v6616, %v6968
        %6970 = vmatprep.mubr.bf16.mxu0 %v3322
        %6971 = vmatmul.mubr.bf16.gmra.mrb[0].mxu0 %v3321
        %v6972 = vpop.f32.mrb[0].mxu0
        %v6973 = vadd.f32 %v6620, %v6972
        %v6974 = vpop.f32.mrb[0].mxu0
        %v6975 = vadd.f32 %v6622, %v6974
        %v6976 = vpop.f32.mrb[0].mxu0
        %v6977 = vadd.f32 %v6624, %v6976
        %v6978 = vpop.f32.mrb[0].mxu0
        %v6979 = vadd.f32 %v6626, %v6978
        %6980 = vdwg.mxu0
        %6981 = vmatprep.subr.bf16.mxu0 %v4482
        %6982 = vmatpush1.bf16.msra.mxu0 %v4481
        %6983 = vmatprep.subr.bf16.mxu0 %v4486
        %6984 = vmatpush1.bf16.msra.mxu0 %v4485
        %6985 = vmatprep.subr.bf16.mxu0 %v4490
        %6986 = vmatpush1.bf16.msra.mxu0 %v4489
        %6987 = vmatprep.subr.bf16.mxu0 %v4494
        %6988 = vmatpush1.bf16.msra.mxu0 %v4493
        %6989 = vmatprep.subr.bf16.mxu0 %v4498
        %6990 = vmatpush1.bf16.msra.mxu0 %v4497
        %6991 = vmatprep.subr.bf16.mxu0 %v4502
        %6992 = vmatpush1.bf16.msra.mxu0 %v4501
        %6993 = vmatprep.subr.bf16.mxu0 %v4506
        %6994 = vmatpush1.bf16.msra.mxu0 %v4505
        %6995 = vmatprep.subr.bf16.mxu0 %v4510
        %6996 = vmatpush1.bf16.msra.mxu0 %v4509
        %6997 = vmatprep.subr.bf16.mxu0 %v4514
        %6998 = vmatpush1.bf16.msra.mxu0 %v4513
        %6999 = vmatprep.subr.bf16.mxu0 %v4518
        %7000 = vmatpush1.bf16.msra.mxu0 %v4517
        %7001 = vmatprep.subr.bf16.mxu0 %v4522
        %7002 = vmatpush1.bf16.msra.mxu0 %v4521
        %7003 = vmatprep.subr.bf16.mxu0 %v4526
        %7004 = vmatpush1.bf16.msra.mxu0 %v4525
        %7005 = vmatprep.subr.bf16.mxu0 %v4530
        %7006 = vmatpush1.bf16.msra.mxu0 %v4529
        %7007 = vmatprep.subr.bf16.mxu0 %v4534
        %7008 = vmatpush1.bf16.msra.mxu0 %v4533
        %7009 = vmatprep.subr.bf16.mxu0 %v4538
        %7010 = vmatpush1.bf16.msra.mxu0 %v4537
        %7011 = vmatprep.subr.bf16.mxu0 %v4542
        %7012 = vmatpush1.bf16.msra.mxu0 %v4541
        %7013 = vmatprep.mubr.bf16.mxu0 %v3076
        %7014 = vmatmul.mubr.bf16.gmra.mrb[0].mxu0 %v3075
        %v7015 = vpop.f32.mrb[0].mxu0
        %v7016 = vadd.f32 %v6663, %v7015
        %v7017 = vpop.f32.mrb[0].mxu0
        %v7018 = vadd.f32 %v6665, %v7017
        %v7019 = vpop.f32.mrb[0].mxu0
        %v7020 = vadd.f32 %v6667, %v7019
        %v7021 = vpop.f32.mrb[0].mxu0
        %v7022 = vadd.f32 %v6669, %v7021
        %7023 = vmatprep.mubr.bf16.mxu0 %v3084
        %7024 = vmatmul.mubr.bf16.gmra.mrb[0].mxu0 %v3083
        %v7025 = vpop.f32.mrb[0].mxu0
        %v7026 = vadd.f32 %v6673, %v7025
        %v7027 = vpop.f32.mrb[0].mxu0
        %v7028 = vadd.f32 %v6675, %v7027
        %v7029 = vpop.f32.mrb[0].mxu0
        %v7030 = vadd.f32 %v6677, %v7029
        %v7031 = vpop.f32.mrb[0].mxu0
        %v7032 = vadd.f32 %v6679, %v7031
        %7033 = vmatprep.mubr.bf16.mxu0 %v3092
        %7034 = vmatmul.mubr.bf16.gmra.mrb[0].mxu0 %v3091
        %v7035 = vpop.f32.mrb[0].mxu0
        %v7036 = vadd.f32 %v6683, %v7035
        %v7037 = vpop.f32.mrb[0].mxu0
        %v7038 = vadd.f32 %v6685, %v7037
        %v7039 = vpop.f32.mrb[0].mxu0
        %v7040 = vadd.f32 %v6687, %v7039
        %v7041 = vpop.f32.mrb[0].mxu0
        %v7042 = vadd.f32 %v6689, %v7041
        %7043 = vmatprep.mubr.bf16.mxu0 %v3100
        %7044 = vmatmul.mubr.bf16.gmra.mrb[0].mxu0 %v3099
        %v7045 = vpop.f32.mrb[0].mxu0
        %v7046 = vadd.f32 %v6693, %v7045
        %v7047 = vpop.f32.mrb[0].mxu0
        %v7048 = vadd.f32 %v6695, %v7047
        %v7049 = vpop.f32.mrb[0].mxu0
        %v7050 = vadd.f32 %v6697, %v7049
        %v7051 = vpop.f32.mrb[0].mxu0
        %v7052 = vadd.f32 %v6699, %v7051
        %7053 = vmatprep.mubr.bf16.mxu0 %v3108
        %7054 = vmatmul.mubr.bf16.gmra.mrb[0].mxu0 %v3107
        %v7055 = vpop.f32.mrb[0].mxu0
        %v7056 = vadd.f32 %v6703, %v7055
        %v7057 = vpop.f32.mrb[0].mxu0
        %v7058 = vadd.f32 %v6705, %v7057
        %v7059 = vpop.f32.mrb[0].mxu0
        %v7060 = vadd.f32 %v6707, %v7059
        %v7061 = vpop.f32.mrb[0].mxu0
        %v7062 = vadd.f32 %v6709, %v7061
        %7063 = vmatprep.mubr.bf16.mxu0 %v3116
        %7064 = vmatmul.mubr.bf16.gmra.mrb[0].mxu0 %v3115
        %v7065 = vpop.f32.mrb[0].mxu0
        %v7066 = vadd.f32 %v6713, %v7065
        %v7067 = vpop.f32.mrb[0].mxu0
        %v7068 = vadd.f32 %v6715, %v7067
        %v7069 = vpop.f32.mrb[0].mxu0
        %v7070 = vadd.f32 %v6717, %v7069
        %v7071 = vpop.f32.mrb[0].mxu0
        %v7072 = vadd.f32 %v6719, %v7071
        %7073 = vmatprep.mubr.bf16.mxu0 %v3124
        %7074 = vmatmul.mubr.bf16.gmra.mrb[0].mxu0 %v3123
        %v7075 = vpop.f32.mrb[0].mxu0
        %v7076 = vadd.f32 %v6723, %v7075
        %v7077 = vpop.f32.mrb[0].mxu0
        %v7078 = vadd.f32 %v6725, %v7077
        %v7079 = vpop.f32.mrb[0].mxu0
        %v7080 = vadd.f32 %v6727, %v7079
        %v7081 = vpop.f32.mrb[0].mxu0
        %v7082 = vadd.f32 %v6729, %v7081
        %7083 = vmatprep.mubr.bf16.mxu0 %v3132
        %7084 = vmatmul.mubr.bf16.gmra.mrb[0].mxu0 %v3131
        %v7085 = vpop.f32.mrb[0].mxu0
        %v7086 = vadd.f32 %v6733, %v7085
        %v7087 = vpop.f32.mrb[0].mxu0
        %v7088 = vadd.f32 %v6735, %v7087
        %v7089 = vpop.f32.mrb[0].mxu0
        %v7090 = vadd.f32 %v6737, %v7089
        %v7091 = vpop.f32.mrb[0].mxu0
        %v7092 = vadd.f32 %v6739, %v7091
        %7093 = vmatprep.mubr.bf16.mxu0 %v3140
        %7094 = vmatmul.mubr.bf16.gmra.mrb[0].mxu0 %v3139
        %v7095 = vpop.f32.mrb[0].mxu0
        %v7096 = vadd.f32 %v6743, %v7095
        %v7097 = vpop.f32.mrb[0].mxu0
        %v7098 = vadd.f32 %v6745, %v7097
        %v7099 = vpop.f32.mrb[0].mxu0
        %v7100 = vadd.f32 %v6747, %v7099
        %v7101 = vpop.f32.mrb[0].mxu0
        %v7102 = vadd.f32 %v6749, %v7101
        %7103 = vmatprep.mubr.bf16.mxu0 %v3148
        %7104 = vmatmul.mubr.bf16.gmra.mrb[0].mxu0 %v3147
        %v7105 = vpop.f32.mrb[0].mxu0
        %v7106 = vadd.f32 %v6753, %v7105
        %v7107 = vpop.f32.mrb[0].mxu0
        %v7108 = vadd.f32 %v6755, %v7107
        %v7109 = vpop.f32.mrb[0].mxu0
        %v7110 = vadd.f32 %v6757, %v7109
        %v7111 = vpop.f32.mrb[0].mxu0
        %v7112 = vadd.f32 %v6759, %v7111
        %7113 = vmatprep.mubr.bf16.mxu0 %v3156
        %7114 = vmatmul.mubr.bf16.gmra.mrb[0].mxu0 %v3155
        %v7115 = vpop.f32.mrb[0].mxu0
        %v7116 = vadd.f32 %v6763, %v7115
        %v7117 = vpop.f32.mrb[0].mxu0
        %v7118 = vadd.f32 %v6765, %v7117
        %v7119 = vpop.f32.mrb[0].mxu0
        %v7120 = vadd.f32 %v6767, %v7119
        %v7121 = vpop.f32.mrb[0].mxu0
        %v7122 = vadd.f32 %v6769, %v7121
        %7123 = vmatprep.mubr.bf16.mxu0 %v3164
        %7124 = vmatmul.mubr.bf16.gmra.mrb[0].mxu0 %v3163
        %v7125 = vpop.f32.mrb[0].mxu0
        %v7126 = vadd.f32 %v6773, %v7125
        %v7127 = vpop.f32.mrb[0].mxu0
        %v7128 = vadd.f32 %v6775, %v7127
        %v7129 = vpop.f32.mrb[0].mxu0
        %v7130 = vadd.f32 %v6777, %v7129
        %v7131 = vpop.f32.mrb[0].mxu0
        %v7132 = vadd.f32 %v6779, %v7131
        %7133 = vmatprep.mubr.bf16.mxu0 %v3172
        %7134 = vmatmul.mubr.bf16.gmra.mrb[0].mxu0 %v3171
        %v7135 = vpop.f32.mrb[0].mxu0
        %v7136 = vadd.f32 %v6783, %v7135
        %v7137 = vpop.f32.mrb[0].mxu0
        %v7138 = vadd.f32 %v6785, %v7137
        %v7139 = vpop.f32.mrb[0].mxu0
        %v7140 = vadd.f32 %v6787, %v7139
        %v7141 = vpop.f32.mrb[0].mxu0
        %v7142 = vadd.f32 %v6789, %v7141
        %7143 = vmatprep.mubr.bf16.mxu0 %v3180
        %7144 = vmatmul.mubr.bf16.gmra.mrb[0].mxu0 %v3179
        %v7145 = vpop.f32.mrb[0].mxu0
        %v7146 = vadd.f32 %v6793, %v7145
        %v7147 = vpop.f32.mrb[0].mxu0
        %v7148 = vadd.f32 %v6795, %v7147
        %v7149 = vpop.f32.mrb[0].mxu0
        %v7150 = vadd.f32 %v6797, %v7149
        %v7151 = vpop.f32.mrb[0].mxu0
        %v7152 = vadd.f32 %v6799, %v7151
        %7153 = vmatprep.mubr.bf16.mxu0 %v3188
        %7154 = vmatmul.mubr.bf16.gmra.mrb[0].mxu0 %v3187
        %v7155 = vpop.f32.mrb[0].mxu0
        %v7156 = vadd.f32 %v6803, %v7155
        %v7157 = vpop.f32.mrb[0].mxu0
        %v7158 = vadd.f32 %v6805, %v7157
        %v7159 = vpop.f32.mrb[0].mxu0
        %v7160 = vadd.f32 %v6807, %v7159
        %v7161 = vpop.f32.mrb[0].mxu0
        %v7162 = vadd.f32 %v6809, %v7161
        %7163 = vmatprep.mubr.bf16.mxu0 %v3196
        %7164 = vmatmul.mubr.bf16.gmra.mrb[0].mxu0 %v3195
        %v7165 = vpop.f32.mrb[0].mxu0
        %v7166 = vadd.f32 %v6813, %v7165
        %v7167 = vpop.f32.mrb[0].mxu0
        %v7168 = vadd.f32 %v6815, %v7167
        %v7169 = vpop.f32.mrb[0].mxu0
        %v7170 = vadd.f32 %v6817, %v7169
        %v7171 = vpop.f32.mrb[0].mxu0
        %v7172 = vadd.f32 %v6819, %v7171
        %7173 = vmatprep.mubr.bf16.mxu0 %v3204
        %7174 = vmatmul.mubr.bf16.gmra.mrb[0].mxu0 %v3203
        %v7175 = vpop.f32.mrb[0].mxu0
        %v7176 = vadd.f32 %v6823, %v7175
        %v7177 = vpop.f32.mrb[0].mxu0
        %v7178 = vadd.f32 %v6825, %v7177
        %v7179 = vpop.f32.mrb[0].mxu0
        %v7180 = vadd.f32 %v6827, %v7179
        %v7181 = vpop.f32.mrb[0].mxu0
        %v7182 = vadd.f32 %v6829, %v7181
        %7183 = vmatprep.mubr.bf16.mxu0 %v3212
        %7184 = vmatmul.mubr.bf16.gmra.mrb[0].mxu0 %v3211
        %v7185 = vpop.f32.mrb[0].mxu0
        %v7186 = vadd.f32 %v6833, %v7185
        %v7187 = vpop.f32.mrb[0].mxu0
        %v7188 = vadd.f32 %v6835, %v7187
        %v7189 = vpop.f32.mrb[0].mxu0
        %v7190 = vadd.f32 %v6837, %v7189
        %v7191 = vpop.f32.mrb[0].mxu0
        %v7192 = vadd.f32 %v6839, %v7191
        %7193 = vmatprep.mubr.bf16.mxu0 %v3220
        %7194 = vmatmul.mubr.bf16.gmra.mrb[0].mxu0 %v3219
        %v7195 = vpop.f32.mrb[0].mxu0
        %v7196 = vadd.f32 %v6843, %v7195
        %v7197 = vpop.f32.mrb[0].mxu0
        %v7198 = vadd.f32 %v6845, %v7197
        %v7199 = vpop.f32.mrb[0].mxu0
        %v7200 = vadd.f32 %v6847, %v7199
        %v7201 = vpop.f32.mrb[0].mxu0
        %v7202 = vadd.f32 %v6849, %v7201
        %7203 = vmatprep.mubr.bf16.mxu0 %v3228
        %7204 = vmatmul.mubr.bf16.gmra.mrb[0].mxu0 %v3227
        %v7205 = vpop.f32.mrb[0].mxu0
        %v7206 = vadd.f32 %v6853, %v7205
        %v7207 = vpop.f32.mrb[0].mxu0
        %v7208 = vadd.f32 %v6855, %v7207
        %v7209 = vpop.f32.mrb[0].mxu0
        %v7210 = vadd.f32 %v6857, %v7209
        %v7211 = vpop.f32.mrb[0].mxu0
        %v7212 = vadd.f32 %v6859, %v7211
        %7213 = vmatprep.mubr.bf16.mxu0 %v3236
        %7214 = vmatmul.mubr.bf16.gmra.mrb[0].mxu0 %v3235
        %v7215 = vpop.f32.mrb[0].mxu0
        %v7216 = vadd.f32 %v6863, %v7215
        %v7217 = vpop.f32.mrb[0].mxu0
        %v7218 = vadd.f32 %v6865, %v7217
        %v7219 = vpop.f32.mrb[0].mxu0
        %v7220 = vadd.f32 %v6867, %v7219
        %v7221 = vpop.f32.mrb[0].mxu0
        %v7222 = vadd.f32 %v6869, %v7221
        %7223 = vmatprep.mubr.bf16.mxu0 %v3244
        %7224 = vmatmul.mubr.bf16.gmra.mrb[0].mxu0 %v3243
        %v7225 = vpop.f32.mrb[0].mxu0
        %v7226 = vadd.f32 %v6873, %v7225
        %v7227 = vpop.f32.mrb[0].mxu0
        %v7228 = vadd.f32 %v6875, %v7227
        %v7229 = vpop.f32.mrb[0].mxu0
        %v7230 = vadd.f32 %v6877, %v7229
        %v7231 = vpop.f32.mrb[0].mxu0
        %v7232 = vadd.f32 %v6879, %v7231
        %7233 = vmatprep.mubr.bf16.mxu0 %v3252
        %7234 = vmatmul.mubr.bf16.gmra.mrb[0].mxu0 %v3251
        %v7235 = vpop.f32.mrb[0].mxu0
        %v7236 = vadd.f32 %v6883, %v7235
        %v7237 = vpop.f32.mrb[0].mxu0
        %v7238 = vadd.f32 %v6885, %v7237
        %v7239 = vpop.f32.mrb[0].mxu0
        %v7240 = vadd.f32 %v6887, %v7239
        %v7241 = vpop.f32.mrb[0].mxu0
        %v7242 = vadd.f32 %v6889, %v7241
        %7243 = vmatprep.mubr.bf16.mxu0 %v3260
        %7244 = vmatmul.mubr.bf16.gmra.mrb[0].mxu0 %v3259
        %v7245 = vpop.f32.mrb[0].mxu0
        %v7246 = vadd.f32 %v6893, %v7245
        %v7247 = vpop.f32.mrb[0].mxu0
        %v7248 = vadd.f32 %v6895, %v7247
        %v7249 = vpop.f32.mrb[0].mxu0
        %v7250 = vadd.f32 %v6897, %v7249
        %v7251 = vpop.f32.mrb[0].mxu0
        %v7252 = vadd.f32 %v6899, %v7251
        %7253 = vmatprep.mubr.bf16.mxu0 %v3268
        %7254 = vmatmul.mubr.bf16.gmra.mrb[0].mxu0 %v3267
        %v7255 = vpop.f32.mrb[0].mxu0
        %v7256 = vadd.f32 %v6903, %v7255
        %v7257 = vpop.f32.mrb[0].mxu0
        %v7258 = vadd.f32 %v6905, %v7257
        %v7259 = vpop.f32.mrb[0].mxu0
        %v7260 = vadd.f32 %v6907, %v7259
        %v7261 = vpop.f32.mrb[0].mxu0
        %v7262 = vadd.f32 %v6909, %v7261
        %7263 = vmatprep.mubr.bf16.mxu0 %v3276
        %7264 = vmatmul.mubr.bf16.gmra.mrb[0].mxu0 %v3275
        %v7265 = vpop.f32.mrb[0].mxu0
        %v7266 = vadd.f32 %v6913, %v7265
        %v7267 = vpop.f32.mrb[0].mxu0
        %v7268 = vadd.f32 %v6915, %v7267
        %v7269 = vpop.f32.mrb[0].mxu0
        %v7270 = vadd.f32 %v6917, %v7269
        %v7271 = vpop.f32.mrb[0].mxu0
        %v7272 = vadd.f32 %v6919, %v7271
        %7273 = vmatprep.mubr.bf16.mxu0 %v3284
        %7274 = vmatmul.mubr.bf16.gmra.mrb[0].mxu0 %v3283
        %v7275 = vpop.f32.mrb[0].mxu0
        %v7276 = vadd.f32 %v6923, %v7275
        %v7277 = vpop.f32.mrb[0].mxu0
        %v7278 = vadd.f32 %v6925, %v7277
        %v7279 = vpop.f32.mrb[0].mxu0
        %v7280 = vadd.f32 %v6927, %v7279
        %v7281 = vpop.f32.mrb[0].mxu0
        %v7282 = vadd.f32 %v6929, %v7281
        %7283 = vmatprep.mubr.bf16.mxu0 %v3292
        %7284 = vmatmul.mubr.bf16.gmra.mrb[0].mxu0 %v3291
        %v7285 = vpop.f32.mrb[0].mxu0
        %v7286 = vadd.f32 %v6933, %v7285
        %v7287 = vpop.f32.mrb[0].mxu0
        %v7288 = vadd.f32 %v6935, %v7287
        %v7289 = vpop.f32.mrb[0].mxu0
        %v7290 = vadd.f32 %v6937, %v7289
        %v7291 = vpop.f32.mrb[0].mxu0
        %v7292 = vadd.f32 %v6939, %v7291
        %7293 = vmatprep.mubr.bf16.mxu0 %v3300
        %7294 = vmatmul.mubr.bf16.gmra.mrb[0].mxu0 %v3299
        %v7295 = vpop.f32.mrb[0].mxu0
        %v7296 = vadd.f32 %v6943, %v7295
        %v7297 = vpop.f32.mrb[0].mxu0
        %v7298 = vadd.f32 %v6945, %v7297
        %v7299 = vpop.f32.mrb[0].mxu0
        %v7300 = vadd.f32 %v6947, %v7299
        %v7301 = vpop.f32.mrb[0].mxu0
        %v7302 = vadd.f32 %v6949, %v7301
        %7303 = vmatprep.mubr.bf16.mxu0 %v3308
        %7304 = vmatmul.mubr.bf16.gmra.mrb[0].mxu0 %v3307
        %v7305 = vpop.f32.mrb[0].mxu0
        %v7306 = vadd.f32 %v6953, %v7305
        %v7307 = vpop.f32.mrb[0].mxu0
        %v7308 = vadd.f32 %v6955, %v7307
        %v7309 = vpop.f32.mrb[0].mxu0
        %v7310 = vadd.f32 %v6957, %v7309
        %v7311 = vpop.f32.mrb[0].mxu0
        %v7312 = vadd.f32 %v6959, %v7311
        %7313 = vmatprep.mubr.bf16.mxu0 %v3316
        %7314 = vmatmul.mubr.bf16.gmra.mrb[0].mxu0 %v3315
        %v7315 = vpop.f32.mrb[0].mxu0
        %v7316 = vadd.f32 %v6963, %v7315
        %v7317 = vpop.f32.mrb[0].mxu0
        %v7318 = vadd.f32 %v6965, %v7317
        %v7319 = vpop.f32.mrb[0].mxu0
        %v7320 = vadd.f32 %v6967, %v7319
        %v7321 = vpop.f32.mrb[0].mxu0
        %v7322 = vadd.f32 %v6969, %v7321
        %7323 = vmatprep.mubr.bf16.mxu0 %v3324
        %7324 = vmatmul.mubr.bf16.gmra.mrb[0].mxu0 %v3323
        %v7325 = vpop.f32.mrb[0].mxu0
        %v7326 = vadd.f32 %v6973, %v7325
        %v7327 = vpop.f32.mrb[0].mxu0
        %v7328 = vadd.f32 %v6975, %v7327
        %v7329 = vpop.f32.mrb[0].mxu0
        %v7330 = vadd.f32 %v6977, %v7329
        %v7331 = vpop.f32.mrb[0].mxu0
        %v7332 = vadd.f32 %v6979, %v7331
        %7333 = vdwg.mxu0
        %7334 = vmatprep.subr.bf16.mxu0 %v4546
        %7335 = vmatpush1.bf16.msra.mxu0 %v4545
        %7336 = vmatprep.subr.bf16.mxu0 %v4550
        %7337 = vmatpush1.bf16.msra.mxu0 %v4549
        %7338 = vmatprep.subr.bf16.mxu0 %v4554
        %7339 = vmatpush1.bf16.msra.mxu0 %v4553
        %7340 = vmatprep.subr.bf16.mxu0 %v4558
        %7341 = vmatpush1.bf16.msra.mxu0 %v4557
        %7342 = vmatprep.subr.bf16.mxu0 %v4562
        %7343 = vmatpush1.bf16.msra.mxu0 %v4561
        %7344 = vmatprep.subr.bf16.mxu0 %v4566
        %7345 = vmatpush1.bf16.msra.mxu0 %v4565
        %7346 = vmatprep.subr.bf16.mxu0 %v4570
        %7347 = vmatpush1.bf16.msra.mxu0 %v4569
        %7348 = vmatprep.subr.bf16.mxu0 %v4574
        %7349 = vmatpush1.bf16.msra.mxu0 %v4573
        %7350 = vmatprep.subr.bf16.mxu0 %v4578
        %7351 = vmatpush1.bf16.msra.mxu0 %v4577
        %7352 = vmatprep.subr.bf16.mxu0 %v4582
        %7353 = vmatpush1.bf16.msra.mxu0 %v4581
        %7354 = vmatprep.subr.bf16.mxu0 %v4586
        %7355 = vmatpush1.bf16.msra.mxu0 %v4585
        %7356 = vmatprep.subr.bf16.mxu0 %v4590
        %7357 = vmatpush1.bf16.msra.mxu0 %v4589
        %7358 = vmatprep.subr.bf16.mxu0 %v4594
        %7359 = vmatpush1.bf16.msra.mxu0 %v4593
        %7360 = vmatprep.subr.bf16.mxu0 %v4598
        %7361 = vmatpush1.bf16.msra.mxu0 %v4597
        %7362 = vmatprep.subr.bf16.mxu0 %v4602
        %7363 = vmatpush1.bf16.msra.mxu0 %v4601
        %7364 = vmatprep.subr.bf16.mxu0 %v4606
        %7365 = vmatpush1.bf16.msra.mxu0 %v4605
        %7366 = vmatprep.mubr.bf16.mxu0 %v3078
        %7367 = vmatmul.mubr.bf16.gmra.mrb[0].mxu0 %v3077
        %v7368 = vpop.f32.mrb[0].mxu0
        %v7369 = vadd.f32 %v7016, %v7368
        %v7370 = vpop.f32.mrb[0].mxu0
        %v7371 = vadd.f32 %v7018, %v7370
        %v7372 = vpop.f32.mrb[0].mxu0
        %v7373 = vadd.f32 %v7020, %v7372
        %v7374 = vpop.f32.mrb[0].mxu0
        %v7375 = vadd.f32 %v7022, %v7374
        %7376 = vmatprep.mubr.bf16.mxu0 %v3086
        %7377 = vmatmul.mubr.bf16.gmra.mrb[0].mxu0 %v3085
        %v7378 = vpop.f32.mrb[0].mxu0
        %v7379 = vadd.f32 %v7026, %v7378
        %v7380 = vpop.f32.mrb[0].mxu0
        %v7381 = vadd.f32 %v7028, %v7380
        %v7382 = vpop.f32.mrb[0].mxu0
        %v7383 = vadd.f32 %v7030, %v7382
        %v7384 = vpop.f32.mrb[0].mxu0
        %v7385 = vadd.f32 %v7032, %v7384
        %7386 = vmatprep.mubr.bf16.mxu0 %v3094
        %7387 = vmatmul.mubr.bf16.gmra.mrb[0].mxu0 %v3093
        %v7388 = vpop.f32.mrb[0].mxu0
        %v7389 = vadd.f32 %v7036, %v7388
        %v7390 = vpop.f32.mrb[0].mxu0
        %v7391 = vadd.f32 %v7038, %v7390
        %v7392 = vpop.f32.mrb[0].mxu0
        %v7393 = vadd.f32 %v7040, %v7392
        %v7394 = vpop.f32.mrb[0].mxu0
        %v7395 = vadd.f32 %v7042, %v7394
        %7396 = vmatprep.mubr.bf16.mxu0 %v3102
        %7397 = vmatmul.mubr.bf16.gmra.mrb[0].mxu0 %v3101
        %v7398 = vpop.f32.mrb[0].mxu0
        %v7399 = vadd.f32 %v7046, %v7398
        %v7400 = vpop.f32.mrb[0].mxu0
        %v7401 = vadd.f32 %v7048, %v7400
        %v7402 = vpop.f32.mrb[0].mxu0
        %v7403 = vadd.f32 %v7050, %v7402
        %v7404 = vpop.f32.mrb[0].mxu0
        %v7405 = vadd.f32 %v7052, %v7404
        %7406 = vmatprep.mubr.bf16.mxu0 %v3110
        %7407 = vmatmul.mubr.bf16.gmra.mrb[0].mxu0 %v3109
        %v7408 = vpop.f32.mrb[0].mxu0
        %v7409 = vadd.f32 %v7056, %v7408
        %v7410 = vpop.f32.mrb[0].mxu0
        %v7411 = vadd.f32 %v7058, %v7410
        %v7412 = vpop.f32.mrb[0].mxu0
        %v7413 = vadd.f32 %v7060, %v7412
        %v7414 = vpop.f32.mrb[0].mxu0
        %v7415 = vadd.f32 %v7062, %v7414
        %7416 = vmatprep.mubr.bf16.mxu0 %v3118
        %7417 = vmatmul.mubr.bf16.gmra.mrb[0].mxu0 %v3117
        %v7418 = vpop.f32.mrb[0].mxu0
        %v7419 = vadd.f32 %v7066, %v7418
        %v7420 = vpop.f32.mrb[0].mxu0
        %v7421 = vadd.f32 %v7068, %v7420
        %v7422 = vpop.f32.mrb[0].mxu0
        %v7423 = vadd.f32 %v7070, %v7422
        %v7424 = vpop.f32.mrb[0].mxu0
        %v7425 = vadd.f32 %v7072, %v7424
        %7426 = vmatprep.mubr.bf16.mxu0 %v3126
        %7427 = vmatmul.mubr.bf16.gmra.mrb[0].mxu0 %v3125
        %v7428 = vpop.f32.mrb[0].mxu0
        %v7429 = vadd.f32 %v7076, %v7428
        %v7430 = vpop.f32.mrb[0].mxu0
        %v7431 = vadd.f32 %v7078, %v7430
        %v7432 = vpop.f32.mrb[0].mxu0
        %v7433 = vadd.f32 %v7080, %v7432
        %v7434 = vpop.f32.mrb[0].mxu0
        %v7435 = vadd.f32 %v7082, %v7434
        %7436 = vmatprep.mubr.bf16.mxu0 %v3134
        %7437 = vmatmul.mubr.bf16.gmra.mrb[0].mxu0 %v3133
        %v7438 = vpop.f32.mrb[0].mxu0
        %v7439 = vadd.f32 %v7086, %v7438
        %v7440 = vpop.f32.mrb[0].mxu0
        %v7441 = vadd.f32 %v7088, %v7440
        %v7442 = vpop.f32.mrb[0].mxu0
        %v7443 = vadd.f32 %v7090, %v7442
        %v7444 = vpop.f32.mrb[0].mxu0
        %v7445 = vadd.f32 %v7092, %v7444
        %7446 = vmatprep.mubr.bf16.mxu0 %v3142
        %7447 = vmatmul.mubr.bf16.gmra.mrb[0].mxu0 %v3141
        %v7448 = vpop.f32.mrb[0].mxu0
        %v7449 = vadd.f32 %v7096, %v7448
        %v7450 = vpop.f32.mrb[0].mxu0
        %v7451 = vadd.f32 %v7098, %v7450
        %v7452 = vpop.f32.mrb[0].mxu0
        %v7453 = vadd.f32 %v7100, %v7452
        %v7454 = vpop.f32.mrb[0].mxu0
        %v7455 = vadd.f32 %v7102, %v7454
        %7456 = vmatprep.mubr.bf16.mxu0 %v3150
        %7457 = vmatmul.mubr.bf16.gmra.mrb[0].mxu0 %v3149
        %v7458 = vpop.f32.mrb[0].mxu0
        %v7459 = vadd.f32 %v7106, %v7458
        %v7460 = vpop.f32.mrb[0].mxu0
        %v7461 = vadd.f32 %v7108, %v7460
        %v7462 = vpop.f32.mrb[0].mxu0
        %v7463 = vadd.f32 %v7110, %v7462
        %v7464 = vpop.f32.mrb[0].mxu0
        %v7465 = vadd.f32 %v7112, %v7464
        %7466 = vmatprep.mubr.bf16.mxu0 %v3158
        %7467 = vmatmul.mubr.bf16.gmra.mrb[0].mxu0 %v3157
        %v7468 = vpop.f32.mrb[0].mxu0
        %v7469 = vadd.f32 %v7116, %v7468
        %v7470 = vpop.f32.mrb[0].mxu0
        %v7471 = vadd.f32 %v7118, %v7470
        %v7472 = vpop.f32.mrb[0].mxu0
        %v7473 = vadd.f32 %v7120, %v7472
        %v7474 = vpop.f32.mrb[0].mxu0
        %v7475 = vadd.f32 %v7122, %v7474
        %7476 = vmatprep.mubr.bf16.mxu0 %v3166
        %7477 = vmatmul.mubr.bf16.gmra.mrb[0].mxu0 %v3165
        %v7478 = vpop.f32.mrb[0].mxu0
        %v7479 = vadd.f32 %v7126, %v7478
        %v7480 = vpop.f32.mrb[0].mxu0
        %v7481 = vadd.f32 %v7128, %v7480
        %v7482 = vpop.f32.mrb[0].mxu0
        %v7483 = vadd.f32 %v7130, %v7482
        %v7484 = vpop.f32.mrb[0].mxu0
        %v7485 = vadd.f32 %v7132, %v7484
        %7486 = vmatprep.mubr.bf16.mxu0 %v3174
        %7487 = vmatmul.mubr.bf16.gmra.mrb[0].mxu0 %v3173
        %v7488 = vpop.f32.mrb[0].mxu0
        %v7489 = vadd.f32 %v7136, %v7488
        %v7490 = vpop.f32.mrb[0].mxu0
        %v7491 = vadd.f32 %v7138, %v7490
        %v7492 = vpop.f32.mrb[0].mxu0
        %v7493 = vadd.f32 %v7140, %v7492
        %v7494 = vpop.f32.mrb[0].mxu0
        %v7495 = vadd.f32 %v7142, %v7494
        %7496 = vmatprep.mubr.bf16.mxu0 %v3182
        %7497 = vmatmul.mubr.bf16.gmra.mrb[0].mxu0 %v3181
        %v7498 = vpop.f32.mrb[0].mxu0
        %v7499 = vadd.f32 %v7146, %v7498
        %v7500 = vpop.f32.mrb[0].mxu0
        %v7501 = vadd.f32 %v7148, %v7500
        %v7502 = vpop.f32.mrb[0].mxu0
        %v7503 = vadd.f32 %v7150, %v7502
        %v7504 = vpop.f32.mrb[0].mxu0
        %v7505 = vadd.f32 %v7152, %v7504
        %7506 = vmatprep.mubr.bf16.mxu0 %v3190
        %7507 = vmatmul.mubr.bf16.gmra.mrb[0].mxu0 %v3189
        %v7508 = vpop.f32.mrb[0].mxu0
        %v7509 = vadd.f32 %v7156, %v7508
        %v7510 = vpop.f32.mrb[0].mxu0
        %v7511 = vadd.f32 %v7158, %v7510
        %v7512 = vpop.f32.mrb[0].mxu0
        %v7513 = vadd.f32 %v7160, %v7512
        %v7514 = vpop.f32.mrb[0].mxu0
        %v7515 = vadd.f32 %v7162, %v7514
        %7516 = vmatprep.mubr.bf16.mxu0 %v3198
        %7517 = vmatmul.mubr.bf16.gmra.mrb[0].mxu0 %v3197
        %v7518 = vpop.f32.mrb[0].mxu0
        %v7519 = vadd.f32 %v7166, %v7518
        %v7520 = vpop.f32.mrb[0].mxu0
        %v7521 = vadd.f32 %v7168, %v7520
        %v7522 = vpop.f32.mrb[0].mxu0
        %v7523 = vadd.f32 %v7170, %v7522
        %v7524 = vpop.f32.mrb[0].mxu0
        %v7525 = vadd.f32 %v7172, %v7524
        %7526 = vmatprep.mubr.bf16.mxu0 %v3206
        %7527 = vmatmul.mubr.bf16.gmra.mrb[0].mxu0 %v3205
        %v7528 = vpop.f32.mrb[0].mxu0
        %v7529 = vadd.f32 %v7176, %v7528
        %v7530 = vpop.f32.mrb[0].mxu0
        %v7531 = vadd.f32 %v7178, %v7530
        %v7532 = vpop.f32.mrb[0].mxu0
        %v7533 = vadd.f32 %v7180, %v7532
        %v7534 = vpop.f32.mrb[0].mxu0
        %v7535 = vadd.f32 %v7182, %v7534
        %7536 = vmatprep.mubr.bf16.mxu0 %v3214
        %7537 = vmatmul.mubr.bf16.gmra.mrb[0].mxu0 %v3213
        %v7538 = vpop.f32.mrb[0].mxu0
        %v7539 = vadd.f32 %v7186, %v7538
        %v7540 = vpop.f32.mrb[0].mxu0
        %v7541 = vadd.f32 %v7188, %v7540
        %v7542 = vpop.f32.mrb[0].mxu0
        %v7543 = vadd.f32 %v7190, %v7542
        %v7544 = vpop.f32.mrb[0].mxu0
        %v7545 = vadd.f32 %v7192, %v7544
        %7546 = vmatprep.mubr.bf16.mxu0 %v3222
        %7547 = vmatmul.mubr.bf16.gmra.mrb[0].mxu0 %v3221
        %v7548 = vpop.f32.mrb[0].mxu0
        %v7549 = vadd.f32 %v7196, %v7548
        %v7550 = vpop.f32.mrb[0].mxu0
        %v7551 = vadd.f32 %v7198, %v7550
        %v7552 = vpop.f32.mrb[0].mxu0
        %v7553 = vadd.f32 %v7200, %v7552
        %v7554 = vpop.f32.mrb[0].mxu0
        %v7555 = vadd.f32 %v7202, %v7554
        %7556 = vmatprep.mubr.bf16.mxu0 %v3230
        %7557 = vmatmul.mubr.bf16.gmra.mrb[0].mxu0 %v3229
        %v7558 = vpop.f32.mrb[0].mxu0
        %v7559 = vadd.f32 %v7206, %v7558
        %v7560 = vpop.f32.mrb[0].mxu0
        %v7561 = vadd.f32 %v7208, %v7560
        %v7562 = vpop.f32.mrb[0].mxu0
        %v7563 = vadd.f32 %v7210, %v7562
        %v7564 = vpop.f32.mrb[0].mxu0
        %v7565 = vadd.f32 %v7212, %v7564
        %7566 = vmatprep.mubr.bf16.mxu0 %v3238
        %7567 = vmatmul.mubr.bf16.gmra.mrb[0].mxu0 %v3237
        %v7568 = vpop.f32.mrb[0].mxu0
        %v7569 = vadd.f32 %v7216, %v7568
        %v7570 = vpop.f32.mrb[0].mxu0
        %v7571 = vadd.f32 %v7218, %v7570
        %v7572 = vpop.f32.mrb[0].mxu0
        %v7573 = vadd.f32 %v7220, %v7572
        %v7574 = vpop.f32.mrb[0].mxu0
        %v7575 = vadd.f32 %v7222, %v7574
        %7576 = vmatprep.mubr.bf16.mxu0 %v3246
        %7577 = vmatmul.mubr.bf16.gmra.mrb[0].mxu0 %v3245
        %v7578 = vpop.f32.mrb[0].mxu0
        %v7579 = vadd.f32 %v7226, %v7578
        %v7580 = vpop.f32.mrb[0].mxu0
        %v7581 = vadd.f32 %v7228, %v7580
        %v7582 = vpop.f32.mrb[0].mxu0
        %v7583 = vadd.f32 %v7230, %v7582
        %v7584 = vpop.f32.mrb[0].mxu0
        %v7585 = vadd.f32 %v7232, %v7584
        %7586 = vmatprep.mubr.bf16.mxu0 %v3254
        %7587 = vmatmul.mubr.bf16.gmra.mrb[0].mxu0 %v3253
        %v7588 = vpop.f32.mrb[0].mxu0
        %v7589 = vadd.f32 %v7236, %v7588
        %v7590 = vpop.f32.mrb[0].mxu0
        %v7591 = vadd.f32 %v7238, %v7590
        %v7592 = vpop.f32.mrb[0].mxu0
        %v7593 = vadd.f32 %v7240, %v7592
        %v7594 = vpop.f32.mrb[0].mxu0
        %v7595 = vadd.f32 %v7242, %v7594
        %7596 = vmatprep.mubr.bf16.mxu0 %v3262
        %7597 = vmatmul.mubr.bf16.gmra.mrb[0].mxu0 %v3261
        %v7598 = vpop.f32.mrb[0].mxu0
        %v7599 = vadd.f32 %v7246, %v7598
        %v7600 = vpop.f32.mrb[0].mxu0
        %v7601 = vadd.f32 %v7248, %v7600
        %v7602 = vpop.f32.mrb[0].mxu0
        %v7603 = vadd.f32 %v7250, %v7602
        %v7604 = vpop.f32.mrb[0].mxu0
        %v7605 = vadd.f32 %v7252, %v7604
        %7606 = vmatprep.mubr.bf16.mxu0 %v3270
        %7607 = vmatmul.mubr.bf16.gmra.mrb[0].mxu0 %v3269
        %v7608 = vpop.f32.mrb[0].mxu0
        %v7609 = vadd.f32 %v7256, %v7608
        %v7610 = vpop.f32.mrb[0].mxu0
        %v7611 = vadd.f32 %v7258, %v7610
        %v7612 = vpop.f32.mrb[0].mxu0
        %v7613 = vadd.f32 %v7260, %v7612
        %v7614 = vpop.f32.mrb[0].mxu0
        %v7615 = vadd.f32 %v7262, %v7614
        %7616 = vmatprep.mubr.bf16.mxu0 %v3278
        %7617 = vmatmul.mubr.bf16.gmra.mrb[0].mxu0 %v3277
        %v7618 = vpop.f32.mrb[0].mxu0
        %v7619 = vadd.f32 %v7266, %v7618
        %v7620 = vpop.f32.mrb[0].mxu0
        %v7621 = vadd.f32 %v7268, %v7620
        %v7622 = vpop.f32.mrb[0].mxu0
        %v7623 = vadd.f32 %v7270, %v7622
        %v7624 = vpop.f32.mrb[0].mxu0
        %v7625 = vadd.f32 %v7272, %v7624
        %7626 = vmatprep.mubr.bf16.mxu0 %v3286
        %7627 = vmatmul.mubr.bf16.gmra.mrb[0].mxu0 %v3285
        %v7628 = vpop.f32.mrb[0].mxu0
        %v7629 = vadd.f32 %v7276, %v7628
        %v7630 = vpop.f32.mrb[0].mxu0
        %v7631 = vadd.f32 %v7278, %v7630
        %v7632 = vpop.f32.mrb[0].mxu0
        %v7633 = vadd.f32 %v7280, %v7632
        %v7634 = vpop.f32.mrb[0].mxu0
        %v7635 = vadd.f32 %v7282, %v7634
        %7636 = vmatprep.mubr.bf16.mxu0 %v3294
        %7637 = vmatmul.mubr.bf16.gmra.mrb[0].mxu0 %v3293
        %v7638 = vpop.f32.mrb[0].mxu0
        %v7639 = vadd.f32 %v7286, %v7638
        %v7640 = vpop.f32.mrb[0].mxu0
        %v7641 = vadd.f32 %v7288, %v7640
        %v7642 = vpop.f32.mrb[0].mxu0
        %v7643 = vadd.f32 %v7290, %v7642
        %v7644 = vpop.f32.mrb[0].mxu0
        %v7645 = vadd.f32 %v7292, %v7644
        %7646 = vmatprep.mubr.bf16.mxu0 %v3302
        %7647 = vmatmul.mubr.bf16.gmra.mrb[0].mxu0 %v3301
        %v7648 = vpop.f32.mrb[0].mxu0
        %v7649 = vadd.f32 %v7296, %v7648
        %v7650 = vpop.f32.mrb[0].mxu0
        %v7651 = vadd.f32 %v7298, %v7650
        %v7652 = vpop.f32.mrb[0].mxu0
        %v7653 = vadd.f32 %v7300, %v7652
        %v7654 = vpop.f32.mrb[0].mxu0
        %v7655 = vadd.f32 %v7302, %v7654
        %7656 = vmatprep.mubr.bf16.mxu0 %v3310
        %7657 = vmatmul.mubr.bf16.gmra.mrb[0].mxu0 %v3309
        %v7658 = vpop.f32.mrb[0].mxu0
        %v7659 = vadd.f32 %v7306, %v7658
        %v7660 = vpop.f32.mrb[0].mxu0
        %v7661 = vadd.f32 %v7308, %v7660
        %v7662 = vpop.f32.mrb[0].mxu0
        %v7663 = vadd.f32 %v7310, %v7662
        %v7664 = vpop.f32.mrb[0].mxu0
        %v7665 = vadd.f32 %v7312, %v7664
        %7666 = vmatprep.mubr.bf16.mxu0 %v3318
        %7667 = vmatmul.mubr.bf16.gmra.mrb[0].mxu0 %v3317
        %v7668 = vpop.f32.mrb[0].mxu0
        %v7669 = vadd.f32 %v7316, %v7668
        %v7670 = vpop.f32.mrb[0].mxu0
        %v7671 = vadd.f32 %v7318, %v7670
        %v7672 = vpop.f32.mrb[0].mxu0
        %v7673 = vadd.f32 %v7320, %v7672
        %v7674 = vpop.f32.mrb[0].mxu0
        %v7675 = vadd.f32 %v7322, %v7674
        %7676 = vmatprep.mubr.bf16.mxu0 %v3326
        %7677 = vmatmul.mubr.bf16.gmra.mrb[0].mxu0 %v3325
        %v7678 = vpop.f32.mrb[0].mxu0
        %v7679 = vadd.f32 %v7326, %v7678
        %v7680 = vpop.f32.mrb[0].mxu0
        %v7681 = vadd.f32 %v7328, %v7680
        %v7682 = vpop.f32.mrb[0].mxu0
        %v7683 = vadd.f32 %v7330, %v7682
        %v7684 = vpop.f32.mrb[0].mxu0
        %v7685 = vadd.f32 %v7332, %v7684
        %7686 = vdwg.mxu0
        %v7687 = vpack.c.bf16 %v5961, %v5957
        %v7688 = vpack.c.bf16 %v5963, %v5959
        %v7689 = vpack.c.bf16 %v7373, %v7369
        %v7690 = vpack.c.bf16 %v7375, %v7371
        %v7691 = vpack.c.bf16 %v5971, %v5967
        %v7692 = vpack.c.bf16 %v5973, %v5969
        %v7693 = vpack.c.bf16 %v7383, %v7379
        %v7694 = vpack.c.bf16 %v7385, %v7381
        %v7695 = vpack.c.bf16 %v5981, %v5977
        %v7696 = vpack.c.bf16 %v5983, %v5979
        %v7697 = vpack.c.bf16 %v7393, %v7389
        %v7698 = vpack.c.bf16 %v7395, %v7391
        %v7699 = vpack.c.bf16 %v5991, %v5987
        %v7700 = vpack.c.bf16 %v5993, %v5989
        %v7701 = vpack.c.bf16 %v7403, %v7399
        %v7702 = vpack.c.bf16 %v7405, %v7401
        %v7703 = vpack.c.bf16 %v6001, %v5997
        %v7704 = vpack.c.bf16 %v6003, %v5999
        %v7705 = vpack.c.bf16 %v7413, %v7409
        %v7706 = vpack.c.bf16 %v7415, %v7411
        %v7707 = vpack.c.bf16 %v6011, %v6007
        %v7708 = vpack.c.bf16 %v6013, %v6009
        %v7709 = vpack.c.bf16 %v7423, %v7419
        %v7710 = vpack.c.bf16 %v7425, %v7421
        %v7711 = vpack.c.bf16 %v6021, %v6017
        %v7712 = vpack.c.bf16 %v6023, %v6019
        %v7713 = vpack.c.bf16 %v7433, %v7429
        %v7714 = vpack.c.bf16 %v7435, %v7431
        %v7715 = vpack.c.bf16 %v6031, %v6027
        %v7716 = vpack.c.bf16 %v6033, %v6029
        %v7717 = vpack.c.bf16 %v7443, %v7439
        %v7718 = vpack.c.bf16 %v7445, %v7441
        %v7719 = vpack.c.bf16 %v6041, %v6037
        %v7720 = vpack.c.bf16 %v6043, %v6039
        %v7721 = vpack.c.bf16 %v7453, %v7449
        %v7722 = vpack.c.bf16 %v7455, %v7451
        %v7723 = vpack.c.bf16 %v6051, %v6047
        %v7724 = vpack.c.bf16 %v6053, %v6049
        %v7725 = vpack.c.bf16 %v7463, %v7459
        %v7726 = vpack.c.bf16 %v7465, %v7461
        %v7727 = vpack.c.bf16 %v6061, %v6057
        %v7728 = vpack.c.bf16 %v6063, %v6059
        %v7729 = vpack.c.bf16 %v7473, %v7469
        %v7730 = vpack.c.bf16 %v7475, %v7471
        %v7731 = vpack.c.bf16 %v6071, %v6067
        %v7732 = vpack.c.bf16 %v6073, %v6069
        %v7733 = vpack.c.bf16 %v7483, %v7479
        %v7734 = vpack.c.bf16 %v7485, %v7481
        %v7735 = vpack.c.bf16 %v6081, %v6077
        %v7736 = vpack.c.bf16 %v6083, %v6079
        %v7737 = vpack.c.bf16 %v7493, %v7489
        %v7738 = vpack.c.bf16 %v7495, %v7491
        %v7739 = vpack.c.bf16 %v6091, %v6087
        %v7740 = vpack.c.bf16 %v6093, %v6089
        %v7741 = vpack.c.bf16 %v7503, %v7499
        %v7742 = vpack.c.bf16 %v7505, %v7501
        %v7743 = vpack.c.bf16 %v6101, %v6097
        %v7744 = vpack.c.bf16 %v6103, %v6099
        %v7745 = vpack.c.bf16 %v7513, %v7509
        %v7746 = vpack.c.bf16 %v7515, %v7511
        %v7747 = vpack.c.bf16 %v6111, %v6107
        %v7748 = vpack.c.bf16 %v6113, %v6109
        %v7749 = vpack.c.bf16 %v7523, %v7519
        %v7750 = vpack.c.bf16 %v7525, %v7521
        %v7751 = vpack.c.bf16 %v6121, %v6117
        %v7752 = vpack.c.bf16 %v6123, %v6119
        %v7753 = vpack.c.bf16 %v7533, %v7529
        %v7754 = vpack.c.bf16 %v7535, %v7531
        %v7755 = vpack.c.bf16 %v6131, %v6127
        %v7756 = vpack.c.bf16 %v6133, %v6129
        %v7757 = vpack.c.bf16 %v7543, %v7539
        %v7758 = vpack.c.bf16 %v7545, %v7541
        %v7759 = vpack.c.bf16 %v6141, %v6137
        %v7760 = vpack.c.bf16 %v6143, %v6139
        %v7761 = vpack.c.bf16 %v7553, %v7549
        %v7762 = vpack.c.bf16 %v7555, %v7551
        %v7763 = vpack.c.bf16 %v6151, %v6147
        %v7764 = vpack.c.bf16 %v6153, %v6149
        %v7765 = vpack.c.bf16 %v7563, %v7559
        %v7766 = vpack.c.bf16 %v7565, %v7561
        %v7767 = vpack.c.bf16 %v6161, %v6157
        %v7768 = vpack.c.bf16 %v6163, %v6159
        %v7769 = vpack.c.bf16 %v7573, %v7569
        %v7770 = vpack.c.bf16 %v7575, %v7571
        %v7771 = vpack.c.bf16 %v6171, %v6167
        %v7772 = vpack.c.bf16 %v6173, %v6169
        %v7773 = vpack.c.bf16 %v7583, %v7579
        %v7774 = vpack.c.bf16 %v7585, %v7581
        %v7775 = vpack.c.bf16 %v6181, %v6177
        %v7776 = vpack.c.bf16 %v6183, %v6179
        %v7777 = vpack.c.bf16 %v7593, %v7589
        %v7778 = vpack.c.bf16 %v7595, %v7591
        %v7779 = vpack.c.bf16 %v6191, %v6187
        %v7780 = vpack.c.bf16 %v6193, %v6189
        %v7781 = vpack.c.bf16 %v7603, %v7599
        %v7782 = vpack.c.bf16 %v7605, %v7601
        %v7783 = vpack.c.bf16 %v6201, %v6197
        %v7784 = vpack.c.bf16 %v6203, %v6199
        %v7785 = vpack.c.bf16 %v7613, %v7609
        %v7786 = vpack.c.bf16 %v7615, %v7611
        %v7787 = vpack.c.bf16 %v6211, %v6207
        %v7788 = vpack.c.bf16 %v6213, %v6209
        %v7789 = vpack.c.bf16 %v7623, %v7619
        %v7790 = vpack.c.bf16 %v7625, %v7621
        %v7791 = vpack.c.bf16 %v6221, %v6217
        %v7792 = vpack.c.bf16 %v6223, %v6219
        %v7793 = vpack.c.bf16 %v7633, %v7629
        %v7794 = vpack.c.bf16 %v7635, %v7631
        %v7795 = vpack.c.bf16 %v6231, %v6227
        %v7796 = vpack.c.bf16 %v6233, %v6229
        %v7797 = vpack.c.bf16 %v7643, %v7639
        %v7798 = vpack.c.bf16 %v7645, %v7641
        %v7799 = vpack.c.bf16 %v6241, %v6237
        %v7800 = vpack.c.bf16 %v6243, %v6239
        %v7801 = vpack.c.bf16 %v7653, %v7649
        %v7802 = vpack.c.bf16 %v7655, %v7651
        %v7803 = vpack.c.bf16 %v6251, %v6247
        %v7804 = vpack.c.bf16 %v6253, %v6249
        %v7805 = vpack.c.bf16 %v7663, %v7659
        %v7806 = vpack.c.bf16 %v7665, %v7661
        %v7807 = vpack.c.bf16 %v6261, %v6257
        %v7808 = vpack.c.bf16 %v6263, %v6259
        %v7809 = vpack.c.bf16 %v7673, %v7669
        %v7810 = vpack.c.bf16 %v7675, %v7671
        %v7811 = vpack.c.bf16 %v6271, %v6267
        %v7812 = vpack.c.bf16 %v6273, %v6269
        %v7813 = vpack.c.bf16 %v7683, %v7679
        %v7814 = vpack.c.bf16 %v7685, %v7681
        %v7815 = vld [vmem:[%s4] sm:$0xf]
        %v7818 = vunpack.c.l.s4 1966171168
        %v7819 = vunpack.c.0.s8 %v7818
        %v7820 = vlaneseq
        %v7821 = vshrl.u32 %v7820, 7
        %v7822 = vsub.s32 %v7819, %v7821
        %v7823 = vrot.slane %v7815, %v7822
        %v7824 = vcombine.high %v7823, %v7823
        %v7826 = vunpack.c.l.s4 1966171168
        %v7827 = vunpack.c.0.s8 %v7826
        %v7828 = vlaneseq
        %v7829 = vshrl.u32 %v7828, 7
        %v7830 = vsub.s32 %v7827, %v7829
        %v7831 = vrot.slane %v7823, %v7830
        %v7833 = vunpack.c.l.s4 1966171168
        %v7834 = vunpack.c.0.s8 %v7833
        %v7835 = vlaneseq
        %v7836 = vshrl.u32 %v7835, 7
        %v7837 = vsub.s32 %v7834, %v7836
        %v7838 = vrot.slane %v7824, %v7837
        %v7839 = vcombine.high %v7831, %v7831
        %v7840 = vcombine.high %v7838, %v7838
        %v7842 = vpack.i.b16 %v7831, %v7831
        %v7844 = vlaneseq
        %v7845 = vshrl.u32 %v7844, 7
        %v7846 = vsub.s32 0, %v7845
        %v7847 = vrot.slane %v7842, %v7846
        %v7849 = vpack.i.b16 %v7838, %v7838
        %v7851 = vlaneseq
        %v7852 = vshrl.u32 %v7851, 7
        %v7853 = vsub.s32 0, %v7852
        %v7854 = vrot.slane %v7849, %v7853
        %v7856 = vpack.i.b16 %v7839, %v7839
        %v7858 = vlaneseq
        %v7859 = vshrl.u32 %v7858, 7
        %v7860 = vsub.s32 0, %v7859
        %v7861 = vrot.slane %v7856, %v7860
        %v7863 = vpack.i.b16 %v7840, %v7840
        %v7865 = vlaneseq
        %v7866 = vshrl.u32 %v7865, 7
        %v7867 = vsub.s32 0, %v7866
        %v7868 = vrot.slane %v7863, %v7867
        %v7869 = vadd.bf16 %v7687, %v7847
        %v7870 = vadd.bf16 %v7688, %v7854
        %v7871 = vadd.bf16 %v7689, %v7861
        %v7872 = vadd.bf16 %v7690, %v7868
        %v7873 = vadd.bf16 %v7691, %v7847
        %v7874 = vadd.bf16 %v7692, %v7854
        %v7875 = vadd.bf16 %v7693, %v7861
        %v7876 = vadd.bf16 %v7694, %v7868
        %v7877 = vadd.bf16 %v7695, %v7847
        %v7878 = vadd.bf16 %v7696, %v7854
        %v7879 = vadd.bf16 %v7697, %v7861
        %v7880 = vadd.bf16 %v7698, %v7868
        %v7881 = vadd.bf16 %v7699, %v7847
        %v7882 = vadd.bf16 %v7700, %v7854
        %v7883 = vadd.bf16 %v7701, %v7861
        %v7884 = vadd.bf16 %v7702, %v7868
        %v7885 = vadd.bf16 %v7703, %v7847
        %v7886 = vadd.bf16 %v7704, %v7854
        %v7887 = vadd.bf16 %v7705, %v7861
        %v7888 = vadd.bf16 %v7706, %v7868
        %v7889 = vadd.bf16 %v7707, %v7847
        %v7890 = vadd.bf16 %v7708, %v7854
        %v7891 = vadd.bf16 %v7709, %v7861
        %v7892 = vadd.bf16 %v7710, %v7868
        %v7893 = vadd.bf16 %v7711, %v7847
        %v7894 = vadd.bf16 %v7712, %v7854
        %v7895 = vadd.bf16 %v7713, %v7861
        %v7896 = vadd.bf16 %v7714, %v7868
        %v7897 = vadd.bf16 %v7715, %v7847
        %v7898 = vadd.bf16 %v7716, %v7854
        %v7899 = vadd.bf16 %v7717, %v7861
        %v7900 = vadd.bf16 %v7718, %v7868
        %v7901 = vadd.bf16 %v7719, %v7847
        %v7902 = vadd.bf16 %v7720, %v7854
        %v7903 = vadd.bf16 %v7721, %v7861
        %v7904 = vadd.bf16 %v7722, %v7868
        %v7905 = vadd.bf16 %v7723, %v7847
        %v7906 = vadd.bf16 %v7724, %v7854
        %v7907 = vadd.bf16 %v7725, %v7861
        %v7908 = vadd.bf16 %v7726, %v7868
        %v7909 = vadd.bf16 %v7727, %v7847
        %v7910 = vadd.bf16 %v7728, %v7854
        %v7911 = vadd.bf16 %v7729, %v7861
        %v7912 = vadd.bf16 %v7730, %v7868
        %v7913 = vadd.bf16 %v7731, %v7847
        %v7914 = vadd.bf16 %v7732, %v7854
        %v7915 = vadd.bf16 %v7733, %v7861
        %v7916 = vadd.bf16 %v7734, %v7868
        %v7917 = vadd.bf16 %v7735, %v7847
        %v7918 = vadd.bf16 %v7736, %v7854
        %v7919 = vadd.bf16 %v7737, %v7861
        %v7920 = vadd.bf16 %v7738, %v7868
        %v7921 = vadd.bf16 %v7739, %v7847
        %v7922 = vadd.bf16 %v7740, %v7854
        %v7923 = vadd.bf16 %v7741, %v7861
        %v7924 = vadd.bf16 %v7742, %v7868
        %v7925 = vadd.bf16 %v7743, %v7847
        %v7926 = vadd.bf16 %v7744, %v7854
        %v7927 = vadd.bf16 %v7745, %v7861
        %v7928 = vadd.bf16 %v7746, %v7868
        %v7929 = vadd.bf16 %v7747, %v7847
        %v7930 = vadd.bf16 %v7748, %v7854
        %v7931 = vadd.bf16 %v7749, %v7861
        %v7932 = vadd.bf16 %v7750, %v7868
        %v7933 = vadd.bf16 %v7751, %v7847
        %v7934 = vadd.bf16 %v7752, %v7854
        %v7935 = vadd.bf16 %v7753, %v7861
        %v7936 = vadd.bf16 %v7754, %v7868
        %v7937 = vadd.bf16 %v7755, %v7847
        %v7938 = vadd.bf16 %v7756, %v7854
        %v7939 = vadd.bf16 %v7757, %v7861
        %v7940 = vadd.bf16 %v7758, %v7868
        %v7941 = vadd.bf16 %v7759, %v7847
        %v7942 = vadd.bf16 %v7760, %v7854
        %v7943 = vadd.bf16 %v7761, %v7861
        %v7944 = vadd.bf16 %v7762, %v7868
        %v7945 = vadd.bf16 %v7763, %v7847
        %v7946 = vadd.bf16 %v7764, %v7854
        %v7947 = vadd.bf16 %v7765, %v7861
        %v7948 = vadd.bf16 %v7766, %v7868
        %v7949 = vadd.bf16 %v7767, %v7847
        %v7950 = vadd.bf16 %v7768, %v7854
        %v7951 = vadd.bf16 %v7769, %v7861
        %v7952 = vadd.bf16 %v7770, %v7868
        %v7953 = vadd.bf16 %v7771, %v7847
        %v7954 = vadd.bf16 %v7772, %v7854
        %v7955 = vadd.bf16 %v7773, %v7861
        %v7956 = vadd.bf16 %v7774, %v7868
        %v7957 = vadd.bf16 %v7775, %v7847
        %v7958 = vadd.bf16 %v7776, %v7854
        %v7959 = vadd.bf16 %v7777, %v7861
        %v7960 = vadd.bf16 %v7778, %v7868
        %v7961 = vadd.bf16 %v7779, %v7847
        %v7962 = vadd.bf16 %v7780, %v7854
        %v7963 = vadd.bf16 %v7781, %v7861
        %v7964 = vadd.bf16 %v7782, %v7868
        %v7965 = vadd.bf16 %v7783, %v7847
        %v7966 = vadd.bf16 %v7784, %v7854
        %v7967 = vadd.bf16 %v7785, %v7861
        %v7968 = vadd.bf16 %v7786, %v7868
        %v7969 = vadd.bf16 %v7787, %v7847
        %v7970 = vadd.bf16 %v7788, %v7854
        %v7971 = vadd.bf16 %v7789, %v7861
        %v7972 = vadd.bf16 %v7790, %v7868
        %v7973 = vadd.bf16 %v7791, %v7847
        %v7974 = vadd.bf16 %v7792, %v7854
        %v7975 = vadd.bf16 %v7793, %v7861
        %v7976 = vadd.bf16 %v7794, %v7868
        %v7977 = vadd.bf16 %v7795, %v7847
        %v7978 = vadd.bf16 %v7796, %v7854
        %v7979 = vadd.bf16 %v7797, %v7861
        %v7980 = vadd.bf16 %v7798, %v7868
        %v7981 = vadd.bf16 %v7799, %v7847
        %v7982 = vadd.bf16 %v7800, %v7854
        %v7983 = vadd.bf16 %v7801, %v7861
        %v7984 = vadd.bf16 %v7802, %v7868
        %v7985 = vadd.bf16 %v7803, %v7847
        %v7986 = vadd.bf16 %v7804, %v7854
        %v7987 = vadd.bf16 %v7805, %v7861
        %v7988 = vadd.bf16 %v7806, %v7868
        %v7989 = vadd.bf16 %v7807, %v7847
        %v7990 = vadd.bf16 %v7808, %v7854
        %v7991 = vadd.bf16 %v7809, %v7861
        %v7992 = vadd.bf16 %v7810, %v7868
        %v7993 = vadd.bf16 %v7811, %v7847
        %v7994 = vadd.bf16 %v7812, %v7854
        %v7995 = vadd.bf16 %v7813, %v7861
        %v7996 = vadd.bf16 %v7814, %v7868
        %v7997 = vmax.bf16 %v7869, 0
        %v7998 = vmax.bf16 %v7870, 0
        %v7999 = vmax.bf16 %v7871, 0
        %v8000 = vmax.bf16 %v7872, 0
        %v8001 = vmax.bf16 %v7873, 0
        %v8002 = vmax.bf16 %v7874, 0
        %v8003 = vmax.bf16 %v7875, 0
        %v8004 = vmax.bf16 %v7876, 0
        %v8005 = vmax.bf16 %v7877, 0
        %v8006 = vmax.bf16 %v7878, 0
        %v8007 = vmax.bf16 %v7879, 0
        %v8008 = vmax.bf16 %v7880, 0
        %v8009 = vmax.bf16 %v7881, 0
        %v8010 = vmax.bf16 %v7882, 0
        %v8011 = vmax.bf16 %v7883, 0
        %v8012 = vmax.bf16 %v7884, 0
        %v8013 = vmax.bf16 %v7885, 0
        %v8014 = vmax.bf16 %v7886, 0
        %v8015 = vmax.bf16 %v7887, 0
        %v8016 = vmax.bf16 %v7888, 0
        %v8017 = vmax.bf16 %v7889, 0
        %v8018 = vmax.bf16 %v7890, 0
        %v8019 = vmax.bf16 %v7891, 0
        %v8020 = vmax.bf16 %v7892, 0
        %v8021 = vmax.bf16 %v7893, 0
        %v8022 = vmax.bf16 %v7894, 0
        %v8023 = vmax.bf16 %v7895, 0
        %v8024 = vmax.bf16 %v7896, 0
        %v8025 = vmax.bf16 %v7897, 0
        %v8026 = vmax.bf16 %v7898, 0
        %v8027 = vmax.bf16 %v7899, 0
        %v8028 = vmax.bf16 %v7900, 0
        %v8029 = vmax.bf16 %v7901, 0
        %v8030 = vmax.bf16 %v7902, 0
        %v8031 = vmax.bf16 %v7903, 0
        %v8032 = vmax.bf16 %v7904, 0
        %v8033 = vmax.bf16 %v7905, 0
        %v8034 = vmax.bf16 %v7906, 0
        %v8035 = vmax.bf16 %v7907, 0
        %v8036 = vmax.bf16 %v7908, 0
        %v8037 = vmax.bf16 %v7909, 0
        %v8038 = vmax.bf16 %v7910, 0
        %v8039 = vmax.bf16 %v7911, 0
        %v8040 = vmax.bf16 %v7912, 0
        %v8041 = vmax.bf16 %v7913, 0
        %v8042 = vmax.bf16 %v7914, 0
        %v8043 = vmax.bf16 %v7915, 0
        %v8044 = vmax.bf16 %v7916, 0
        %v8045 = vmax.bf16 %v7917, 0
        %v8046 = vmax.bf16 %v7918, 0
        %v8047 = vmax.bf16 %v7919, 0
        %v8048 = vmax.bf16 %v7920, 0
        %v8049 = vmax.bf16 %v7921, 0
        %v8050 = vmax.bf16 %v7922, 0
        %v8051 = vmax.bf16 %v7923, 0
        %v8052 = vmax.bf16 %v7924, 0
        %v8053 = vmax.bf16 %v7925, 0
        %v8054 = vmax.bf16 %v7926, 0
        %v8055 = vmax.bf16 %v7927, 0
        %v8056 = vmax.bf16 %v7928, 0
        %v8057 = vmax.bf16 %v7929, 0
        %v8058 = vmax.bf16 %v7930, 0
        %v8059 = vmax.bf16 %v7931, 0
        %v8060 = vmax.bf16 %v7932, 0
        %v8061 = vmax.bf16 %v7933, 0
        %v8062 = vmax.bf16 %v7934, 0
        %v8063 = vmax.bf16 %v7935, 0
        %v8064 = vmax.bf16 %v7936, 0
        %v8065 = vmax.bf16 %v7937, 0
        %v8066 = vmax.bf16 %v7938, 0
        %v8067 = vmax.bf16 %v7939, 0
        %v8068 = vmax.bf16 %v7940, 0
        %v8069 = vmax.bf16 %v7941, 0
        %v8070 = vmax.bf16 %v7942, 0
        %v8071 = vmax.bf16 %v7943, 0
        %v8072 = vmax.bf16 %v7944, 0
        %v8073 = vmax.bf16 %v7945, 0
        %v8074 = vmax.bf16 %v7946, 0
        %v8075 = vmax.bf16 %v7947, 0
        %v8076 = vmax.bf16 %v7948, 0
        %v8077 = vmax.bf16 %v7949, 0
        %v8078 = vmax.bf16 %v7950, 0
        %v8079 = vmax.bf16 %v7951, 0
        %v8080 = vmax.bf16 %v7952, 0
        %v8081 = vmax.bf16 %v7953, 0
        %v8082 = vmax.bf16 %v7954, 0
        %v8083 = vmax.bf16 %v7955, 0
        %v8084 = vmax.bf16 %v7956, 0
        %v8085 = vmax.bf16 %v7957, 0
        %v8086 = vmax.bf16 %v7958, 0
        %v8087 = vmax.bf16 %v7959, 0
        %v8088 = vmax.bf16 %v7960, 0
        %v8089 = vmax.bf16 %v7961, 0
        %v8090 = vmax.bf16 %v7962, 0
        %v8091 = vmax.bf16 %v7963, 0
        %v8092 = vmax.bf16 %v7964, 0
        %v8093 = vmax.bf16 %v7965, 0
        %v8094 = vmax.bf16 %v7966, 0
        %v8095 = vmax.bf16 %v7967, 0
        %v8096 = vmax.bf16 %v7968, 0
        %v8097 = vmax.bf16 %v7969, 0
        %v8098 = vmax.bf16 %v7970, 0
        %v8099 = vmax.bf16 %v7971, 0
        %v8100 = vmax.bf16 %v7972, 0
        %v8101 = vmax.bf16 %v7973, 0
        %v8102 = vmax.bf16 %v7974, 0
        %v8103 = vmax.bf16 %v7975, 0
        %v8104 = vmax.bf16 %v7976, 0
        %v8105 = vmax.bf16 %v7977, 0
        %v8106 = vmax.bf16 %v7978, 0
        %v8107 = vmax.bf16 %v7979, 0
        %v8108 = vmax.bf16 %v7980, 0
        %v8109 = vmax.bf16 %v7981, 0
        %v8110 = vmax.bf16 %v7982, 0
        %v8111 = vmax.bf16 %v7983, 0
        %v8112 = vmax.bf16 %v7984, 0
        %v8113 = vmax.bf16 %v7985, 0
        %v8114 = vmax.bf16 %v7986, 0
        %v8115 = vmax.bf16 %v7987, 0
        %v8116 = vmax.bf16 %v7988, 0
        %v8117 = vmax.bf16 %v7989, 0
        %v8118 = vmax.bf16 %v7990, 0
        %v8119 = vmax.bf16 %v7991, 0
        %v8120 = vmax.bf16 %v7992, 0
        %v8121 = vmax.bf16 %v7993, 0
        %v8122 = vmax.bf16 %v7994, 0
        %v8123 = vmax.bf16 %v7995, 0
        %v8124 = vmax.bf16 %v7996, 0
        %v8125 = vld [vmem:[#allocation9] sm:$0xff]
        %v8126 = vld [vmem:[#allocation9 + $0x8] sm:$0xff]
        %v8127 = vld [vmem:[#allocation9 + $0x10] sm:$0xff]
        %v8128 = vld [vmem:[#allocation9 + $0x18] sm:$0xff]
        %v8129 = vld [vmem:[#allocation9 + $0x20] sm:$0xff]
        %v8130 = vld [vmem:[#allocation9 + $0x28] sm:$0xff]
        %v8131 = vld [vmem:[#allocation9 + $0x30] sm:$0xff]
        %v8132 = vld [vmem:[#allocation9 + $0x38] sm:$0xff]
        %v8133 = vld [vmem:[#allocation9 + $0x40] sm:$0xff]
        %v8134 = vld [vmem:[#allocation9 + $0x48] sm:$0xff]
        %v8135 = vld [vmem:[#allocation9 + $0x50] sm:$0xff]
        %v8136 = vld [vmem:[#allocation9 + $0x58] sm:$0xff]
        %v8137 = vld [vmem:[#allocation9 + $0x60] sm:$0xff]
        %v8138 = vld [vmem:[#allocation9 + $0x68] sm:$0xff]
        %v8139 = vld [vmem:[#allocation9 + $0x70] sm:$0xff]
        %v8140 = vld [vmem:[#allocation9 + $0x78] sm:$0xff]
        %v8141 = vld [vmem:[#allocation9 + $0x80] sm:$0xff]
        %v8142 = vld [vmem:[#allocation9 + $0x88] sm:$0xff]
        %v8143 = vld [vmem:[#allocation9 + $0x90] sm:$0xff]
        %v8144 = vld [vmem:[#allocation9 + $0x98] sm:$0xff]
        %v8145 = vld [vmem:[#allocation9 + $0xa0] sm:$0xff]
        %v8146 = vld [vmem:[#allocation9 + $0xa8] sm:$0xff]
        %v8147 = vld [vmem:[#allocation9 + $0xb0] sm:$0xff]
        %v8148 = vld [vmem:[#allocation9 + $0xb8] sm:$0xff]
        %v8149 = vld [vmem:[#allocation9 + $0xc0] sm:$0xff]
        %v8150 = vld [vmem:[#allocation9 + $0xc8] sm:$0xff]
        %v8151 = vld [vmem:[#allocation9 + $0xd0] sm:$0xff]
        %v8152 = vld [vmem:[#allocation9 + $0xd8] sm:$0xff]
        %v8153 = vld [vmem:[#allocation9 + $0xe0] sm:$0xff]
        %v8154 = vld [vmem:[#allocation9 + $0xe8] sm:$0xff]
        %v8155 = vld [vmem:[#allocation9 + $0xf0] sm:$0xff]
        %v8156 = vld [vmem:[#allocation9 + $0xf8] sm:$0xff]
        %v8157 = vld [vmem:[#allocation9 + $0x100] sm:$0xff]
        %v8158 = vld [vmem:[#allocation9 + $0x108] sm:$0xff]
        %v8159 = vld [vmem:[#allocation9 + $0x110] sm:$0xff]
        %v8160 = vld [vmem:[#allocation9 + $0x118] sm:$0xff]
        %v8161 = vld [vmem:[#allocation9 + $0x120] sm:$0xff]
        %v8162 = vld [vmem:[#allocation9 + $0x128] sm:$0xff]
        %v8163 = vld [vmem:[#allocation9 + $0x130] sm:$0xff]
        %v8164 = vld [vmem:[#allocation9 + $0x138] sm:$0xff]
        %v8165 = vld [vmem:[#allocation9 + $0x140] sm:$0xff]
        %v8166 = vld [vmem:[#allocation9 + $0x148] sm:$0xff]
        %v8167 = vld [vmem:[#allocation9 + $0x150] sm:$0xff]
        %v8168 = vld [vmem:[#allocation9 + $0x158] sm:$0xff]
        %v8169 = vld [vmem:[#allocation9 + $0x160] sm:$0xff]
        %v8170 = vld [vmem:[#allocation9 + $0x168] sm:$0xff]
        %v8171 = vld [vmem:[#allocation9 + $0x170] sm:$0xff]
        %v8172 = vld [vmem:[#allocation9 + $0x178] sm:$0xff]
        %v8173 = vld [vmem:[#allocation9 + $0x180] sm:$0xff]
        %v8174 = vld [vmem:[#allocation9 + $0x188] sm:$0xff]
        %v8175 = vld [vmem:[#allocation9 + $0x190] sm:$0xff]
        %v8176 = vld [vmem:[#allocation9 + $0x198] sm:$0xff]
        %v8177 = vld [vmem:[#allocation9 + $0x1a0] sm:$0xff]
        %v8178 = vld [vmem:[#allocation9 + $0x1a8] sm:$0xff]
        %v8179 = vld [vmem:[#allocation9 + $0x1b0] sm:$0xff]
        %v8180 = vld [vmem:[#allocation9 + $0x1b8] sm:$0xff]
        %v8181 = vld [vmem:[#allocation9 + $0x1c0] sm:$0xff]
        %v8182 = vld [vmem:[#allocation9 + $0x1c8] sm:$0xff]
        %v8183 = vld [vmem:[#allocation9 + $0x1d0] sm:$0xff]
        %v8184 = vld [vmem:[#allocation9 + $0x1d8] sm:$0xff]
        %v8185 = vld [vmem:[#allocation9 + $0x1e0] sm:$0xff]
        %v8186 = vld [vmem:[#allocation9 + $0x1e8] sm:$0xff]
        %v8187 = vld [vmem:[#allocation9 + $0x1f0] sm:$0xff]
        %v8188 = vld [vmem:[#allocation9 + $0x1f8] sm:$0xff]
        %v8189 = vld [vmem:[%s6] sm:$0x3]
        %v8191 = vlaneseq
        %v8192 = vshrl.u32 %v8191, 7
        %v8193 = vsub.s32 0, %v8192
        %v8194 = vrot.slane %v8189, %v8193
        %v8195 = vlaneseq
        %v8196 = vshrl.u32 %v8195, 7
        %v8197 = vsub.s32 1, %v8196
        %v8198 = vrot.slane %v8189, %v8197
        %v8265 = vunpack.c.l.b16 %v8125
        %v8266 = vunpack.c.h.b16 %v8125
        %v8267 = vunpack.c.l.b16 %v8126
        %v8268 = vunpack.c.h.b16 %v8126
        %v8269 = vunpack.c.l.b16 %v8127
        %v8270 = vunpack.c.h.b16 %v8127
        %v8271 = vunpack.c.l.b16 %v8128
        %v8272 = vunpack.c.h.b16 %v8128
        %v8273 = vunpack.c.l.b16 %v8129
        %v8274 = vunpack.c.h.b16 %v8129
        %v8275 = vunpack.c.l.b16 %v8130
        %v8276 = vunpack.c.h.b16 %v8130
        %v8277 = vunpack.c.l.b16 %v8131
        %v8278 = vunpack.c.h.b16 %v8131
        %v8279 = vunpack.c.l.b16 %v8132
        %v8280 = vunpack.c.h.b16 %v8132
        %v8281 = vunpack.c.l.b16 %v8133
        %v8282 = vunpack.c.h.b16 %v8133
        %v8283 = vunpack.c.l.b16 %v8134
        %v8284 = vunpack.c.h.b16 %v8134
        %v8285 = vunpack.c.l.b16 %v8135
        %v8286 = vunpack.c.h.b16 %v8135
        %v8287 = vunpack.c.l.b16 %v8136
        %v8288 = vunpack.c.h.b16 %v8136
        %v8289 = vunpack.c.l.b16 %v8137
        %v8290 = vunpack.c.h.b16 %v8137
        %v8291 = vunpack.c.l.b16 %v8138
        %v8292 = vunpack.c.h.b16 %v8138
        %v8293 = vunpack.c.l.b16 %v8139
        %v8294 = vunpack.c.h.b16 %v8139
        %v8295 = vunpack.c.l.b16 %v8140
        %v8296 = vunpack.c.h.b16 %v8140
        %v8297 = vunpack.c.l.b16 %v8141
        %v8298 = vunpack.c.h.b16 %v8141
        %v8299 = vunpack.c.l.b16 %v8142
        %v8300 = vunpack.c.h.b16 %v8142
        %v8301 = vunpack.c.l.b16 %v8143
        %v8302 = vunpack.c.h.b16 %v8143
        %v8303 = vunpack.c.l.b16 %v8144
        %v8304 = vunpack.c.h.b16 %v8144
        %v8305 = vunpack.c.l.b16 %v8145
        %v8306 = vunpack.c.h.b16 %v8145
        %v8307 = vunpack.c.l.b16 %v8146
        %v8308 = vunpack.c.h.b16 %v8146
        %v8309 = vunpack.c.l.b16 %v8147
        %v8310 = vunpack.c.h.b16 %v8147
        %v8311 = vunpack.c.l.b16 %v8148
        %v8312 = vunpack.c.h.b16 %v8148
        %v8313 = vunpack.c.l.b16 %v8149
        %v8314 = vunpack.c.h.b16 %v8149
        %v8315 = vunpack.c.l.b16 %v8150
        %v8316 = vunpack.c.h.b16 %v8150
        %v8317 = vunpack.c.l.b16 %v8151
        %v8318 = vunpack.c.h.b16 %v8151
        %v8319 = vunpack.c.l.b16 %v8152
        %v8320 = vunpack.c.h.b16 %v8152
        %v8321 = vunpack.c.l.b16 %v8153
        %v8322 = vunpack.c.h.b16 %v8153
        %v8323 = vunpack.c.l.b16 %v8154
        %v8324 = vunpack.c.h.b16 %v8154
        %v8325 = vunpack.c.l.b16 %v8155
        %v8326 = vunpack.c.h.b16 %v8155
        %v8327 = vunpack.c.l.b16 %v8156
        %v8328 = vunpack.c.h.b16 %v8156
        %v8329 = vunpack.c.l.b16 %v8157
        %v8330 = vunpack.c.h.b16 %v8157
        %v8331 = vunpack.c.l.b16 %v8158
        %v8332 = vunpack.c.h.b16 %v8158
        %v8333 = vunpack.c.l.b16 %v8159
        %v8334 = vunpack.c.h.b16 %v8159
        %v8335 = vunpack.c.l.b16 %v8160
        %v8336 = vunpack.c.h.b16 %v8160
        %v8337 = vunpack.c.l.b16 %v8161
        %v8338 = vunpack.c.h.b16 %v8161
        %v8339 = vunpack.c.l.b16 %v8162
        %v8340 = vunpack.c.h.b16 %v8162
        %v8341 = vunpack.c.l.b16 %v8163
        %v8342 = vunpack.c.h.b16 %v8163
        %v8343 = vunpack.c.l.b16 %v8164
        %v8344 = vunpack.c.h.b16 %v8164
        %v8345 = vunpack.c.l.b16 %v8165
        %v8346 = vunpack.c.h.b16 %v8165
        %v8347 = vunpack.c.l.b16 %v8166
        %v8348 = vunpack.c.h.b16 %v8166
        %v8349 = vunpack.c.l.b16 %v8167
        %v8350 = vunpack.c.h.b16 %v8167
        %v8351 = vunpack.c.l.b16 %v8168
        %v8352 = vunpack.c.h.b16 %v8168
        %v8353 = vunpack.c.l.b16 %v8169
        %v8354 = vunpack.c.h.b16 %v8169
        %v8355 = vunpack.c.l.b16 %v8170
        %v8356 = vunpack.c.h.b16 %v8170
        %v8357 = vunpack.c.l.b16 %v8171
        %v8358 = vunpack.c.h.b16 %v8171
        %v8359 = vunpack.c.l.b16 %v8172
        %v8360 = vunpack.c.h.b16 %v8172
        %v8361 = vunpack.c.l.b16 %v8173
        %v8362 = vunpack.c.h.b16 %v8173
        %v8363 = vunpack.c.l.b16 %v8174
        %v8364 = vunpack.c.h.b16 %v8174
        %v8365 = vunpack.c.l.b16 %v8175
        %v8366 = vunpack.c.h.b16 %v8175
        %v8367 = vunpack.c.l.b16 %v8176
        %v8368 = vunpack.c.h.b16 %v8176
        %v8369 = vunpack.c.l.b16 %v8177
        %v8370 = vunpack.c.h.b16 %v8177
        %v8371 = vunpack.c.l.b16 %v8178
        %v8372 = vunpack.c.h.b16 %v8178
        %v8373 = vunpack.c.l.b16 %v8179
        %v8374 = vunpack.c.h.b16 %v8179
        %v8375 = vunpack.c.l.b16 %v8180
        %v8376 = vunpack.c.h.b16 %v8180
        %v8377 = vunpack.c.l.b16 %v8181
        %v8378 = vunpack.c.h.b16 %v8181
        %v8379 = vunpack.c.l.b16 %v8182
        %v8380 = vunpack.c.h.b16 %v8182
        %v8381 = vunpack.c.l.b16 %v8183
        %v8382 = vunpack.c.h.b16 %v8183
        %v8383 = vunpack.c.l.b16 %v8184
        %v8384 = vunpack.c.h.b16 %v8184
        %v8385 = vunpack.c.l.b16 %v8185
        %v8386 = vunpack.c.h.b16 %v8185
        %v8387 = vunpack.c.l.b16 %v8186
        %v8388 = vunpack.c.h.b16 %v8186
        %v8389 = vunpack.c.l.b16 %v8187
        %v8390 = vunpack.c.h.b16 %v8187
        %v8391 = vunpack.c.l.b16 %v8188
        %v8392 = vunpack.c.h.b16 %v8188
        %v8393 = vpack.c.b16 %v8267, %v8265
        %v8394 = vpack.c.b16 %v8268, %v8266
        %v8395 = vpack.c.b16 %v8271, %v8269
        %v8396 = vpack.c.b16 %v8272, %v8270
        %v8397 = vpack.c.b16 %v8275, %v8273
        %v8398 = vpack.c.b16 %v8276, %v8274
        %v8399 = vpack.c.b16 %v8279, %v8277
        %v8400 = vpack.c.b16 %v8280, %v8278
        %v8401 = vpack.c.b16 %v8283, %v8281
        %v8402 = vpack.c.b16 %v8284, %v8282
        %v8403 = vpack.c.b16 %v8287, %v8285
        %v8404 = vpack.c.b16 %v8288, %v8286
        %v8405 = vpack.c.b16 %v8291, %v8289
        %v8406 = vpack.c.b16 %v8292, %v8290
        %v8407 = vpack.c.b16 %v8295, %v8293
        %v8408 = vpack.c.b16 %v8296, %v8294
        %v8409 = vpack.c.b16 %v8299, %v8297
        %v8410 = vpack.c.b16 %v8300, %v8298
        %v8411 = vpack.c.b16 %v8303, %v8301
        %v8412 = vpack.c.b16 %v8304, %v8302
        %v8413 = vpack.c.b16 %v8307, %v8305
        %v8414 = vpack.c.b16 %v8308, %v8306
        %v8415 = vpack.c.b16 %v8311, %v8309
        %v8416 = vpack.c.b16 %v8312, %v8310
        %v8417 = vpack.c.b16 %v8315, %v8313
        %v8418 = vpack.c.b16 %v8316, %v8314
        %v8419 = vpack.c.b16 %v8319, %v8317
        %v8420 = vpack.c.b16 %v8320, %v8318
        %v8421 = vpack.c.b16 %v8323, %v8321
        %v8422 = vpack.c.b16 %v8324, %v8322
        %v8423 = vpack.c.b16 %v8327, %v8325
        %v8424 = vpack.c.b16 %v8328, %v8326
        %v8425 = vpack.c.b16 %v8331, %v8329
        %v8426 = vpack.c.b16 %v8332, %v8330
        %v8427 = vpack.c.b16 %v8335, %v8333
        %v8428 = vpack.c.b16 %v8336, %v8334
        %v8429 = vpack.c.b16 %v8339, %v8337
        %v8430 = vpack.c.b16 %v8340, %v8338
        %v8431 = vpack.c.b16 %v8343, %v8341
        %v8432 = vpack.c.b16 %v8344, %v8342
        %v8433 = vpack.c.b16 %v8347, %v8345
        %v8434 = vpack.c.b16 %v8348, %v8346
        %v8435 = vpack.c.b16 %v8351, %v8349
        %v8436 = vpack.c.b16 %v8352, %v8350
        %v8437 = vpack.c.b16 %v8355, %v8353
        %v8438 = vpack.c.b16 %v8356, %v8354
        %v8439 = vpack.c.b16 %v8359, %v8357
        %v8440 = vpack.c.b16 %v8360, %v8358
        %v8441 = vpack.c.b16 %v8363, %v8361
        %v8442 = vpack.c.b16 %v8364, %v8362
        %v8443 = vpack.c.b16 %v8367, %v8365
        %v8444 = vpack.c.b16 %v8368, %v8366
        %v8445 = vpack.c.b16 %v8371, %v8369
        %v8446 = vpack.c.b16 %v8372, %v8370
        %v8447 = vpack.c.b16 %v8375, %v8373
        %v8448 = vpack.c.b16 %v8376, %v8374
        %v8449 = vpack.c.b16 %v8379, %v8377
        %v8450 = vpack.c.b16 %v8380, %v8378
        %v8451 = vpack.c.b16 %v8383, %v8381
        %v8452 = vpack.c.b16 %v8384, %v8382
        %v8453 = vpack.c.b16 %v8387, %v8385
        %v8454 = vpack.c.b16 %v8388, %v8386
        %v8455 = vpack.c.b16 %v8391, %v8389
        %v8456 = vpack.c.b16 %v8392, %v8390
        %8521 = vmatprep.subr.bf16.mxu0 %v8394
        %8522 = vmatpush1.bf16.msra.mxu0 %v8393
        %8523 = vmatprep.subr.bf16.mxu0 %v8396
        %8524 = vmatpush1.bf16.msra.mxu0 %v8395
        %8525 = vmatprep.subr.bf16.mxu0 %v8398
        %8526 = vmatpush1.bf16.msra.mxu0 %v8397
        %8527 = vmatprep.subr.bf16.mxu0 %v8400
        %8528 = vmatpush1.bf16.msra.mxu0 %v8399
        %8529 = vmatprep.subr.bf16.mxu0 %v8402
        %8530 = vmatpush1.bf16.msra.mxu0 %v8401
        %8531 = vmatprep.subr.bf16.mxu0 %v8404
        %8532 = vmatpush1.bf16.msra.mxu0 %v8403
        %8533 = vmatprep.subr.bf16.mxu0 %v8406
        %8534 = vmatpush1.bf16.msra.mxu0 %v8405
        %8535 = vmatprep.subr.bf16.mxu0 %v8408
        %8536 = vmatpush1.bf16.msra.mxu0 %v8407
        %8537 = vmatprep.subr.bf16.mxu0 %v8410
        %8538 = vmatpush1.bf16.msra.mxu0 %v8409
        %8539 = vmatprep.subr.bf16.mxu0 %v8412
        %8540 = vmatpush1.bf16.msra.mxu0 %v8411
        %8541 = vmatprep.subr.bf16.mxu0 %v8414
        %8542 = vmatpush1.bf16.msra.mxu0 %v8413
        %8543 = vmatprep.subr.bf16.mxu0 %v8416
        %8544 = vmatpush1.bf16.msra.mxu0 %v8415
        %8545 = vmatprep.subr.bf16.mxu0 %v8418
        %8546 = vmatpush1.bf16.msra.mxu0 %v8417
        %8547 = vmatprep.subr.bf16.mxu0 %v8420
        %8548 = vmatpush1.bf16.msra.mxu0 %v8419
        %8549 = vmatprep.subr.bf16.mxu0 %v8422
        %8550 = vmatpush1.bf16.msra.mxu0 %v8421
        %8551 = vmatprep.subr.bf16.mxu0 %v8424
        %8552 = vmatpush1.bf16.msra.mxu0 %v8423
        %8553 = vmatprep.mubr.bf16.mxu0 %v7998
        %8554 = vmatmul.mubr.bf16.gmra.mrb[0].mxu0 %v7997
        %v8555 = vpop.f32.mrb[0].mxu0
        %v8556 = vadd.f32 %v8194, %v8555
        %v8557 = vpop.f32.mrb[0].mxu0
        %v8558 = vadd.f32 %v8198, %v8557
        %v8559 = vpop.f32.mrb[0].mxu0
        %v8560 = vadd.f32 %v8194, %v8559
        %v8561 = vpop.f32.mrb[0].mxu0
        %v8562 = vadd.f32 %v8198, %v8561
        %8563 = vmatprep.mubr.bf16.mxu0 %v8002
        %8564 = vmatmul.mubr.bf16.gmra.mrb[0].mxu0 %v8001
        %v8565 = vpop.f32.mrb[0].mxu0
        %v8566 = vadd.f32 %v8194, %v8565
        %v8567 = vpop.f32.mrb[0].mxu0
        %v8568 = vadd.f32 %v8198, %v8567
        %v8569 = vpop.f32.mrb[0].mxu0
        %v8570 = vadd.f32 %v8194, %v8569
        %v8571 = vpop.f32.mrb[0].mxu0
        %v8572 = vadd.f32 %v8198, %v8571
        %8573 = vmatprep.mubr.bf16.mxu0 %v8006
        %8574 = vmatmul.mubr.bf16.gmra.mrb[0].mxu0 %v8005
        %v8575 = vpop.f32.mrb[0].mxu0
        %v8576 = vadd.f32 %v8194, %v8575
        %v8577 = vpop.f32.mrb[0].mxu0
        %v8578 = vadd.f32 %v8198, %v8577
        %v8579 = vpop.f32.mrb[0].mxu0
        %v8580 = vadd.f32 %v8194, %v8579
        %v8581 = vpop.f32.mrb[0].mxu0
        %v8582 = vadd.f32 %v8198, %v8581
        %8583 = vmatprep.mubr.bf16.mxu0 %v8010
        %8584 = vmatmul.mubr.bf16.gmra.mrb[0].mxu0 %v8009
        %v8585 = vpop.f32.mrb[0].mxu0
        %v8586 = vadd.f32 %v8194, %v8585
        %v8587 = vpop.f32.mrb[0].mxu0
        %v8588 = vadd.f32 %v8198, %v8587
        %v8589 = vpop.f32.mrb[0].mxu0
        %v8590 = vadd.f32 %v8194, %v8589
        %v8591 = vpop.f32.mrb[0].mxu0
        %v8592 = vadd.f32 %v8198, %v8591
        %8593 = vmatprep.mubr.bf16.mxu0 %v8014
        %8594 = vmatmul.mubr.bf16.gmra.mrb[0].mxu0 %v8013
        %v8595 = vpop.f32.mrb[0].mxu0
        %v8596 = vadd.f32 %v8194, %v8595
        %v8597 = vpop.f32.mrb[0].mxu0
        %v8598 = vadd.f32 %v8198, %v8597
        %v8599 = vpop.f32.mrb[0].mxu0
        %v8600 = vadd.f32 %v8194, %v8599
        %v8601 = vpop.f32.mrb[0].mxu0
        %v8602 = vadd.f32 %v8198, %v8601
        %8603 = vmatprep.mubr.bf16.mxu0 %v8018
        %8604 = vmatmul.mubr.bf16.gmra.mrb[0].mxu0 %v8017
        %v8605 = vpop.f32.mrb[0].mxu0
        %v8606 = vadd.f32 %v8194, %v8605
        %v8607 = vpop.f32.mrb[0].mxu0
        %v8608 = vadd.f32 %v8198, %v8607
        %v8609 = vpop.f32.mrb[0].mxu0
        %v8610 = vadd.f32 %v8194, %v8609
        %v8611 = vpop.f32.mrb[0].mxu0
        %v8612 = vadd.f32 %v8198, %v8611
        %8613 = vmatprep.mubr.bf16.mxu0 %v8022
        %8614 = vmatmul.mubr.bf16.gmra.mrb[0].mxu0 %v8021
        %v8615 = vpop.f32.mrb[0].mxu0
        %v8616 = vadd.f32 %v8194, %v8615
        %v8617 = vpop.f32.mrb[0].mxu0
        %v8618 = vadd.f32 %v8198, %v8617
        %v8619 = vpop.f32.mrb[0].mxu0
        %v8620 = vadd.f32 %v8194, %v8619
        %v8621 = vpop.f32.mrb[0].mxu0
        %v8622 = vadd.f32 %v8198, %v8621
        %8623 = vmatprep.mubr.bf16.mxu0 %v8026
        %8624 = vmatmul.mubr.bf16.gmra.mrb[0].mxu0 %v8025
        %v8625 = vpop.f32.mrb[0].mxu0
        %v8626 = vadd.f32 %v8194, %v8625
        %v8627 = vpop.f32.mrb[0].mxu0
        %v8628 = vadd.f32 %v8198, %v8627
        %v8629 = vpop.f32.mrb[0].mxu0
        %v8630 = vadd.f32 %v8194, %v8629
        %v8631 = vpop.f32.mrb[0].mxu0
        %v8632 = vadd.f32 %v8198, %v8631
        %8633 = vmatprep.mubr.bf16.mxu0 %v8030
        %8634 = vmatmul.mubr.bf16.gmra.mrb[0].mxu0 %v8029
        %v8635 = vpop.f32.mrb[0].mxu0
        %v8636 = vadd.f32 %v8194, %v8635
        %v8637 = vpop.f32.mrb[0].mxu0
        %v8638 = vadd.f32 %v8198, %v8637
        %v8639 = vpop.f32.mrb[0].mxu0
        %v8640 = vadd.f32 %v8194, %v8639
        %v8641 = vpop.f32.mrb[0].mxu0
        %v8642 = vadd.f32 %v8198, %v8641
        %8643 = vmatprep.mubr.bf16.mxu0 %v8034
        %8644 = vmatmul.mubr.bf16.gmra.mrb[0].mxu0 %v8033
        %v8645 = vpop.f32.mrb[0].mxu0
        %v8646 = vadd.f32 %v8194, %v8645
        %v8647 = vpop.f32.mrb[0].mxu0
        %v8648 = vadd.f32 %v8198, %v8647
        %v8649 = vpop.f32.mrb[0].mxu0
        %v8650 = vadd.f32 %v8194, %v8649
        %v8651 = vpop.f32.mrb[0].mxu0
        %v8652 = vadd.f32 %v8198, %v8651
        %8653 = vmatprep.mubr.bf16.mxu0 %v8038
        %8654 = vmatmul.mubr.bf16.gmra.mrb[0].mxu0 %v8037
        %v8655 = vpop.f32.mrb[0].mxu0
        %v8656 = vadd.f32 %v8194, %v8655
        %v8657 = vpop.f32.mrb[0].mxu0
        %v8658 = vadd.f32 %v8198, %v8657
        %v8659 = vpop.f32.mrb[0].mxu0
        %v8660 = vadd.f32 %v8194, %v8659
        %v8661 = vpop.f32.mrb[0].mxu0
        %v8662 = vadd.f32 %v8198, %v8661
        %8663 = vmatprep.mubr.bf16.mxu0 %v8042
        %8664 = vmatmul.mubr.bf16.gmra.mrb[0].mxu0 %v8041
        %v8665 = vpop.f32.mrb[0].mxu0
        %v8666 = vadd.f32 %v8194, %v8665
        %v8667 = vpop.f32.mrb[0].mxu0
        %v8668 = vadd.f32 %v8198, %v8667
        %v8669 = vpop.f32.mrb[0].mxu0
        %v8670 = vadd.f32 %v8194, %v8669
        %v8671 = vpop.f32.mrb[0].mxu0
        %v8672 = vadd.f32 %v8198, %v8671
        %8673 = vmatprep.mubr.bf16.mxu0 %v8046
        %8674 = vmatmul.mubr.bf16.gmra.mrb[0].mxu0 %v8045
        %v8675 = vpop.f32.mrb[0].mxu0
        %v8676 = vadd.f32 %v8194, %v8675
        %v8677 = vpop.f32.mrb[0].mxu0
        %v8678 = vadd.f32 %v8198, %v8677
        %v8679 = vpop.f32.mrb[0].mxu0
        %v8680 = vadd.f32 %v8194, %v8679
        %v8681 = vpop.f32.mrb[0].mxu0
        %v8682 = vadd.f32 %v8198, %v8681
        %8683 = vmatprep.mubr.bf16.mxu0 %v8050
        %8684 = vmatmul.mubr.bf16.gmra.mrb[0].mxu0 %v8049
        %v8685 = vpop.f32.mrb[0].mxu0
        %v8686 = vadd.f32 %v8194, %v8685
        %v8687 = vpop.f32.mrb[0].mxu0
        %v8688 = vadd.f32 %v8198, %v8687
        %v8689 = vpop.f32.mrb[0].mxu0
        %v8690 = vadd.f32 %v8194, %v8689
        %v8691 = vpop.f32.mrb[0].mxu0
        %v8692 = vadd.f32 %v8198, %v8691
        %8693 = vmatprep.mubr.bf16.mxu0 %v8054
        %8694 = vmatmul.mubr.bf16.gmra.mrb[0].mxu0 %v8053
        %v8695 = vpop.f32.mrb[0].mxu0
        %v8696 = vadd.f32 %v8194, %v8695
        %v8697 = vpop.f32.mrb[0].mxu0
        %v8698 = vadd.f32 %v8198, %v8697
        %v8699 = vpop.f32.mrb[0].mxu0
        %v8700 = vadd.f32 %v8194, %v8699
        %v8701 = vpop.f32.mrb[0].mxu0
        %v8702 = vadd.f32 %v8198, %v8701
        %8703 = vmatprep.mubr.bf16.mxu0 %v8058
        %8704 = vmatmul.mubr.bf16.gmra.mrb[0].mxu0 %v8057
        %v8705 = vpop.f32.mrb[0].mxu0
        %v8706 = vadd.f32 %v8194, %v8705
        %v8707 = vpop.f32.mrb[0].mxu0
        %v8708 = vadd.f32 %v8198, %v8707
        %v8709 = vpop.f32.mrb[0].mxu0
        %v8710 = vadd.f32 %v8194, %v8709
        %v8711 = vpop.f32.mrb[0].mxu0
        %v8712 = vadd.f32 %v8198, %v8711
        %8713 = vmatprep.mubr.bf16.mxu0 %v8062
        %8714 = vmatmul.mubr.bf16.gmra.mrb[0].mxu0 %v8061
        %v8715 = vpop.f32.mrb[0].mxu0
        %v8716 = vadd.f32 %v8194, %v8715
        %v8717 = vpop.f32.mrb[0].mxu0
        %v8718 = vadd.f32 %v8198, %v8717
        %v8719 = vpop.f32.mrb[0].mxu0
        %v8720 = vadd.f32 %v8194, %v8719
        %v8721 = vpop.f32.mrb[0].mxu0
        %v8722 = vadd.f32 %v8198, %v8721
        %8723 = vmatprep.mubr.bf16.mxu0 %v8066
        %8724 = vmatmul.mubr.bf16.gmra.mrb[0].mxu0 %v8065
        %v8725 = vpop.f32.mrb[0].mxu0
        %v8726 = vadd.f32 %v8194, %v8725
        %v8727 = vpop.f32.mrb[0].mxu0
        %v8728 = vadd.f32 %v8198, %v8727
        %v8729 = vpop.f32.mrb[0].mxu0
        %v8730 = vadd.f32 %v8194, %v8729
        %v8731 = vpop.f32.mrb[0].mxu0
        %v8732 = vadd.f32 %v8198, %v8731
        %8733 = vmatprep.mubr.bf16.mxu0 %v8070
        %8734 = vmatmul.mubr.bf16.gmra.mrb[0].mxu0 %v8069
        %v8735 = vpop.f32.mrb[0].mxu0
        %v8736 = vadd.f32 %v8194, %v8735
        %v8737 = vpop.f32.mrb[0].mxu0
        %v8738 = vadd.f32 %v8198, %v8737
        %v8739 = vpop.f32.mrb[0].mxu0
        %v8740 = vadd.f32 %v8194, %v8739
        %v8741 = vpop.f32.mrb[0].mxu0
        %v8742 = vadd.f32 %v8198, %v8741
        %8743 = vmatprep.mubr.bf16.mxu0 %v8074
        %8744 = vmatmul.mubr.bf16.gmra.mrb[0].mxu0 %v8073
        %v8745 = vpop.f32.mrb[0].mxu0
        %v8746 = vadd.f32 %v8194, %v8745
        %v8747 = vpop.f32.mrb[0].mxu0
        %v8748 = vadd.f32 %v8198, %v8747
        %v8749 = vpop.f32.mrb[0].mxu0
        %v8750 = vadd.f32 %v8194, %v8749
        %v8751 = vpop.f32.mrb[0].mxu0
        %v8752 = vadd.f32 %v8198, %v8751
        %8753 = vmatprep.mubr.bf16.mxu0 %v8078
        %8754 = vmatmul.mubr.bf16.gmra.mrb[0].mxu0 %v8077
        %v8755 = vpop.f32.mrb[0].mxu0
        %v8756 = vadd.f32 %v8194, %v8755
        %v8757 = vpop.f32.mrb[0].mxu0
        %v8758 = vadd.f32 %v8198, %v8757
        %v8759 = vpop.f32.mrb[0].mxu0
        %v8760 = vadd.f32 %v8194, %v8759
        %v8761 = vpop.f32.mrb[0].mxu0
        %v8762 = vadd.f32 %v8198, %v8761
        %8763 = vmatprep.mubr.bf16.mxu0 %v8082
        %8764 = vmatmul.mubr.bf16.gmra.mrb[0].mxu0 %v8081
        %v8765 = vpop.f32.mrb[0].mxu0
        %v8766 = vadd.f32 %v8194, %v8765
        %v8767 = vpop.f32.mrb[0].mxu0
        %v8768 = vadd.f32 %v8198, %v8767
        %v8769 = vpop.f32.mrb[0].mxu0
        %v8770 = vadd.f32 %v8194, %v8769
        %v8771 = vpop.f32.mrb[0].mxu0
        %v8772 = vadd.f32 %v8198, %v8771
        %8773 = vmatprep.mubr.bf16.mxu0 %v8086
        %8774 = vmatmul.mubr.bf16.gmra.mrb[0].mxu0 %v8085
        %v8775 = vpop.f32.mrb[0].mxu0
        %v8776 = vadd.f32 %v8194, %v8775
        %v8777 = vpop.f32.mrb[0].mxu0
        %v8778 = vadd.f32 %v8198, %v8777
        %v8779 = vpop.f32.mrb[0].mxu0
        %v8780 = vadd.f32 %v8194, %v8779
        %v8781 = vpop.f32.mrb[0].mxu0
        %v8782 = vadd.f32 %v8198, %v8781
        %8783 = vmatprep.mubr.bf16.mxu0 %v8090
        %8784 = vmatmul.mubr.bf16.gmra.mrb[0].mxu0 %v8089
        %v8785 = vpop.f32.mrb[0].mxu0
        %v8786 = vadd.f32 %v8194, %v8785
        %v8787 = vpop.f32.mrb[0].mxu0
        %v8788 = vadd.f32 %v8198, %v8787
        %v8789 = vpop.f32.mrb[0].mxu0
        %v8790 = vadd.f32 %v8194, %v8789
        %v8791 = vpop.f32.mrb[0].mxu0
        %v8792 = vadd.f32 %v8198, %v8791
        %8793 = vmatprep.mubr.bf16.mxu0 %v8094
        %8794 = vmatmul.mubr.bf16.gmra.mrb[0].mxu0 %v8093
        %v8795 = vpop.f32.mrb[0].mxu0
        %v8796 = vadd.f32 %v8194, %v8795
        %v8797 = vpop.f32.mrb[0].mxu0
        %v8798 = vadd.f32 %v8198, %v8797
        %v8799 = vpop.f32.mrb[0].mxu0
        %v8800 = vadd.f32 %v8194, %v8799
        %v8801 = vpop.f32.mrb[0].mxu0
        %v8802 = vadd.f32 %v8198, %v8801
        %8803 = vmatprep.mubr.bf16.mxu0 %v8098
        %8804 = vmatmul.mubr.bf16.gmra.mrb[0].mxu0 %v8097
        %v8805 = vpop.f32.mrb[0].mxu0
        %v8806 = vadd.f32 %v8194, %v8805
        %v8807 = vpop.f32.mrb[0].mxu0
        %v8808 = vadd.f32 %v8198, %v8807
        %v8809 = vpop.f32.mrb[0].mxu0
        %v8810 = vadd.f32 %v8194, %v8809
        %v8811 = vpop.f32.mrb[0].mxu0
        %v8812 = vadd.f32 %v8198, %v8811
        %8813 = vmatprep.mubr.bf16.mxu0 %v8102
        %8814 = vmatmul.mubr.bf16.gmra.mrb[0].mxu0 %v8101
        %v8815 = vpop.f32.mrb[0].mxu0
        %v8816 = vadd.f32 %v8194, %v8815
        %v8817 = vpop.f32.mrb[0].mxu0
        %v8818 = vadd.f32 %v8198, %v8817
        %v8819 = vpop.f32.mrb[0].mxu0
        %v8820 = vadd.f32 %v8194, %v8819
        %v8821 = vpop.f32.mrb[0].mxu0
        %v8822 = vadd.f32 %v8198, %v8821
        %8823 = vmatprep.mubr.bf16.mxu0 %v8106
        %8824 = vmatmul.mubr.bf16.gmra.mrb[0].mxu0 %v8105
        %v8825 = vpop.f32.mrb[0].mxu0
        %v8826 = vadd.f32 %v8194, %v8825
        %v8827 = vpop.f32.mrb[0].mxu0
        %v8828 = vadd.f32 %v8198, %v8827
        %v8829 = vpop.f32.mrb[0].mxu0
        %v8830 = vadd.f32 %v8194, %v8829
        %v8831 = vpop.f32.mrb[0].mxu0
        %v8832 = vadd.f32 %v8198, %v8831
        %8833 = vmatprep.mubr.bf16.mxu0 %v8110
        %8834 = vmatmul.mubr.bf16.gmra.mrb[0].mxu0 %v8109
        %v8835 = vpop.f32.mrb[0].mxu0
        %v8836 = vadd.f32 %v8194, %v8835
        %v8837 = vpop.f32.mrb[0].mxu0
        %v8838 = vadd.f32 %v8198, %v8837
        %v8839 = vpop.f32.mrb[0].mxu0
        %v8840 = vadd.f32 %v8194, %v8839
        %v8841 = vpop.f32.mrb[0].mxu0
        %v8842 = vadd.f32 %v8198, %v8841
        %8843 = vmatprep.mubr.bf16.mxu0 %v8114
        %8844 = vmatmul.mubr.bf16.gmra.mrb[0].mxu0 %v8113
        %v8845 = vpop.f32.mrb[0].mxu0
        %v8846 = vadd.f32 %v8194, %v8845
        %v8847 = vpop.f32.mrb[0].mxu0
        %v8848 = vadd.f32 %v8198, %v8847
        %v8849 = vpop.f32.mrb[0].mxu0
        %v8850 = vadd.f32 %v8194, %v8849
        %v8851 = vpop.f32.mrb[0].mxu0
        %v8852 = vadd.f32 %v8198, %v8851
        %8853 = vmatprep.mubr.bf16.mxu0 %v8118
        %8854 = vmatmul.mubr.bf16.gmra.mrb[0].mxu0 %v8117
        %v8855 = vpop.f32.mrb[0].mxu0
        %v8856 = vadd.f32 %v8194, %v8855
        %v8857 = vpop.f32.mrb[0].mxu0
        %v8858 = vadd.f32 %v8198, %v8857
        %v8859 = vpop.f32.mrb[0].mxu0
        %v8860 = vadd.f32 %v8194, %v8859
        %v8861 = vpop.f32.mrb[0].mxu0
        %v8862 = vadd.f32 %v8198, %v8861
        %8863 = vmatprep.mubr.bf16.mxu0 %v8122
        %8864 = vmatmul.mubr.bf16.gmra.mrb[0].mxu0 %v8121
        %v8865 = vpop.f32.mrb[0].mxu0
        %v8866 = vadd.f32 %v8194, %v8865
        %v8867 = vpop.f32.mrb[0].mxu0
        %v8868 = vadd.f32 %v8198, %v8867
        %v8869 = vpop.f32.mrb[0].mxu0
        %v8870 = vadd.f32 %v8194, %v8869
        %v8871 = vpop.f32.mrb[0].mxu0
        %v8872 = vadd.f32 %v8198, %v8871
        %8873 = vdwg.mxu0
        %8874 = vmatprep.subr.bf16.mxu0 %v8426
        %8875 = vmatpush1.bf16.msra.mxu0 %v8425
        %8876 = vmatprep.subr.bf16.mxu0 %v8428
        %8877 = vmatpush1.bf16.msra.mxu0 %v8427
        %8878 = vmatprep.subr.bf16.mxu0 %v8430
        %8879 = vmatpush1.bf16.msra.mxu0 %v8429
        %8880 = vmatprep.subr.bf16.mxu0 %v8432
        %8881 = vmatpush1.bf16.msra.mxu0 %v8431
        %8882 = vmatprep.subr.bf16.mxu0 %v8434
        %8883 = vmatpush1.bf16.msra.mxu0 %v8433
        %8884 = vmatprep.subr.bf16.mxu0 %v8436
        %8885 = vmatpush1.bf16.msra.mxu0 %v8435
        %8886 = vmatprep.subr.bf16.mxu0 %v8438
        %8887 = vmatpush1.bf16.msra.mxu0 %v8437
        %8888 = vmatprep.subr.bf16.mxu0 %v8440
        %8889 = vmatpush1.bf16.msra.mxu0 %v8439
        %8890 = vmatprep.subr.bf16.mxu0 %v8442
        %8891 = vmatpush1.bf16.msra.mxu0 %v8441
        %8892 = vmatprep.subr.bf16.mxu0 %v8444
        %8893 = vmatpush1.bf16.msra.mxu0 %v8443
        %8894 = vmatprep.subr.bf16.mxu0 %v8446
        %8895 = vmatpush1.bf16.msra.mxu0 %v8445
        %8896 = vmatprep.subr.bf16.mxu0 %v8448
        %8897 = vmatpush1.bf16.msra.mxu0 %v8447
        %8898 = vmatprep.subr.bf16.mxu0 %v8450
        %8899 = vmatpush1.bf16.msra.mxu0 %v8449
        %8900 = vmatprep.subr.bf16.mxu0 %v8452
        %8901 = vmatpush1.bf16.msra.mxu0 %v8451
        %8902 = vmatprep.subr.bf16.mxu0 %v8454
        %8903 = vmatpush1.bf16.msra.mxu0 %v8453
        %8904 = vmatprep.subr.bf16.mxu0 %v8456
        %8905 = vmatpush1.bf16.msra.mxu0 %v8455
        %8906 = vmatprep.mubr.bf16.mxu0 %v8000
        %8907 = vmatmul.mubr.bf16.gmra.mrb[0].mxu0 %v7999
        %v8908 = vpop.f32.mrb[0].mxu0
        %v8909 = vadd.f32 %v8556, %v8908
        %v8910 = vpop.f32.mrb[0].mxu0
        %v8911 = vadd.f32 %v8558, %v8910
        %v8912 = vpop.f32.mrb[0].mxu0
        %v8913 = vadd.f32 %v8560, %v8912
        %v8914 = vpop.f32.mrb[0].mxu0
        %v8915 = vadd.f32 %v8562, %v8914
        %8916 = vmatprep.mubr.bf16.mxu0 %v8004
        %8917 = vmatmul.mubr.bf16.gmra.mrb[0].mxu0 %v8003
        %v8918 = vpop.f32.mrb[0].mxu0
        %v8919 = vadd.f32 %v8566, %v8918
        %v8920 = vpop.f32.mrb[0].mxu0
        %v8921 = vadd.f32 %v8568, %v8920
        %v8922 = vpop.f32.mrb[0].mxu0
        %v8923 = vadd.f32 %v8570, %v8922
        %v8924 = vpop.f32.mrb[0].mxu0
        %v8925 = vadd.f32 %v8572, %v8924
        %8926 = vmatprep.mubr.bf16.mxu0 %v8008
        %8927 = vmatmul.mubr.bf16.gmra.mrb[0].mxu0 %v8007
        %v8928 = vpop.f32.mrb[0].mxu0
        %v8929 = vadd.f32 %v8576, %v8928
        %v8930 = vpop.f32.mrb[0].mxu0
        %v8931 = vadd.f32 %v8578, %v8930
        %v8932 = vpop.f32.mrb[0].mxu0
        %v8933 = vadd.f32 %v8580, %v8932
        %v8934 = vpop.f32.mrb[0].mxu0
        %v8935 = vadd.f32 %v8582, %v8934
        %8936 = vmatprep.mubr.bf16.mxu0 %v8012
        %8937 = vmatmul.mubr.bf16.gmra.mrb[0].mxu0 %v8011
        %v8938 = vpop.f32.mrb[0].mxu0
        %v8939 = vadd.f32 %v8586, %v8938
        %v8940 = vpop.f32.mrb[0].mxu0
        %v8941 = vadd.f32 %v8588, %v8940
        %v8942 = vpop.f32.mrb[0].mxu0
        %v8943 = vadd.f32 %v8590, %v8942
        %v8944 = vpop.f32.mrb[0].mxu0
        %v8945 = vadd.f32 %v8592, %v8944
        %8946 = vmatprep.mubr.bf16.mxu0 %v8016
        %8947 = vmatmul.mubr.bf16.gmra.mrb[0].mxu0 %v8015
        %v8948 = vpop.f32.mrb[0].mxu0
        %v8949 = vadd.f32 %v8596, %v8948
        %v8950 = vpop.f32.mrb[0].mxu0
        %v8951 = vadd.f32 %v8598, %v8950
        %v8952 = vpop.f32.mrb[0].mxu0
        %v8953 = vadd.f32 %v8600, %v8952
        %v8954 = vpop.f32.mrb[0].mxu0
        %v8955 = vadd.f32 %v8602, %v8954
        %8956 = vmatprep.mubr.bf16.mxu0 %v8020
        %8957 = vmatmul.mubr.bf16.gmra.mrb[0].mxu0 %v8019
        %v8958 = vpop.f32.mrb[0].mxu0
        %v8959 = vadd.f32 %v8606, %v8958
        %v8960 = vpop.f32.mrb[0].mxu0
        %v8961 = vadd.f32 %v8608, %v8960
        %v8962 = vpop.f32.mrb[0].mxu0
        %v8963 = vadd.f32 %v8610, %v8962
        %v8964 = vpop.f32.mrb[0].mxu0
        %v8965 = vadd.f32 %v8612, %v8964
        %8966 = vmatprep.mubr.bf16.mxu0 %v8024
        %8967 = vmatmul.mubr.bf16.gmra.mrb[0].mxu0 %v8023
        %v8968 = vpop.f32.mrb[0].mxu0
        %v8969 = vadd.f32 %v8616, %v8968
        %v8970 = vpop.f32.mrb[0].mxu0
        %v8971 = vadd.f32 %v8618, %v8970
        %v8972 = vpop.f32.mrb[0].mxu0
        %v8973 = vadd.f32 %v8620, %v8972
        %v8974 = vpop.f32.mrb[0].mxu0
        %v8975 = vadd.f32 %v8622, %v8974
        %8976 = vmatprep.mubr.bf16.mxu0 %v8028
        %8977 = vmatmul.mubr.bf16.gmra.mrb[0].mxu0 %v8027
        %v8978 = vpop.f32.mrb[0].mxu0
        %v8979 = vadd.f32 %v8626, %v8978
        %v8980 = vpop.f32.mrb[0].mxu0
        %v8981 = vadd.f32 %v8628, %v8980
        %v8982 = vpop.f32.mrb[0].mxu0
        %v8983 = vadd.f32 %v8630, %v8982
        %v8984 = vpop.f32.mrb[0].mxu0
        %v8985 = vadd.f32 %v8632, %v8984
        %8986 = vmatprep.mubr.bf16.mxu0 %v8032
        %8987 = vmatmul.mubr.bf16.gmra.mrb[0].mxu0 %v8031
        %v8988 = vpop.f32.mrb[0].mxu0
        %v8989 = vadd.f32 %v8636, %v8988
        %v8990 = vpop.f32.mrb[0].mxu0
        %v8991 = vadd.f32 %v8638, %v8990
        %v8992 = vpop.f32.mrb[0].mxu0
        %v8993 = vadd.f32 %v8640, %v8992
        %v8994 = vpop.f32.mrb[0].mxu0
        %v8995 = vadd.f32 %v8642, %v8994
        %8996 = vmatprep.mubr.bf16.mxu0 %v8036
        %8997 = vmatmul.mubr.bf16.gmra.mrb[0].mxu0 %v8035
        %v8998 = vpop.f32.mrb[0].mxu0
        %v8999 = vadd.f32 %v8646, %v8998
        %v9000 = vpop.f32.mrb[0].mxu0
        %v9001 = vadd.f32 %v8648, %v9000
        %v9002 = vpop.f32.mrb[0].mxu0
        %v9003 = vadd.f32 %v8650, %v9002
        %v9004 = vpop.f32.mrb[0].mxu0
        %v9005 = vadd.f32 %v8652, %v9004
        %9006 = vmatprep.mubr.bf16.mxu0 %v8040
        %9007 = vmatmul.mubr.bf16.gmra.mrb[0].mxu0 %v8039
        %v9008 = vpop.f32.mrb[0].mxu0
        %v9009 = vadd.f32 %v8656, %v9008
        %v9010 = vpop.f32.mrb[0].mxu0
        %v9011 = vadd.f32 %v8658, %v9010
        %v9012 = vpop.f32.mrb[0].mxu0
        %v9013 = vadd.f32 %v8660, %v9012
        %v9014 = vpop.f32.mrb[0].mxu0
        %v9015 = vadd.f32 %v8662, %v9014
        %9016 = vmatprep.mubr.bf16.mxu0 %v8044
        %9017 = vmatmul.mubr.bf16.gmra.mrb[0].mxu0 %v8043
        %v9018 = vpop.f32.mrb[0].mxu0
        %v9019 = vadd.f32 %v8666, %v9018
        %v9020 = vpop.f32.mrb[0].mxu0
        %v9021 = vadd.f32 %v8668, %v9020
        %v9022 = vpop.f32.mrb[0].mxu0
        %v9023 = vadd.f32 %v8670, %v9022
        %v9024 = vpop.f32.mrb[0].mxu0
        %v9025 = vadd.f32 %v8672, %v9024
        %9026 = vmatprep.mubr.bf16.mxu0 %v8048
        %9027 = vmatmul.mubr.bf16.gmra.mrb[0].mxu0 %v8047
        %v9028 = vpop.f32.mrb[0].mxu0
        %v9029 = vadd.f32 %v8676, %v9028
        %v9030 = vpop.f32.mrb[0].mxu0
        %v9031 = vadd.f32 %v8678, %v9030
        %v9032 = vpop.f32.mrb[0].mxu0
        %v9033 = vadd.f32 %v8680, %v9032
        %v9034 = vpop.f32.mrb[0].mxu0
        %v9035 = vadd.f32 %v8682, %v9034
        %9036 = vmatprep.mubr.bf16.mxu0 %v8052
        %9037 = vmatmul.mubr.bf16.gmra.mrb[0].mxu0 %v8051
        %v9038 = vpop.f32.mrb[0].mxu0
        %v9039 = vadd.f32 %v8686, %v9038
        %v9040 = vpop.f32.mrb[0].mxu0
        %v9041 = vadd.f32 %v8688, %v9040
        %v9042 = vpop.f32.mrb[0].mxu0
        %v9043 = vadd.f32 %v8690, %v9042
        %v9044 = vpop.f32.mrb[0].mxu0
        %v9045 = vadd.f32 %v8692, %v9044
        %9046 = vmatprep.mubr.bf16.mxu0 %v8056
        %9047 = vmatmul.mubr.bf16.gmra.mrb[0].mxu0 %v8055
        %v9048 = vpop.f32.mrb[0].mxu0
        %v9049 = vadd.f32 %v8696, %v9048
        %v9050 = vpop.f32.mrb[0].mxu0
        %v9051 = vadd.f32 %v8698, %v9050
        %v9052 = vpop.f32.mrb[0].mxu0
        %v9053 = vadd.f32 %v8700, %v9052
        %v9054 = vpop.f32.mrb[0].mxu0
        %v9055 = vadd.f32 %v8702, %v9054
        %9056 = vmatprep.mubr.bf16.mxu0 %v8060
        %9057 = vmatmul.mubr.bf16.gmra.mrb[0].mxu0 %v8059
        %v9058 = vpop.f32.mrb[0].mxu0
        %v9059 = vadd.f32 %v8706, %v9058
        %v9060 = vpop.f32.mrb[0].mxu0
        %v9061 = vadd.f32 %v8708, %v9060
        %v9062 = vpop.f32.mrb[0].mxu0
        %v9063 = vadd.f32 %v8710, %v9062
        %v9064 = vpop.f32.mrb[0].mxu0
        %v9065 = vadd.f32 %v8712, %v9064
        %9066 = vmatprep.mubr.bf16.mxu0 %v8064
        %9067 = vmatmul.mubr.bf16.gmra.mrb[0].mxu0 %v8063
        %v9068 = vpop.f32.mrb[0].mxu0
        %v9069 = vadd.f32 %v8716, %v9068
        %v9070 = vpop.f32.mrb[0].mxu0
        %v9071 = vadd.f32 %v8718, %v9070
        %v9072 = vpop.f32.mrb[0].mxu0
        %v9073 = vadd.f32 %v8720, %v9072
        %v9074 = vpop.f32.mrb[0].mxu0
        %v9075 = vadd.f32 %v8722, %v9074
        %9076 = vmatprep.mubr.bf16.mxu0 %v8068
        %9077 = vmatmul.mubr.bf16.gmra.mrb[0].mxu0 %v8067
        %v9078 = vpop.f32.mrb[0].mxu0
        %v9079 = vadd.f32 %v8726, %v9078
        %v9080 = vpop.f32.mrb[0].mxu0
        %v9081 = vadd.f32 %v8728, %v9080
        %v9082 = vpop.f32.mrb[0].mxu0
        %v9083 = vadd.f32 %v8730, %v9082
        %v9084 = vpop.f32.mrb[0].mxu0
        %v9085 = vadd.f32 %v8732, %v9084
        %9086 = vmatprep.mubr.bf16.mxu0 %v8072
        %9087 = vmatmul.mubr.bf16.gmra.mrb[0].mxu0 %v8071
        %v9088 = vpop.f32.mrb[0].mxu0
        %v9089 = vadd.f32 %v8736, %v9088
        %v9090 = vpop.f32.mrb[0].mxu0
        %v9091 = vadd.f32 %v8738, %v9090
        %v9092 = vpop.f32.mrb[0].mxu0
        %v9093 = vadd.f32 %v8740, %v9092
        %v9094 = vpop.f32.mrb[0].mxu0
        %v9095 = vadd.f32 %v8742, %v9094
        %9096 = vmatprep.mubr.bf16.mxu0 %v8076
        %9097 = vmatmul.mubr.bf16.gmra.mrb[0].mxu0 %v8075
        %v9098 = vpop.f32.mrb[0].mxu0
        %v9099 = vadd.f32 %v8746, %v9098
        %v9100 = vpop.f32.mrb[0].mxu0
        %v9101 = vadd.f32 %v8748, %v9100
        %v9102 = vpop.f32.mrb[0].mxu0
        %v9103 = vadd.f32 %v8750, %v9102
        %v9104 = vpop.f32.mrb[0].mxu0
        %v9105 = vadd.f32 %v8752, %v9104
        %9106 = vmatprep.mubr.bf16.mxu0 %v8080
        %9107 = vmatmul.mubr.bf16.gmra.mrb[0].mxu0 %v8079
        %v9108 = vpop.f32.mrb[0].mxu0
        %v9109 = vadd.f32 %v8756, %v9108
        %v9110 = vpop.f32.mrb[0].mxu0
        %v9111 = vadd.f32 %v8758, %v9110
        %v9112 = vpop.f32.mrb[0].mxu0
        %v9113 = vadd.f32 %v8760, %v9112
        %v9114 = vpop.f32.mrb[0].mxu0
        %v9115 = vadd.f32 %v8762, %v9114
        %9116 = vmatprep.mubr.bf16.mxu0 %v8084
        %9117 = vmatmul.mubr.bf16.gmra.mrb[0].mxu0 %v8083
        %v9118 = vpop.f32.mrb[0].mxu0
        %v9119 = vadd.f32 %v8766, %v9118
        %v9120 = vpop.f32.mrb[0].mxu0
        %v9121 = vadd.f32 %v8768, %v9120
        %v9122 = vpop.f32.mrb[0].mxu0
        %v9123 = vadd.f32 %v8770, %v9122
        %v9124 = vpop.f32.mrb[0].mxu0
        %v9125 = vadd.f32 %v8772, %v9124
        %9126 = vmatprep.mubr.bf16.mxu0 %v8088
        %9127 = vmatmul.mubr.bf16.gmra.mrb[0].mxu0 %v8087
        %v9128 = vpop.f32.mrb[0].mxu0
        %v9129 = vadd.f32 %v8776, %v9128
        %v9130 = vpop.f32.mrb[0].mxu0
        %v9131 = vadd.f32 %v8778, %v9130
        %v9132 = vpop.f32.mrb[0].mxu0
        %v9133 = vadd.f32 %v8780, %v9132
        %v9134 = vpop.f32.mrb[0].mxu0
        %v9135 = vadd.f32 %v8782, %v9134
        %9136 = vmatprep.mubr.bf16.mxu0 %v8092
        %9137 = vmatmul.mubr.bf16.gmra.mrb[0].mxu0 %v8091
        %v9138 = vpop.f32.mrb[0].mxu0
        %v9139 = vadd.f32 %v8786, %v9138
        %v9140 = vpop.f32.mrb[0].mxu0
        %v9141 = vadd.f32 %v8788, %v9140
        %v9142 = vpop.f32.mrb[0].mxu0
        %v9143 = vadd.f32 %v8790, %v9142
        %v9144 = vpop.f32.mrb[0].mxu0
        %v9145 = vadd.f32 %v8792, %v9144
        %9146 = vmatprep.mubr.bf16.mxu0 %v8096
        %9147 = vmatmul.mubr.bf16.gmra.mrb[0].mxu0 %v8095
        %v9148 = vpop.f32.mrb[0].mxu0
        %v9149 = vadd.f32 %v8796, %v9148
        %v9150 = vpop.f32.mrb[0].mxu0
        %v9151 = vadd.f32 %v8798, %v9150
        %v9152 = vpop.f32.mrb[0].mxu0
        %v9153 = vadd.f32 %v8800, %v9152
        %v9154 = vpop.f32.mrb[0].mxu0
        %v9155 = vadd.f32 %v8802, %v9154
        %9156 = vmatprep.mubr.bf16.mxu0 %v8100
        %9157 = vmatmul.mubr.bf16.gmra.mrb[0].mxu0 %v8099
        %v9158 = vpop.f32.mrb[0].mxu0
        %v9159 = vadd.f32 %v8806, %v9158
        %v9160 = vpop.f32.mrb[0].mxu0
        %v9161 = vadd.f32 %v8808, %v9160
        %v9162 = vpop.f32.mrb[0].mxu0
        %v9163 = vadd.f32 %v8810, %v9162
        %v9164 = vpop.f32.mrb[0].mxu0
        %v9165 = vadd.f32 %v8812, %v9164
        %9166 = vmatprep.mubr.bf16.mxu0 %v8104
        %9167 = vmatmul.mubr.bf16.gmra.mrb[0].mxu0 %v8103
        %v9168 = vpop.f32.mrb[0].mxu0
        %v9169 = vadd.f32 %v8816, %v9168
        %v9170 = vpop.f32.mrb[0].mxu0
        %v9171 = vadd.f32 %v8818, %v9170
        %v9172 = vpop.f32.mrb[0].mxu0
        %v9173 = vadd.f32 %v8820, %v9172
        %v9174 = vpop.f32.mrb[0].mxu0
        %v9175 = vadd.f32 %v8822, %v9174
        %9176 = vmatprep.mubr.bf16.mxu0 %v8108
        %9177 = vmatmul.mubr.bf16.gmra.mrb[0].mxu0 %v8107
        %v9178 = vpop.f32.mrb[0].mxu0
        %v9179 = vadd.f32 %v8826, %v9178
        %v9180 = vpop.f32.mrb[0].mxu0
        %v9181 = vadd.f32 %v8828, %v9180
        %v9182 = vpop.f32.mrb[0].mxu0
        %v9183 = vadd.f32 %v8830, %v9182
        %v9184 = vpop.f32.mrb[0].mxu0
        %v9185 = vadd.f32 %v8832, %v9184
        %9186 = vmatprep.mubr.bf16.mxu0 %v8112
        %9187 = vmatmul.mubr.bf16.gmra.mrb[0].mxu0 %v8111
        %v9188 = vpop.f32.mrb[0].mxu0
        %v9189 = vadd.f32 %v8836, %v9188
        %v9190 = vpop.f32.mrb[0].mxu0
        %v9191 = vadd.f32 %v8838, %v9190
        %v9192 = vpop.f32.mrb[0].mxu0
        %v9193 = vadd.f32 %v8840, %v9192
        %v9194 = vpop.f32.mrb[0].mxu0
        %v9195 = vadd.f32 %v8842, %v9194
        %9196 = vmatprep.mubr.bf16.mxu0 %v8116
        %9197 = vmatmul.mubr.bf16.gmra.mrb[0].mxu0 %v8115
        %v9198 = vpop.f32.mrb[0].mxu0
        %v9199 = vadd.f32 %v8846, %v9198
        %v9200 = vpop.f32.mrb[0].mxu0
        %v9201 = vadd.f32 %v8848, %v9200
        %v9202 = vpop.f32.mrb[0].mxu0
        %v9203 = vadd.f32 %v8850, %v9202
        %v9204 = vpop.f32.mrb[0].mxu0
        %v9205 = vadd.f32 %v8852, %v9204
        %9206 = vmatprep.mubr.bf16.mxu0 %v8120
        %9207 = vmatmul.mubr.bf16.gmra.mrb[0].mxu0 %v8119
        %v9208 = vpop.f32.mrb[0].mxu0
        %v9209 = vadd.f32 %v8856, %v9208
        %v9210 = vpop.f32.mrb[0].mxu0
        %v9211 = vadd.f32 %v8858, %v9210
        %v9212 = vpop.f32.mrb[0].mxu0
        %v9213 = vadd.f32 %v8860, %v9212
        %v9214 = vpop.f32.mrb[0].mxu0
        %v9215 = vadd.f32 %v8862, %v9214
        %9216 = vmatprep.mubr.bf16.mxu0 %v8124
        %9217 = vmatmul.mubr.bf16.gmra.mrb[0].mxu0 %v8123
        %v9218 = vpop.f32.mrb[0].mxu0
        %v9219 = vadd.f32 %v8866, %v9218
        %v9220 = vpop.f32.mrb[0].mxu0
        %v9221 = vadd.f32 %v8868, %v9220
        %v9222 = vpop.f32.mrb[0].mxu0
        %v9223 = vadd.f32 %v8870, %v9222
        %v9224 = vpop.f32.mrb[0].mxu0
        %v9225 = vadd.f32 %v8872, %v9224
        %9226 = vdwg.mxu0
        %v9227 = vxor.u32 %v8909, 2147483648
        %v9228 = vxor.u32 %v8911, 2147483648
        %v9229 = vxor.u32 %v8913, 2147483648
        %v9230 = vxor.u32 %v8915, 2147483648
        %v9231 = vxor.u32 %v8919, 2147483648
        %v9232 = vxor.u32 %v8921, 2147483648
        %v9233 = vxor.u32 %v8923, 2147483648
        %v9234 = vxor.u32 %v8925, 2147483648
        %v9235 = vxor.u32 %v8929, 2147483648
        %v9236 = vxor.u32 %v8931, 2147483648
        %v9237 = vxor.u32 %v8933, 2147483648
        %v9238 = vxor.u32 %v8935, 2147483648
        %v9239 = vxor.u32 %v8939, 2147483648
        %v9240 = vxor.u32 %v8941, 2147483648
        %v9241 = vxor.u32 %v8943, 2147483648
        %v9242 = vxor.u32 %v8945, 2147483648
        %v9243 = vxor.u32 %v8949, 2147483648
        %v9244 = vxor.u32 %v8951, 2147483648
        %v9245 = vxor.u32 %v8953, 2147483648
        %v9246 = vxor.u32 %v8955, 2147483648
        %v9247 = vxor.u32 %v8959, 2147483648
        %v9248 = vxor.u32 %v8961, 2147483648
        %v9249 = vxor.u32 %v8963, 2147483648
        %v9250 = vxor.u32 %v8965, 2147483648
        %v9251 = vxor.u32 %v8969, 2147483648
        %v9252 = vxor.u32 %v8971, 2147483648
        %v9253 = vxor.u32 %v8973, 2147483648
        %v9254 = vxor.u32 %v8975, 2147483648
        %v9255 = vxor.u32 %v8979, 2147483648
        %v9256 = vxor.u32 %v8981, 2147483648
        %v9257 = vxor.u32 %v8983, 2147483648
        %v9258 = vxor.u32 %v8985, 2147483648
        %v9259 = vxor.u32 %v8989, 2147483648
        %v9260 = vxor.u32 %v8991, 2147483648
        %v9261 = vxor.u32 %v8993, 2147483648
        %v9262 = vxor.u32 %v8995, 2147483648
        %v9263 = vxor.u32 %v8999, 2147483648
        %v9264 = vxor.u32 %v9001, 2147483648
        %v9265 = vxor.u32 %v9003, 2147483648
        %v9266 = vxor.u32 %v9005, 2147483648
        %v9267 = vxor.u32 %v9009, 2147483648
        %v9268 = vxor.u32 %v9011, 2147483648
        %v9269 = vxor.u32 %v9013, 2147483648
        %v9270 = vxor.u32 %v9015, 2147483648
        %v9271 = vxor.u32 %v9019, 2147483648
        %v9272 = vxor.u32 %v9021, 2147483648
        %v9273 = vxor.u32 %v9023, 2147483648
        %v9274 = vxor.u32 %v9025, 2147483648
        %v9275 = vxor.u32 %v9029, 2147483648
        %v9276 = vxor.u32 %v9031, 2147483648
        %v9277 = vxor.u32 %v9033, 2147483648
        %v9278 = vxor.u32 %v9035, 2147483648
        %v9279 = vxor.u32 %v9039, 2147483648
        %v9280 = vxor.u32 %v9041, 2147483648
        %v9281 = vxor.u32 %v9043, 2147483648
        %v9282 = vxor.u32 %v9045, 2147483648
        %v9283 = vxor.u32 %v9049, 2147483648
        %v9284 = vxor.u32 %v9051, 2147483648
        %v9285 = vxor.u32 %v9053, 2147483648
        %v9286 = vxor.u32 %v9055, 2147483648
        %v9287 = vxor.u32 %v9059, 2147483648
        %v9288 = vxor.u32 %v9061, 2147483648
        %v9289 = vxor.u32 %v9063, 2147483648
        %v9290 = vxor.u32 %v9065, 2147483648
        %v9291 = vxor.u32 %v9069, 2147483648
        %v9292 = vxor.u32 %v9071, 2147483648
        %v9293 = vxor.u32 %v9073, 2147483648
        %v9294 = vxor.u32 %v9075, 2147483648
        %v9295 = vxor.u32 %v9079, 2147483648
        %v9296 = vxor.u32 %v9081, 2147483648
        %v9297 = vxor.u32 %v9083, 2147483648
        %v9298 = vxor.u32 %v9085, 2147483648
        %v9299 = vxor.u32 %v9089, 2147483648
        %v9300 = vxor.u32 %v9091, 2147483648
        %v9301 = vxor.u32 %v9093, 2147483648
        %v9302 = vxor.u32 %v9095, 2147483648
        %v9303 = vxor.u32 %v9099, 2147483648
        %v9304 = vxor.u32 %v9101, 2147483648
        %v9305 = vxor.u32 %v9103, 2147483648
        %v9306 = vxor.u32 %v9105, 2147483648
        %v9307 = vxor.u32 %v9109, 2147483648
        %v9308 = vxor.u32 %v9111, 2147483648
        %v9309 = vxor.u32 %v9113, 2147483648
        %v9310 = vxor.u32 %v9115, 2147483648
        %v9311 = vxor.u32 %v9119, 2147483648
        %v9312 = vxor.u32 %v9121, 2147483648
        %v9313 = vxor.u32 %v9123, 2147483648
        %v9314 = vxor.u32 %v9125, 2147483648
        %v9315 = vxor.u32 %v9129, 2147483648
        %v9316 = vxor.u32 %v9131, 2147483648
        %v9317 = vxor.u32 %v9133, 2147483648
        %v9318 = vxor.u32 %v9135, 2147483648
        %v9319 = vxor.u32 %v9139, 2147483648
        %v9320 = vxor.u32 %v9141, 2147483648
        %v9321 = vxor.u32 %v9143, 2147483648
        %v9322 = vxor.u32 %v9145, 2147483648
        %v9323 = vxor.u32 %v9149, 2147483648
        %v9324 = vxor.u32 %v9151, 2147483648
        %v9325 = vxor.u32 %v9153, 2147483648
        %v9326 = vxor.u32 %v9155, 2147483648
        %v9327 = vxor.u32 %v9159, 2147483648
        %v9328 = vxor.u32 %v9161, 2147483648
        %v9329 = vxor.u32 %v9163, 2147483648
        %v9330 = vxor.u32 %v9165, 2147483648
        %v9331 = vxor.u32 %v9169, 2147483648
        %v9332 = vxor.u32 %v9171, 2147483648
        %v9333 = vxor.u32 %v9173, 2147483648
        %v9334 = vxor.u32 %v9175, 2147483648
        %v9335 = vxor.u32 %v9179, 2147483648
        %v9336 = vxor.u32 %v9181, 2147483648
        %v9337 = vxor.u32 %v9183, 2147483648
        %v9338 = vxor.u32 %v9185, 2147483648
        %v9339 = vxor.u32 %v9189, 2147483648
        %v9340 = vxor.u32 %v9191, 2147483648
        %v9341 = vxor.u32 %v9193, 2147483648
        %v9342 = vxor.u32 %v9195, 2147483648
        %v9343 = vxor.u32 %v9199, 2147483648
        %v9344 = vxor.u32 %v9201, 2147483648
        %v9345 = vxor.u32 %v9203, 2147483648
        %v9346 = vxor.u32 %v9205, 2147483648
        %v9347 = vxor.u32 %v9209, 2147483648
        %v9348 = vxor.u32 %v9211, 2147483648
        %v9349 = vxor.u32 %v9213, 2147483648
        %v9350 = vxor.u32 %v9215, 2147483648
        %v9351 = vxor.u32 %v9219, 2147483648
        %v9352 = vxor.u32 %v9221, 2147483648
        %v9353 = vxor.u32 %v9223, 2147483648
        %v9354 = vxor.u32 %v9225, 2147483648
        %v9355 = vmul.f32 %v9227, 1.442695
        %v9356 = vpow.pop %v9355
        %v9357 = vmul.f32 %v9228, 1.442695
        %v9358 = vpow.pop %v9357
        %v9359 = vmul.f32 %v9229, 1.442695
        %v9360 = vpow.pop %v9359
        %v9361 = vmul.f32 %v9230, 1.442695
        %v9362 = vpow.pop %v9361
        %v9363 = vmul.f32 %v9231, 1.442695
        %v9364 = vpow.pop %v9363
        %v9365 = vmul.f32 %v9232, 1.442695
        %v9366 = vpow.pop %v9365
        %v9367 = vmul.f32 %v9233, 1.442695
        %v9368 = vpow.pop %v9367
        %v9369 = vmul.f32 %v9234, 1.442695
        %v9370 = vpow.pop %v9369
        %v9371 = vmul.f32 %v9235, 1.442695
        %v9372 = vpow.pop %v9371
        %v9373 = vmul.f32 %v9236, 1.442695
        %v9374 = vpow.pop %v9373
        %v9375 = vmul.f32 %v9237, 1.442695
        %v9376 = vpow.pop %v9375
        %v9377 = vmul.f32 %v9238, 1.442695
        %v9378 = vpow.pop %v9377
        %v9379 = vmul.f32 %v9239, 1.442695
        %v9380 = vpow.pop %v9379
        %v9381 = vmul.f32 %v9240, 1.442695
        %v9382 = vpow.pop %v9381
        %v9383 = vmul.f32 %v9241, 1.442695
        %v9384 = vpow.pop %v9383
        %v9385 = vmul.f32 %v9242, 1.442695
        %v9386 = vpow.pop %v9385
        %v9387 = vmul.f32 %v9243, 1.442695
        %v9388 = vpow.pop %v9387
        %v9389 = vmul.f32 %v9244, 1.442695
        %v9390 = vpow.pop %v9389
        %v9391 = vmul.f32 %v9245, 1.442695
        %v9392 = vpow.pop %v9391
        %v9393 = vmul.f32 %v9246, 1.442695
        %v9394 = vpow.pop %v9393
        %v9395 = vmul.f32 %v9247, 1.442695
        %v9396 = vpow.pop %v9395
        %v9397 = vmul.f32 %v9248, 1.442695
        %v9398 = vpow.pop %v9397
        %v9399 = vmul.f32 %v9249, 1.442695
        %v9400 = vpow.pop %v9399
        %v9401 = vmul.f32 %v9250, 1.442695
        %v9402 = vpow.pop %v9401
        %v9403 = vmul.f32 %v9251, 1.442695
        %v9404 = vpow.pop %v9403
        %v9405 = vmul.f32 %v9252, 1.442695
        %v9406 = vpow.pop %v9405
        %v9407 = vmul.f32 %v9253, 1.442695
        %v9408 = vpow.pop %v9407
        %v9409 = vmul.f32 %v9254, 1.442695
        %v9410 = vpow.pop %v9409
        %v9411 = vmul.f32 %v9255, 1.442695
        %v9412 = vpow.pop %v9411
        %v9413 = vmul.f32 %v9256, 1.442695
        %v9414 = vpow.pop %v9413
        %v9415 = vmul.f32 %v9257, 1.442695
        %v9416 = vpow.pop %v9415
        %v9417 = vmul.f32 %v9258, 1.442695
        %v9418 = vpow.pop %v9417
        %v9419 = vmul.f32 %v9259, 1.442695
        %v9420 = vpow.pop %v9419
        %v9421 = vmul.f32 %v9260, 1.442695
        %v9422 = vpow.pop %v9421
        %v9423 = vmul.f32 %v9261, 1.442695
        %v9424 = vpow.pop %v9423
        %v9425 = vmul.f32 %v9262, 1.442695
        %v9426 = vpow.pop %v9425
        %v9427 = vmul.f32 %v9263, 1.442695
        %v9428 = vpow.pop %v9427
        %v9429 = vmul.f32 %v9264, 1.442695
        %v9430 = vpow.pop %v9429
        %v9431 = vmul.f32 %v9265, 1.442695
        %v9432 = vpow.pop %v9431
        %v9433 = vmul.f32 %v9266, 1.442695
        %v9434 = vpow.pop %v9433
        %v9435 = vmul.f32 %v9267, 1.442695
        %v9436 = vpow.pop %v9435
        %v9437 = vmul.f32 %v9268, 1.442695
        %v9438 = vpow.pop %v9437
        %v9439 = vmul.f32 %v9269, 1.442695
        %v9440 = vpow.pop %v9439
        %v9441 = vmul.f32 %v9270, 1.442695
        %v9442 = vpow.pop %v9441
        %v9443 = vmul.f32 %v9271, 1.442695
        %v9444 = vpow.pop %v9443
        %v9445 = vmul.f32 %v9272, 1.442695
        %v9446 = vpow.pop %v9445
        %v9447 = vmul.f32 %v9273, 1.442695
        %v9448 = vpow.pop %v9447
        %v9449 = vmul.f32 %v9274, 1.442695
        %v9450 = vpow.pop %v9449
        %v9451 = vmul.f32 %v9275, 1.442695
        %v9452 = vpow.pop %v9451
        %v9453 = vmul.f32 %v9276, 1.442695
        %v9454 = vpow.pop %v9453
        %v9455 = vmul.f32 %v9277, 1.442695
        %v9456 = vpow.pop %v9455
        %v9457 = vmul.f32 %v9278, 1.442695
        %v9458 = vpow.pop %v9457
        %v9459 = vmul.f32 %v9279, 1.442695
        %v9460 = vpow.pop %v9459
        %v9461 = vmul.f32 %v9280, 1.442695
        %v9462 = vpow.pop %v9461
        %v9463 = vmul.f32 %v9281, 1.442695
        %v9464 = vpow.pop %v9463
        %v9465 = vmul.f32 %v9282, 1.442695
        %v9466 = vpow.pop %v9465
        %v9467 = vmul.f32 %v9283, 1.442695
        %v9468 = vpow.pop %v9467
        %v9469 = vmul.f32 %v9284, 1.442695
        %v9470 = vpow.pop %v9469
        %v9471 = vmul.f32 %v9285, 1.442695
        %v9472 = vpow.pop %v9471
        %v9473 = vmul.f32 %v9286, 1.442695
        %v9474 = vpow.pop %v9473
        %v9475 = vmul.f32 %v9287, 1.442695
        %v9476 = vpow.pop %v9475
        %v9477 = vmul.f32 %v9288, 1.442695
        %v9478 = vpow.pop %v9477
        %v9479 = vmul.f32 %v9289, 1.442695
        %v9480 = vpow.pop %v9479
        %v9481 = vmul.f32 %v9290, 1.442695
        %v9482 = vpow.pop %v9481
        %v9483 = vmul.f32 %v9291, 1.442695
        %v9484 = vpow.pop %v9483
        %v9485 = vmul.f32 %v9292, 1.442695
        %v9486 = vpow.pop %v9485
        %v9487 = vmul.f32 %v9293, 1.442695
        %v9488 = vpow.pop %v9487
        %v9489 = vmul.f32 %v9294, 1.442695
        %v9490 = vpow.pop %v9489
        %v9491 = vmul.f32 %v9295, 1.442695
        %v9492 = vpow.pop %v9491
        %v9493 = vmul.f32 %v9296, 1.442695
        %v9494 = vpow.pop %v9493
        %v9495 = vmul.f32 %v9297, 1.442695
        %v9496 = vpow.pop %v9495
        %v9497 = vmul.f32 %v9298, 1.442695
        %v9498 = vpow.pop %v9497
        %v9499 = vmul.f32 %v9299, 1.442695
        %v9500 = vpow.pop %v9499
        %v9501 = vmul.f32 %v9300, 1.442695
        %v9502 = vpow.pop %v9501
        %v9503 = vmul.f32 %v9301, 1.442695
        %v9504 = vpow.pop %v9503
        %v9505 = vmul.f32 %v9302, 1.442695
        %v9506 = vpow.pop %v9505
        %v9507 = vmul.f32 %v9303, 1.442695
        %v9508 = vpow.pop %v9507
        %v9509 = vmul.f32 %v9304, 1.442695
        %v9510 = vpow.pop %v9509
        %v9511 = vmul.f32 %v9305, 1.442695
        %v9512 = vpow.pop %v9511
        %v9513 = vmul.f32 %v9306, 1.442695
        %v9514 = vpow.pop %v9513
        %v9515 = vmul.f32 %v9307, 1.442695
        %v9516 = vpow.pop %v9515
        %v9517 = vmul.f32 %v9308, 1.442695
        %v9518 = vpow.pop %v9517
        %v9519 = vmul.f32 %v9309, 1.442695
        %v9520 = vpow.pop %v9519
        %v9521 = vmul.f32 %v9310, 1.442695
        %v9522 = vpow.pop %v9521
        %v9523 = vmul.f32 %v9311, 1.442695
        %v9524 = vpow.pop %v9523
        %v9525 = vmul.f32 %v9312, 1.442695
        %v9526 = vpow.pop %v9525
        %v9527 = vmul.f32 %v9313, 1.442695
        %v9528 = vpow.pop %v9527
        %v9529 = vmul.f32 %v9314, 1.442695
        %v9530 = vpow.pop %v9529
        %v9531 = vmul.f32 %v9315, 1.442695
        %v9532 = vpow.pop %v9531
        %v9533 = vmul.f32 %v9316, 1.442695
        %v9534 = vpow.pop %v9533
        %v9535 = vmul.f32 %v9317, 1.442695
        %v9536 = vpow.pop %v9535
        %v9537 = vmul.f32 %v9318, 1.442695
        %v9538 = vpow.pop %v9537
        %v9539 = vmul.f32 %v9319, 1.442695
        %v9540 = vpow.pop %v9539
        %v9541 = vmul.f32 %v9320, 1.442695
        %v9542 = vpow.pop %v9541
        %v9543 = vmul.f32 %v9321, 1.442695
        %v9544 = vpow.pop %v9543
        %v9545 = vmul.f32 %v9322, 1.442695
        %v9546 = vpow.pop %v9545
        %v9547 = vmul.f32 %v9323, 1.442695
        %v9548 = vpow.pop %v9547
        %v9549 = vmul.f32 %v9324, 1.442695
        %v9550 = vpow.pop %v9549
        %v9551 = vmul.f32 %v9325, 1.442695
        %v9552 = vpow.pop %v9551
        %v9553 = vmul.f32 %v9326, 1.442695
        %v9554 = vpow.pop %v9553
        %v9555 = vmul.f32 %v9327, 1.442695
        %v9556 = vpow.pop %v9555
        %v9557 = vmul.f32 %v9328, 1.442695
        %v9558 = vpow.pop %v9557
        %v9559 = vmul.f32 %v9329, 1.442695
        %v9560 = vpow.pop %v9559
        %v9561 = vmul.f32 %v9330, 1.442695
        %v9562 = vpow.pop %v9561
        %v9563 = vmul.f32 %v9331, 1.442695
        %v9564 = vpow.pop %v9563
        %v9565 = vmul.f32 %v9332, 1.442695
        %v9566 = vpow.pop %v9565
        %v9567 = vmul.f32 %v9333, 1.442695
        %v9568 = vpow.pop %v9567
        %v9569 = vmul.f32 %v9334, 1.442695
        %v9570 = vpow.pop %v9569
        %v9571 = vmul.f32 %v9335, 1.442695
        %v9572 = vpow.pop %v9571
        %v9573 = vmul.f32 %v9336, 1.442695
        %v9574 = vpow.pop %v9573
        %v9575 = vmul.f32 %v9337, 1.442695
        %v9576 = vpow.pop %v9575
        %v9577 = vmul.f32 %v9338, 1.442695
        %v9578 = vpow.pop %v9577
        %v9579 = vmul.f32 %v9339, 1.442695
        %v9580 = vpow.pop %v9579
        %v9581 = vmul.f32 %v9340, 1.442695
        %v9582 = vpow.pop %v9581
        %v9583 = vmul.f32 %v9341, 1.442695
        %v9584 = vpow.pop %v9583
        %v9585 = vmul.f32 %v9342, 1.442695
        %v9586 = vpow.pop %v9585
        %v9587 = vmul.f32 %v9343, 1.442695
        %v9588 = vpow.pop %v9587
        %v9589 = vmul.f32 %v9344, 1.442695
        %v9590 = vpow.pop %v9589
        %v9591 = vmul.f32 %v9345, 1.442695
        %v9592 = vpow.pop %v9591
        %v9593 = vmul.f32 %v9346, 1.442695
        %v9594 = vpow.pop %v9593
        %v9595 = vmul.f32 %v9347, 1.442695
        %v9596 = vpow.pop %v9595
        %v9597 = vmul.f32 %v9348, 1.442695
        %v9598 = vpow.pop %v9597
        %v9599 = vmul.f32 %v9349, 1.442695
        %v9600 = vpow.pop %v9599
        %v9601 = vmul.f32 %v9350, 1.442695
        %v9602 = vpow.pop %v9601
        %v9603 = vmul.f32 %v9351, 1.442695
        %v9604 = vpow.pop %v9603
        %v9605 = vmul.f32 %v9352, 1.442695
        %v9606 = vpow.pop %v9605
        %v9607 = vmul.f32 %v9353, 1.442695
        %v9608 = vpow.pop %v9607
        %v9609 = vmul.f32 %v9354, 1.442695
        %v9610 = vpow.pop %v9609
        %v9611 = vadd.f32 %v9356, 1.0
        %v9612 = vadd.f32 %v9358, 1.0
        %v9613 = vadd.f32 %v9360, 1.0
        %v9614 = vadd.f32 %v9362, 1.0
        %v9615 = vadd.f32 %v9364, 1.0
        %v9616 = vadd.f32 %v9366, 1.0
        %v9617 = vadd.f32 %v9368, 1.0
        %v9618 = vadd.f32 %v9370, 1.0
        %v9619 = vadd.f32 %v9372, 1.0
        %v9620 = vadd.f32 %v9374, 1.0
        %v9621 = vadd.f32 %v9376, 1.0
        %v9622 = vadd.f32 %v9378, 1.0
        %v9623 = vadd.f32 %v9380, 1.0
        %v9624 = vadd.f32 %v9382, 1.0
        %v9625 = vadd.f32 %v9384, 1.0
        %v9626 = vadd.f32 %v9386, 1.0
        %v9627 = vadd.f32 %v9388, 1.0
        %v9628 = vadd.f32 %v9390, 1.0
        %v9629 = vadd.f32 %v9392, 1.0
        %v9630 = vadd.f32 %v9394, 1.0
        %v9631 = vadd.f32 %v9396, 1.0
        %v9632 = vadd.f32 %v9398, 1.0
        %v9633 = vadd.f32 %v9400, 1.0
        %v9634 = vadd.f32 %v9402, 1.0
        %v9635 = vadd.f32 %v9404, 1.0
        %v9636 = vadd.f32 %v9406, 1.0
        %v9637 = vadd.f32 %v9408, 1.0
        %v9638 = vadd.f32 %v9410, 1.0
        %v9639 = vadd.f32 %v9412, 1.0
        %v9640 = vadd.f32 %v9414, 1.0
        %v9641 = vadd.f32 %v9416, 1.0
        %v9642 = vadd.f32 %v9418, 1.0
        %v9643 = vadd.f32 %v9420, 1.0
        %v9644 = vadd.f32 %v9422, 1.0
        %v9645 = vadd.f32 %v9424, 1.0
        %v9646 = vadd.f32 %v9426, 1.0
        %v9647 = vadd.f32 %v9428, 1.0
        %v9648 = vadd.f32 %v9430, 1.0
        %v9649 = vadd.f32 %v9432, 1.0
        %v9650 = vadd.f32 %v9434, 1.0
        %v9651 = vadd.f32 %v9436, 1.0
        %v9652 = vadd.f32 %v9438, 1.0
        %v9653 = vadd.f32 %v9440, 1.0
        %v9654 = vadd.f32 %v9442, 1.0
        %v9655 = vadd.f32 %v9444, 1.0
        %v9656 = vadd.f32 %v9446, 1.0
        %v9657 = vadd.f32 %v9448, 1.0
        %v9658 = vadd.f32 %v9450, 1.0
        %v9659 = vadd.f32 %v9452, 1.0
        %v9660 = vadd.f32 %v9454, 1.0
        %v9661 = vadd.f32 %v9456, 1.0
        %v9662 = vadd.f32 %v9458, 1.0
        %v9663 = vadd.f32 %v9460, 1.0
        %v9664 = vadd.f32 %v9462, 1.0
        %v9665 = vadd.f32 %v9464, 1.0
        %v9666 = vadd.f32 %v9466, 1.0
        %v9667 = vadd.f32 %v9468, 1.0
        %v9668 = vadd.f32 %v9470, 1.0
        %v9669 = vadd.f32 %v9472, 1.0
        %v9670 = vadd.f32 %v9474, 1.0
        %v9671 = vadd.f32 %v9476, 1.0
        %v9672 = vadd.f32 %v9478, 1.0
        %v9673 = vadd.f32 %v9480, 1.0
        %v9674 = vadd.f32 %v9482, 1.0
        %v9675 = vadd.f32 %v9484, 1.0
        %v9676 = vadd.f32 %v9486, 1.0
        %v9677 = vadd.f32 %v9488, 1.0
        %v9678 = vadd.f32 %v9490, 1.0
        %v9679 = vadd.f32 %v9492, 1.0
        %v9680 = vadd.f32 %v9494, 1.0
        %v9681 = vadd.f32 %v9496, 1.0
        %v9682 = vadd.f32 %v9498, 1.0
        %v9683 = vadd.f32 %v9500, 1.0
        %v9684 = vadd.f32 %v9502, 1.0
        %v9685 = vadd.f32 %v9504, 1.0
        %v9686 = vadd.f32 %v9506, 1.0
        %v9687 = vadd.f32 %v9508, 1.0
        %v9688 = vadd.f32 %v9510, 1.0
        %v9689 = vadd.f32 %v9512, 1.0
        %v9690 = vadd.f32 %v9514, 1.0
        %v9691 = vadd.f32 %v9516, 1.0
        %v9692 = vadd.f32 %v9518, 1.0
        %v9693 = vadd.f32 %v9520, 1.0
        %v9694 = vadd.f32 %v9522, 1.0
        %v9695 = vadd.f32 %v9524, 1.0
        %v9696 = vadd.f32 %v9526, 1.0
        %v9697 = vadd.f32 %v9528, 1.0
        %v9698 = vadd.f32 %v9530, 1.0
        %v9699 = vadd.f32 %v9532, 1.0
        %v9700 = vadd.f32 %v9534, 1.0
        %v9701 = vadd.f32 %v9536, 1.0
        %v9702 = vadd.f32 %v9538, 1.0
        %v9703 = vadd.f32 %v9540, 1.0
        %v9704 = vadd.f32 %v9542, 1.0
        %v9705 = vadd.f32 %v9544, 1.0
        %v9706 = vadd.f32 %v9546, 1.0
        %v9707 = vadd.f32 %v9548, 1.0
        %v9708 = vadd.f32 %v9550, 1.0
        %v9709 = vadd.f32 %v9552, 1.0
        %v9710 = vadd.f32 %v9554, 1.0
        %v9711 = vadd.f32 %v9556, 1.0
        %v9712 = vadd.f32 %v9558, 1.0
        %v9713 = vadd.f32 %v9560, 1.0
        %v9714 = vadd.f32 %v9562, 1.0
        %v9715 = vadd.f32 %v9564, 1.0
        %v9716 = vadd.f32 %v9566, 1.0
        %v9717 = vadd.f32 %v9568, 1.0
        %v9718 = vadd.f32 %v9570, 1.0
        %v9719 = vadd.f32 %v9572, 1.0
        %v9720 = vadd.f32 %v9574, 1.0
        %v9721 = vadd.f32 %v9576, 1.0
        %v9722 = vadd.f32 %v9578, 1.0
        %v9723 = vadd.f32 %v9580, 1.0
        %v9724 = vadd.f32 %v9582, 1.0
        %v9725 = vadd.f32 %v9584, 1.0
        %v9726 = vadd.f32 %v9586, 1.0
        %v9727 = vadd.f32 %v9588, 1.0
        %v9728 = vadd.f32 %v9590, 1.0
        %v9729 = vadd.f32 %v9592, 1.0
        %v9730 = vadd.f32 %v9594, 1.0
        %v9731 = vadd.f32 %v9596, 1.0
        %v9732 = vadd.f32 %v9598, 1.0
        %v9733 = vadd.f32 %v9600, 1.0
        %v9734 = vadd.f32 %v9602, 1.0
        %v9735 = vadd.f32 %v9604, 1.0
        %v9736 = vadd.f32 %v9606, 1.0
        %v9737 = vadd.f32 %v9608, 1.0
        %v9738 = vadd.f32 %v9610, 1.0
        %v9739 = vrcp.pop %v9611
        %v9740 = vmul.f32 1.0, %v9739
        %v9741 = vrcp.pop %v9612
        %v9742 = vmul.f32 1.0, %v9741
        %v9743 = vrcp.pop %v9613
        %v9744 = vmul.f32 1.0, %v9743
        %v9745 = vrcp.pop %v9614
        %v9746 = vmul.f32 1.0, %v9745
        %v9747 = vrcp.pop %v9615
        %v9748 = vmul.f32 1.0, %v9747
        %v9749 = vrcp.pop %v9616
        %v9750 = vmul.f32 1.0, %v9749
        %v9751 = vrcp.pop %v9617
        %v9752 = vmul.f32 1.0, %v9751
        %v9753 = vrcp.pop %v9618
        %v9754 = vmul.f32 1.0, %v9753
        %v9755 = vrcp.pop %v9619
        %v9756 = vmul.f32 1.0, %v9755
        %v9757 = vrcp.pop %v9620
        %v9758 = vmul.f32 1.0, %v9757
        %v9759 = vrcp.pop %v9621
        %v9760 = vmul.f32 1.0, %v9759
        %v9761 = vrcp.pop %v9622
        %v9762 = vmul.f32 1.0, %v9761
        %v9763 = vrcp.pop %v9623
        %v9764 = vmul.f32 1.0, %v9763
        %v9765 = vrcp.pop %v9624
        %v9766 = vmul.f32 1.0, %v9765
        %v9767 = vrcp.pop %v9625
        %v9768 = vmul.f32 1.0, %v9767
        %v9769 = vrcp.pop %v9626
        %v9770 = vmul.f32 1.0, %v9769
        %v9771 = vrcp.pop %v9627
        %v9772 = vmul.f32 1.0, %v9771
        %v9773 = vrcp.pop %v9628
        %v9774 = vmul.f32 1.0, %v9773
        %v9775 = vrcp.pop %v9629
        %v9776 = vmul.f32 1.0, %v9775
        %v9777 = vrcp.pop %v9630
        %v9778 = vmul.f32 1.0, %v9777
        %v9779 = vrcp.pop %v9631
        %v9780 = vmul.f32 1.0, %v9779
        %v9781 = vrcp.pop %v9632
        %v9782 = vmul.f32 1.0, %v9781
        %v9783 = vrcp.pop %v9633
        %v9784 = vmul.f32 1.0, %v9783
        %v9785 = vrcp.pop %v9634
        %v9786 = vmul.f32 1.0, %v9785
        %v9787 = vrcp.pop %v9635
        %v9788 = vmul.f32 1.0, %v9787
        %v9789 = vrcp.pop %v9636
        %v9790 = vmul.f32 1.0, %v9789
        %v9791 = vrcp.pop %v9637
        %v9792 = vmul.f32 1.0, %v9791
        %v9793 = vrcp.pop %v9638
        %v9794 = vmul.f32 1.0, %v9793
        %v9795 = vrcp.pop %v9639
        %v9796 = vmul.f32 1.0, %v9795
        %v9797 = vrcp.pop %v9640
        %v9798 = vmul.f32 1.0, %v9797
        %v9799 = vrcp.pop %v9641
        %v9800 = vmul.f32 1.0, %v9799
        %v9801 = vrcp.pop %v9642
        %v9802 = vmul.f32 1.0, %v9801
        %v9803 = vrcp.pop %v9643
        %v9804 = vmul.f32 1.0, %v9803
        %v9805 = vrcp.pop %v9644
        %v9806 = vmul.f32 1.0, %v9805
        %v9807 = vrcp.pop %v9645
        %v9808 = vmul.f32 1.0, %v9807
        %v9809 = vrcp.pop %v9646
        %v9810 = vmul.f32 1.0, %v9809
        %v9811 = vrcp.pop %v9647
        %v9812 = vmul.f32 1.0, %v9811
        %v9813 = vrcp.pop %v9648
        %v9814 = vmul.f32 1.0, %v9813
        %v9815 = vrcp.pop %v9649
        %v9816 = vmul.f32 1.0, %v9815
        %v9817 = vrcp.pop %v9650
        %v9818 = vmul.f32 1.0, %v9817
        %v9819 = vrcp.pop %v9651
        %v9820 = vmul.f32 1.0, %v9819
        %v9821 = vrcp.pop %v9652
        %v9822 = vmul.f32 1.0, %v9821
        %v9823 = vrcp.pop %v9653
        %v9824 = vmul.f32 1.0, %v9823
        %v9825 = vrcp.pop %v9654
        %v9826 = vmul.f32 1.0, %v9825
        %v9827 = vrcp.pop %v9655
        %v9828 = vmul.f32 1.0, %v9827
        %v9829 = vrcp.pop %v9656
        %v9830 = vmul.f32 1.0, %v9829
        %v9831 = vrcp.pop %v9657
        %v9832 = vmul.f32 1.0, %v9831
        %v9833 = vrcp.pop %v9658
        %v9834 = vmul.f32 1.0, %v9833
        %v9835 = vrcp.pop %v9659
        %v9836 = vmul.f32 1.0, %v9835
        %v9837 = vrcp.pop %v9660
        %v9838 = vmul.f32 1.0, %v9837
        %v9839 = vrcp.pop %v9661
        %v9840 = vmul.f32 1.0, %v9839
        %v9841 = vrcp.pop %v9662
        %v9842 = vmul.f32 1.0, %v9841
        %v9843 = vrcp.pop %v9663
        %v9844 = vmul.f32 1.0, %v9843
        %v9845 = vrcp.pop %v9664
        %v9846 = vmul.f32 1.0, %v9845
        %v9847 = vrcp.pop %v9665
        %v9848 = vmul.f32 1.0, %v9847
        %v9849 = vrcp.pop %v9666
        %v9850 = vmul.f32 1.0, %v9849
        %v9851 = vrcp.pop %v9667
        %v9852 = vmul.f32 1.0, %v9851
        %v9853 = vrcp.pop %v9668
        %v9854 = vmul.f32 1.0, %v9853
        %v9855 = vrcp.pop %v9669
        %v9856 = vmul.f32 1.0, %v9855
        %v9857 = vrcp.pop %v9670
        %v9858 = vmul.f32 1.0, %v9857
        %v9859 = vrcp.pop %v9671
        %v9860 = vmul.f32 1.0, %v9859
        %v9861 = vrcp.pop %v9672
        %v9862 = vmul.f32 1.0, %v9861
        %v9863 = vrcp.pop %v9673
        %v9864 = vmul.f32 1.0, %v9863
        %v9865 = vrcp.pop %v9674
        %v9866 = vmul.f32 1.0, %v9865
        %v9867 = vrcp.pop %v9675
        %v9868 = vmul.f32 1.0, %v9867
        %v9869 = vrcp.pop %v9676
        %v9870 = vmul.f32 1.0, %v9869
        %v9871 = vrcp.pop %v9677
        %v9872 = vmul.f32 1.0, %v9871
        %v9873 = vrcp.pop %v9678
        %v9874 = vmul.f32 1.0, %v9873
        %v9875 = vrcp.pop %v9679
        %v9876 = vmul.f32 1.0, %v9875
        %v9877 = vrcp.pop %v9680
        %v9878 = vmul.f32 1.0, %v9877
        %v9879 = vrcp.pop %v9681
        %v9880 = vmul.f32 1.0, %v9879
        %v9881 = vrcp.pop %v9682
        %v9882 = vmul.f32 1.0, %v9881
        %v9883 = vrcp.pop %v9683
        %v9884 = vmul.f32 1.0, %v9883
        %v9885 = vrcp.pop %v9684
        %v9886 = vmul.f32 1.0, %v9885
        %v9887 = vrcp.pop %v9685
        %v9888 = vmul.f32 1.0, %v9887
        %v9889 = vrcp.pop %v9686
        %v9890 = vmul.f32 1.0, %v9889
        %v9891 = vrcp.pop %v9687
        %v9892 = vmul.f32 1.0, %v9891
        %v9893 = vrcp.pop %v9688
        %v9894 = vmul.f32 1.0, %v9893
        %v9895 = vrcp.pop %v9689
        %v9896 = vmul.f32 1.0, %v9895
        %v9897 = vrcp.pop %v9690
        %v9898 = vmul.f32 1.0, %v9897
        %v9899 = vrcp.pop %v9691
        %v9900 = vmul.f32 1.0, %v9899
        %v9901 = vrcp.pop %v9692
        %v9902 = vmul.f32 1.0, %v9901
        %v9903 = vrcp.pop %v9693
        %v9904 = vmul.f32 1.0, %v9903
        %v9905 = vrcp.pop %v9694
        %v9906 = vmul.f32 1.0, %v9905
        %v9907 = vrcp.pop %v9695
        %v9908 = vmul.f32 1.0, %v9907
        %v9909 = vrcp.pop %v9696
        %v9910 = vmul.f32 1.0, %v9909
        %v9911 = vrcp.pop %v9697
        %v9912 = vmul.f32 1.0, %v9911
        %v9913 = vrcp.pop %v9698
        %v9914 = vmul.f32 1.0, %v9913
        %v9915 = vrcp.pop %v9699
        %v9916 = vmul.f32 1.0, %v9915
        %v9917 = vrcp.pop %v9700
        %v9918 = vmul.f32 1.0, %v9917
        %v9919 = vrcp.pop %v9701
        %v9920 = vmul.f32 1.0, %v9919
        %v9921 = vrcp.pop %v9702
        %v9922 = vmul.f32 1.0, %v9921
        %v9923 = vrcp.pop %v9703
        %v9924 = vmul.f32 1.0, %v9923
        %v9925 = vrcp.pop %v9704
        %v9926 = vmul.f32 1.0, %v9925
        %v9927 = vrcp.pop %v9705
        %v9928 = vmul.f32 1.0, %v9927
        %v9929 = vrcp.pop %v9706
        %v9930 = vmul.f32 1.0, %v9929
        %v9931 = vrcp.pop %v9707
        %v9932 = vmul.f32 1.0, %v9931
        %v9933 = vrcp.pop %v9708
        %v9934 = vmul.f32 1.0, %v9933
        %v9935 = vrcp.pop %v9709
        %v9936 = vmul.f32 1.0, %v9935
        %v9937 = vrcp.pop %v9710
        %v9938 = vmul.f32 1.0, %v9937
        %v9939 = vrcp.pop %v9711
        %v9940 = vmul.f32 1.0, %v9939
        %v9941 = vrcp.pop %v9712
        %v9942 = vmul.f32 1.0, %v9941
        %v9943 = vrcp.pop %v9713
        %v9944 = vmul.f32 1.0, %v9943
        %v9945 = vrcp.pop %v9714
        %v9946 = vmul.f32 1.0, %v9945
        %v9947 = vrcp.pop %v9715
        %v9948 = vmul.f32 1.0, %v9947
        %v9949 = vrcp.pop %v9716
        %v9950 = vmul.f32 1.0, %v9949
        %v9951 = vrcp.pop %v9717
        %v9952 = vmul.f32 1.0, %v9951
        %v9953 = vrcp.pop %v9718
        %v9954 = vmul.f32 1.0, %v9953
        %v9955 = vrcp.pop %v9719
        %v9956 = vmul.f32 1.0, %v9955
        %v9957 = vrcp.pop %v9720
        %v9958 = vmul.f32 1.0, %v9957
        %v9959 = vrcp.pop %v9721
        %v9960 = vmul.f32 1.0, %v9959
        %v9961 = vrcp.pop %v9722
        %v9962 = vmul.f32 1.0, %v9961
        %v9963 = vrcp.pop %v9723
        %v9964 = vmul.f32 1.0, %v9963
        %v9965 = vrcp.pop %v9724
        %v9966 = vmul.f32 1.0, %v9965
        %v9967 = vrcp.pop %v9725
        %v9968 = vmul.f32 1.0, %v9967
        %v9969 = vrcp.pop %v9726
        %v9970 = vmul.f32 1.0, %v9969
        %v9971 = vrcp.pop %v9727
        %v9972 = vmul.f32 1.0, %v9971
        %v9973 = vrcp.pop %v9728
        %v9974 = vmul.f32 1.0, %v9973
        %v9975 = vrcp.pop %v9729
        %v9976 = vmul.f32 1.0, %v9975
        %v9977 = vrcp.pop %v9730
        %v9978 = vmul.f32 1.0, %v9977
        %v9979 = vrcp.pop %v9731
        %v9980 = vmul.f32 1.0, %v9979
        %v9981 = vrcp.pop %v9732
        %v9982 = vmul.f32 1.0, %v9981
        %v9983 = vrcp.pop %v9733
        %v9984 = vmul.f32 1.0, %v9983
        %v9985 = vrcp.pop %v9734
        %v9986 = vmul.f32 1.0, %v9985
        %v9987 = vrcp.pop %v9735
        %v9988 = vmul.f32 1.0, %v9987
        %v9989 = vrcp.pop %v9736
        %v9990 = vmul.f32 1.0, %v9989
        %v9991 = vrcp.pop %v9737
        %v9992 = vmul.f32 1.0, %v9991
        %v9993 = vrcp.pop %v9738
        %v9994 = vmul.f32 1.0, %v9993
        %v9995 = vpack.c.bf16 %v9744, %v9740
        %v9996 = vpack.c.bf16 %v9746, %v9742
        %v9997 = vpack.c.bf16 %v9752, %v9748
        %v9998 = vpack.c.bf16 %v9754, %v9750
        %v9999 = vpack.c.bf16 %v9760, %v9756
        %v10000 = vpack.c.bf16 %v9762, %v9758
        %v10001 = vpack.c.bf16 %v9768, %v9764
        %v10002 = vpack.c.bf16 %v9770, %v9766
        %v10003 = vpack.c.bf16 %v9776, %v9772
        %v10004 = vpack.c.bf16 %v9778, %v9774
        %v10005 = vpack.c.bf16 %v9784, %v9780
        %v10006 = vpack.c.bf16 %v9786, %v9782
        %v10007 = vpack.c.bf16 %v9792, %v9788
        %v10008 = vpack.c.bf16 %v9794, %v9790
        %v10009 = vpack.c.bf16 %v9800, %v9796
        %v10010 = vpack.c.bf16 %v9802, %v9798
        %v10011 = vpack.c.bf16 %v9808, %v9804
        %v10012 = vpack.c.bf16 %v9810, %v9806
        %v10013 = vpack.c.bf16 %v9816, %v9812
        %v10014 = vpack.c.bf16 %v9818, %v9814
        %v10015 = vpack.c.bf16 %v9824, %v9820
        %v10016 = vpack.c.bf16 %v9826, %v9822
        %v10017 = vpack.c.bf16 %v9832, %v9828
        %v10018 = vpack.c.bf16 %v9834, %v9830
        %v10019 = vpack.c.bf16 %v9840, %v9836
        %v10020 = vpack.c.bf16 %v9842, %v9838
        %v10021 = vpack.c.bf16 %v9848, %v9844
        %v10022 = vpack.c.bf16 %v9850, %v9846
        %v10023 = vpack.c.bf16 %v9856, %v9852
        %v10024 = vpack.c.bf16 %v9858, %v9854
        %v10025 = vpack.c.bf16 %v9864, %v9860
        %v10026 = vpack.c.bf16 %v9866, %v9862
        %v10027 = vpack.c.bf16 %v9872, %v9868
        %v10028 = vpack.c.bf16 %v9874, %v9870
        %v10029 = vpack.c.bf16 %v9880, %v9876
        %v10030 = vpack.c.bf16 %v9882, %v9878
        %v10031 = vpack.c.bf16 %v9888, %v9884
        %v10032 = vpack.c.bf16 %v9890, %v9886
        %v10033 = vpack.c.bf16 %v9896, %v9892
        %v10034 = vpack.c.bf16 %v9898, %v9894
        %v10035 = vpack.c.bf16 %v9904, %v9900
        %v10036 = vpack.c.bf16 %v9906, %v9902
        %v10037 = vpack.c.bf16 %v9912, %v9908
        %v10038 = vpack.c.bf16 %v9914, %v9910
        %v10039 = vpack.c.bf16 %v9920, %v9916
        %v10040 = vpack.c.bf16 %v9922, %v9918
        %v10041 = vpack.c.bf16 %v9928, %v9924
        %v10042 = vpack.c.bf16 %v9930, %v9926
        %v10043 = vpack.c.bf16 %v9936, %v9932
        %v10044 = vpack.c.bf16 %v9938, %v9934
        %v10045 = vpack.c.bf16 %v9944, %v9940
        %v10046 = vpack.c.bf16 %v9946, %v9942
        %v10047 = vpack.c.bf16 %v9952, %v9948
        %v10048 = vpack.c.bf16 %v9954, %v9950
        %v10049 = vpack.c.bf16 %v9960, %v9956
        %v10050 = vpack.c.bf16 %v9962, %v9958
        %v10051 = vpack.c.bf16 %v9968, %v9964
        %v10052 = vpack.c.bf16 %v9970, %v9966
        %v10053 = vpack.c.bf16 %v9976, %v9972
        %v10054 = vpack.c.bf16 %v9978, %v9974
        %v10055 = vpack.c.bf16 %v9984, %v9980
        %v10056 = vpack.c.bf16 %v9986, %v9982
        %v10057 = vpack.c.bf16 %v9992, %v9988
        %v10058 = vpack.c.bf16 %v9994, %v9990
        %v10059 = vld [vmem:[%s7] sm:$0x3]
        %v10060 = vld [vmem:[#allocation2] sm:$0x1]
        %10062 = vset.pattern.permute.xlu0 0
        %10063 = vperm.xlu0 %10062, %v10060
        %v10064 = vpop.permute.xlu0 %10063
        %v10066 = vlaneseq
        %v10067 = vshrl.u32 %v10066, 7
        %v10068 = vsub.s32 0, %v10067
        %v10069 = vrot.slane %v10064, %v10068
        %v10072 = vunpack.c.l.s4 1966171168
        %v10073 = vunpack.c.0.s8 %v10072
        %v10074 = vlaneseq
        %v10075 = vshrl.u32 %v10074, 7
        %v10076 = vsub.s32 %v10073, %v10075
        %v10077 = vrot.slane %v10059, %v10076
        %v10078 = vcombine.high %v10077, %v10077
        %v10080 = vunpack.c.l.s4 1966171168
        %v10081 = vunpack.c.0.s8 %v10080
        %v10082 = vlaneseq
        %v10083 = vshrl.u32 %v10082, 7
        %v10084 = vsub.s32 %v10081, %v10083
        %v10085 = vrot.slane %v10077, %v10084
        %v10087 = vunpack.c.l.s4 1966171168
        %v10088 = vunpack.c.0.s8 %v10087
        %v10089 = vlaneseq
        %v10090 = vshrl.u32 %v10089, 7
        %v10091 = vsub.s32 %v10088, %v10090
        %v10092 = vrot.slane %v10078, %v10091
        %10095 = vmatprep.subr.bf16.mxu0 %v9996
        %10096 = vmatpush1.bf16.xpose.msra.mxu0 %v9995
        %10097 = vmatprep.subr.bf16.mxu0 %v9998
        %10098 = vmatpush1.bf16.xpose.msra.mxu0 %v9997
        %10099 = vmatprep.subr.bf16.mxu0 %v10000
        %10100 = vmatpush1.bf16.xpose.msra.mxu0 %v9999
        %10101 = vmatprep.subr.bf16.mxu0 %v10002
        %10102 = vmatpush1.bf16.xpose.msra.mxu0 %v10001
        %10103 = vmatprep.subr.bf16.mxu0 %v10004
        %10104 = vmatpush1.bf16.xpose.msra.mxu0 %v10003
        %10105 = vmatprep.subr.bf16.mxu0 %v10006
        %10106 = vmatpush1.bf16.xpose.msra.mxu0 %v10005
        %10107 = vmatprep.subr.bf16.mxu0 %v10008
        %10108 = vmatpush1.bf16.xpose.msra.mxu0 %v10007
        %10109 = vmatprep.subr.bf16.mxu0 %v10010
        %10110 = vmatpush1.bf16.xpose.msra.mxu0 %v10009
        %10111 = vmatprep.subr.bf16.mxu0 %v10012
        %10112 = vmatpush1.bf16.xpose.msra.mxu0 %v10011
        %10113 = vmatprep.subr.bf16.mxu0 %v10014
        %10114 = vmatpush1.bf16.xpose.msra.mxu0 %v10013
        %10115 = vmatprep.subr.bf16.mxu0 %v10016
        %10116 = vmatpush1.bf16.xpose.msra.mxu0 %v10015
        %10117 = vmatprep.subr.bf16.mxu0 %v10018
        %10118 = vmatpush1.bf16.xpose.msra.mxu0 %v10017
        %10119 = vmatprep.subr.bf16.mxu0 %v10020
        %10120 = vmatpush1.bf16.xpose.msra.mxu0 %v10019
        %10121 = vmatprep.subr.bf16.mxu0 %v10022
        %10122 = vmatpush1.bf16.xpose.msra.mxu0 %v10021
        %10123 = vmatprep.subr.bf16.mxu0 %v10024
        %10124 = vmatpush1.bf16.xpose.msra.mxu0 %v10023
        %10125 = vmatprep.subr.bf16.mxu0 %v10026
        %10126 = vmatpush1.bf16.xpose.msra.mxu0 %v10025
        %10127 = vmatprep.mubr.bf16.mxu0 %v10092
        %10128 = vmatmul.mubr.bf16.gmra.mrb[0].mxu0 %v10085
        %v10129 = vpop.f32.mrb[0].mxu0
        %v10130 = vadd.f32 %v10069, %v10129
        %v10131 = vpop.f32.mrb[0].mxu0
        %v10132 = vadd.f32 %v10069, %v10131
        %v10133 = vpop.f32.mrb[0].mxu0
        %v10134 = vpop.f32.mrb[0].mxu0
        %10135 = vdwg.mxu0
        %10136 = vmatprep.subr.bf16.mxu0 %v10028
        %10137 = vmatpush1.bf16.xpose.msra.mxu0 %v10027
        %10138 = vmatprep.subr.bf16.mxu0 %v10030
        %10139 = vmatpush1.bf16.xpose.msra.mxu0 %v10029
        %10140 = vmatprep.subr.bf16.mxu0 %v10032
        %10141 = vmatpush1.bf16.xpose.msra.mxu0 %v10031
        %10142 = vmatprep.subr.bf16.mxu0 %v10034
        %10143 = vmatpush1.bf16.xpose.msra.mxu0 %v10033
        %10144 = vmatprep.subr.bf16.mxu0 %v10036
        %10145 = vmatpush1.bf16.xpose.msra.mxu0 %v10035
        %10146 = vmatprep.subr.bf16.mxu0 %v10038
        %10147 = vmatpush1.bf16.xpose.msra.mxu0 %v10037
        %10148 = vmatprep.subr.bf16.mxu0 %v10040
        %10149 = vmatpush1.bf16.xpose.msra.mxu0 %v10039
        %10150 = vmatprep.subr.bf16.mxu0 %v10042
        %10151 = vmatpush1.bf16.xpose.msra.mxu0 %v10041
        %10152 = vmatprep.subr.bf16.mxu0 %v10044
        %10153 = vmatpush1.bf16.xpose.msra.mxu0 %v10043
        %10154 = vmatprep.subr.bf16.mxu0 %v10046
        %10155 = vmatpush1.bf16.xpose.msra.mxu0 %v10045
        %10156 = vmatprep.subr.bf16.mxu0 %v10048
        %10157 = vmatpush1.bf16.xpose.msra.mxu0 %v10047
        %10158 = vmatprep.subr.bf16.mxu0 %v10050
        %10159 = vmatpush1.bf16.xpose.msra.mxu0 %v10049
        %10160 = vmatprep.subr.bf16.mxu0 %v10052
        %10161 = vmatpush1.bf16.xpose.msra.mxu0 %v10051
        %10162 = vmatprep.subr.bf16.mxu0 %v10054
        %10163 = vmatpush1.bf16.xpose.msra.mxu0 %v10053
        %10164 = vmatprep.subr.bf16.mxu0 %v10056
        %10165 = vmatpush1.bf16.xpose.msra.mxu0 %v10055
        %10166 = vmatprep.subr.bf16.mxu0 %v10058
        %10167 = vmatpush1.bf16.xpose.msra.mxu0 %v10057
        %10168 = vmatprep.mubr.bf16.mxu0 %v10092
        %10169 = vmatmul.mubr.bf16.gmra.mrb[0].mxu0 %v10085
        %v10170 = vpop.f32.mrb[0].mxu0
        %v10171 = vadd.f32 %v10069, %v10170
        %v10172 = vpop.f32.mrb[0].mxu0
        %v10173 = vadd.f32 %v10069, %v10172
        %v10174 = vpop.f32.mrb[0].mxu0
        %v10175 = vpop.f32.mrb[0].mxu0
        %10176 = vdwg.mxu0
        %v10177 = vxor.u32 %v10130, 2147483648
        %v10178 = vxor.u32 %v10132, 2147483648
        %v10179 = vxor.u32 %v10171, 2147483648
        %v10180 = vxor.u32 %v10173, 2147483648
        %v10181 = vmul.f32 %v10177, 1.442695
        %v10182 = vpow.pop %v10181
        %v10183 = vmul.f32 %v10178, 1.442695
        %v10184 = vpow.pop %v10183
        %v10185 = vmul.f32 %v10179, 1.442695
        %v10186 = vpow.pop %v10185
        %v10187 = vmul.f32 %v10180, 1.442695
        %v10188 = vpow.pop %v10187
        %v10189 = vadd.f32 %v10182, 1.0
        %v10190 = vadd.f32 %v10184, 1.0
        %v10191 = vadd.f32 %v10186, 1.0
        %v10192 = vadd.f32 %v10188, 1.0
        %v10193 = vrcp.pop %v10189
        %v10194 = vmul.f32 1.0, %v10193
        %v10195 = vrcp.pop %v10190
        %v10196 = vmul.f32 1.0, %v10195
        %v10197 = vrcp.pop %v10191
        %v10198 = vmul.f32 1.0, %v10197
        %v10199 = vrcp.pop %v10192
        %v10200 = vmul.f32 1.0, %v10199
        %v10205 = vcombine.low %v10194, %v10196
        %v10206 = vcombine.low %v10198, %v10200
        %v10208 = vunpack.c.l.s4 1966171168
        %v10209 = vunpack.c.0.s8 %v10208
        %v10210 = vlaneseq
        %v10211 = vshrl.u32 %v10210, 7
        %v10212 = vsub.s32 %v10209, %v10211
        %v10213 = vrot.slane %v10205, %v10212
        %v10215 = vunpack.c.l.s4 1966171168
        %v10216 = vunpack.c.0.s8 %v10215
        %v10217 = vlaneseq
        %v10218 = vshrl.u32 %v10217, 7
        %v10219 = vsub.s32 %v10216, %v10218
        %v10220 = vrot.slane %v10206, %v10219
        %v10221 = vcombine.low %v10213, %v10220
        %v10223 = vunpack.c.l.s4 1966171168
        %v10224 = vunpack.c.0.s8 %v10223
        %v10225 = vlaneseq
        %v10226 = vshrl.u32 %v10225, 7
        %v10227 = vsub.s32 %v10224, %v10226
        %v10228 = vrot.slane %v10221, %v10227
        %v10230 = vlaneseq
        %vm10231 = vcmp.ge.s32.totalorder %v10230, 0
        %vm10232 = vcmp.lt.s32.totalorder %v10230, 512
        %vm10233 = vmand %vm10231, %vm10232
        %10234 = vst.msk [vmem:[%s396] sm:$0xf] %vm10233, %v10228
        %s10235 = sand.u32 %s232, 1
        %s10236 = scalar_lea.sflag [#allocation5], %s10235
        %s10237 = sand.u32 %s232, 1
        %s10238 = smul.addr %s10237, 4
        %s10239 = scalar_lea.vmem [#allocation11], %s10238
        // Predicated region
        $region73: #{mlp_forward_padded.1} parent=55 // pred_check
          %p10240 = pneg %p242
        $region74: #{mlp_forward_padded.1} parent=55 // pred_check_branch
          %10242 = sbr.rel (%p10240) target = $region76
        $region75: #{mlp_forward_padded.1} parent=55 // pred_region
          %s10243 = smul.u32 4, %s30
          %s10245 = ssub.s32 64, 64
          %10246 = vsyncadd %s10236, %s10245
          %s10247 = smul.addr %s10243, 16
          %s10248 = scalar_lea.hbm %s9, %s10247
          %s10250 = sshll.u32 %s10239, 4
          %s10251 = int_to_ptr.vmem [resolvable:$true] %s10250
          %10253 = dma.vmem_to_hbm [thread:$0]  %s10251, 64, %s10248, %s10236
        $region76: #{mlp_forward_padded.1} parent=55 // pred_fallthru
          _
      $region56: #{mlp_forward_padded.1} parent=5 // pred_fallthru
        _
      %p10254 = scmp.le.s32.totalorder 2, %s25
      // Predicated region
      $region77: #{mlp_forward_padded.1} parent=5 // pred_check
        %p10255 = pneg %p10254
      $region78: #{mlp_forward_padded.1} parent=5 // pred_check_branch
        %10257 = sbr.rel (%p10255) target = $region80
      $region79: #{mlp_forward_padded.1} parent=5 // pred_region
        %s10258 = ssub.s32 %s25, 2
        // Predicated region
        $region81: #{mlp_forward_padded.1} parent=79 // pred_check
          %p10259 = pneg %p248
        $region82: #{mlp_forward_padded.1} parent=79 // pred_check_branch
          %10261 = sbr.rel (%p10259) target = $region84
        $region83: #{mlp_forward_padded.1} parent=79 // pred_region
          %s10262 = sand.u32 %s233, 1
          %s10263 = scalar_lea.sflag [#allocation5], %s10262
          %s10264 = sand.u32 %s233, 1
          %s10265 = smul.addr %s10264, 4
          %s10266 = scalar_lea.vmem [#allocation11], %s10265
          %10267 = dma.done %s10263, 64
        $region84: #{mlp_forward_padded.1} parent=79 // pred_fallthru
          _
      $region80: #{mlp_forward_padded.1} parent=5 // pred_fallthru
        _
    $region6: #{mlp_forward_padded.1} parent=1 // loop_footer
      %s29 = sadd.s32 1, %s25
    $region7: #{mlp_forward_padded.1} parent=1 // loop_footer_branch
      %24 = sbr.rel target = $region3
    $region8: #{mlp_forward_padded.1} parent=1 // loop_exit
      _
    %10268 = vsyncpa [#allocation4], 1
    %s10269 = scalar_lea.sflag [#allocation4], 1
    %10270 = vsyncpa %s10269, 1
    %10271 = vsyncpa [#allocation7], 1
    %10272 = vsyncpa [#allocation10], 1
    %10273 = vsyncpa [#allocation5], 1
    %s10274 = scalar_lea.sflag [#allocation5], 1
    %10275 = vsyncpa %s10274, 1

</llo_original>
